<compile_context>
chip_gen: v5e
topology: v5e:2x2
jax: 0.10.0
libtpu: 0.0.40
codegen_flags: <defaults>
</compile_context>

<pallas_src>
import functools

import jax
import jax.numpy as jnp
from jax.experimental import pallas as pl
from jax.experimental.pallas import tpu as pltpu

D_MODEL = 32      # d_model
NHEAD = 4         # nhead2
PERIOD = 12       # self.period (fixed in the module)
N_STOCKS = 16     # sequence length L (number of stocks)
THRESHOLD = 4     # top-k selection (PyTorch default 0 selects nothing)
BATCH = 4         # demo batch (grid axis)


# ----------------------------------------------------------------------------
# Fused per-batch-element kernel:
#   attention -> MLP -> tanh -> stable desc. sort -> top-k -> softmax -> lookup
# ----------------------------------------------------------------------------
def _caan_kernel(x_ref, wqkv_ref, bqkv_ref, wo_ref, bo_ref,
                 w1_ref, b1_ref, w2_ref, b2_ref, w3_ref, b3_ref,
                 key_ref, action_ref, stocks_ref, *,
                 d_model, nhead, period, threshold):
    E = d_model
    P = period
    H = nhead
    dh = E // H
    S = key_ref.shape[0]

    x = x_ref[0]                                            # (P*S, E), period-major

    # ---- fused Q/K/V projection: ONE MXU matmul (1/sqrt(dh) folded into the Q block) ----
    qkv = jnp.dot(x, wqkv_ref[...],
                  preferred_element_type=jnp.float32) + bqkv_ref[...]      # (P*S, 3E)
    qkv3 = qkv.reshape(P, S, 3 * E)

    # ---- attention: 3-D einsums batched over the period axis, static head loop ----
    head_outs = []
    for h in range(H):
        qh = qkv3[:, :, h * dh:(h + 1) * dh]                # (P, S, dh), already scaled
        kh = qkv3[:, :, E + h * dh:E + (h + 1) * dh]
        vh = qkv3[:, :, 2 * E + h * dh:2 * E + (h + 1) * dh]
        s_ph = jnp.einsum('psd,ptd->pst', qh, kh,
                          preferred_element_type=jnp.float32)              # (P, S, S)
        m = jnp.max(s_ph, axis=-1, keepdims=True)
        e = jnp.exp(s_ph - m)
        probs = e / jnp.sum(e, axis=-1, keepdims=True)
        # TODO(synk): attention-weight dropout skipped (inference mode).
        head_outs.append(jnp.einsum('pst,ptd->psd', probs, vh,
                                    preferred_element_type=jnp.float32))   # (P, S, dh)
    ctx = jnp.concatenate(head_outs, axis=-1)                               # (P, S, E)
    out_flat = jnp.dot(ctx.reshape(P * S, E), wo_ref[...],
                       preferred_element_type=jnp.float32) + bo_ref[...]    # (P*S, E)
    out3_bf = out_flat.astype(jnp.bfloat16).reshape(P, S, E)

    # ---- linear_w1 as P accumulating K=E matmuls (no lane-misaligned tgt concat) ----
    F = w1_ref.shape[2]
    h1 = jnp.zeros((S, F), jnp.float32)
    for p in range(P):
        h1 = h1 + jnp.dot(out3_bf[p], w1_ref[p],
                          preferred_element_type=jnp.float32)
    h1 = jnp.maximum(h1 + b1_ref[...], 0.0)                 # relu; dropout = identity
    h2 = jnp.dot(h1.astype(jnp.bfloat16), w2_ref[...],
                 preferred_element_type=jnp.float32) + b2_ref[...]
    h2 = jnp.maximum(h2, 0.0)                               # relu; dropout = identity
    # final F/2 -> 1 projection as a VPU broadcast-multiply + lane reduction
    score = jnp.tanh(jnp.sum(h2 * w3_ref[...], axis=-1, keepdims=True)
                     + b3_ref[...])                                          # (S, 1)

    # ---- descending stable sort via ranks + top-threshold + softmax + key lookup ----
    i_col = jax.lax.broadcasted_iota(jnp.int32, (S, S), 0)   # [i, j] = i
    j_row = jax.lax.broadcasted_iota(jnp.int32, (S, S), 1)   # [i, j] = j
    eye = i_col == j_row

    # score as a (1, S) row without a transpose: mask with eye, reduce sublanes.
    score_row = jnp.sum(jnp.where(eye, score, 0.0), axis=0, keepdims=True)   # (1, S)

    # outranks[i, j] = stock j strictly ahead of stock i (stable tie-break by index)
    outranks = (score_row > score) | ((score_row == score) & (j_row < i_col))
    rank_col = jnp.sum(outranks.astype(jnp.int32), axis=1, keepdims=True)    # (S, 1)

    # sel[i, t] = (rank of stock i == t) -> one-hot permutation matrix
    sel = rank_col == j_row                                                  # (S, S)
    sorted_scores = jnp.sum(jnp.where(sel, score, 0.0),
                            axis=0, keepdims=True)                           # (1, S)
    # TODO(synk): pandas key_table replaced by an int32 id array lookup.
    sorted_keys = jnp.sum(jnp.where(sel, key_ref[...], 0),
                          axis=0, keepdims=True)                             # (1, S) int32

    top = sorted_scores[:, :threshold]                       # (1, threshold), lane-major
    tmax = jnp.max(top, axis=-1, keepdims=True)
    te = jnp.exp(top - tmax)
    action_ref[0] = te / jnp.sum(te, axis=-1, keepdims=True)                 # (1, threshold)
    stocks_ref[0] = sorted_keys[:, :threshold]


# ----------------------------------------------------------------------------
# Wrapper: one pallas_call, grid over the batch, weights VMEM-resident
# ----------------------------------------------------------------------------
def caan_forward(memory, params, key_table, threshold=THRESHOLD):
    """memory: (B, S, P, E) or (S, P, E) float32.

    Returns:
      batched:   action (B, threshold) float32, stocks (B, threshold) int32
      unbatched: action (threshold, 1) float32, stocks (threshold,) int32
    """
    if threshold < 1:
        raise ValueError("threshold must be >= 1 (PyTorch default 0 selects nothing)")
    squeeze = memory.ndim == 3
    if squeeze:
        memory = memory[None]
    B, S, P, E = memory.shape
    F = P * E
    H2 = F // 2

    # period-major regrouping done host-side (free XLA transpose, fuses upstream)
    x = jnp.transpose(memory, (0, 2, 1, 3)).reshape(B, P * S, E)   # (B, P*S, E)
    key_col = key_table.reshape(S, 1).astype(jnp.int32)

    kernel = functools.partial(_caan_kernel, d_model=E, nhead=NHEAD,
                               period=P, threshold=threshold)
    const2 = lambda b: (0, 0)

    action, stocks = pl.pallas_call(
        kernel,
        grid=(B,),
        in_specs=[
            pl.BlockSpec((1, P * S, E), lambda b: (b, 0, 0)),     # per-step input
            pl.BlockSpec((E, 3 * E), const2),                     # wqkv (resident)
            pl.BlockSpec((1, 3 * E), const2),                     # bqkv
            pl.BlockSpec((E, E), const2),                         # wo
            pl.BlockSpec((1, E), const2),                         # bo
            pl.BlockSpec((P, E, F), lambda b: (0, 0, 0)),         # w1 (bf16, resident)
            pl.BlockSpec((1, F), const2),                         # b1
            pl.BlockSpec((F, H2), const2),                        # w2 (bf16, resident)
            pl.BlockSpec((1, H2), const2),                        # b2
            pl.BlockSpec((1, H2), const2),                        # w3 row
            pl.BlockSpec((1, 1), const2),                         # b3
            pl.BlockSpec((S, 1), const2),                         # stock ids (column)
        ],
        out_specs=[
            pl.BlockSpec((1, 1, threshold), lambda b: (b, 0, 0)),
            pl.BlockSpec((1, 1, threshold), lambda b: (b, 0, 0)),
        ],
        out_shape=(jax.ShapeDtypeStruct((B, 1, threshold), jnp.float32),
                   jax.ShapeDtypeStruct((B, 1, threshold), jnp.int32)),
        compiler_params=pltpu.CompilerParams(
            dimension_semantics=("parallel",)),                   # split batch across v7x TCs
    )(x, params["wqkv"], params["bqkv"], params["wo"], params["bo"],
      params["w1"], params["b1"], params["w2"], params["b2"],
      params["w3"], params["b3"], key_col)

    action = action[:, 0, :]                                      # (B, threshold)
    stocks = stocks[:, 0, :]                                      # (B, threshold)
    if squeeze:
        return action[0].reshape(threshold, 1), stocks[0]
    return action, stocks


# ----------------------------------------------------------------------------
# Parameters: PyTorch-layout init + kernel-friendly packing
# ----------------------------------------------------------------------------
def init_params(key):
    """Raw weights, stored pre-transposed (y = x @ W + b)."""
    E = D_MODEL
    F = E * PERIOD            # num_hidden_node1 = d_model * period
    H2 = F // 2               # num_hidden_node2
    ks = jax.random.split(key, 7)

    def w(k, shape, fan_in):
        return jax.random.normal(k, shape, jnp.float32) / jnp.sqrt(jnp.float32(fan_in))

    return {
        "wq": w(ks[0], (E, E), E), "wk": w(ks[1], (E, E), E), "wv": w(ks[2], (E, E), E),
        "bq": jnp.zeros((1, E), jnp.float32),
        "bk": jnp.zeros((1, E), jnp.float32),
        "bv": jnp.zeros((1, E), jnp.float32),
        "wo": w(ks[3], (E, E), E), "bo": jnp.zeros((1, E), jnp.float32),
        "w1": w(ks[4], (F, F), F),   "b1": jnp.full((1, F), 0.01, jnp.float32),
        "w2": w(ks[5], (F, H2), F),  "b2": jnp.full((1, H2), 0.01, jnp.float32),
        "w3": w(ks[6], (1, H2), H2), "b3": jnp.zeros((1, 1), jnp.float32),
    }


def prepare_params(raw, nhead=NHEAD):
    """Pack raw weights into the kernel layout:
       - wq|wk|wv fused into (E, 3E), 1/sqrt(head_dim) folded into the Q block,
       - w1 reshaped (P, E, F) and w1/w2 cast to bf16 (f32 accumulation in-kernel)."""
    E = raw["wq"].shape[0]
    dh = E // nhead
    scale = 1.0 / float(dh) ** 0.5
    F = raw["w1"].shape[0]
    P = F // E
    return {
        "wqkv": jnp.concatenate([raw["wq"] * scale, raw["wk"], raw["wv"]], axis=1),
        "bqkv": jnp.concatenate([raw["bq"] * scale, raw["bk"], raw["bv"]], axis=1),
        "wo": raw["wo"], "bo": raw["bo"],
        "w1": raw["w1"].reshape(P, E, F).astype(jnp.bfloat16),
        "b1": raw["b1"],
        "w2": raw["w2"].astype(jnp.bfloat16),
        "b2": raw["b2"],
        "w3": raw["w3"], "b3": raw["b3"],
    }


if __name__ == "__main__":
    root = jax.random.PRNGKey(0)
    k_mem, k_par = jax.random.split(root)

    memory = jax.random.normal(k_mem, (BATCH, N_STOCKS, PERIOD, D_MODEL), dtype=jnp.float32)
    params = prepare_params(init_params(k_par))
    key_table = jnp.arange(N_STOCKS, dtype=jnp.int32) + 1000   # synthetic stock ids

    fwd = jax.jit(functools.partial(caan_forward, threshold=THRESHOLD))

    # ---- batched path: one pallas_call, grid over the batch ----
    action_b, stocks_b = fwd(memory, params, key_table)
    jax.block_until_ready((action_b, stocks_b))
    assert action_b.shape == (BATCH, THRESHOLD)
    assert stocks_b.shape == (BATCH, THRESHOLD)
    assert bool(jnp.all(jnp.isfinite(action_b)))
    assert bool(jnp.all(jnp.abs(jnp.sum(action_b, axis=-1) - 1.0) < 1e-3))  # softmax rows
    assert bool(jnp.all(jnp.isin(stocks_b, key_table)))                     # valid ids

    # ---- single-example path (module-fidelity output shapes) ----
    action_1, stocks_1 = fwd(memory[0], params, key_table)
    jax.block_until_ready((action_1, stocks_1))
    assert action_1.shape == (THRESHOLD, 1)
    assert stocks_1.shape == (THRESHOLD,)
    assert abs(float(jnp.sum(action_1)) - 1.0) < 1e-3
    assert bool(jnp.all(jnp.isin(stocks_1, key_table)))

    print("KERNEL_OK")
</pallas_src>

<mosaic_0001>
module attributes {stable_mosaic.version = 11 : i64} {
  func.func @_caan_kernel(%arg0: i32, %arg1: memref<1x192x32xf32, #tpu.memory_space<vmem>>, %arg2: memref<32x96xf32, #tpu.memory_space<vmem>>, %arg3: memref<1x96xf32, #tpu.memory_space<vmem>>, %arg4: memref<32x32xf32, #tpu.memory_space<vmem>>, %arg5: memref<1x32xf32, #tpu.memory_space<vmem>>, %arg6: memref<12x32x384xbf16, #tpu.memory_space<vmem>>, %arg7: memref<1x384xf32, #tpu.memory_space<vmem>>, %arg8: memref<384x192xbf16, #tpu.memory_space<vmem>>, %arg9: memref<1x192xf32, #tpu.memory_space<vmem>>, %arg10: memref<1x192xf32, #tpu.memory_space<vmem>>, %arg11: memref<1x1xf32, #tpu.memory_space<vmem>>, %arg12: memref<16x1xi32, #tpu.memory_space<vmem>>, %arg13: memref<1x1x4xf32, #tpu.memory_space<vmem>>, %arg14: memref<1x1x4xi32, #tpu.memory_space<vmem>>) attributes {dimension_semantics = [#tpu.dimension_semantics<parallel>], iteration_bounds = array<i64: 4>, scalar_prefetch = 0 : i64, scratch_operands = 0 : i64, tpu.core_type = #tpu.core_type<tc>, window_params = [{transform_indices = @transform_0, window_bounds = array<i64: 1, 192, 32>}, {pipeline_mode = #tpu.pipeline_mode<synchronous>, transform_indices = @transform_1, window_bounds = array<i64: 32, 96>}, {pipeline_mode = #tpu.pipeline_mode<synchronous>, transform_indices = @transform_2, window_bounds = array<i64: 1, 96>}, {pipeline_mode = #tpu.pipeline_mode<synchronous>, transform_indices = @transform_3, window_bounds = array<i64: 32, 32>}, {pipeline_mode = #tpu.pipeline_mode<synchronous>, transform_indices = @transform_4, window_bounds = array<i64: 1, 32>}, {pipeline_mode = #tpu.pipeline_mode<synchronous>, transform_indices = @transform_5, window_bounds = array<i64: 12, 32, 384>}, {pipeline_mode = #tpu.pipeline_mode<synchronous>, transform_indices = @transform_6, window_bounds = array<i64: 1, 384>}, {pipeline_mode = #tpu.pipeline_mode<synchronous>, transform_indices = @transform_7, window_bounds = array<i64: 384, 192>}, {pipeline_mode = #tpu.pipeline_mode<synchronous>, transform_indices = @transform_8, window_bounds = array<i64: 1, 192>}, {pipeline_mode = #tpu.pipeline_mode<synchronous>, transform_indices = @transform_9, window_bounds = array<i64: 1, 192>}, {pipeline_mode = #tpu.pipeline_mode<synchronous>, transform_indices = @transform_10, window_bounds = array<i64: 1, 1>}, {pipeline_mode = #tpu.pipeline_mode<synchronous>, transform_indices = @transform_11, window_bounds = array<i64: 16, 1>}, {transform_indices = @transform_12, window_bounds = array<i64: 1, 1, 4>}, {transform_indices = @transform_13, window_bounds = array<i64: 1, 1, 4>}]} {
    %c0 = arith.constant 0 : index
    %c0_0 = arith.constant 0 : index
    %c0_1 = arith.constant 0 : index
    %0 = vector.load %arg1[%c0, %c0_0, %c0_1] : memref<1x192x32xf32, #tpu.memory_space<vmem>>, vector<1x192x32xf32>
    %1 = vector.shape_cast %0 : vector<1x192x32xf32> to vector<192x32xf32>
    %c0_2 = arith.constant 0 : index
    %c0_3 = arith.constant 0 : index
    %2 = vector.load %arg2[%c0_2, %c0_3] : memref<32x96xf32, #tpu.memory_space<vmem>>, vector<32x96xf32>
    %cst = arith.constant dense<0.000000e+00> : vector<192x96xf32>
    %3 = tpu.matmul %1, %2, %cst {dimension_numbers = #tpu.dot_dimension_numbers<[1], [0], [0], [1], [0, 0, 1, 1], [], []>} : vector<192x32xf32>, vector<32x96xf32>, vector<192x96xf32> -> vector<192x96xf32>
    %c0_4 = arith.constant 0 : index
    %c0_5 = arith.constant 0 : index
    %4 = vector.load %arg3[%c0_4, %c0_5] : memref<1x96xf32, #tpu.memory_space<vmem>>, vector<1x96xf32>
    %5 = vector.broadcast %4 : vector<1x96xf32> to vector<192x96xf32>
    %6 = arith.addf %3, %5 : vector<192x96xf32>
    %7 = vector.shape_cast %6 : vector<192x96xf32> to vector<12x16x96xf32>
    %8 = vector.extract_strided_slice %7 {offsets = [0, 0, 0], sizes = [12, 16, 8], strides = [1, 1, 1]} : vector<12x16x96xf32> to vector<12x16x8xf32>
    %9 = vector.extract_strided_slice %7 {offsets = [0, 0, 32], sizes = [12, 16, 8], strides = [1, 1, 1]} : vector<12x16x96xf32> to vector<12x16x8xf32>
    %10 = vector.extract_strided_slice %7 {offsets = [0, 0, 64], sizes = [12, 16, 8], strides = [1, 1, 1]} : vector<12x16x96xf32> to vector<12x16x8xf32>
    "tpu.trace_start"() <{level = 10 : i32, message = "psd,ptd->pst"}> : () -> ()
    %cst_6 = arith.constant dense<0.000000e+00> : vector<12x16x16xf32>
    %11 = tpu.matmul %8, %9, %cst_6 {dimension_numbers = #tpu.dot_dimension_numbers<[2], [2], [1], [1], [0, 0, 0, 1, 1, 1], [0], [0]>} : vector<12x16x8xf32>, vector<12x16x8xf32>, vector<12x16x16xf32> -> vector<12x16x16xf32>
    "tpu.trace_stop"() : () -> ()
    %cst_7 = arith.constant dense<0xFF800000> : vector<12x16xf32>
    %12 = vector.multi_reduction <maximumf>, %11, %cst_7 [2] : vector<12x16x16xf32> to vector<12x16xf32>
    %13 = vector.shape_cast %12 : vector<12x16xf32> to vector<12x16x1xf32>
    %14 = vector.broadcast %13 : vector<12x16x1xf32> to vector<12x16x16xf32>
    %15 = arith.subf %11, %14 : vector<12x16x16xf32>
    %16 = math.exp %15 : vector<12x16x16xf32>
    %cst_8 = arith.constant dense<0.000000e+00> : vector<12x16xf32>
    %17 = vector.multi_reduction <add>, %16, %cst_8 [2] : vector<12x16x16xf32> to vector<12x16xf32>
    %18 = vector.shape_cast %17 : vector<12x16xf32> to vector<12x16x1xf32>
    %19 = vector.broadcast %18 : vector<12x16x1xf32> to vector<12x16x16xf32>
    %20 = arith.divf %16, %19 : vector<12x16x16xf32>
    "tpu.trace_start"() <{level = 10 : i32, message = "pst,ptd->psd"}> : () -> ()
    %cst_9 = arith.constant dense<0.000000e+00> : vector<12x16x8xf32>
    %21 = tpu.matmul %20, %10, %cst_9 {dimension_numbers = #tpu.dot_dimension_numbers<[2], [1], [1], [2], [0, 0, 0, 1, 1, 2], [0], [0]>} : vector<12x16x16xf32>, vector<12x16x8xf32>, vector<12x16x8xf32> -> vector<12x16x8xf32>
    "tpu.trace_stop"() : () -> ()
    %22 = vector.extract_strided_slice %7 {offsets = [0, 0, 8], sizes = [12, 16, 8], strides = [1, 1, 1]} : vector<12x16x96xf32> to vector<12x16x8xf32>
    %23 = vector.extract_strided_slice %7 {offsets = [0, 0, 40], sizes = [12, 16, 8], strides = [1, 1, 1]} : vector<12x16x96xf32> to vector<12x16x8xf32>
    %24 = vector.extract_strided_slice %7 {offsets = [0, 0, 72], sizes = [12, 16, 8], strides = [1, 1, 1]} : vector<12x16x96xf32> to vector<12x16x8xf32>
    "tpu.trace_start"() <{level = 10 : i32, message = "psd,ptd->pst"}> : () -> ()
    %cst_10 = arith.constant dense<0.000000e+00> : vector<12x16x16xf32>
    %25 = tpu.matmul %22, %23, %cst_10 {dimension_numbers = #tpu.dot_dimension_numbers<[2], [2], [1], [1], [0, 0, 0, 1, 1, 1], [0], [0]>} : vector<12x16x8xf32>, vector<12x16x8xf32>, vector<12x16x16xf32> -> vector<12x16x16xf32>
    "tpu.trace_stop"() : () -> ()
    %cst_11 = arith.constant dense<0xFF800000> : vector<12x16xf32>
    %26 = vector.multi_reduction <maximumf>, %25, %cst_11 [2] : vector<12x16x16xf32> to vector<12x16xf32>
    %27 = vector.shape_cast %26 : vector<12x16xf32> to vector<12x16x1xf32>
    %28 = vector.broadcast %27 : vector<12x16x1xf32> to vector<12x16x16xf32>
    %29 = arith.subf %25, %28 : vector<12x16x16xf32>
    %30 = math.exp %29 : vector<12x16x16xf32>
    %cst_12 = arith.constant dense<0.000000e+00> : vector<12x16xf32>
    %31 = vector.multi_reduction <add>, %30, %cst_12 [2] : vector<12x16x16xf32> to vector<12x16xf32>
    %32 = vector.shape_cast %31 : vector<12x16xf32> to vector<12x16x1xf32>
    %33 = vector.broadcast %32 : vector<12x16x1xf32> to vector<12x16x16xf32>
    %34 = arith.divf %30, %33 : vector<12x16x16xf32>
    "tpu.trace_start"() <{level = 10 : i32, message = "pst,ptd->psd"}> : () -> ()
    %cst_13 = arith.constant dense<0.000000e+00> : vector<12x16x8xf32>
    %35 = tpu.matmul %34, %24, %cst_13 {dimension_numbers = #tpu.dot_dimension_numbers<[2], [1], [1], [2], [0, 0, 0, 1, 1, 2], [0], [0]>} : vector<12x16x16xf32>, vector<12x16x8xf32>, vector<12x16x8xf32> -> vector<12x16x8xf32>
    "tpu.trace_stop"() : () -> ()
    %36 = vector.extract_strided_slice %7 {offsets = [0, 0, 16], sizes = [12, 16, 8], strides = [1, 1, 1]} : vector<12x16x96xf32> to vector<12x16x8xf32>
    %37 = vector.extract_strided_slice %7 {offsets = [0, 0, 48], sizes = [12, 16, 8], strides = [1, 1, 1]} : vector<12x16x96xf32> to vector<12x16x8xf32>
    %38 = vector.extract_strided_slice %7 {offsets = [0, 0, 80], sizes = [12, 16, 8], strides = [1, 1, 1]} : vector<12x16x96xf32> to vector<12x16x8xf32>
    "tpu.trace_start"() <{level = 10 : i32, message = "psd,ptd->pst"}> : () -> ()
    %cst_14 = arith.constant dense<0.000000e+00> : vector<12x16x16xf32>
    %39 = tpu.matmul %36, %37, %cst_14 {dimension_numbers = #tpu.dot_dimension_numbers<[2], [2], [1], [1], [0, 0, 0, 1, 1, 1], [0], [0]>} : vector<12x16x8xf32>, vector<12x16x8xf32>, vector<12x16x16xf32> -> vector<12x16x16xf32>
    "tpu.trace_stop"() : () -> ()
    %cst_15 = arith.constant dense<0xFF800000> : vector<12x16xf32>
    %40 = vector.multi_reduction <maximumf>, %39, %cst_15 [2] : vector<12x16x16xf32> to vector<12x16xf32>
    %41 = vector.shape_cast %40 : vector<12x16xf32> to vector<12x16x1xf32>
    %42 = vector.broadcast %41 : vector<12x16x1xf32> to vector<12x16x16xf32>
    %43 = arith.subf %39, %42 : vector<12x16x16xf32>
    %44 = math.exp %43 : vector<12x16x16xf32>
    %cst_16 = arith.constant dense<0.000000e+00> : vector<12x16xf32>
    %45 = vector.multi_reduction <add>, %44, %cst_16 [2] : vector<12x16x16xf32> to vector<12x16xf32>
    %46 = vector.shape_cast %45 : vector<12x16xf32> to vector<12x16x1xf32>
    %47 = vector.broadcast %46 : vector<12x16x1xf32> to vector<12x16x16xf32>
    %48 = arith.divf %44, %47 : vector<12x16x16xf32>
    "tpu.trace_start"() <{level = 10 : i32, message = "pst,ptd->psd"}> : () -> ()
    %cst_17 = arith.constant dense<0.000000e+00> : vector<12x16x8xf32>
    %49 = tpu.matmul %48, %38, %cst_17 {dimension_numbers = #tpu.dot_dimension_numbers<[2], [1], [1], [2], [0, 0, 0, 1, 1, 2], [0], [0]>} : vector<12x16x16xf32>, vector<12x16x8xf32>, vector<12x16x8xf32> -> vector<12x16x8xf32>
    "tpu.trace_stop"() : () -> ()
    %50 = vector.extract_strided_slice %7 {offsets = [0, 0, 24], sizes = [12, 16, 8], strides = [1, 1, 1]} : vector<12x16x96xf32> to vector<12x16x8xf32>
    %51 = vector.extract_strided_slice %7 {offsets = [0, 0, 56], sizes = [12, 16, 8], strides = [1, 1, 1]} : vector<12x16x96xf32> to vector<12x16x8xf32>
    %52 = vector.extract_strided_slice %7 {offsets = [0, 0, 88], sizes = [12, 16, 8], strides = [1, 1, 1]} : vector<12x16x96xf32> to vector<12x16x8xf32>
    "tpu.trace_start"() <{level = 10 : i32, message = "psd,ptd->pst"}> : () -> ()
    %cst_18 = arith.constant dense<0.000000e+00> : vector<12x16x16xf32>
    %53 = tpu.matmul %50, %51, %cst_18 {dimension_numbers = #tpu.dot_dimension_numbers<[2], [2], [1], [1], [0, 0, 0, 1, 1, 1], [0], [0]>} : vector<12x16x8xf32>, vector<12x16x8xf32>, vector<12x16x16xf32> -> vector<12x16x16xf32>
    "tpu.trace_stop"() : () -> ()
    %cst_19 = arith.constant dense<0xFF800000> : vector<12x16xf32>
    %54 = vector.multi_reduction <maximumf>, %53, %cst_19 [2] : vector<12x16x16xf32> to vector<12x16xf32>
    %55 = vector.shape_cast %54 : vector<12x16xf32> to vector<12x16x1xf32>
    %56 = vector.broadcast %55 : vector<12x16x1xf32> to vector<12x16x16xf32>
    %57 = arith.subf %53, %56 : vector<12x16x16xf32>
    %58 = math.exp %57 : vector<12x16x16xf32>
    %cst_20 = arith.constant dense<0.000000e+00> : vector<12x16xf32>
    %59 = vector.multi_reduction <add>, %58, %cst_20 [2] : vector<12x16x16xf32> to vector<12x16xf32>
    %60 = vector.shape_cast %59 : vector<12x16xf32> to vector<12x16x1xf32>
    %61 = vector.broadcast %60 : vector<12x16x1xf32> to vector<12x16x16xf32>
    %62 = arith.divf %58, %61 : vector<12x16x16xf32>
    "tpu.trace_start"() <{level = 10 : i32, message = "pst,ptd->psd"}> : () -> ()
    %cst_21 = arith.constant dense<0.000000e+00> : vector<12x16x8xf32>
    %63 = tpu.matmul %62, %52, %cst_21 {dimension_numbers = #tpu.dot_dimension_numbers<[2], [1], [1], [2], [0, 0, 0, 1, 1, 2], [0], [0]>} : vector<12x16x16xf32>, vector<12x16x8xf32>, vector<12x16x8xf32> -> vector<12x16x8xf32>
    "tpu.trace_stop"() : () -> ()
    %64 = tpu.concatenate %21, %35, %49, %63 in 2 : vector<12x16x8xf32>, vector<12x16x8xf32>, vector<12x16x8xf32>, vector<12x16x8xf32> -> vector<12x16x32xf32>
    %65 = vector.shape_cast %64 : vector<12x16x32xf32> to vector<192x32xf32>
    %c0_22 = arith.constant 0 : index
    %c0_23 = arith.constant 0 : index
    %66 = vector.load %arg4[%c0_22, %c0_23] : memref<32x32xf32, #tpu.memory_space<vmem>>, vector<32x32xf32>
    %cst_24 = arith.constant dense<0.000000e+00> : vector<192x32xf32>
    %67 = tpu.matmul %65, %66, %cst_24 {dimension_numbers = #tpu.dot_dimension_numbers<[1], [0], [0], [1], [0, 0, 1, 1], [], []>} : vector<192x32xf32>, vector<32x32xf32>, vector<192x32xf32> -> vector<192x32xf32>
    %c0_25 = arith.constant 0 : index
    %c0_26 = arith.constant 0 : index
    %68 = vector.load %arg5[%c0_25, %c0_26] : memref<1x32xf32, #tpu.memory_space<vmem>>, vector<1x32xf32>
    %69 = vector.broadcast %68 : vector<1x32xf32> to vector<192x32xf32>
    %70 = arith.addf %67, %69 : vector<192x32xf32>
    %71 = arith.truncf %70 : vector<192x32xf32> to vector<192x32xbf16>
    %72 = vector.shape_cast %71 : vector<192x32xbf16> to vector<12x16x32xbf16>
    %cst_27 = arith.constant 0.000000e+00 : f32
    %73 = vector.broadcast %cst_27 : f32 to vector<16x384xf32>
    %74 = vector.extract_strided_slice %72 {offsets = [0, 0, 0], sizes = [1, 16, 32], strides = [1, 1, 1]} : vector<12x16x32xbf16> to vector<1x16x32xbf16>
    %75 = vector.shape_cast %74 : vector<1x16x32xbf16> to vector<16x32xbf16>
    %c0_28 = arith.constant 0 : index
    %c0_29 = arith.constant 0 : index
    %c0_30 = arith.constant 0 : index
    %76 = vector.load %arg6[%c0_28, %c0_29, %c0_30] : memref<12x32x384xbf16, #tpu.memory_space<vmem>>, vector<1x32x384xbf16>
    %77 = vector.shape_cast %76 : vector<1x32x384xbf16> to vector<32x384xbf16>
    %cst_31 = arith.constant dense<0.000000e+00> : vector<16x384xf32>
    %78 = tpu.matmul %75, %77, %cst_31 {dimension_numbers = #tpu.dot_dimension_numbers<[1], [0], [0], [1], [0, 0, 1, 1], [], []>} : vector<16x32xbf16>, vector<32x384xbf16>, vector<16x384xf32> -> vector<16x384xf32>
    %79 = arith.addf %73, %78 : vector<16x384xf32>
    %80 = vector.extract_strided_slice %72 {offsets = [1, 0, 0], sizes = [1, 16, 32], strides = [1, 1, 1]} : vector<12x16x32xbf16> to vector<1x16x32xbf16>
    %81 = vector.shape_cast %80 : vector<1x16x32xbf16> to vector<16x32xbf16>
    %c1 = arith.constant 1 : index
    %c0_32 = arith.constant 0 : index
    %c0_33 = arith.constant 0 : index
    %82 = vector.load %arg6[%c1, %c0_32, %c0_33] : memref<12x32x384xbf16, #tpu.memory_space<vmem>>, vector<1x32x384xbf16>
    %83 = vector.shape_cast %82 : vector<1x32x384xbf16> to vector<32x384xbf16>
    %cst_34 = arith.constant dense<0.000000e+00> : vector<16x384xf32>
    %84 = tpu.matmul %81, %83, %cst_34 {dimension_numbers = #tpu.dot_dimension_numbers<[1], [0], [0], [1], [0, 0, 1, 1], [], []>} : vector<16x32xbf16>, vector<32x384xbf16>, vector<16x384xf32> -> vector<16x384xf32>
    %85 = arith.addf %79, %84 : vector<16x384xf32>
    %86 = vector.extract_strided_slice %72 {offsets = [2, 0, 0], sizes = [1, 16, 32], strides = [1, 1, 1]} : vector<12x16x32xbf16> to vector<1x16x32xbf16>
    %87 = vector.shape_cast %86 : vector<1x16x32xbf16> to vector<16x32xbf16>
    %c2 = arith.constant 2 : index
    %c0_35 = arith.constant 0 : index
    %c0_36 = arith.constant 0 : index
    %88 = vector.load %arg6[%c2, %c0_35, %c0_36] : memref<12x32x384xbf16, #tpu.memory_space<vmem>>, vector<1x32x384xbf16>
    %89 = vector.shape_cast %88 : vector<1x32x384xbf16> to vector<32x384xbf16>
    %cst_37 = arith.constant dense<0.000000e+00> : vector<16x384xf32>
    %90 = tpu.matmul %87, %89, %cst_37 {dimension_numbers = #tpu.dot_dimension_numbers<[1], [0], [0], [1], [0, 0, 1, 1], [], []>} : vector<16x32xbf16>, vector<32x384xbf16>, vector<16x384xf32> -> vector<16x384xf32>
    %91 = arith.addf %85, %90 : vector<16x384xf32>
    %92 = vector.extract_strided_slice %72 {offsets = [3, 0, 0], sizes = [1, 16, 32], strides = [1, 1, 1]} : vector<12x16x32xbf16> to vector<1x16x32xbf16>
    %93 = vector.shape_cast %92 : vector<1x16x32xbf16> to vector<16x32xbf16>
    %c3 = arith.constant 3 : index
    %c0_38 = arith.constant 0 : index
    %c0_39 = arith.constant 0 : index
    %94 = vector.load %arg6[%c3, %c0_38, %c0_39] : memref<12x32x384xbf16, #tpu.memory_space<vmem>>, vector<1x32x384xbf16>
    %95 = vector.shape_cast %94 : vector<1x32x384xbf16> to vector<32x384xbf16>
    %cst_40 = arith.constant dense<0.000000e+00> : vector<16x384xf32>
    %96 = tpu.matmul %93, %95, %cst_40 {dimension_numbers = #tpu.dot_dimension_numbers<[1], [0], [0], [1], [0, 0, 1, 1], [], []>} : vector<16x32xbf16>, vector<32x384xbf16>, vector<16x384xf32> -> vector<16x384xf32>
    %97 = arith.addf %91, %96 : vector<16x384xf32>
    %98 = vector.extract_strided_slice %72 {offsets = [4, 0, 0], sizes = [1, 16, 32], strides = [1, 1, 1]} : vector<12x16x32xbf16> to vector<1x16x32xbf16>
    %99 = vector.shape_cast %98 : vector<1x16x32xbf16> to vector<16x32xbf16>
    %c4 = arith.constant 4 : index
    %c0_41 = arith.constant 0 : index
    %c0_42 = arith.constant 0 : index
    %100 = vector.load %arg6[%c4, %c0_41, %c0_42] : memref<12x32x384xbf16, #tpu.memory_space<vmem>>, vector<1x32x384xbf16>
    %101 = vector.shape_cast %100 : vector<1x32x384xbf16> to vector<32x384xbf16>
    %cst_43 = arith.constant dense<0.000000e+00> : vector<16x384xf32>
    %102 = tpu.matmul %99, %101, %cst_43 {dimension_numbers = #tpu.dot_dimension_numbers<[1], [0], [0], [1], [0, 0, 1, 1], [], []>} : vector<16x32xbf16>, vector<32x384xbf16>, vector<16x384xf32> -> vector<16x384xf32>
    %103 = arith.addf %97, %102 : vector<16x384xf32>
    %104 = vector.extract_strided_slice %72 {offsets = [5, 0, 0], sizes = [1, 16, 32], strides = [1, 1, 1]} : vector<12x16x32xbf16> to vector<1x16x32xbf16>
    %105 = vector.shape_cast %104 : vector<1x16x32xbf16> to vector<16x32xbf16>
    %c5 = arith.constant 5 : index
    %c0_44 = arith.constant 0 : index
    %c0_45 = arith.constant 0 : index
    %106 = vector.load %arg6[%c5, %c0_44, %c0_45] : memref<12x32x384xbf16, #tpu.memory_space<vmem>>, vector<1x32x384xbf16>
    %107 = vector.shape_cast %106 : vector<1x32x384xbf16> to vector<32x384xbf16>
    %cst_46 = arith.constant dense<0.000000e+00> : vector<16x384xf32>
    %108 = tpu.matmul %105, %107, %cst_46 {dimension_numbers = #tpu.dot_dimension_numbers<[1], [0], [0], [1], [0, 0, 1, 1], [], []>} : vector<16x32xbf16>, vector<32x384xbf16>, vector<16x384xf32> -> vector<16x384xf32>
    %109 = arith.addf %103, %108 : vector<16x384xf32>
    %110 = vector.extract_strided_slice %72 {offsets = [6, 0, 0], sizes = [1, 16, 32], strides = [1, 1, 1]} : vector<12x16x32xbf16> to vector<1x16x32xbf16>
    %111 = vector.shape_cast %110 : vector<1x16x32xbf16> to vector<16x32xbf16>
    %c6 = arith.constant 6 : index
    %c0_47 = arith.constant 0 : index
    %c0_48 = arith.constant 0 : index
    %112 = vector.load %arg6[%c6, %c0_47, %c0_48] : memref<12x32x384xbf16, #tpu.memory_space<vmem>>, vector<1x32x384xbf16>
    %113 = vector.shape_cast %112 : vector<1x32x384xbf16> to vector<32x384xbf16>
    %cst_49 = arith.constant dense<0.000000e+00> : vector<16x384xf32>
    %114 = tpu.matmul %111, %113, %cst_49 {dimension_numbers = #tpu.dot_dimension_numbers<[1], [0], [0], [1], [0, 0, 1, 1], [], []>} : vector<16x32xbf16>, vector<32x384xbf16>, vector<16x384xf32> -> vector<16x384xf32>
    %115 = arith.addf %109, %114 : vector<16x384xf32>
    %116 = vector.extract_strided_slice %72 {offsets = [7, 0, 0], sizes = [1, 16, 32], strides = [1, 1, 1]} : vector<12x16x32xbf16> to vector<1x16x32xbf16>
    %117 = vector.shape_cast %116 : vector<1x16x32xbf16> to vector<16x32xbf16>
    %c7 = arith.constant 7 : index
    %c0_50 = arith.constant 0 : index
    %c0_51 = arith.constant 0 : index
    %118 = vector.load %arg6[%c7, %c0_50, %c0_51] : memref<12x32x384xbf16, #tpu.memory_space<vmem>>, vector<1x32x384xbf16>
    %119 = vector.shape_cast %118 : vector<1x32x384xbf16> to vector<32x384xbf16>
    %cst_52 = arith.constant dense<0.000000e+00> : vector<16x384xf32>
    %120 = tpu.matmul %117, %119, %cst_52 {dimension_numbers = #tpu.dot_dimension_numbers<[1], [0], [0], [1], [0, 0, 1, 1], [], []>} : vector<16x32xbf16>, vector<32x384xbf16>, vector<16x384xf32> -> vector<16x384xf32>
    %121 = arith.addf %115, %120 : vector<16x384xf32>
    %122 = vector.extract_strided_slice %72 {offsets = [8, 0, 0], sizes = [1, 16, 32], strides = [1, 1, 1]} : vector<12x16x32xbf16> to vector<1x16x32xbf16>
    %123 = vector.shape_cast %122 : vector<1x16x32xbf16> to vector<16x32xbf16>
    %c8 = arith.constant 8 : index
    %c0_53 = arith.constant 0 : index
    %c0_54 = arith.constant 0 : index
    %124 = vector.load %arg6[%c8, %c0_53, %c0_54] : memref<12x32x384xbf16, #tpu.memory_space<vmem>>, vector<1x32x384xbf16>
    %125 = vector.shape_cast %124 : vector<1x32x384xbf16> to vector<32x384xbf16>
    %cst_55 = arith.constant dense<0.000000e+00> : vector<16x384xf32>
    %126 = tpu.matmul %123, %125, %cst_55 {dimension_numbers = #tpu.dot_dimension_numbers<[1], [0], [0], [1], [0, 0, 1, 1], [], []>} : vector<16x32xbf16>, vector<32x384xbf16>, vector<16x384xf32> -> vector<16x384xf32>
    %127 = arith.addf %121, %126 : vector<16x384xf32>
    %128 = vector.extract_strided_slice %72 {offsets = [9, 0, 0], sizes = [1, 16, 32], strides = [1, 1, 1]} : vector<12x16x32xbf16> to vector<1x16x32xbf16>
    %129 = vector.shape_cast %128 : vector<1x16x32xbf16> to vector<16x32xbf16>
    %c9 = arith.constant 9 : index
    %c0_56 = arith.constant 0 : index
    %c0_57 = arith.constant 0 : index
    %130 = vector.load %arg6[%c9, %c0_56, %c0_57] : memref<12x32x384xbf16, #tpu.memory_space<vmem>>, vector<1x32x384xbf16>
    %131 = vector.shape_cast %130 : vector<1x32x384xbf16> to vector<32x384xbf16>
    %cst_58 = arith.constant dense<0.000000e+00> : vector<16x384xf32>
    %132 = tpu.matmul %129, %131, %cst_58 {dimension_numbers = #tpu.dot_dimension_numbers<[1], [0], [0], [1], [0, 0, 1, 1], [], []>} : vector<16x32xbf16>, vector<32x384xbf16>, vector<16x384xf32> -> vector<16x384xf32>
    %133 = arith.addf %127, %132 : vector<16x384xf32>
    %134 = vector.extract_strided_slice %72 {offsets = [10, 0, 0], sizes = [1, 16, 32], strides = [1, 1, 1]} : vector<12x16x32xbf16> to vector<1x16x32xbf16>
    %135 = vector.shape_cast %134 : vector<1x16x32xbf16> to vector<16x32xbf16>
    %c10 = arith.constant 10 : index
    %c0_59 = arith.constant 0 : index
    %c0_60 = arith.constant 0 : index
    %136 = vector.load %arg6[%c10, %c0_59, %c0_60] : memref<12x32x384xbf16, #tpu.memory_space<vmem>>, vector<1x32x384xbf16>
    %137 = vector.shape_cast %136 : vector<1x32x384xbf16> to vector<32x384xbf16>
    %cst_61 = arith.constant dense<0.000000e+00> : vector<16x384xf32>
    %138 = tpu.matmul %135, %137, %cst_61 {dimension_numbers = #tpu.dot_dimension_numbers<[1], [0], [0], [1], [0, 0, 1, 1], [], []>} : vector<16x32xbf16>, vector<32x384xbf16>, vector<16x384xf32> -> vector<16x384xf32>
    %139 = arith.addf %133, %138 : vector<16x384xf32>
    %140 = vector.extract_strided_slice %72 {offsets = [11, 0, 0], sizes = [1, 16, 32], strides = [1, 1, 1]} : vector<12x16x32xbf16> to vector<1x16x32xbf16>
    %141 = vector.shape_cast %140 : vector<1x16x32xbf16> to vector<16x32xbf16>
    %c11 = arith.constant 11 : index
    %c0_62 = arith.constant 0 : index
    %c0_63 = arith.constant 0 : index
    %142 = vector.load %arg6[%c11, %c0_62, %c0_63] : memref<12x32x384xbf16, #tpu.memory_space<vmem>>, vector<1x32x384xbf16>
    %143 = vector.shape_cast %142 : vector<1x32x384xbf16> to vector<32x384xbf16>
    %cst_64 = arith.constant dense<0.000000e+00> : vector<16x384xf32>
    %144 = tpu.matmul %141, %143, %cst_64 {dimension_numbers = #tpu.dot_dimension_numbers<[1], [0], [0], [1], [0, 0, 1, 1], [], []>} : vector<16x32xbf16>, vector<32x384xbf16>, vector<16x384xf32> -> vector<16x384xf32>
    %145 = arith.addf %139, %144 : vector<16x384xf32>
    %c0_65 = arith.constant 0 : index
    %c0_66 = arith.constant 0 : index
    %146 = vector.load %arg7[%c0_65, %c0_66] : memref<1x384xf32, #tpu.memory_space<vmem>>, vector<1x384xf32>
    %147 = vector.broadcast %146 : vector<1x384xf32> to vector<16x384xf32>
    %148 = arith.addf %145, %147 : vector<16x384xf32>
    %cst_67 = arith.constant 0.000000e+00 : f32
    %149 = vector.broadcast %cst_67 : f32 to vector<16x384xf32>
    %150 = arith.maximumf %148, %149 : vector<16x384xf32>
    %151 = arith.truncf %150 : vector<16x384xf32> to vector<16x384xbf16>
    %c0_68 = arith.constant 0 : index
    %c0_69 = arith.constant 0 : index
    %152 = vector.load %arg8[%c0_68, %c0_69] : memref<384x192xbf16, #tpu.memory_space<vmem>>, vector<384x192xbf16>
    %cst_70 = arith.constant dense<0.000000e+00> : vector<16x192xf32>
    %153 = tpu.matmul %151, %152, %cst_70 {dimension_numbers = #tpu.dot_dimension_numbers<[1], [0], [0], [1], [0, 0, 1, 1], [], []>} : vector<16x384xbf16>, vector<384x192xbf16>, vector<16x192xf32> -> vector<16x192xf32>
    %c0_71 = arith.constant 0 : index
    %c0_72 = arith.constant 0 : index
    %154 = vector.load %arg9[%c0_71, %c0_72] : memref<1x192xf32, #tpu.memory_space<vmem>>, vector<1x192xf32>
    %155 = vector.broadcast %154 : vector<1x192xf32> to vector<16x192xf32>
    %156 = arith.addf %153, %155 : vector<16x192xf32>
    %cst_73 = arith.constant 0.000000e+00 : f32
    %157 = vector.broadcast %cst_73 : f32 to vector<16x192xf32>
    %158 = arith.maximumf %156, %157 : vector<16x192xf32>
    %c0_74 = arith.constant 0 : index
    %c0_75 = arith.constant 0 : index
    %159 = vector.load %arg10[%c0_74, %c0_75] : memref<1x192xf32, #tpu.memory_space<vmem>>, vector<1x192xf32>
    %160 = vector.broadcast %159 : vector<1x192xf32> to vector<16x192xf32>
    %161 = arith.mulf %158, %160 : vector<16x192xf32>
    %cst_76 = arith.constant dense<0.000000e+00> : vector<16xf32>
    %162 = vector.multi_reduction <add>, %161, %cst_76 [1] : vector<16x192xf32> to vector<16xf32>
    %163 = vector.shape_cast %162 : vector<16xf32> to vector<16x1xf32>
    %c0_77 = arith.constant 0 : index
    %c0_78 = arith.constant 0 : index
    %164 = vector.load %arg11[%c0_77, %c0_78] : memref<1x1xf32, #tpu.memory_space<vmem>>, vector<1x1xf32>
    %165 = vector.broadcast %164 : vector<1x1xf32> to vector<16x1xf32>
    %166 = arith.addf %163, %165 : vector<16x1xf32>
    %167 = math.tanh %166 : vector<16x1xf32>
    %168 = tpu.iota {dimensions = array<i32: 0>} : vector<16x16xi32>
    %169 = tpu.iota {dimensions = array<i32: 1>} : vector<16x16xi32>
    %170 = arith.cmpi eq, %168, %169 : vector<16x16xi32>
    %cst_79 = arith.constant 0.000000e+00 : f32
    %171 = vector.shape_cast %167 : vector<16x1xf32> to vector<16x1xf32>
    %172 = vector.broadcast %171 : vector<16x1xf32> to vector<16x16xf32>
    %173 = vector.broadcast %cst_79 : f32 to vector<16x16xf32>
    %174 = arith.select %170, %172, %173 : vector<16x16xi1>, vector<16x16xf32>
    %cst_80 = arith.constant dense<0.000000e+00> : vector<16xf32>
    %175 = vector.multi_reduction <add>, %174, %cst_80 [0] : vector<16x16xf32> to vector<16xf32>
    %176 = vector.shape_cast %175 : vector<16xf32> to vector<1x16xf32>
    %177 = vector.broadcast %176 : vector<1x16xf32> to vector<16x16xf32>
    %178 = vector.broadcast %167 : vector<16x1xf32> to vector<16x16xf32>
    %179 = arith.cmpf ogt, %177, %178 : vector<16x16xf32>
    %180 = vector.broadcast %176 : vector<1x16xf32> to vector<16x16xf32>
    %181 = vector.broadcast %167 : vector<16x1xf32> to vector<16x16xf32>
    %182 = arith.cmpf oeq, %180, %181 : vector<16x16xf32>
    %183 = arith.cmpi slt, %169, %168 : vector<16x16xi32>
    %184 = arith.andi %182, %183 : vector<16x16xi1>
    %185 = arith.ori %179, %184 : vector<16x16xi1>
    %186 = arith.extui %185 : vector<16x16xi1> to vector<16x16xi32>
    %cst_81 = arith.constant dense<0> : vector<16xi32>
    %187 = vector.multi_reduction <add>, %186, %cst_81 [1] : vector<16x16xi32> to vector<16xi32>
    %188 = vector.shape_cast %187 : vector<16xi32> to vector<16x1xi32>
    %189 = vector.broadcast %188 : vector<16x1xi32> to vector<16x16xi32>
    %190 = arith.cmpi eq, %189, %169 : vector<16x16xi32>
    %cst_82 = arith.constant 0.000000e+00 : f32
    %191 = vector.shape_cast %167 : vector<16x1xf32> to vector<16x1xf32>
    %192 = vector.broadcast %191 : vector<16x1xf32> to vector<16x16xf32>
    %193 = vector.broadcast %cst_82 : f32 to vector<16x16xf32>
    %194 = arith.select %190, %192, %193 : vector<16x16xi1>, vector<16x16xf32>
    %cst_83 = arith.constant dense<0.000000e+00> : vector<16xf32>
    %195 = vector.multi_reduction <add>, %194, %cst_83 [0] : vector<16x16xf32> to vector<16xf32>
    %196 = vector.shape_cast %195 : vector<16xf32> to vector<1x16xf32>
    %c0_84 = arith.constant 0 : index
    %c0_85 = arith.constant 0 : index
    %197 = vector.load %arg12[%c0_84, %c0_85] : memref<16x1xi32, #tpu.memory_space<vmem>>, vector<16x1xi32>
    %c0_i32 = arith.constant 0 : i32
    %198 = vector.shape_cast %197 : vector<16x1xi32> to vector<16x1xi32>
    %199 = vector.broadcast %198 : vector<16x1xi32> to vector<16x16xi32>
    %200 = vector.broadcast %c0_i32 : i32 to vector<16x16xi32>
    %201 = arith.select %190, %199, %200 : vector<16x16xi1>, vector<16x16xi32>
    %cst_86 = arith.constant dense<0> : vector<16xi32>
    %202 = vector.multi_reduction <add>, %201, %cst_86 [0] : vector<16x16xi32> to vector<16xi32>
    %203 = vector.shape_cast %202 : vector<16xi32> to vector<1x16xi32>
    %204 = vector.extract_strided_slice %196 {offsets = [0, 0], sizes = [1, 4], strides = [1, 1]} : vector<1x16xf32> to vector<1x4xf32>
    %cst_87 = arith.constant dense<0xFF800000> : vector<1xf32>
    %205 = vector.multi_reduction <maximumf>, %204, %cst_87 [1] : vector<1x4xf32> to vector<1xf32>
    %206 = vector.shape_cast %205 : vector<1xf32> to vector<1x1xf32>
    %207 = vector.broadcast %206 : vector<1x1xf32> to vector<1x4xf32>
    %208 = arith.subf %204, %207 : vector<1x4xf32>
    %209 = math.exp %208 : vector<1x4xf32>
    %cst_88 = arith.constant dense<0.000000e+00> : vector<1xf32>
    %210 = vector.multi_reduction <add>, %209, %cst_88 [1] : vector<1x4xf32> to vector<1xf32>
    %211 = vector.shape_cast %210 : vector<1xf32> to vector<1x1xf32>
    %212 = vector.broadcast %211 : vector<1x1xf32> to vector<1x4xf32>
    %213 = arith.divf %209, %212 : vector<1x4xf32>
    %c0_89 = arith.constant 0 : index
    %c0_90 = arith.constant 0 : index
    %c0_91 = arith.constant 0 : index
    %214 = vector.load %arg13[%c0_89, %c0_90, %c0_91] : memref<1x1x4xf32, #tpu.memory_space<vmem>>, vector<1x1x4xf32>
    %215 = vector.shape_cast %214 : vector<1x1x4xf32> to vector<1x4xf32>
    %216 = vector.shape_cast %213 : vector<1x4xf32> to vector<1x1x4xf32>
    tpu.vector_store %arg13[%c0_89, %c0_90, %c0_91], %216 {strides = array<i32>} : memref<1x1x4xf32, #tpu.memory_space<vmem>>, vector<1x1x4xf32>,
    %217 = vector.extract_strided_slice %203 {offsets = [0, 0], sizes = [1, 4], strides = [1, 1]} : vector<1x16xi32> to vector<1x4xi32>
    %c0_92 = arith.constant 0 : index
    %c0_93 = arith.constant 0 : index
    %c0_94 = arith.constant 0 : index
    %218 = vector.load %arg14[%c0_92, %c0_93, %c0_94] : memref<1x1x4xi32, #tpu.memory_space<vmem>>, vector<1x1x4xi32>
    %219 = vector.shape_cast %218 : vector<1x1x4xi32> to vector<1x4xi32>
    %220 = vector.shape_cast %217 : vector<1x4xi32> to vector<1x1x4xi32>
    tpu.vector_store %arg14[%c0_92, %c0_93, %c0_94], %220 {strides = array<i32>} : memref<1x1x4xi32, #tpu.memory_space<vmem>>, vector<1x1x4xi32>,
    return
  }
  func.func @transform_0(%arg0: i32) -> (i32, i32, i32) {
    %c0_i32 = arith.constant 0 : i32
    %c0_i32_0 = arith.constant 0 : i32
    %c0_i32_1 = arith.constant 0 : i32
    return %arg0, %c0_i32, %c0_i32_0 : i32, i32, i32
  }
  func.func @transform_1(%arg0: i32) -> (i32, i32) {
    %c0_i32 = arith.constant 0 : i32
    %c0_i32_0 = arith.constant 0 : i32
    %c0_i32_1 = arith.constant 0 : i32
    return %c0_i32, %c0_i32_0 : i32, i32
  }
  func.func @transform_2(%arg0: i32) -> (i32, i32) {
    %c0_i32 = arith.constant 0 : i32
    %c0_i32_0 = arith.constant 0 : i32
    %c0_i32_1 = arith.constant 0 : i32
    return %c0_i32, %c0_i32_0 : i32, i32
  }
  func.func @transform_3(%arg0: i32) -> (i32, i32) {
    %c0_i32 = arith.constant 0 : i32
    %c0_i32_0 = arith.constant 0 : i32
    %c0_i32_1 = arith.constant 0 : i32
    return %c0_i32, %c0_i32_0 : i32, i32
  }
  func.func @transform_4(%arg0: i32) -> (i32, i32) {
    %c0_i32 = arith.constant 0 : i32
    %c0_i32_0 = arith.constant 0 : i32
    %c0_i32_1 = arith.constant 0 : i32
    return %c0_i32, %c0_i32_0 : i32, i32
  }
  func.func @transform_5(%arg0: i32) -> (i32, i32, i32) {
    %c0_i32 = arith.constant 0 : i32
    %c0_i32_0 = arith.constant 0 : i32
    %c0_i32_1 = arith.constant 0 : i32
    %c0_i32_2 = arith.constant 0 : i32
    return %c0_i32, %c0_i32_0, %c0_i32_1 : i32, i32, i32
  }
  func.func @transform_6(%arg0: i32) -> (i32, i32) {
    %c0_i32 = arith.constant 0 : i32
    %c0_i32_0 = arith.constant 0 : i32
    %c0_i32_1 = arith.constant 0 : i32
    return %c0_i32, %c0_i32_0 : i32, i32
  }
  func.func @transform_7(%arg0: i32) -> (i32, i32) {
    %c0_i32 = arith.constant 0 : i32
    %c0_i32_0 = arith.constant 0 : i32
    %c0_i32_1 = arith.constant 0 : i32
    return %c0_i32, %c0_i32_0 : i32, i32
  }
  func.func @transform_8(%arg0: i32) -> (i32, i32) {
    %c0_i32 = arith.constant 0 : i32
    %c0_i32_0 = arith.constant 0 : i32
    %c0_i32_1 = arith.constant 0 : i32
    return %c0_i32, %c0_i32_0 : i32, i32
  }
  func.func @transform_9(%arg0: i32) -> (i32, i32) {
    %c0_i32 = arith.constant 0 : i32
    %c0_i32_0 = arith.constant 0 : i32
    %c0_i32_1 = arith.constant 0 : i32
    return %c0_i32, %c0_i32_0 : i32, i32
  }
  func.func @transform_10(%arg0: i32) -> (i32, i32) {
    %c0_i32 = arith.constant 0 : i32
    %c0_i32_0 = arith.constant 0 : i32
    %c0_i32_1 = arith.constant 0 : i32
    return %c0_i32, %c0_i32_0 : i32, i32
  }
  func.func @transform_11(%arg0: i32) -> (i32, i32) {
    %c0_i32 = arith.constant 0 : i32
    %c0_i32_0 = arith.constant 0 : i32
    %c0_i32_1 = arith.constant 0 : i32
    return %c0_i32, %c0_i32_0 : i32, i32
  }
  func.func @transform_12(%arg0: i32) -> (i32, i32, i32) {
    %c0_i32 = arith.constant 0 : i32
    %c0_i32_0 = arith.constant 0 : i32
    %c0_i32_1 = arith.constant 0 : i32
    return %arg0, %c0_i32, %c0_i32_0 : i32, i32, i32
  }
  func.func @transform_13(%arg0: i32) -> (i32, i32, i32) {
    %c0_i32 = arith.constant 0 : i32
    %c0_i32_0 = arith.constant 0 : i32
    %c0_i32_1 = arith.constant 0 : i32
    return %arg0, %c0_i32, %c0_i32_0 : i32, i32, i32
  }
}

</mosaic_0001>

<llo_original>
// kernel: caan_forward.1
$region0: #{caan_forward.1}
  #allocation0 [shape = 'u32[]', space=smem, size = 0x4, offset = 0x4, fixed_abs, tag = 'smem constant byte address 0x4 - core index']
  #allocation1 [shape = 'u32[72,128]{1,0:T(1,128)}', space=vmem, size = 0x9000, scoped, tag = 'internal scratch']
  #allocation2 [shape = 'f32[1,1]{1,0:T(1,128)S(1)}', space=vmem, size = 0x200, scoped, tag = 'scoped memory for caan_forward.1']
  %s0 = inlined_call_operand.hbm [shape: f32[4,192,32], index: 0, kind: input, shape index: {}]
  %s1 = inlined_call_operand.vmem [shape: f32[32,96], index: 1, kind: input, shape index: {}]
  %s2 = inlined_call_operand.vmem [shape: f32[1,96], index: 2, kind: input, shape index: {}]
  %s3 = inlined_call_operand.vmem [shape: f32[32,32], index: 3, kind: input, shape index: {}]
  %s4 = inlined_call_operand.vmem [shape: f32[1,32], index: 4, kind: input, shape index: {}]
  %s5 = inlined_call_operand.vmem [shape: bf16[12,32,384], index: 5, kind: input, shape index: {}]
  %s6 = inlined_call_operand.vmem [shape: f32[1,384], index: 6, kind: input, shape index: {}]
  %s7 = inlined_call_operand.vmem [shape: bf16[384,192], index: 7, kind: input, shape index: {}]
  %s8 = inlined_call_operand.vmem [shape: f32[1,192], index: 8, kind: input, shape index: {}]
  %s9 = inlined_call_operand.vmem [shape: f32[1,192], index: 9, kind: input, shape index: {}]
  %s10 = inlined_call_operand.<no memory space> [shape: f32[1,1], index: 10, kind: input, shape index: {}]
  %s11 = inlined_call_operand.vmem [shape: s32[16,1], index: 11, kind: input, shape index: {}]
  %s12 = inlined_call_operand.hbm [shape: f32[4,1,4], index: 12, kind: output, shape index: {0}]
  %s13 = inlined_call_operand.hbm [shape: s32[4,1,4], index: 13, kind: output, shape index: {1}]
  %14 = xla_tuple %s12, %s13
  %s15 = sld [smem:[#allocation0]]
  $region93: #{caan_forward.1} parent=0
    _
  %s17 = ssub.s32 1, %s15
  %s18 = scalar_select 0, %s17, %s15
  %v19 = vstv %s10
  %20 = vst [vmem:[#allocation2] sm:$0x1] %v19
  $region1: #{caan_forward.1} parent=0
    #allocation3 [shape = 'u8[196608]{0}', space=vmem, size = 0x30000, scoped, tag = 'input window, operand 0']
    #allocation4 [shape = 's32[2]{0}', space=sflag, size = 0x8, scoped, tag = 'scoped memory for caan_forward.1']
    #allocation5 [shape = 's32[2]{0}', space=sflag, size = 0x8, scoped, tag = 'scoped memory for caan_forward.1']
    #allocation6 [shape = 'u8[1024]{0}', space=vmem, size = 0x400, scoped, tag = 'output window, operand 0']
    #allocation7 [shape = 'u8[1024]{0}', space=vmem, size = 0x400, scoped, tag = 'output window, operand 1']
    #allocation8 [shape = 's32[2]{0}', space=sflag, size = 0x8, scoped, tag = 'scoped memory for caan_forward.1']
    %21 = vsyncpa [#allocation4], 0
    %s22 = scalar_lea.sflag [#allocation4], 1
    %23 = vsyncpa %s22, 0
    %24 = vsyncpa [#allocation5], 0
    %s25 = scalar_lea.sflag [#allocation5], 1
    %26 = vsyncpa %s25, 0
    %27 = vsyncpa [#allocation8], 0
    %s28 = scalar_lea.sflag [#allocation8], 1
    %29 = vsyncpa %s28, 0
    loop: start=0, step=1, limit=6
    $region2: #{caan_forward.1} parent=1 // loop_pre_header
      _
    $region3: #{caan_forward.1} parent=1 // loop_header
      %s31 = sphi 0, %s35
      %p32 = scmp.ge.s32.totalorder %s31, 6
      %s41 = sphi 0, %s43
      %s44 = sphi 0, %s41
      %s45 = sphi 0, %s44
      %s61 = sphi 0, %s45
      %s65 = sphi 0, %s65
      %s67 = sphi 0, %s65
      %s68 = sphi 0, %s67
      %s82 = sphi 0, %s68
      %s86 = sphi 0, %s86
      %s88 = sphi 0, %s86
      %s89 = sphi 0, %s88
      %s103 = sphi 0, %s89
      %s107 = sphi 0, %s107
      %s109 = sphi 0, %s107
      %s110 = sphi 0, %s109
      %s124 = sphi 0, %s110
      %s128 = sphi 0, %s128
      %s130 = sphi 0, %s128
      %s131 = sphi 0, %s130
      %s145 = sphi 0, %s131
      %s149 = sphi 0, %s149
      %s151 = sphi 0, %s149
      %s152 = sphi 0, %s151
      %s166 = sphi 0, %s152
      %s170 = sphi 0, %s170
      %s172 = sphi 0, %s170
      %s173 = sphi 0, %s172
      %s187 = sphi 0, %s173
      %s191 = sphi 0, %s191
      %s193 = sphi 0, %s191
      %s194 = sphi 0, %s193
      %s208 = sphi 0, %s194
      %s212 = sphi 0, %s212
      %s214 = sphi 0, %s212
      %s215 = sphi 0, %s214
      %s229 = sphi 0, %s215
      %s233 = sphi 0, %s233
      %s235 = sphi 0, %s233
      %s236 = sphi 0, %s235
      %s250 = sphi 0, %s236
      %s254 = sphi 0, %s254
      %s256 = sphi 0, %s254
      %s257 = sphi 0, %s256
      %s271 = sphi 0, %s257
      %s275 = sphi 0, %s275
      %s277 = sphi 0, %s275
      %s278 = sphi 0, %s277
      %s292 = sphi 0, %s278
      %s298 = sphi 0, %s300
      %s301 = sphi 0, %s298
      %s302 = sphi 0, %s301
      %s318 = sphi 0, %s302
      %s324 = sphi 0, %s326
      %s327 = sphi 0, %s324
      %s328 = sphi 0, %s327
      %s344 = sphi 0, %s328
    $region4: #{caan_forward.1} parent=1 // loop_header_branch
      %34 = sbr.rel (%p32) target = $region8
    $region5: #{caan_forward.1} parent=1 // loop_body
      %s36 = ssub.s32 %s31, 1
      %s37 = ssub.s32 %s31, 2
      %s38 = sadd.s32 %s31, 1
      %s39 = ssub.s32 %s31, %s38
      %p40 = scmp.eq.s32.totalorder %s39, 0
      %s42 = sadd.s32 %s41, 1
      %s43 = scalar_select %p40, %s41, %s42
      %p46 = pneg %p40
      %p47 = scmp.eq.s32.totalorder %s31, 3
      %p48 = por %p46, %p47
      %p49 = scmp.ne.s32.totalorder %s41, %s44
      %p50 = scmp.eq.s32.totalorder %s31, 0
      %p51 = por %p49, %p50
      %p52 = scmp.ne.s32.totalorder %s41, %s44
      %p53 = scmp.eq.s32.totalorder %s36, 3
      %p54 = por %p52, %p53
      %p55 = scmp.ne.s32.totalorder %s44, %s45
      %p56 = scmp.eq.s32.totalorder %s36, 0
      %p57 = por %p55, %p56
      %p58 = scmp.ne.s32.totalorder %s44, %s45
      %p59 = scmp.eq.s32.totalorder %s37, 3
      %p60 = por %p58, %p59
      %p62 = scmp.ne.s32.totalorder %s45, %s61
      %p63 = scmp.eq.s32.totalorder %s37, 0
      %p64 = por %p62, %p63
      %s66 = sadd.s32 %s65, 1
      %p69 = scmp.eq.s32.totalorder %s31, 3
      %p70 = scmp.ne.s32.totalorder %s65, %s67
      %p71 = scmp.eq.s32.totalorder %s31, 0
      %p72 = por %p70, %p71
      %p73 = scmp.ne.s32.totalorder %s65, %s67
      %p74 = scmp.eq.s32.totalorder %s36, 3
      %p75 = por %p73, %p74
      %p76 = scmp.ne.s32.totalorder %s67, %s68
      %p77 = scmp.eq.s32.totalorder %s36, 0
      %p78 = por %p76, %p77
      %p79 = scmp.ne.s32.totalorder %s67, %s68
      %p80 = scmp.eq.s32.totalorder %s37, 3
      %p81 = por %p79, %p80
      %p83 = scmp.ne.s32.totalorder %s68, %s82
      %p84 = scmp.eq.s32.totalorder %s37, 0
      %p85 = por %p83, %p84
      %s87 = sadd.s32 %s86, 1
      %p90 = scmp.eq.s32.totalorder %s31, 3
      %p91 = scmp.ne.s32.totalorder %s86, %s88
      %p92 = scmp.eq.s32.totalorder %s31, 0
      %p93 = por %p91, %p92
      %p94 = scmp.ne.s32.totalorder %s86, %s88
      %p95 = scmp.eq.s32.totalorder %s36, 3
      %p96 = por %p94, %p95
      %p97 = scmp.ne.s32.totalorder %s88, %s89
      %p98 = scmp.eq.s32.totalorder %s36, 0
      %p99 = por %p97, %p98
      %p100 = scmp.ne.s32.totalorder %s88, %s89
      %p101 = scmp.eq.s32.totalorder %s37, 3
      %p102 = por %p100, %p101
      %p104 = scmp.ne.s32.totalorder %s89, %s103
      %p105 = scmp.eq.s32.totalorder %s37, 0
      %p106 = por %p104, %p105
      %s108 = sadd.s32 %s107, 1
      %p111 = scmp.eq.s32.totalorder %s31, 3
      %p112 = scmp.ne.s32.totalorder %s107, %s109
      %p113 = scmp.eq.s32.totalorder %s31, 0
      %p114 = por %p112, %p113
      %p115 = scmp.ne.s32.totalorder %s107, %s109
      %p116 = scmp.eq.s32.totalorder %s36, 3
      %p117 = por %p115, %p116
      %p118 = scmp.ne.s32.totalorder %s109, %s110
      %p119 = scmp.eq.s32.totalorder %s36, 0
      %p120 = por %p118, %p119
      %p121 = scmp.ne.s32.totalorder %s109, %s110
      %p122 = scmp.eq.s32.totalorder %s37, 3
      %p123 = por %p121, %p122
      %p125 = scmp.ne.s32.totalorder %s110, %s124
      %p126 = scmp.eq.s32.totalorder %s37, 0
      %p127 = por %p125, %p126
      %s129 = sadd.s32 %s128, 1
      %p132 = scmp.eq.s32.totalorder %s31, 3
      %p133 = scmp.ne.s32.totalorder %s128, %s130
      %p134 = scmp.eq.s32.totalorder %s31, 0
      %p135 = por %p133, %p134
      %p136 = scmp.ne.s32.totalorder %s128, %s130
      %p137 = scmp.eq.s32.totalorder %s36, 3
      %p138 = por %p136, %p137
      %p139 = scmp.ne.s32.totalorder %s130, %s131
      %p140 = scmp.eq.s32.totalorder %s36, 0
      %p141 = por %p139, %p140
      %p142 = scmp.ne.s32.totalorder %s130, %s131
      %p143 = scmp.eq.s32.totalorder %s37, 3
      %p144 = por %p142, %p143
      %p146 = scmp.ne.s32.totalorder %s131, %s145
      %p147 = scmp.eq.s32.totalorder %s37, 0
      %p148 = por %p146, %p147
      %s150 = sadd.s32 %s149, 1
      %p153 = scmp.eq.s32.totalorder %s31, 3
      %p154 = scmp.ne.s32.totalorder %s149, %s151
      %p155 = scmp.eq.s32.totalorder %s31, 0
      %p156 = por %p154, %p155
      %p157 = scmp.ne.s32.totalorder %s149, %s151
      %p158 = scmp.eq.s32.totalorder %s36, 3
      %p159 = por %p157, %p158
      %p160 = scmp.ne.s32.totalorder %s151, %s152
      %p161 = scmp.eq.s32.totalorder %s36, 0
      %p162 = por %p160, %p161
      %p163 = scmp.ne.s32.totalorder %s151, %s152
      %p164 = scmp.eq.s32.totalorder %s37, 3
      %p165 = por %p163, %p164
      %p167 = scmp.ne.s32.totalorder %s152, %s166
      %p168 = scmp.eq.s32.totalorder %s37, 0
      %p169 = por %p167, %p168
      %s171 = sadd.s32 %s170, 1
      %p174 = scmp.eq.s32.totalorder %s31, 3
      %p175 = scmp.ne.s32.totalorder %s170, %s172
      %p176 = scmp.eq.s32.totalorder %s31, 0
      %p177 = por %p175, %p176
      %p178 = scmp.ne.s32.totalorder %s170, %s172
      %p179 = scmp.eq.s32.totalorder %s36, 3
      %p180 = por %p178, %p179
      %p181 = scmp.ne.s32.totalorder %s172, %s173
      %p182 = scmp.eq.s32.totalorder %s36, 0
      %p183 = por %p181, %p182
      %p184 = scmp.ne.s32.totalorder %s172, %s173
      %p185 = scmp.eq.s32.totalorder %s37, 3
      %p186 = por %p184, %p185
      %p188 = scmp.ne.s32.totalorder %s173, %s187
      %p189 = scmp.eq.s32.totalorder %s37, 0
      %p190 = por %p188, %p189
      %s192 = sadd.s32 %s191, 1
      %p195 = scmp.eq.s32.totalorder %s31, 3
      %p196 = scmp.ne.s32.totalorder %s191, %s193
      %p197 = scmp.eq.s32.totalorder %s31, 0
      %p198 = por %p196, %p197
      %p199 = scmp.ne.s32.totalorder %s191, %s193
      %p200 = scmp.eq.s32.totalorder %s36, 3
      %p201 = por %p199, %p200
      %p202 = scmp.ne.s32.totalorder %s193, %s194
      %p203 = scmp.eq.s32.totalorder %s36, 0
      %p204 = por %p202, %p203
      %p205 = scmp.ne.s32.totalorder %s193, %s194
      %p206 = scmp.eq.s32.totalorder %s37, 3
      %p207 = por %p205, %p206
      %p209 = scmp.ne.s32.totalorder %s194, %s208
      %p210 = scmp.eq.s32.totalorder %s37, 0
      %p211 = por %p209, %p210
      %s213 = sadd.s32 %s212, 1
      %p216 = scmp.eq.s32.totalorder %s31, 3
      %p217 = scmp.ne.s32.totalorder %s212, %s214
      %p218 = scmp.eq.s32.totalorder %s31, 0
      %p219 = por %p217, %p218
      %p220 = scmp.ne.s32.totalorder %s212, %s214
      %p221 = scmp.eq.s32.totalorder %s36, 3
      %p222 = por %p220, %p221
      %p223 = scmp.ne.s32.totalorder %s214, %s215
      %p224 = scmp.eq.s32.totalorder %s36, 0
      %p225 = por %p223, %p224
      %p226 = scmp.ne.s32.totalorder %s214, %s215
      %p227 = scmp.eq.s32.totalorder %s37, 3
      %p228 = por %p226, %p227
      %p230 = scmp.ne.s32.totalorder %s215, %s229
      %p231 = scmp.eq.s32.totalorder %s37, 0
      %p232 = por %p230, %p231
      %s234 = sadd.s32 %s233, 1
      %p237 = scmp.eq.s32.totalorder %s31, 3
      %p238 = scmp.ne.s32.totalorder %s233, %s235
      %p239 = scmp.eq.s32.totalorder %s31, 0
      %p240 = por %p238, %p239
      %p241 = scmp.ne.s32.totalorder %s233, %s235
      %p242 = scmp.eq.s32.totalorder %s36, 3
      %p243 = por %p241, %p242
      %p244 = scmp.ne.s32.totalorder %s235, %s236
      %p245 = scmp.eq.s32.totalorder %s36, 0
      %p246 = por %p244, %p245
      %p247 = scmp.ne.s32.totalorder %s235, %s236
      %p248 = scmp.eq.s32.totalorder %s37, 3
      %p249 = por %p247, %p248
      %p251 = scmp.ne.s32.totalorder %s236, %s250
      %p252 = scmp.eq.s32.totalorder %s37, 0
      %p253 = por %p251, %p252
      %s255 = sadd.s32 %s254, 1
      %p258 = scmp.eq.s32.totalorder %s31, 3
      %p259 = scmp.ne.s32.totalorder %s254, %s256
      %p260 = scmp.eq.s32.totalorder %s31, 0
      %p261 = por %p259, %p260
      %p262 = scmp.ne.s32.totalorder %s254, %s256
      %p263 = scmp.eq.s32.totalorder %s36, 3
      %p264 = por %p262, %p263
      %p265 = scmp.ne.s32.totalorder %s256, %s257
      %p266 = scmp.eq.s32.totalorder %s36, 0
      %p267 = por %p265, %p266
      %p268 = scmp.ne.s32.totalorder %s256, %s257
      %p269 = scmp.eq.s32.totalorder %s37, 3
      %p270 = por %p268, %p269
      %p272 = scmp.ne.s32.totalorder %s257, %s271
      %p273 = scmp.eq.s32.totalorder %s37, 0
      %p274 = por %p272, %p273
      %s276 = sadd.s32 %s275, 1
      %p279 = scmp.eq.s32.totalorder %s31, 3
      %p280 = scmp.ne.s32.totalorder %s275, %s277
      %p281 = scmp.eq.s32.totalorder %s31, 0
      %p282 = por %p280, %p281
      %p283 = scmp.ne.s32.totalorder %s275, %s277
      %p284 = scmp.eq.s32.totalorder %s36, 3
      %p285 = por %p283, %p284
      %p286 = scmp.ne.s32.totalorder %s277, %s278
      %p287 = scmp.eq.s32.totalorder %s36, 0
      %p288 = por %p286, %p287
      %p289 = scmp.ne.s32.totalorder %s277, %s278
      %p290 = scmp.eq.s32.totalorder %s37, 3
      %p291 = por %p289, %p290
      %p293 = scmp.ne.s32.totalorder %s278, %s292
      %p294 = scmp.eq.s32.totalorder %s37, 0
      %p295 = por %p293, %p294
      %s296 = ssub.s32 %s31, %s38
      %p297 = scmp.eq.s32.totalorder %s296, 0
      %s299 = sadd.s32 %s298, 1
      %s300 = scalar_select %p297, %s298, %s299
      %p303 = pneg %p297
      %p304 = scmp.eq.s32.totalorder %s31, 3
      %p305 = por %p303, %p304
      %p306 = scmp.ne.s32.totalorder %s298, %s301
      %p307 = scmp.eq.s32.totalorder %s31, 0
      %p308 = por %p306, %p307
      %p309 = scmp.ne.s32.totalorder %s298, %s301
      %p310 = scmp.eq.s32.totalorder %s36, 3
      %p311 = por %p309, %p310
      %p312 = scmp.ne.s32.totalorder %s301, %s302
      %p313 = scmp.eq.s32.totalorder %s36, 0
      %p314 = por %p312, %p313
      %p315 = scmp.ne.s32.totalorder %s301, %s302
      %p316 = scmp.eq.s32.totalorder %s37, 3
      %p317 = por %p315, %p316
      %p319 = scmp.ne.s32.totalorder %s302, %s318
      %p320 = scmp.eq.s32.totalorder %s37, 0
      %p321 = por %p319, %p320
      %s322 = ssub.s32 %s31, %s38
      %p323 = scmp.eq.s32.totalorder %s322, 0
      %s325 = sadd.s32 %s324, 1
      %s326 = scalar_select %p323, %s324, %s325
      %p329 = pneg %p323
      %p330 = scmp.eq.s32.totalorder %s31, 3
      %p331 = por %p329, %p330
      %p332 = scmp.ne.s32.totalorder %s324, %s327
      %p333 = scmp.eq.s32.totalorder %s31, 0
      %p334 = por %p332, %p333
      %p335 = scmp.ne.s32.totalorder %s324, %s327
      %p336 = scmp.eq.s32.totalorder %s36, 3
      %p337 = por %p335, %p336
      %p338 = scmp.ne.s32.totalorder %s327, %s328
      %p339 = scmp.eq.s32.totalorder %s36, 0
      %p340 = por %p338, %p339
      %p341 = scmp.ne.s32.totalorder %s327, %s328
      %p342 = scmp.eq.s32.totalorder %s37, 3
      %p343 = por %p341, %p342
      %p345 = scmp.ne.s32.totalorder %s328, %s344
      %p346 = scmp.eq.s32.totalorder %s37, 0
      %p347 = por %p345, %p346
      %p348 = scmp.le.s32.totalorder 1, %s31
      %p349 = scmp.lt.s32.totalorder %s31, 5
      %p350 = pnand %p348, %p349
      %p351 = pneg %p350
      // Predicated region
      $region9: #{caan_forward.1} parent=5 // pred_check
        _
      $region10: #{caan_forward.1} parent=5 // pred_check_branch
        %353 = sbr.rel (%p350) target = $region12
      $region11: #{caan_forward.1} parent=5 // pred_region
        %s354 = ssub.s32 %s31, 1
        // Predicated region
        $region13: #{caan_forward.1} parent=11 // pred_check
          %p355 = pneg %p78
        $region14: #{caan_forward.1} parent=11 // pred_check_branch
          %357 = sbr.rel (%p355) target = $region16
        $region15: #{caan_forward.1} parent=11 // pred_region
          _
        $region16: #{caan_forward.1} parent=11 // pred_fallthru
          _
        // Predicated region
        $region17: #{caan_forward.1} parent=11 // pred_check
          %p358 = pneg %p99
        $region18: #{caan_forward.1} parent=11 // pred_check_branch
          %360 = sbr.rel (%p358) target = $region20
        $region19: #{caan_forward.1} parent=11 // pred_region
          _
        $region20: #{caan_forward.1} parent=11 // pred_fallthru
          _
        // Predicated region
        $region21: #{caan_forward.1} parent=11 // pred_check
          %p361 = pneg %p120
        $region22: #{caan_forward.1} parent=11 // pred_check_branch
          %363 = sbr.rel (%p361) target = $region24
        $region23: #{caan_forward.1} parent=11 // pred_region
          _
        $region24: #{caan_forward.1} parent=11 // pred_fallthru
          _
        // Predicated region
        $region25: #{caan_forward.1} parent=11 // pred_check
          %p364 = pneg %p141
        $region26: #{caan_forward.1} parent=11 // pred_check_branch
          %366 = sbr.rel (%p364) target = $region28
        $region27: #{caan_forward.1} parent=11 // pred_region
          _
        $region28: #{caan_forward.1} parent=11 // pred_fallthru
          _
        // Predicated region
        $region29: #{caan_forward.1} parent=11 // pred_check
          %p367 = pneg %p162
        $region30: #{caan_forward.1} parent=11 // pred_check_branch
          %369 = sbr.rel (%p367) target = $region32
        $region31: #{caan_forward.1} parent=11 // pred_region
          _
        $region32: #{caan_forward.1} parent=11 // pred_fallthru
          _
        // Predicated region
        $region33: #{caan_forward.1} parent=11 // pred_check
          %p370 = pneg %p183
        $region34: #{caan_forward.1} parent=11 // pred_check_branch
          %372 = sbr.rel (%p370) target = $region36
        $region35: #{caan_forward.1} parent=11 // pred_region
          _
        $region36: #{caan_forward.1} parent=11 // pred_fallthru
          _
        // Predicated region
        $region37: #{caan_forward.1} parent=11 // pred_check
          %p373 = pneg %p204
        $region38: #{caan_forward.1} parent=11 // pred_check_branch
          %375 = sbr.rel (%p373) target = $region40
        $region39: #{caan_forward.1} parent=11 // pred_region
          _
        $region40: #{caan_forward.1} parent=11 // pred_fallthru
          _
        // Predicated region
        $region41: #{caan_forward.1} parent=11 // pred_check
          %p376 = pneg %p225
        $region42: #{caan_forward.1} parent=11 // pred_check_branch
          %378 = sbr.rel (%p376) target = $region44
        $region43: #{caan_forward.1} parent=11 // pred_region
          _
        $region44: #{caan_forward.1} parent=11 // pred_fallthru
          _
        // Predicated region
        $region45: #{caan_forward.1} parent=11 // pred_check
          %p379 = pneg %p246
        $region46: #{caan_forward.1} parent=11 // pred_check_branch
          %381 = sbr.rel (%p379) target = $region48
        $region47: #{caan_forward.1} parent=11 // pred_region
          _
        $region48: #{caan_forward.1} parent=11 // pred_fallthru
          _
        // Predicated region
        $region49: #{caan_forward.1} parent=11 // pred_check
          %p382 = pneg %p267
        $region50: #{caan_forward.1} parent=11 // pred_check_branch
          %384 = sbr.rel (%p382) target = $region52
        $region51: #{caan_forward.1} parent=11 // pred_region
          _
        $region52: #{caan_forward.1} parent=11 // pred_fallthru
          _
        // Predicated region
        $region53: #{caan_forward.1} parent=11 // pred_check
          %p385 = pneg %p288
        $region54: #{caan_forward.1} parent=11 // pred_check_branch
          %387 = sbr.rel (%p385) target = $region56
        $region55: #{caan_forward.1} parent=11 // pred_region
          _
        $region56: #{caan_forward.1} parent=11 // pred_fallthru
          _
      $region12: #{caan_forward.1} parent=5 // pred_fallthru
        _
      %p388 = scmp.lt.s32.totalorder %s31, 4
      // Predicated region
      $region57: #{caan_forward.1} parent=5 // pred_check
        %p389 = pneg %p388
      $region58: #{caan_forward.1} parent=5 // pred_check_branch
        %391 = sbr.rel (%p389) target = $region60
      $region59: #{caan_forward.1} parent=5 // pred_region
        // Predicated region
        $region61: #{caan_forward.1} parent=59 // pred_check
          %p392 = pneg %p51
        $region62: #{caan_forward.1} parent=59 // pred_check_branch
          %394 = sbr.rel (%p392) target = $region64
        $region63: #{caan_forward.1} parent=59 // pred_region
          %s395 = sand.u32 %s41, 1
          %s396 = scalar_lea.sflag [#allocation4], %s395
          %s397 = sand.u32 %s41, 1
          %s398 = smul.addr %s397, 192
          %s399 = scalar_lea.vmem [#allocation3], %s398
          %401 = vsyncadd %s396, 0
          %s402 = smul.addr %s31, 24
          %s403 = smul.addr %s402, 8
          %s404 = scalar_lea.hbm %s0, %s403
          %s405 = sshll.u32 %s404, 4
          %s406 = int_to_ptr.hbm [resolvable:$true] %s405
          %s407 = sshll.u32 %s399, 4
          %s408 = int_to_ptr.vmem [resolvable:$true] %s407
          %413 = dma.hbm_to_vmem [thread:$0]  %s406, 3072, %s408, %s396, 128, 128, 8
        $region64: #{caan_forward.1} parent=59 // pred_fallthru
          _
      $region60: #{caan_forward.1} parent=5 // pred_fallthru
        _
      %p414 = scmp.le.s32.totalorder 1, %s31
      %p415 = scmp.lt.s32.totalorder %s31, 5
      %p416 = pnand %p414, %p415
      %p417 = pneg %p416
      // Predicated region
      $region65: #{caan_forward.1} parent=5 // pred_check
        _
      $region66: #{caan_forward.1} parent=5 // pred_check_branch
        %419 = sbr.rel (%p416) target = $region68
      $region67: #{caan_forward.1} parent=5 // pred_region
        %s420 = ssub.s32 %s31, 1
        %s421 = sand.u32 %s44, 1
        %s422 = scalar_lea.sflag [#allocation4], %s421
        %s423 = sand.u32 %s44, 1
        %s424 = smul.addr %s423, 192
        %s425 = scalar_lea.vmem [#allocation3], %s424
        // Predicated region
        $region69: #{caan_forward.1} parent=67 // pred_check
          %p426 = pneg %p57
        $region70: #{caan_forward.1} parent=67 // pred_check_branch
          %428 = sbr.rel (%p426) target = $region72
        $region71: #{caan_forward.1} parent=67 // pred_region
          %430 = dma.done %s422, 3072
        $region72: #{caan_forward.1} parent=67 // pred_fallthru
          _
        %s431 = sand.u32 %s44, 1
        %s432 = scalar_lea.sflag [#allocation4], %s431
        %s433 = sand.u32 %s44, 1
        %s434 = smul.addr %s433, 192
        %s435 = scalar_lea.vmem [#allocation3], %s434
        %p436 = pneg %p57
        %p437 = pneg %p54
        %p438 = pneg %p78
        %p439 = pneg %p75
        %p440 = pneg %p99
        %p441 = pneg %p96
        %p442 = pneg %p120
        %p443 = pneg %p117
        %p444 = pneg %p141
        %p445 = pneg %p138
        %p446 = pneg %p162
        %p447 = pneg %p159
        %p448 = pneg %p183
        %p449 = pneg %p180
        %p450 = pneg %p204
        %p451 = pneg %p201
        %p452 = pneg %p225
        %p453 = pneg %p222
        %p454 = pneg %p246
        %p455 = pneg %p243
        %p456 = pneg %p267
        %p457 = pneg %p264
        %p458 = pneg %p288
        %p459 = pneg %p285
        %p460 = pneg %p314
        %p461 = pneg %p311
        %s462 = sand.u32 %s301, 1
        %s463 = scalar_lea.sflag [#allocation5], %s462
        %s464 = sand.u32 %s301, 1
        %s465 = scalar_lea.vmem [#allocation6], %s464
        %p466 = pneg %p340
        %p467 = pneg %p337
        %s468 = sand.u32 %s327, 1
        %s469 = scalar_lea.sflag [#allocation8], %s468
        %s470 = sand.u32 %s327, 1
        %s471 = scalar_lea.vmem [#allocation7], %s470
        %v473 = vld [vmem:[%s425] sm:$0xff]
        %v474 = vld [vmem:[%s425 + $0x8] sm:$0xff]
        %v475 = vld [vmem:[%s425 + $0x10] sm:$0xff]
        %v476 = vld [vmem:[%s425 + $0x18] sm:$0xff]
        %v477 = vld [vmem:[%s425 + $0x20] sm:$0xff]
        %v478 = vld [vmem:[%s425 + $0x28] sm:$0xff]
        %v479 = vld [vmem:[%s425 + $0x30] sm:$0xff]
        %v480 = vld [vmem:[%s425 + $0x38] sm:$0xff]
        %v481 = vld [vmem:[%s425 + $0x40] sm:$0xff]
        %v482 = vld [vmem:[%s425 + $0x48] sm:$0xff]
        %v483 = vld [vmem:[%s425 + $0x50] sm:$0xff]
        %v484 = vld [vmem:[%s425 + $0x58] sm:$0xff]
        %v485 = vld [vmem:[%s425 + $0x60] sm:$0xff]
        %v486 = vld [vmem:[%s425 + $0x68] sm:$0xff]
        %v487 = vld [vmem:[%s425 + $0x70] sm:$0xff]
        %v488 = vld [vmem:[%s425 + $0x78] sm:$0xff]
        %v489 = vld [vmem:[%s425 + $0x80] sm:$0xff]
        %v490 = vld [vmem:[%s425 + $0x88] sm:$0xff]
        %v491 = vld [vmem:[%s425 + $0x90] sm:$0xff]
        %v492 = vld [vmem:[%s425 + $0x98] sm:$0xff]
        %v493 = vld [vmem:[%s425 + $0xa0] sm:$0xff]
        %v494 = vld [vmem:[%s425 + $0xa8] sm:$0xff]
        %v495 = vld [vmem:[%s425 + $0xb0] sm:$0xff]
        %v496 = vld [vmem:[%s425 + $0xb8] sm:$0xff]
        %v497 = vld [vmem:[%s1] sm:$0xff]
        %v498 = vld [vmem:[%s1 + $0x8] sm:$0xff]
        %v499 = vld [vmem:[%s1 + $0x10] sm:$0xff]
        %v500 = vld [vmem:[%s1 + $0x18] sm:$0xff]
        %v501 = vld [vmem:[%s2] sm:$0x1]
        %v503 = vperm.slane %v501, 0
        %vm505 = vcmask 261120
        %v507 = vsel %vm505, %v473, 0
        %v510 = vsel %vm505, %v474, 0
        %v513 = vsel %vm505, %v475, 0
        %v516 = vsel %vm505, %v476, 0
        %v519 = vsel %vm505, %v477, 0
        %v522 = vsel %vm505, %v478, 0
        %v525 = vsel %vm505, %v479, 0
        %v528 = vsel %vm505, %v480, 0
        %v531 = vsel %vm505, %v481, 0
        %v534 = vsel %vm505, %v482, 0
        %v537 = vsel %vm505, %v483, 0
        %v540 = vsel %vm505, %v484, 0
        %v543 = vsel %vm505, %v485, 0
        %v546 = vsel %vm505, %v486, 0
        %v549 = vsel %vm505, %v487, 0
        %v552 = vsel %vm505, %v488, 0
        %v555 = vsel %vm505, %v489, 0
        %v558 = vsel %vm505, %v490, 0
        %v561 = vsel %vm505, %v491, 0
        %v564 = vsel %vm505, %v492, 0
        %v567 = vsel %vm505, %v493, 0
        %v570 = vsel %vm505, %v494, 0
        %v573 = vsel %vm505, %v495, 0
        %v576 = vsel %vm505, %v496, 0
        %578 = vmatpush.msra.mxu0 0.0
        %579 = vmatpush.msra.mxu0 0.0
        %580 = vmatpush.msra.mxu0 0.0
        %581 = vmatpush.msra.mxu0 0.0
        %582 = vmatpush.msra.mxu0 0.0
        %583 = vmatpush.msra.mxu0 0.0
        %584 = vmatpush.msra.mxu0 0.0
        %585 = vmatpush.msra.mxu0 0.0
        %586 = vmatpush.msra.mxu0 0.0
        %587 = vmatpush.msra.mxu0 0.0
        %588 = vmatpush.msra.mxu0 0.0
        %589 = vmatpush.msra.mxu0 0.0
        %590 = vmatpush.msra.mxu0 %v500
        %591 = vmatpush.msra.mxu0 %v499
        %592 = vmatpush.msra.mxu0 %v498
        %593 = vmatpush.msra.mxu0 %v497
        %594 = vmatmul.f32.gmra.mxu0 %v507
        %v595 = vpop.f32.mrf.mxu0
        %v596 = vadd.f32 %v503, %v595
        %597 = vmatmul.f32.gmra.mxu0 %v510
        %v598 = vpop.f32.mrf.mxu0
        %v599 = vadd.f32 %v503, %v598
        %600 = vmatmul.f32.gmra.mxu0 %v513
        %v601 = vpop.f32.mrf.mxu0
        %v602 = vadd.f32 %v503, %v601
        %603 = vmatmul.f32.gmra.mxu0 %v516
        %v604 = vpop.f32.mrf.mxu0
        %v605 = vadd.f32 %v503, %v604
        %606 = vmatmul.f32.gmra.mxu0 %v519
        %v607 = vpop.f32.mrf.mxu0
        %v608 = vadd.f32 %v503, %v607
        %609 = vmatmul.f32.gmra.mxu0 %v522
        %v610 = vpop.f32.mrf.mxu0
        %v611 = vadd.f32 %v503, %v610
        %612 = vmatmul.f32.gmra.mxu0 %v525
        %v613 = vpop.f32.mrf.mxu0
        %v614 = vadd.f32 %v503, %v613
        %615 = vmatmul.f32.gmra.mxu0 %v528
        %v616 = vpop.f32.mrf.mxu0
        %v617 = vadd.f32 %v503, %v616
        %618 = vmatmul.f32.gmra.mxu0 %v531
        %v619 = vpop.f32.mrf.mxu0
        %v620 = vadd.f32 %v503, %v619
        %621 = vmatmul.f32.gmra.mxu0 %v534
        %v622 = vpop.f32.mrf.mxu0
        %v623 = vadd.f32 %v503, %v622
        %624 = vmatmul.f32.gmra.mxu0 %v537
        %v625 = vpop.f32.mrf.mxu0
        %v626 = vadd.f32 %v503, %v625
        %627 = vmatmul.f32.gmra.mxu0 %v540
        %v628 = vpop.f32.mrf.mxu0
        %v629 = vadd.f32 %v503, %v628
        %630 = vmatmul.f32.gmra.mxu0 %v543
        %v631 = vpop.f32.mrf.mxu0
        %v632 = vadd.f32 %v503, %v631
        %633 = vmatmul.f32.gmra.mxu0 %v546
        %v634 = vpop.f32.mrf.mxu0
        %v635 = vadd.f32 %v503, %v634
        %636 = vmatmul.f32.gmra.mxu0 %v549
        %v637 = vpop.f32.mrf.mxu0
        %v638 = vadd.f32 %v503, %v637
        %639 = vmatmul.f32.gmra.mxu0 %v552
        %v640 = vpop.f32.mrf.mxu0
        %v641 = vadd.f32 %v503, %v640
        %642 = vmatmul.f32.gmra.mxu0 %v555
        %v643 = vpop.f32.mrf.mxu0
        %v644 = vadd.f32 %v503, %v643
        %645 = vmatmul.f32.gmra.mxu0 %v558
        %v646 = vpop.f32.mrf.mxu0
        %v647 = vadd.f32 %v503, %v646
        %648 = vmatmul.f32.gmra.mxu0 %v561
        %v649 = vpop.f32.mrf.mxu0
        %v650 = vadd.f32 %v503, %v649
        %651 = vmatmul.f32.gmra.mxu0 %v564
        %v652 = vpop.f32.mrf.mxu0
        %v653 = vadd.f32 %v503, %v652
        %654 = vmatmul.f32.gmra.mxu0 %v567
        %v655 = vpop.f32.mrf.mxu0
        %v656 = vadd.f32 %v503, %v655
        %657 = vmatmul.f32.gmra.mxu0 %v570
        %v658 = vpop.f32.mrf.mxu0
        %v659 = vadd.f32 %v503, %v658
        %660 = vmatmul.f32.gmra.mxu0 %v573
        %v661 = vpop.f32.mrf.mxu0
        %v662 = vadd.f32 %v503, %v661
        %663 = vmatmul.f32.gmra.mxu0 %v576
        %v664 = vpop.f32.mrf.mxu0
        %v665 = vadd.f32 %v503, %v664
        %666 = vdwg.mxu0
        %669 = vrot.lane.b32.xlu0 %v596, 96
        %v670 = vpop.permute.xlu0 %669
        %671 = vrot.lane.b32.xlu0 %v599, 96
        %v672 = vpop.permute.xlu0 %671
        %vm673 = vcmask 64512
        %v674 = vsel %vm673, %v596, 0
        %v676 = vsel %vm673, %v599, 0
        %v678 = vsel %vm673, %v670, 0
        %v680 = vsel %vm673, %v672, 0
        %682 = vmatpush.xpose.msra.mxu0 0.0
        %683 = vmatpush.xpose.msra.mxu0 0.0
        %684 = vmatpush.xpose.msra.mxu0 0.0
        %685 = vmatpush.xpose.msra.mxu0 0.0
        %686 = vmatpush.xpose.msra.mxu0 0.0
        %687 = vmatpush.xpose.msra.mxu0 0.0
        %688 = vmatpush.xpose.msra.mxu0 0.0
        %689 = vmatpush.xpose.msra.mxu0 0.0
        %690 = vmatpush.xpose.msra.mxu0 0.0
        %691 = vmatpush.xpose.msra.mxu0 0.0
        %692 = vmatpush.xpose.msra.mxu0 0.0
        %693 = vmatpush.xpose.msra.mxu0 0.0
        %694 = vmatpush.xpose.msra.mxu0 0.0
        %695 = vmatpush.xpose.msra.mxu0 0.0
        %696 = vmatpush.xpose.msra.mxu0 %v680
        %697 = vmatpush.xpose.msra.mxu0 %v678
        %698 = vmatmul.f32.gmra.mxu0 %v674
        %v699 = vpop.f32.mrf.mxu0
        %v700 = vadd.f32 0.0, %v699
        %701 = vmatmul.f32.gmra.mxu0 %v676
        %v702 = vpop.f32.mrf.mxu0
        %v703 = vadd.f32 0.0, %v702
        %704 = vdwg.mxu0
        %707 = vrot.lane.b32.xlu0 %v602, 96
        %v708 = vpop.permute.xlu0 %707
        %709 = vrot.lane.b32.xlu0 %v605, 96
        %v710 = vpop.permute.xlu0 %709
        %v711 = vsel %vm673, %v602, 0
        %v713 = vsel %vm673, %v605, 0
        %v715 = vsel %vm673, %v708, 0
        %v717 = vsel %vm673, %v710, 0
        %719 = vmatpush.xpose.msra.mxu0 0.0
        %720 = vmatpush.xpose.msra.mxu0 0.0
        %721 = vmatpush.xpose.msra.mxu0 0.0
        %722 = vmatpush.xpose.msra.mxu0 0.0
        %723 = vmatpush.xpose.msra.mxu0 0.0
        %724 = vmatpush.xpose.msra.mxu0 0.0
        %725 = vmatpush.xpose.msra.mxu0 0.0
        %726 = vmatpush.xpose.msra.mxu0 0.0
        %727 = vmatpush.xpose.msra.mxu0 0.0
        %728 = vmatpush.xpose.msra.mxu0 0.0
        %729 = vmatpush.xpose.msra.mxu0 0.0
        %730 = vmatpush.xpose.msra.mxu0 0.0
        %731 = vmatpush.xpose.msra.mxu0 0.0
        %732 = vmatpush.xpose.msra.mxu0 0.0
        %733 = vmatpush.xpose.msra.mxu0 %v717
        %734 = vmatpush.xpose.msra.mxu0 %v715
        %735 = vmatmul.f32.gmra.mxu0 %v711
        %v736 = vpop.f32.mrf.mxu0
        %v737 = vadd.f32 0.0, %v736
        %738 = vmatmul.f32.gmra.mxu0 %v713
        %v739 = vpop.f32.mrf.mxu0
        %v740 = vadd.f32 0.0, %v739
        %741 = vdwg.mxu0
        %744 = vrot.lane.b32.xlu0 %v608, 96
        %v745 = vpop.permute.xlu0 %744
        %746 = vrot.lane.b32.xlu0 %v611, 96
        %v747 = vpop.permute.xlu0 %746
        %v748 = vsel %vm673, %v608, 0
        %v750 = vsel %vm673, %v611, 0
        %v752 = vsel %vm673, %v745, 0
        %v754 = vsel %vm673, %v747, 0
        %756 = vmatpush.xpose.msra.mxu0 0.0
        %757 = vmatpush.xpose.msra.mxu0 0.0
        %758 = vmatpush.xpose.msra.mxu0 0.0
        %759 = vmatpush.xpose.msra.mxu0 0.0
        %760 = vmatpush.xpose.msra.mxu0 0.0
        %761 = vmatpush.xpose.msra.mxu0 0.0
        %762 = vmatpush.xpose.msra.mxu0 0.0
        %763 = vmatpush.xpose.msra.mxu0 0.0
        %764 = vmatpush.xpose.msra.mxu0 0.0
        %765 = vmatpush.xpose.msra.mxu0 0.0
        %766 = vmatpush.xpose.msra.mxu0 0.0
        %767 = vmatpush.xpose.msra.mxu0 0.0
        %768 = vmatpush.xpose.msra.mxu0 0.0
        %769 = vmatpush.xpose.msra.mxu0 0.0
        %770 = vmatpush.xpose.msra.mxu0 %v754
        %771 = vmatpush.xpose.msra.mxu0 %v752
        %772 = vmatmul.f32.gmra.mxu0 %v748
        %v773 = vpop.f32.mrf.mxu0
        %v774 = vadd.f32 0.0, %v773
        %775 = vmatmul.f32.gmra.mxu0 %v750
        %v776 = vpop.f32.mrf.mxu0
        %v777 = vadd.f32 0.0, %v776
        %778 = vdwg.mxu0
        %781 = vrot.lane.b32.xlu0 %v614, 96
        %v782 = vpop.permute.xlu0 %781
        %783 = vrot.lane.b32.xlu0 %v617, 96
        %v784 = vpop.permute.xlu0 %783
        %v785 = vsel %vm673, %v614, 0
        %v787 = vsel %vm673, %v617, 0
        %v789 = vsel %vm673, %v782, 0
        %v791 = vsel %vm673, %v784, 0
        %793 = vmatpush.xpose.msra.mxu0 0.0
        %794 = vmatpush.xpose.msra.mxu0 0.0
        %795 = vmatpush.xpose.msra.mxu0 0.0
        %796 = vmatpush.xpose.msra.mxu0 0.0
        %797 = vmatpush.xpose.msra.mxu0 0.0
        %798 = vmatpush.xpose.msra.mxu0 0.0
        %799 = vmatpush.xpose.msra.mxu0 0.0
        %800 = vmatpush.xpose.msra.mxu0 0.0
        %801 = vmatpush.xpose.msra.mxu0 0.0
        %802 = vmatpush.xpose.msra.mxu0 0.0
        %803 = vmatpush.xpose.msra.mxu0 0.0
        %804 = vmatpush.xpose.msra.mxu0 0.0
        %805 = vmatpush.xpose.msra.mxu0 0.0
        %806 = vmatpush.xpose.msra.mxu0 0.0
        %807 = vmatpush.xpose.msra.mxu0 %v791
        %808 = vmatpush.xpose.msra.mxu0 %v789
        %809 = vmatmul.f32.gmra.mxu0 %v785
        %v810 = vpop.f32.mrf.mxu0
        %v811 = vadd.f32 0.0, %v810
        %812 = vmatmul.f32.gmra.mxu0 %v787
        %v813 = vpop.f32.mrf.mxu0
        %v814 = vadd.f32 0.0, %v813
        %815 = vdwg.mxu0
        %818 = vrot.lane.b32.xlu0 %v620, 96
        %v819 = vpop.permute.xlu0 %818
        %820 = vrot.lane.b32.xlu0 %v623, 96
        %v821 = vpop.permute.xlu0 %820
        %v822 = vsel %vm673, %v620, 0
        %v824 = vsel %vm673, %v623, 0
        %v826 = vsel %vm673, %v819, 0
        %v828 = vsel %vm673, %v821, 0
        %830 = vmatpush.xpose.msra.mxu0 0.0
        %831 = vmatpush.xpose.msra.mxu0 0.0
        %832 = vmatpush.xpose.msra.mxu0 0.0
        %833 = vmatpush.xpose.msra.mxu0 0.0
        %834 = vmatpush.xpose.msra.mxu0 0.0
        %835 = vmatpush.xpose.msra.mxu0 0.0
        %836 = vmatpush.xpose.msra.mxu0 0.0
        %837 = vmatpush.xpose.msra.mxu0 0.0
        %838 = vmatpush.xpose.msra.mxu0 0.0
        %839 = vmatpush.xpose.msra.mxu0 0.0
        %840 = vmatpush.xpose.msra.mxu0 0.0
        %841 = vmatpush.xpose.msra.mxu0 0.0
        %842 = vmatpush.xpose.msra.mxu0 0.0
        %843 = vmatpush.xpose.msra.mxu0 0.0
        %844 = vmatpush.xpose.msra.mxu0 %v828
        %845 = vmatpush.xpose.msra.mxu0 %v826
        %846 = vmatmul.f32.gmra.mxu0 %v822
        %v847 = vpop.f32.mrf.mxu0
        %v848 = vadd.f32 0.0, %v847
        %849 = vmatmul.f32.gmra.mxu0 %v824
        %v850 = vpop.f32.mrf.mxu0
        %v851 = vadd.f32 0.0, %v850
        %852 = vdwg.mxu0
        %855 = vrot.lane.b32.xlu0 %v626, 96
        %v856 = vpop.permute.xlu0 %855
        %857 = vrot.lane.b32.xlu0 %v629, 96
        %v858 = vpop.permute.xlu0 %857
        %v859 = vsel %vm673, %v626, 0
        %v861 = vsel %vm673, %v629, 0
        %v863 = vsel %vm673, %v856, 0
        %v865 = vsel %vm673, %v858, 0
        %867 = vmatpush.xpose.msra.mxu0 0.0
        %868 = vmatpush.xpose.msra.mxu0 0.0
        %869 = vmatpush.xpose.msra.mxu0 0.0
        %870 = vmatpush.xpose.msra.mxu0 0.0
        %871 = vmatpush.xpose.msra.mxu0 0.0
        %872 = vmatpush.xpose.msra.mxu0 0.0
        %873 = vmatpush.xpose.msra.mxu0 0.0
        %874 = vmatpush.xpose.msra.mxu0 0.0
        %875 = vmatpush.xpose.msra.mxu0 0.0
        %876 = vmatpush.xpose.msra.mxu0 0.0
        %877 = vmatpush.xpose.msra.mxu0 0.0
        %878 = vmatpush.xpose.msra.mxu0 0.0
        %879 = vmatpush.xpose.msra.mxu0 0.0
        %880 = vmatpush.xpose.msra.mxu0 0.0
        %881 = vmatpush.xpose.msra.mxu0 %v865
        %882 = vmatpush.xpose.msra.mxu0 %v863
        %883 = vmatmul.f32.gmra.mxu0 %v859
        %v884 = vpop.f32.mrf.mxu0
        %v885 = vadd.f32 0.0, %v884
        %886 = vmatmul.f32.gmra.mxu0 %v861
        %v887 = vpop.f32.mrf.mxu0
        %v888 = vadd.f32 0.0, %v887
        %889 = vdwg.mxu0
        %892 = vrot.lane.b32.xlu0 %v632, 96
        %v893 = vpop.permute.xlu0 %892
        %894 = vrot.lane.b32.xlu0 %v635, 96
        %v895 = vpop.permute.xlu0 %894
        %v896 = vsel %vm673, %v632, 0
        %v898 = vsel %vm673, %v635, 0
        %v900 = vsel %vm673, %v893, 0
        %v902 = vsel %vm673, %v895, 0
        %904 = vmatpush.xpose.msra.mxu0 0.0
        %905 = vmatpush.xpose.msra.mxu0 0.0
        %906 = vmatpush.xpose.msra.mxu0 0.0
        %907 = vmatpush.xpose.msra.mxu0 0.0
        %908 = vmatpush.xpose.msra.mxu0 0.0
        %909 = vmatpush.xpose.msra.mxu0 0.0
        %910 = vmatpush.xpose.msra.mxu0 0.0
        %911 = vmatpush.xpose.msra.mxu0 0.0
        %912 = vmatpush.xpose.msra.mxu0 0.0
        %913 = vmatpush.xpose.msra.mxu0 0.0
        %914 = vmatpush.xpose.msra.mxu0 0.0
        %915 = vmatpush.xpose.msra.mxu0 0.0
        %916 = vmatpush.xpose.msra.mxu0 0.0
        %917 = vmatpush.xpose.msra.mxu0 0.0
        %918 = vmatpush.xpose.msra.mxu0 %v902
        %919 = vmatpush.xpose.msra.mxu0 %v900
        %920 = vmatmul.f32.gmra.mxu0 %v896
        %v921 = vpop.f32.mrf.mxu0
        %v922 = vadd.f32 0.0, %v921
        %923 = vmatmul.f32.gmra.mxu0 %v898
        %v924 = vpop.f32.mrf.mxu0
        %v925 = vadd.f32 0.0, %v924
        %926 = vdwg.mxu0
        %929 = vrot.lane.b32.xlu0 %v638, 96
        %v930 = vpop.permute.xlu0 %929
        %931 = vrot.lane.b32.xlu0 %v641, 96
        %v932 = vpop.permute.xlu0 %931
        %v933 = vsel %vm673, %v638, 0
        %v935 = vsel %vm673, %v641, 0
        %v937 = vsel %vm673, %v930, 0
        %v939 = vsel %vm673, %v932, 0
        %941 = vmatpush.xpose.msra.mxu0 0.0
        %942 = vmatpush.xpose.msra.mxu0 0.0
        %943 = vmatpush.xpose.msra.mxu0 0.0
        %944 = vmatpush.xpose.msra.mxu0 0.0
        %945 = vmatpush.xpose.msra.mxu0 0.0
        %946 = vmatpush.xpose.msra.mxu0 0.0
        %947 = vmatpush.xpose.msra.mxu0 0.0
        %948 = vmatpush.xpose.msra.mxu0 0.0
        %949 = vmatpush.xpose.msra.mxu0 0.0
        %950 = vmatpush.xpose.msra.mxu0 0.0
        %951 = vmatpush.xpose.msra.mxu0 0.0
        %952 = vmatpush.xpose.msra.mxu0 0.0
        %953 = vmatpush.xpose.msra.mxu0 0.0
        %954 = vmatpush.xpose.msra.mxu0 0.0
        %955 = vmatpush.xpose.msra.mxu0 %v939
        %956 = vmatpush.xpose.msra.mxu0 %v937
        %957 = vmatmul.f32.gmra.mxu0 %v933
        %v958 = vpop.f32.mrf.mxu0
        %v959 = vadd.f32 0.0, %v958
        %960 = vmatmul.f32.gmra.mxu0 %v935
        %v961 = vpop.f32.mrf.mxu0
        %v962 = vadd.f32 0.0, %v961
        %963 = vdwg.mxu0
        %966 = vrot.lane.b32.xlu0 %v644, 96
        %v967 = vpop.permute.xlu0 %966
        %968 = vrot.lane.b32.xlu0 %v647, 96
        %v969 = vpop.permute.xlu0 %968
        %v970 = vsel %vm673, %v644, 0
        %v972 = vsel %vm673, %v647, 0
        %v974 = vsel %vm673, %v967, 0
        %v976 = vsel %vm673, %v969, 0
        %978 = vmatpush.xpose.msra.mxu0 0.0
        %979 = vmatpush.xpose.msra.mxu0 0.0
        %980 = vmatpush.xpose.msra.mxu0 0.0
        %981 = vmatpush.xpose.msra.mxu0 0.0
        %982 = vmatpush.xpose.msra.mxu0 0.0
        %983 = vmatpush.xpose.msra.mxu0 0.0
        %984 = vmatpush.xpose.msra.mxu0 0.0
        %985 = vmatpush.xpose.msra.mxu0 0.0
        %986 = vmatpush.xpose.msra.mxu0 0.0
        %987 = vmatpush.xpose.msra.mxu0 0.0
        %988 = vmatpush.xpose.msra.mxu0 0.0
        %989 = vmatpush.xpose.msra.mxu0 0.0
        %990 = vmatpush.xpose.msra.mxu0 0.0
        %991 = vmatpush.xpose.msra.mxu0 0.0
        %992 = vmatpush.xpose.msra.mxu0 %v976
        %993 = vmatpush.xpose.msra.mxu0 %v974
        %994 = vmatmul.f32.gmra.mxu0 %v970
        %v995 = vpop.f32.mrf.mxu0
        %v996 = vadd.f32 0.0, %v995
        %997 = vmatmul.f32.gmra.mxu0 %v972
        %v998 = vpop.f32.mrf.mxu0
        %v999 = vadd.f32 0.0, %v998
        %1000 = vdwg.mxu0
        %1003 = vrot.lane.b32.xlu0 %v650, 96
        %v1004 = vpop.permute.xlu0 %1003
        %1005 = vrot.lane.b32.xlu0 %v653, 96
        %v1006 = vpop.permute.xlu0 %1005
        %v1007 = vsel %vm673, %v650, 0
        %v1009 = vsel %vm673, %v653, 0
        %v1011 = vsel %vm673, %v1004, 0
        %v1013 = vsel %vm673, %v1006, 0
        %1015 = vmatpush.xpose.msra.mxu0 0.0
        %1016 = vmatpush.xpose.msra.mxu0 0.0
        %1017 = vmatpush.xpose.msra.mxu0 0.0
        %1018 = vmatpush.xpose.msra.mxu0 0.0
        %1019 = vmatpush.xpose.msra.mxu0 0.0
        %1020 = vmatpush.xpose.msra.mxu0 0.0
        %1021 = vmatpush.xpose.msra.mxu0 0.0
        %1022 = vmatpush.xpose.msra.mxu0 0.0
        %1023 = vmatpush.xpose.msra.mxu0 0.0
        %1024 = vmatpush.xpose.msra.mxu0 0.0
        %1025 = vmatpush.xpose.msra.mxu0 0.0
        %1026 = vmatpush.xpose.msra.mxu0 0.0
        %1027 = vmatpush.xpose.msra.mxu0 0.0
        %1028 = vmatpush.xpose.msra.mxu0 0.0
        %1029 = vmatpush.xpose.msra.mxu0 %v1013
        %1030 = vmatpush.xpose.msra.mxu0 %v1011
        %1031 = vmatmul.f32.gmra.mxu0 %v1007
        %v1032 = vpop.f32.mrf.mxu0
        %v1033 = vadd.f32 0.0, %v1032
        %1034 = vmatmul.f32.gmra.mxu0 %v1009
        %v1035 = vpop.f32.mrf.mxu0
        %v1036 = vadd.f32 0.0, %v1035
        %1037 = vdwg.mxu0
        %1040 = vrot.lane.b32.xlu0 %v656, 96
        %v1041 = vpop.permute.xlu0 %1040
        %1042 = vrot.lane.b32.xlu0 %v659, 96
        %v1043 = vpop.permute.xlu0 %1042
        %v1044 = vsel %vm673, %v656, 0
        %v1046 = vsel %vm673, %v659, 0
        %v1048 = vsel %vm673, %v1041, 0
        %v1050 = vsel %vm673, %v1043, 0
        %1052 = vmatpush.xpose.msra.mxu0 0.0
        %1053 = vmatpush.xpose.msra.mxu0 0.0
        %1054 = vmatpush.xpose.msra.mxu0 0.0
        %1055 = vmatpush.xpose.msra.mxu0 0.0
        %1056 = vmatpush.xpose.msra.mxu0 0.0
        %1057 = vmatpush.xpose.msra.mxu0 0.0
        %1058 = vmatpush.xpose.msra.mxu0 0.0
        %1059 = vmatpush.xpose.msra.mxu0 0.0
        %1060 = vmatpush.xpose.msra.mxu0 0.0
        %1061 = vmatpush.xpose.msra.mxu0 0.0
        %1062 = vmatpush.xpose.msra.mxu0 0.0
        %1063 = vmatpush.xpose.msra.mxu0 0.0
        %1064 = vmatpush.xpose.msra.mxu0 0.0
        %1065 = vmatpush.xpose.msra.mxu0 0.0
        %1066 = vmatpush.xpose.msra.mxu0 %v1050
        %1067 = vmatpush.xpose.msra.mxu0 %v1048
        %1068 = vmatmul.f32.gmra.mxu0 %v1044
        %v1069 = vpop.f32.mrf.mxu0
        %v1070 = vadd.f32 0.0, %v1069
        %1071 = vmatmul.f32.gmra.mxu0 %v1046
        %v1072 = vpop.f32.mrf.mxu0
        %v1073 = vadd.f32 0.0, %v1072
        %1074 = vdwg.mxu0
        %1077 = vrot.lane.b32.xlu0 %v662, 96
        %v1078 = vpop.permute.xlu0 %1077
        %1079 = vrot.lane.b32.xlu0 %v665, 96
        %v1080 = vpop.permute.xlu0 %1079
        %v1081 = vsel %vm673, %v662, 0
        %v1083 = vsel %vm673, %v665, 0
        %v1085 = vsel %vm673, %v1078, 0
        %v1087 = vsel %vm673, %v1080, 0
        %1089 = vmatpush.xpose.msra.mxu0 0.0
        %1090 = vmatpush.xpose.msra.mxu0 0.0
        %1091 = vmatpush.xpose.msra.mxu0 0.0
        %1092 = vmatpush.xpose.msra.mxu0 0.0
        %1093 = vmatpush.xpose.msra.mxu0 0.0
        %1094 = vmatpush.xpose.msra.mxu0 0.0
        %1095 = vmatpush.xpose.msra.mxu0 0.0
        %1096 = vmatpush.xpose.msra.mxu0 0.0
        %1097 = vmatpush.xpose.msra.mxu0 0.0
        %1098 = vmatpush.xpose.msra.mxu0 0.0
        %1099 = vmatpush.xpose.msra.mxu0 0.0
        %1100 = vmatpush.xpose.msra.mxu0 0.0
        %1101 = vmatpush.xpose.msra.mxu0 0.0
        %1102 = vmatpush.xpose.msra.mxu0 0.0
        %1103 = vmatpush.xpose.msra.mxu0 %v1087
        %1104 = vmatpush.xpose.msra.mxu0 %v1085
        %1105 = vmatmul.f32.gmra.mxu0 %v1081
        %v1106 = vpop.f32.mrf.mxu0
        %v1107 = vadd.f32 0.0, %v1106
        %1108 = vmatmul.f32.gmra.mxu0 %v1083
        %v1109 = vpop.f32.mrf.mxu0
        %v1110 = vadd.f32 0.0, %v1109
        %1111 = vdwg.mxu0
        %vm1112 = vcmask 130048
        %v1113 = vsel %vm1112, %v700, -inf
        %1114 = vmax.xlane.f32.xlu0 %v1113
        %v1115 = vpop.xlane.xlu0 %1114
        %v1116 = vsel %vm1112, %v703, -inf
        %1117 = vmax.xlane.f32.xlu0 %v1116
        %v1118 = vpop.xlane.xlu0 %1117
        %v1119 = vsel %vm1112, %v737, -inf
        %1120 = vmax.xlane.f32.xlu0 %v1119
        %v1121 = vpop.xlane.xlu0 %1120
        %v1122 = vsel %vm1112, %v740, -inf
        %1123 = vmax.xlane.f32.xlu0 %v1122
        %v1124 = vpop.xlane.xlu0 %1123
        %v1125 = vsel %vm1112, %v774, -inf
        %1126 = vmax.xlane.f32.xlu0 %v1125
        %v1127 = vpop.xlane.xlu0 %1126
        %v1128 = vsel %vm1112, %v777, -inf
        %1129 = vmax.xlane.f32.xlu0 %v1128
        %v1130 = vpop.xlane.xlu0 %1129
        %v1131 = vsel %vm1112, %v811, -inf
        %1132 = vmax.xlane.f32.xlu0 %v1131
        %v1133 = vpop.xlane.xlu0 %1132
        %v1134 = vsel %vm1112, %v814, -inf
        %1135 = vmax.xlane.f32.xlu0 %v1134
        %v1136 = vpop.xlane.xlu0 %1135
        %v1137 = vsel %vm1112, %v848, -inf
        %1138 = vmax.xlane.f32.xlu0 %v1137
        %v1139 = vpop.xlane.xlu0 %1138
        %v1140 = vsel %vm1112, %v851, -inf
        %1141 = vmax.xlane.f32.xlu0 %v1140
        %v1142 = vpop.xlane.xlu0 %1141
        %v1143 = vsel %vm1112, %v885, -inf
        %1144 = vmax.xlane.f32.xlu0 %v1143
        %v1145 = vpop.xlane.xlu0 %1144
        %v1146 = vsel %vm1112, %v888, -inf
        %1147 = vmax.xlane.f32.xlu0 %v1146
        %v1148 = vpop.xlane.xlu0 %1147
        %v1149 = vsel %vm1112, %v922, -inf
        %1150 = vmax.xlane.f32.xlu0 %v1149
        %v1151 = vpop.xlane.xlu0 %1150
        %v1152 = vsel %vm1112, %v925, -inf
        %1153 = vmax.xlane.f32.xlu0 %v1152
        %v1154 = vpop.xlane.xlu0 %1153
        %v1155 = vsel %vm1112, %v959, -inf
        %1156 = vmax.xlane.f32.xlu0 %v1155
        %v1157 = vpop.xlane.xlu0 %1156
        %v1158 = vsel %vm1112, %v962, -inf
        %1159 = vmax.xlane.f32.xlu0 %v1158
        %v1160 = vpop.xlane.xlu0 %1159
        %v1161 = vsel %vm1112, %v996, -inf
        %1162 = vmax.xlane.f32.xlu0 %v1161
        %v1163 = vpop.xlane.xlu0 %1162
        %v1164 = vsel %vm1112, %v999, -inf
        %1165 = vmax.xlane.f32.xlu0 %v1164
        %v1166 = vpop.xlane.xlu0 %1165
        %v1167 = vsel %vm1112, %v1033, -inf
        %1168 = vmax.xlane.f32.xlu0 %v1167
        %v1169 = vpop.xlane.xlu0 %1168
        %v1170 = vsel %vm1112, %v1036, -inf
        %1171 = vmax.xlane.f32.xlu0 %v1170
        %v1172 = vpop.xlane.xlu0 %1171
        %v1173 = vsel %vm1112, %v1070, -inf
        %1174 = vmax.xlane.f32.xlu0 %v1173
        %v1175 = vpop.xlane.xlu0 %1174
        %v1176 = vsel %vm1112, %v1073, -inf
        %1177 = vmax.xlane.f32.xlu0 %v1176
        %v1178 = vpop.xlane.xlu0 %1177
        %v1179 = vsel %vm1112, %v1107, -inf
        %1180 = vmax.xlane.f32.xlu0 %v1179
        %v1181 = vpop.xlane.xlu0 %1180
        %v1182 = vsel %vm1112, %v1110, -inf
        %1183 = vmax.xlane.f32.xlu0 %v1182
        %v1184 = vpop.xlane.xlu0 %1183
        %v1185 = vsub.f32 %v700, %v1115
        %v1186 = vsub.f32 %v703, %v1118
        %v1187 = vsub.f32 %v737, %v1121
        %v1188 = vsub.f32 %v740, %v1124
        %v1189 = vsub.f32 %v774, %v1127
        %v1190 = vsub.f32 %v777, %v1130
        %v1191 = vsub.f32 %v811, %v1133
        %v1192 = vsub.f32 %v814, %v1136
        %v1193 = vsub.f32 %v848, %v1139
        %v1194 = vsub.f32 %v851, %v1142
        %v1195 = vsub.f32 %v885, %v1145
        %v1196 = vsub.f32 %v888, %v1148
        %v1197 = vsub.f32 %v922, %v1151
        %v1198 = vsub.f32 %v925, %v1154
        %v1199 = vsub.f32 %v959, %v1157
        %v1200 = vsub.f32 %v962, %v1160
        %v1201 = vsub.f32 %v996, %v1163
        %v1202 = vsub.f32 %v999, %v1166
        %v1203 = vsub.f32 %v1033, %v1169
        %v1204 = vsub.f32 %v1036, %v1172
        %v1205 = vsub.f32 %v1070, %v1175
        %v1206 = vsub.f32 %v1073, %v1178
        %v1207 = vsub.f32 %v1107, %v1181
        %v1208 = vsub.f32 %v1110, %v1184
        %v1209 = vmul.f32 %v1185, 1.442695
        %v1210 = vpow.pop %v1209
        %v1211 = vmul.f32 %v1186, 1.442695
        %v1212 = vpow.pop %v1211
        %v1213 = vmul.f32 %v1187, 1.442695
        %v1214 = vpow.pop %v1213
        %v1215 = vmul.f32 %v1188, 1.442695
        %v1216 = vpow.pop %v1215
        %v1217 = vmul.f32 %v1189, 1.442695
        %v1218 = vpow.pop %v1217
        %v1219 = vmul.f32 %v1190, 1.442695
        %v1220 = vpow.pop %v1219
        %v1221 = vmul.f32 %v1191, 1.442695
        %v1222 = vpow.pop %v1221
        %v1223 = vmul.f32 %v1192, 1.442695
        %v1224 = vpow.pop %v1223
        %v1225 = vmul.f32 %v1193, 1.442695
        %v1226 = vpow.pop %v1225
        %v1227 = vmul.f32 %v1194, 1.442695
        %v1228 = vpow.pop %v1227
        %v1229 = vmul.f32 %v1195, 1.442695
        %v1230 = vpow.pop %v1229
        %v1231 = vmul.f32 %v1196, 1.442695
        %v1232 = vpow.pop %v1231
        %v1233 = vmul.f32 %v1197, 1.442695
        %v1234 = vpow.pop %v1233
        %v1235 = vmul.f32 %v1198, 1.442695
        %v1236 = vpow.pop %v1235
        %v1237 = vmul.f32 %v1199, 1.442695
        %v1238 = vpow.pop %v1237
        %v1239 = vmul.f32 %v1200, 1.442695
        %v1240 = vpow.pop %v1239
        %v1241 = vmul.f32 %v1201, 1.442695
        %v1242 = vpow.pop %v1241
        %v1243 = vmul.f32 %v1202, 1.442695
        %v1244 = vpow.pop %v1243
        %v1245 = vmul.f32 %v1203, 1.442695
        %v1246 = vpow.pop %v1245
        %v1247 = vmul.f32 %v1204, 1.442695
        %v1248 = vpow.pop %v1247
        %v1249 = vmul.f32 %v1205, 1.442695
        %v1250 = vpow.pop %v1249
        %v1251 = vmul.f32 %v1206, 1.442695
        %v1252 = vpow.pop %v1251
        %v1253 = vmul.f32 %v1207, 1.442695
        %v1254 = vpow.pop %v1253
        %v1255 = vmul.f32 %v1208, 1.442695
        %v1256 = vpow.pop %v1255
        %v1257 = vsel %vm1112, %v1210, 0.0
        %1258 = vadd.xlane.f32.xlu0 %v1257
        %v1259 = vpop.xlane.xlu0 %1258
        %v1260 = vsel %vm1112, %v1212, 0.0
        %1261 = vadd.xlane.f32.xlu0 %v1260
        %v1262 = vpop.xlane.xlu0 %1261
        %v1263 = vsel %vm1112, %v1214, 0.0
        %1264 = vadd.xlane.f32.xlu0 %v1263
        %v1265 = vpop.xlane.xlu0 %1264
        %v1266 = vsel %vm1112, %v1216, 0.0
        %1267 = vadd.xlane.f32.xlu0 %v1266
        %v1268 = vpop.xlane.xlu0 %1267
        %v1269 = vsel %vm1112, %v1218, 0.0
        %1270 = vadd.xlane.f32.xlu0 %v1269
        %v1271 = vpop.xlane.xlu0 %1270
        %v1272 = vsel %vm1112, %v1220, 0.0
        %1273 = vadd.xlane.f32.xlu0 %v1272
        %v1274 = vpop.xlane.xlu0 %1273
        %v1275 = vsel %vm1112, %v1222, 0.0
        %1276 = vadd.xlane.f32.xlu0 %v1275
        %v1277 = vpop.xlane.xlu0 %1276
        %v1278 = vsel %vm1112, %v1224, 0.0
        %1279 = vadd.xlane.f32.xlu0 %v1278
        %v1280 = vpop.xlane.xlu0 %1279
        %v1281 = vsel %vm1112, %v1226, 0.0
        %1282 = vadd.xlane.f32.xlu0 %v1281
        %v1283 = vpop.xlane.xlu0 %1282
        %v1284 = vsel %vm1112, %v1228, 0.0
        %1285 = vadd.xlane.f32.xlu0 %v1284
        %v1286 = vpop.xlane.xlu0 %1285
        %v1287 = vsel %vm1112, %v1230, 0.0
        %1288 = vadd.xlane.f32.xlu0 %v1287
        %v1289 = vpop.xlane.xlu0 %1288
        %v1290 = vsel %vm1112, %v1232, 0.0
        %1291 = vadd.xlane.f32.xlu0 %v1290
        %v1292 = vpop.xlane.xlu0 %1291
        %v1293 = vsel %vm1112, %v1234, 0.0
        %1294 = vadd.xlane.f32.xlu0 %v1293
        %v1295 = vpop.xlane.xlu0 %1294
        %v1296 = vsel %vm1112, %v1236, 0.0
        %1297 = vadd.xlane.f32.xlu0 %v1296
        %v1298 = vpop.xlane.xlu0 %1297
        %v1299 = vsel %vm1112, %v1238, 0.0
        %1300 = vadd.xlane.f32.xlu0 %v1299
        %v1301 = vpop.xlane.xlu0 %1300
        %v1302 = vsel %vm1112, %v1240, 0.0
        %1303 = vadd.xlane.f32.xlu0 %v1302
        %v1304 = vpop.xlane.xlu0 %1303
        %v1305 = vsel %vm1112, %v1242, 0.0
        %1306 = vadd.xlane.f32.xlu0 %v1305
        %v1307 = vpop.xlane.xlu0 %1306
        %v1308 = vsel %vm1112, %v1244, 0.0
        %1309 = vadd.xlane.f32.xlu0 %v1308
        %v1310 = vpop.xlane.xlu0 %1309
        %v1311 = vsel %vm1112, %v1246, 0.0
        %1312 = vadd.xlane.f32.xlu0 %v1311
        %v1313 = vpop.xlane.xlu0 %1312
        %v1314 = vsel %vm1112, %v1248, 0.0
        %1315 = vadd.xlane.f32.xlu0 %v1314
        %v1316 = vpop.xlane.xlu0 %1315
        %v1317 = vsel %vm1112, %v1250, 0.0
        %1318 = vadd.xlane.f32.xlu0 %v1317
        %v1319 = vpop.xlane.xlu0 %1318
        %v1320 = vsel %vm1112, %v1252, 0.0
        %1321 = vadd.xlane.f32.xlu0 %v1320
        %v1322 = vpop.xlane.xlu0 %1321
        %v1323 = vsel %vm1112, %v1254, 0.0
        %1324 = vadd.xlane.f32.xlu0 %v1323
        %v1325 = vpop.xlane.xlu0 %1324
        %v1326 = vsel %vm1112, %v1256, 0.0
        %1327 = vadd.xlane.f32.xlu0 %v1326
        %v1328 = vpop.xlane.xlu0 %1327
        %v1329 = vrcp.pop %v1259
        %v1330 = vmul.f32 %v1259, %v1329
        %v1331 = vsub.f32 1.0, %v1330
        %v1332 = vmul.f32 %v1329, %v1331
        %v1333 = vadd.f32 %v1329, %v1332
        %vm1334 = vweird.f32 %v1259
        %vm1335 = vweird.f32 %v1329
        %vm1336 = vmor %vm1334, %vm1335
        %v1337 = vsel %vm1336, %v1329, %v1333
        %v1338 = vand.u32 2147483647, %v1259
        %vm1339 = vcmp.eq.f32.partialorder %v1338, 8.507059e+37
        %v1340 = vand.u32 %v1259, 2147483648
        %v1341 = vor.u32 1.1754944e-38, %v1340
        %v1342 = vsel %vm1339, %v1341, %v1337
        %v1343 = vmul.f32 %v1210, %v1342
        %v1344 = vrcp.pop %v1262
        %v1345 = vmul.f32 %v1262, %v1344
        %v1346 = vsub.f32 1.0, %v1345
        %v1347 = vmul.f32 %v1344, %v1346
        %v1348 = vadd.f32 %v1344, %v1347
        %vm1349 = vweird.f32 %v1262
        %vm1350 = vweird.f32 %v1344
        %vm1351 = vmor %vm1349, %vm1350
        %v1352 = vsel %vm1351, %v1344, %v1348
        %v1353 = vand.u32 2147483647, %v1262
        %vm1354 = vcmp.eq.f32.partialorder %v1353, 8.507059e+37
        %v1355 = vand.u32 %v1262, 2147483648
        %v1356 = vor.u32 1.1754944e-38, %v1355
        %v1357 = vsel %vm1354, %v1356, %v1352
        %v1358 = vmul.f32 %v1212, %v1357
        %v1359 = vrcp.pop %v1265
        %v1360 = vmul.f32 %v1265, %v1359
        %v1361 = vsub.f32 1.0, %v1360
        %v1362 = vmul.f32 %v1359, %v1361
        %v1363 = vadd.f32 %v1359, %v1362
        %vm1364 = vweird.f32 %v1265
        %vm1365 = vweird.f32 %v1359
        %vm1366 = vmor %vm1364, %vm1365
        %v1367 = vsel %vm1366, %v1359, %v1363
        %v1368 = vand.u32 2147483647, %v1265
        %vm1369 = vcmp.eq.f32.partialorder %v1368, 8.507059e+37
        %v1370 = vand.u32 %v1265, 2147483648
        %v1371 = vor.u32 1.1754944e-38, %v1370
        %v1372 = vsel %vm1369, %v1371, %v1367
        %v1373 = vmul.f32 %v1214, %v1372
        %v1374 = vrcp.pop %v1268
        %v1375 = vmul.f32 %v1268, %v1374
        %v1376 = vsub.f32 1.0, %v1375
        %v1377 = vmul.f32 %v1374, %v1376
        %v1378 = vadd.f32 %v1374, %v1377
        %vm1379 = vweird.f32 %v1268
        %vm1380 = vweird.f32 %v1374
        %vm1381 = vmor %vm1379, %vm1380
        %v1382 = vsel %vm1381, %v1374, %v1378
        %v1383 = vand.u32 2147483647, %v1268
        %vm1384 = vcmp.eq.f32.partialorder %v1383, 8.507059e+37
        %v1385 = vand.u32 %v1268, 2147483648
        %v1386 = vor.u32 1.1754944e-38, %v1385
        %v1387 = vsel %vm1384, %v1386, %v1382
        %v1388 = vmul.f32 %v1216, %v1387
        %v1389 = vrcp.pop %v1271
        %v1390 = vmul.f32 %v1271, %v1389
        %v1391 = vsub.f32 1.0, %v1390
        %v1392 = vmul.f32 %v1389, %v1391
        %v1393 = vadd.f32 %v1389, %v1392
        %vm1394 = vweird.f32 %v1271
        %vm1395 = vweird.f32 %v1389
        %vm1396 = vmor %vm1394, %vm1395
        %v1397 = vsel %vm1396, %v1389, %v1393
        %v1398 = vand.u32 2147483647, %v1271
        %vm1399 = vcmp.eq.f32.partialorder %v1398, 8.507059e+37
        %v1400 = vand.u32 %v1271, 2147483648
        %v1401 = vor.u32 1.1754944e-38, %v1400
        %v1402 = vsel %vm1399, %v1401, %v1397
        %v1403 = vmul.f32 %v1218, %v1402
        %v1404 = vrcp.pop %v1274
        %v1405 = vmul.f32 %v1274, %v1404
        %v1406 = vsub.f32 1.0, %v1405
        %v1407 = vmul.f32 %v1404, %v1406
        %v1408 = vadd.f32 %v1404, %v1407
        %vm1409 = vweird.f32 %v1274
        %vm1410 = vweird.f32 %v1404
        %vm1411 = vmor %vm1409, %vm1410
        %v1412 = vsel %vm1411, %v1404, %v1408
        %v1413 = vand.u32 2147483647, %v1274
        %vm1414 = vcmp.eq.f32.partialorder %v1413, 8.507059e+37
        %v1415 = vand.u32 %v1274, 2147483648
        %v1416 = vor.u32 1.1754944e-38, %v1415
        %v1417 = vsel %vm1414, %v1416, %v1412
        %v1418 = vmul.f32 %v1220, %v1417
        %v1419 = vrcp.pop %v1277
        %v1420 = vmul.f32 %v1277, %v1419
        %v1421 = vsub.f32 1.0, %v1420
        %v1422 = vmul.f32 %v1419, %v1421
        %v1423 = vadd.f32 %v1419, %v1422
        %vm1424 = vweird.f32 %v1277
        %vm1425 = vweird.f32 %v1419
        %vm1426 = vmor %vm1424, %vm1425
        %v1427 = vsel %vm1426, %v1419, %v1423
        %v1428 = vand.u32 2147483647, %v1277
        %vm1429 = vcmp.eq.f32.partialorder %v1428, 8.507059e+37
        %v1430 = vand.u32 %v1277, 2147483648
        %v1431 = vor.u32 1.1754944e-38, %v1430
        %v1432 = vsel %vm1429, %v1431, %v1427
        %v1433 = vmul.f32 %v1222, %v1432
        %v1434 = vrcp.pop %v1280
        %v1435 = vmul.f32 %v1280, %v1434
        %v1436 = vsub.f32 1.0, %v1435
        %v1437 = vmul.f32 %v1434, %v1436
        %v1438 = vadd.f32 %v1434, %v1437
        %vm1439 = vweird.f32 %v1280
        %vm1440 = vweird.f32 %v1434
        %vm1441 = vmor %vm1439, %vm1440
        %v1442 = vsel %vm1441, %v1434, %v1438
        %v1443 = vand.u32 2147483647, %v1280
        %vm1444 = vcmp.eq.f32.partialorder %v1443, 8.507059e+37
        %v1445 = vand.u32 %v1280, 2147483648
        %v1446 = vor.u32 1.1754944e-38, %v1445
        %v1447 = vsel %vm1444, %v1446, %v1442
        %v1448 = vmul.f32 %v1224, %v1447
        %v1449 = vrcp.pop %v1283
        %v1450 = vmul.f32 %v1283, %v1449
        %v1451 = vsub.f32 1.0, %v1450
        %v1452 = vmul.f32 %v1449, %v1451
        %v1453 = vadd.f32 %v1449, %v1452
        %vm1454 = vweird.f32 %v1283
        %vm1455 = vweird.f32 %v1449
        %vm1456 = vmor %vm1454, %vm1455
        %v1457 = vsel %vm1456, %v1449, %v1453
        %v1458 = vand.u32 2147483647, %v1283
        %vm1459 = vcmp.eq.f32.partialorder %v1458, 8.507059e+37
        %v1460 = vand.u32 %v1283, 2147483648
        %v1461 = vor.u32 1.1754944e-38, %v1460
        %v1462 = vsel %vm1459, %v1461, %v1457
        %v1463 = vmul.f32 %v1226, %v1462
        %v1464 = vrcp.pop %v1286
        %v1465 = vmul.f32 %v1286, %v1464
        %v1466 = vsub.f32 1.0, %v1465
        %v1467 = vmul.f32 %v1464, %v1466
        %v1468 = vadd.f32 %v1464, %v1467
        %vm1469 = vweird.f32 %v1286
        %vm1470 = vweird.f32 %v1464
        %vm1471 = vmor %vm1469, %vm1470
        %v1472 = vsel %vm1471, %v1464, %v1468
        %v1473 = vand.u32 2147483647, %v1286
        %vm1474 = vcmp.eq.f32.partialorder %v1473, 8.507059e+37
        %v1475 = vand.u32 %v1286, 2147483648
        %v1476 = vor.u32 1.1754944e-38, %v1475
        %v1477 = vsel %vm1474, %v1476, %v1472
        %v1478 = vmul.f32 %v1228, %v1477
        %v1479 = vrcp.pop %v1289
        %v1480 = vmul.f32 %v1289, %v1479
        %v1481 = vsub.f32 1.0, %v1480
        %v1482 = vmul.f32 %v1479, %v1481
        %v1483 = vadd.f32 %v1479, %v1482
        %vm1484 = vweird.f32 %v1289
        %vm1485 = vweird.f32 %v1479
        %vm1486 = vmor %vm1484, %vm1485
        %v1487 = vsel %vm1486, %v1479, %v1483
        %v1488 = vand.u32 2147483647, %v1289
        %vm1489 = vcmp.eq.f32.partialorder %v1488, 8.507059e+37
        %v1490 = vand.u32 %v1289, 2147483648
        %v1491 = vor.u32 1.1754944e-38, %v1490
        %v1492 = vsel %vm1489, %v1491, %v1487
        %v1493 = vmul.f32 %v1230, %v1492
        %v1494 = vrcp.pop %v1292
        %v1495 = vmul.f32 %v1292, %v1494
        %v1496 = vsub.f32 1.0, %v1495
        %v1497 = vmul.f32 %v1494, %v1496
        %v1498 = vadd.f32 %v1494, %v1497
        %vm1499 = vweird.f32 %v1292
        %vm1500 = vweird.f32 %v1494
        %vm1501 = vmor %vm1499, %vm1500
        %v1502 = vsel %vm1501, %v1494, %v1498
        %v1503 = vand.u32 2147483647, %v1292
        %vm1504 = vcmp.eq.f32.partialorder %v1503, 8.507059e+37
        %v1505 = vand.u32 %v1292, 2147483648
        %v1506 = vor.u32 1.1754944e-38, %v1505
        %v1507 = vsel %vm1504, %v1506, %v1502
        %v1508 = vmul.f32 %v1232, %v1507
        %v1509 = vrcp.pop %v1295
        %v1510 = vmul.f32 %v1295, %v1509
        %v1511 = vsub.f32 1.0, %v1510
        %v1512 = vmul.f32 %v1509, %v1511
        %v1513 = vadd.f32 %v1509, %v1512
        %vm1514 = vweird.f32 %v1295
        %vm1515 = vweird.f32 %v1509
        %vm1516 = vmor %vm1514, %vm1515
        %v1517 = vsel %vm1516, %v1509, %v1513
        %v1518 = vand.u32 2147483647, %v1295
        %vm1519 = vcmp.eq.f32.partialorder %v1518, 8.507059e+37
        %v1520 = vand.u32 %v1295, 2147483648
        %v1521 = vor.u32 1.1754944e-38, %v1520
        %v1522 = vsel %vm1519, %v1521, %v1517
        %v1523 = vmul.f32 %v1234, %v1522
        %v1524 = vrcp.pop %v1298
        %v1525 = vmul.f32 %v1298, %v1524
        %v1526 = vsub.f32 1.0, %v1525
        %v1527 = vmul.f32 %v1524, %v1526
        %v1528 = vadd.f32 %v1524, %v1527
        %vm1529 = vweird.f32 %v1298
        %vm1530 = vweird.f32 %v1524
        %vm1531 = vmor %vm1529, %vm1530
        %v1532 = vsel %vm1531, %v1524, %v1528
        %v1533 = vand.u32 2147483647, %v1298
        %vm1534 = vcmp.eq.f32.partialorder %v1533, 8.507059e+37
        %v1535 = vand.u32 %v1298, 2147483648
        %v1536 = vor.u32 1.1754944e-38, %v1535
        %v1537 = vsel %vm1534, %v1536, %v1532
        %v1538 = vmul.f32 %v1236, %v1537
        %v1539 = vrcp.pop %v1301
        %v1540 = vmul.f32 %v1301, %v1539
        %v1541 = vsub.f32 1.0, %v1540
        %v1542 = vmul.f32 %v1539, %v1541
        %v1543 = vadd.f32 %v1539, %v1542
        %vm1544 = vweird.f32 %v1301
        %vm1545 = vweird.f32 %v1539
        %vm1546 = vmor %vm1544, %vm1545
        %v1547 = vsel %vm1546, %v1539, %v1543
        %v1548 = vand.u32 2147483647, %v1301
        %vm1549 = vcmp.eq.f32.partialorder %v1548, 8.507059e+37
        %v1550 = vand.u32 %v1301, 2147483648
        %v1551 = vor.u32 1.1754944e-38, %v1550
        %v1552 = vsel %vm1549, %v1551, %v1547
        %v1553 = vmul.f32 %v1238, %v1552
        %v1554 = vrcp.pop %v1304
        %v1555 = vmul.f32 %v1304, %v1554
        %v1556 = vsub.f32 1.0, %v1555
        %v1557 = vmul.f32 %v1554, %v1556
        %v1558 = vadd.f32 %v1554, %v1557
        %vm1559 = vweird.f32 %v1304
        %vm1560 = vweird.f32 %v1554
        %vm1561 = vmor %vm1559, %vm1560
        %v1562 = vsel %vm1561, %v1554, %v1558
        %v1563 = vand.u32 2147483647, %v1304
        %vm1564 = vcmp.eq.f32.partialorder %v1563, 8.507059e+37
        %v1565 = vand.u32 %v1304, 2147483648
        %v1566 = vor.u32 1.1754944e-38, %v1565
        %v1567 = vsel %vm1564, %v1566, %v1562
        %v1568 = vmul.f32 %v1240, %v1567
        %v1569 = vrcp.pop %v1307
        %v1570 = vmul.f32 %v1307, %v1569
        %v1571 = vsub.f32 1.0, %v1570
        %v1572 = vmul.f32 %v1569, %v1571
        %v1573 = vadd.f32 %v1569, %v1572
        %vm1574 = vweird.f32 %v1307
        %vm1575 = vweird.f32 %v1569
        %vm1576 = vmor %vm1574, %vm1575
        %v1577 = vsel %vm1576, %v1569, %v1573
        %v1578 = vand.u32 2147483647, %v1307
        %vm1579 = vcmp.eq.f32.partialorder %v1578, 8.507059e+37
        %v1580 = vand.u32 %v1307, 2147483648
        %v1581 = vor.u32 1.1754944e-38, %v1580
        %v1582 = vsel %vm1579, %v1581, %v1577
        %v1583 = vmul.f32 %v1242, %v1582
        %v1584 = vrcp.pop %v1310
        %v1585 = vmul.f32 %v1310, %v1584
        %v1586 = vsub.f32 1.0, %v1585
        %v1587 = vmul.f32 %v1584, %v1586
        %v1588 = vadd.f32 %v1584, %v1587
        %vm1589 = vweird.f32 %v1310
        %vm1590 = vweird.f32 %v1584
        %vm1591 = vmor %vm1589, %vm1590
        %v1592 = vsel %vm1591, %v1584, %v1588
        %v1593 = vand.u32 2147483647, %v1310
        %vm1594 = vcmp.eq.f32.partialorder %v1593, 8.507059e+37
        %v1595 = vand.u32 %v1310, 2147483648
        %v1596 = vor.u32 1.1754944e-38, %v1595
        %v1597 = vsel %vm1594, %v1596, %v1592
        %v1598 = vmul.f32 %v1244, %v1597
        %v1599 = vrcp.pop %v1313
        %v1600 = vmul.f32 %v1313, %v1599
        %v1601 = vsub.f32 1.0, %v1600
        %v1602 = vmul.f32 %v1599, %v1601
        %v1603 = vadd.f32 %v1599, %v1602
        %vm1604 = vweird.f32 %v1313
        %vm1605 = vweird.f32 %v1599
        %vm1606 = vmor %vm1604, %vm1605
        %v1607 = vsel %vm1606, %v1599, %v1603
        %v1608 = vand.u32 2147483647, %v1313
        %vm1609 = vcmp.eq.f32.partialorder %v1608, 8.507059e+37
        %v1610 = vand.u32 %v1313, 2147483648
        %v1611 = vor.u32 1.1754944e-38, %v1610
        %v1612 = vsel %vm1609, %v1611, %v1607
        %v1613 = vmul.f32 %v1246, %v1612
        %v1614 = vrcp.pop %v1316
        %v1615 = vmul.f32 %v1316, %v1614
        %v1616 = vsub.f32 1.0, %v1615
        %v1617 = vmul.f32 %v1614, %v1616
        %v1618 = vadd.f32 %v1614, %v1617
        %vm1619 = vweird.f32 %v1316
        %vm1620 = vweird.f32 %v1614
        %vm1621 = vmor %vm1619, %vm1620
        %v1622 = vsel %vm1621, %v1614, %v1618
        %v1623 = vand.u32 2147483647, %v1316
        %vm1624 = vcmp.eq.f32.partialorder %v1623, 8.507059e+37
        %v1625 = vand.u32 %v1316, 2147483648
        %v1626 = vor.u32 1.1754944e-38, %v1625
        %v1627 = vsel %vm1624, %v1626, %v1622
        %v1628 = vmul.f32 %v1248, %v1627
        %v1629 = vrcp.pop %v1319
        %v1630 = vmul.f32 %v1319, %v1629
        %v1631 = vsub.f32 1.0, %v1630
        %v1632 = vmul.f32 %v1629, %v1631
        %v1633 = vadd.f32 %v1629, %v1632
        %vm1634 = vweird.f32 %v1319
        %vm1635 = vweird.f32 %v1629
        %vm1636 = vmor %vm1634, %vm1635
        %v1637 = vsel %vm1636, %v1629, %v1633
        %v1638 = vand.u32 2147483647, %v1319
        %vm1639 = vcmp.eq.f32.partialorder %v1638, 8.507059e+37
        %v1640 = vand.u32 %v1319, 2147483648
        %v1641 = vor.u32 1.1754944e-38, %v1640
        %v1642 = vsel %vm1639, %v1641, %v1637
        %v1643 = vmul.f32 %v1250, %v1642
        %v1644 = vrcp.pop %v1322
        %v1645 = vmul.f32 %v1322, %v1644
        %v1646 = vsub.f32 1.0, %v1645
        %v1647 = vmul.f32 %v1644, %v1646
        %v1648 = vadd.f32 %v1644, %v1647
        %vm1649 = vweird.f32 %v1322
        %vm1650 = vweird.f32 %v1644
        %vm1651 = vmor %vm1649, %vm1650
        %v1652 = vsel %vm1651, %v1644, %v1648
        %v1653 = vand.u32 2147483647, %v1322
        %vm1654 = vcmp.eq.f32.partialorder %v1653, 8.507059e+37
        %v1655 = vand.u32 %v1322, 2147483648
        %v1656 = vor.u32 1.1754944e-38, %v1655
        %v1657 = vsel %vm1654, %v1656, %v1652
        %v1658 = vmul.f32 %v1252, %v1657
        %v1659 = vrcp.pop %v1325
        %v1660 = vmul.f32 %v1325, %v1659
        %v1661 = vsub.f32 1.0, %v1660
        %v1662 = vmul.f32 %v1659, %v1661
        %v1663 = vadd.f32 %v1659, %v1662
        %vm1664 = vweird.f32 %v1325
        %vm1665 = vweird.f32 %v1659
        %vm1666 = vmor %vm1664, %vm1665
        %v1667 = vsel %vm1666, %v1659, %v1663
        %v1668 = vand.u32 2147483647, %v1325
        %vm1669 = vcmp.eq.f32.partialorder %v1668, 8.507059e+37
        %v1670 = vand.u32 %v1325, 2147483648
        %v1671 = vor.u32 1.1754944e-38, %v1670
        %v1672 = vsel %vm1669, %v1671, %v1667
        %v1673 = vmul.f32 %v1254, %v1672
        %v1674 = vrcp.pop %v1328
        %v1675 = vmul.f32 %v1328, %v1674
        %v1676 = vsub.f32 1.0, %v1675
        %v1677 = vmul.f32 %v1674, %v1676
        %v1678 = vadd.f32 %v1674, %v1677
        %vm1679 = vweird.f32 %v1328
        %vm1680 = vweird.f32 %v1674
        %vm1681 = vmor %vm1679, %vm1680
        %v1682 = vsel %vm1681, %v1674, %v1678
        %v1683 = vand.u32 2147483647, %v1328
        %vm1684 = vcmp.eq.f32.partialorder %v1683, 8.507059e+37
        %v1685 = vand.u32 %v1328, 2147483648
        %v1686 = vor.u32 1.1754944e-38, %v1685
        %v1687 = vsel %vm1684, %v1686, %v1682
        %v1688 = vmul.f32 %v1256, %v1687
        %1689 = vrot.lane.b32.xlu0 %v596, 64
        %v1690 = vpop.permute.xlu0 %1689
        %1691 = vrot.lane.b32.xlu0 %v599, 64
        %v1692 = vpop.permute.xlu0 %1691
        %v1696 = vsel %vm1112, %v1343, 0
        %v1699 = vsel %vm1112, %v1358, 0
        %1701 = vmatpush.msra.mxu0 0.0
        %1702 = vmatpush.msra.mxu0 0.0
        %1703 = vmatpush.msra.mxu0 0.0
        %1704 = vmatpush.msra.mxu0 0.0
        %1705 = vmatpush.msra.mxu0 0.0
        %1706 = vmatpush.msra.mxu0 0.0
        %1707 = vmatpush.msra.mxu0 0.0
        %1708 = vmatpush.msra.mxu0 0.0
        %1709 = vmatpush.msra.mxu0 0.0
        %1710 = vmatpush.msra.mxu0 0.0
        %1711 = vmatpush.msra.mxu0 0.0
        %1712 = vmatpush.msra.mxu0 0.0
        %1713 = vmatpush.msra.mxu0 0.0
        %1714 = vmatpush.msra.mxu0 0.0
        %1715 = vmatpush.msra.mxu0 %v1692
        %1716 = vmatpush.msra.mxu0 %v1690
        %1717 = vmatmul.f32.gmra.mxu0 %v1696
        %v1718 = vpop.f32.mrf.mxu0
        %v1719 = vadd.f32 0.0, %v1718
        %1720 = vmatmul.f32.gmra.mxu0 %v1699
        %v1721 = vpop.f32.mrf.mxu0
        %v1722 = vadd.f32 0.0, %v1721
        %1723 = vdwg.mxu0
        %1724 = vrot.lane.b32.xlu0 %v602, 64
        %v1725 = vpop.permute.xlu0 %1724
        %1726 = vrot.lane.b32.xlu0 %v605, 64
        %v1727 = vpop.permute.xlu0 %1726
        %v1731 = vsel %vm1112, %v1373, 0
        %v1734 = vsel %vm1112, %v1388, 0
        %1736 = vmatpush.msra.mxu0 0.0
        %1737 = vmatpush.msra.mxu0 0.0
        %1738 = vmatpush.msra.mxu0 0.0
        %1739 = vmatpush.msra.mxu0 0.0
        %1740 = vmatpush.msra.mxu0 0.0
        %1741 = vmatpush.msra.mxu0 0.0
        %1742 = vmatpush.msra.mxu0 0.0
        %1743 = vmatpush.msra.mxu0 0.0
        %1744 = vmatpush.msra.mxu0 0.0
        %1745 = vmatpush.msra.mxu0 0.0
        %1746 = vmatpush.msra.mxu0 0.0
        %1747 = vmatpush.msra.mxu0 0.0
        %1748 = vmatpush.msra.mxu0 0.0
        %1749 = vmatpush.msra.mxu0 0.0
        %1750 = vmatpush.msra.mxu0 %v1727
        %1751 = vmatpush.msra.mxu0 %v1725
        %1752 = vmatmul.f32.gmra.mxu0 %v1731
        %v1753 = vpop.f32.mrf.mxu0
        %v1754 = vadd.f32 0.0, %v1753
        %1755 = vmatmul.f32.gmra.mxu0 %v1734
        %v1756 = vpop.f32.mrf.mxu0
        %v1757 = vadd.f32 0.0, %v1756
        %1758 = vdwg.mxu0
        %1759 = vrot.lane.b32.xlu0 %v608, 64
        %v1760 = vpop.permute.xlu0 %1759
        %1761 = vrot.lane.b32.xlu0 %v611, 64
        %v1762 = vpop.permute.xlu0 %1761
        %v1766 = vsel %vm1112, %v1403, 0
        %v1769 = vsel %vm1112, %v1418, 0
        %1771 = vmatpush.msra.mxu0 0.0
        %1772 = vmatpush.msra.mxu0 0.0
        %1773 = vmatpush.msra.mxu0 0.0
        %1774 = vmatpush.msra.mxu0 0.0
        %1775 = vmatpush.msra.mxu0 0.0
        %1776 = vmatpush.msra.mxu0 0.0
        %1777 = vmatpush.msra.mxu0 0.0
        %1778 = vmatpush.msra.mxu0 0.0
        %1779 = vmatpush.msra.mxu0 0.0
        %1780 = vmatpush.msra.mxu0 0.0
        %1781 = vmatpush.msra.mxu0 0.0
        %1782 = vmatpush.msra.mxu0 0.0
        %1783 = vmatpush.msra.mxu0 0.0
        %1784 = vmatpush.msra.mxu0 0.0
        %1785 = vmatpush.msra.mxu0 %v1762
        %1786 = vmatpush.msra.mxu0 %v1760
        %1787 = vmatmul.f32.gmra.mxu0 %v1766
        %v1788 = vpop.f32.mrf.mxu0
        %v1789 = vadd.f32 0.0, %v1788
        %1790 = vmatmul.f32.gmra.mxu0 %v1769
        %v1791 = vpop.f32.mrf.mxu0
        %v1792 = vadd.f32 0.0, %v1791
        %1793 = vdwg.mxu0
        %1794 = vrot.lane.b32.xlu0 %v614, 64
        %v1795 = vpop.permute.xlu0 %1794
        %1796 = vrot.lane.b32.xlu0 %v617, 64
        %v1797 = vpop.permute.xlu0 %1796
        %v1801 = vsel %vm1112, %v1433, 0
        %v1804 = vsel %vm1112, %v1448, 0
        %1806 = vmatpush.msra.mxu0 0.0
        %1807 = vmatpush.msra.mxu0 0.0
        %1808 = vmatpush.msra.mxu0 0.0
        %1809 = vmatpush.msra.mxu0 0.0
        %1810 = vmatpush.msra.mxu0 0.0
        %1811 = vmatpush.msra.mxu0 0.0
        %1812 = vmatpush.msra.mxu0 0.0
        %1813 = vmatpush.msra.mxu0 0.0
        %1814 = vmatpush.msra.mxu0 0.0
        %1815 = vmatpush.msra.mxu0 0.0
        %1816 = vmatpush.msra.mxu0 0.0
        %1817 = vmatpush.msra.mxu0 0.0
        %1818 = vmatpush.msra.mxu0 0.0
        %1819 = vmatpush.msra.mxu0 0.0
        %1820 = vmatpush.msra.mxu0 %v1797
        %1821 = vmatpush.msra.mxu0 %v1795
        %1822 = vmatmul.f32.gmra.mxu0 %v1801
        %v1823 = vpop.f32.mrf.mxu0
        %v1824 = vadd.f32 0.0, %v1823
        %1825 = vmatmul.f32.gmra.mxu0 %v1804
        %v1826 = vpop.f32.mrf.mxu0
        %v1827 = vadd.f32 0.0, %v1826
        %1828 = vdwg.mxu0
        %1829 = vrot.lane.b32.xlu0 %v620, 64
        %v1830 = vpop.permute.xlu0 %1829
        %1831 = vrot.lane.b32.xlu0 %v623, 64
        %v1832 = vpop.permute.xlu0 %1831
        %v1836 = vsel %vm1112, %v1463, 0
        %v1839 = vsel %vm1112, %v1478, 0
        %1841 = vmatpush.msra.mxu0 0.0
        %1842 = vmatpush.msra.mxu0 0.0
        %1843 = vmatpush.msra.mxu0 0.0
        %1844 = vmatpush.msra.mxu0 0.0
        %1845 = vmatpush.msra.mxu0 0.0
        %1846 = vmatpush.msra.mxu0 0.0
        %1847 = vmatpush.msra.mxu0 0.0
        %1848 = vmatpush.msra.mxu0 0.0
        %1849 = vmatpush.msra.mxu0 0.0
        %1850 = vmatpush.msra.mxu0 0.0
        %1851 = vmatpush.msra.mxu0 0.0
        %1852 = vmatpush.msra.mxu0 0.0
        %1853 = vmatpush.msra.mxu0 0.0
        %1854 = vmatpush.msra.mxu0 0.0
        %1855 = vmatpush.msra.mxu0 %v1832
        %1856 = vmatpush.msra.mxu0 %v1830
        %1857 = vmatmul.f32.gmra.mxu0 %v1836
        %v1858 = vpop.f32.mrf.mxu0
        %v1859 = vadd.f32 0.0, %v1858
        %1860 = vmatmul.f32.gmra.mxu0 %v1839
        %v1861 = vpop.f32.mrf.mxu0
        %v1862 = vadd.f32 0.0, %v1861
        %1863 = vdwg.mxu0
        %1864 = vrot.lane.b32.xlu0 %v626, 64
        %v1865 = vpop.permute.xlu0 %1864
        %1866 = vrot.lane.b32.xlu0 %v629, 64
        %v1867 = vpop.permute.xlu0 %1866
        %v1871 = vsel %vm1112, %v1493, 0
        %v1874 = vsel %vm1112, %v1508, 0
        %1876 = vmatpush.msra.mxu0 0.0
        %1877 = vmatpush.msra.mxu0 0.0
        %1878 = vmatpush.msra.mxu0 0.0
        %1879 = vmatpush.msra.mxu0 0.0
        %1880 = vmatpush.msra.mxu0 0.0
        %1881 = vmatpush.msra.mxu0 0.0
        %1882 = vmatpush.msra.mxu0 0.0
        %1883 = vmatpush.msra.mxu0 0.0
        %1884 = vmatpush.msra.mxu0 0.0
        %1885 = vmatpush.msra.mxu0 0.0
        %1886 = vmatpush.msra.mxu0 0.0
        %1887 = vmatpush.msra.mxu0 0.0
        %1888 = vmatpush.msra.mxu0 0.0
        %1889 = vmatpush.msra.mxu0 0.0
        %1890 = vmatpush.msra.mxu0 %v1867
        %1891 = vmatpush.msra.mxu0 %v1865
        %1892 = vmatmul.f32.gmra.mxu0 %v1871
        %v1893 = vpop.f32.mrf.mxu0
        %v1894 = vadd.f32 0.0, %v1893
        %1895 = vmatmul.f32.gmra.mxu0 %v1874
        %v1896 = vpop.f32.mrf.mxu0
        %v1897 = vadd.f32 0.0, %v1896
        %1898 = vdwg.mxu0
        %1899 = vrot.lane.b32.xlu0 %v632, 64
        %v1900 = vpop.permute.xlu0 %1899
        %1901 = vrot.lane.b32.xlu0 %v635, 64
        %v1902 = vpop.permute.xlu0 %1901
        %v1906 = vsel %vm1112, %v1523, 0
        %v1909 = vsel %vm1112, %v1538, 0
        %1911 = vmatpush.msra.mxu0 0.0
        %1912 = vmatpush.msra.mxu0 0.0
        %1913 = vmatpush.msra.mxu0 0.0
        %1914 = vmatpush.msra.mxu0 0.0
        %1915 = vmatpush.msra.mxu0 0.0
        %1916 = vmatpush.msra.mxu0 0.0
        %1917 = vmatpush.msra.mxu0 0.0
        %1918 = vmatpush.msra.mxu0 0.0
        %1919 = vmatpush.msra.mxu0 0.0
        %1920 = vmatpush.msra.mxu0 0.0
        %1921 = vmatpush.msra.mxu0 0.0
        %1922 = vmatpush.msra.mxu0 0.0
        %1923 = vmatpush.msra.mxu0 0.0
        %1924 = vmatpush.msra.mxu0 0.0
        %1925 = vmatpush.msra.mxu0 %v1902
        %1926 = vmatpush.msra.mxu0 %v1900
        %1927 = vmatmul.f32.gmra.mxu0 %v1906
        %v1928 = vpop.f32.mrf.mxu0
        %v1929 = vadd.f32 0.0, %v1928
        %1930 = vmatmul.f32.gmra.mxu0 %v1909
        %v1931 = vpop.f32.mrf.mxu0
        %v1932 = vadd.f32 0.0, %v1931
        %1933 = vdwg.mxu0
        %1934 = vrot.lane.b32.xlu0 %v638, 64
        %v1935 = vpop.permute.xlu0 %1934
        %1936 = vrot.lane.b32.xlu0 %v641, 64
        %v1937 = vpop.permute.xlu0 %1936
        %v1941 = vsel %vm1112, %v1553, 0
        %v1944 = vsel %vm1112, %v1568, 0
        %1946 = vmatpush.msra.mxu0 0.0
        %1947 = vmatpush.msra.mxu0 0.0
        %1948 = vmatpush.msra.mxu0 0.0
        %1949 = vmatpush.msra.mxu0 0.0
        %1950 = vmatpush.msra.mxu0 0.0
        %1951 = vmatpush.msra.mxu0 0.0
        %1952 = vmatpush.msra.mxu0 0.0
        %1953 = vmatpush.msra.mxu0 0.0
        %1954 = vmatpush.msra.mxu0 0.0
        %1955 = vmatpush.msra.mxu0 0.0
        %1956 = vmatpush.msra.mxu0 0.0
        %1957 = vmatpush.msra.mxu0 0.0
        %1958 = vmatpush.msra.mxu0 0.0
        %1959 = vmatpush.msra.mxu0 0.0
        %1960 = vmatpush.msra.mxu0 %v1937
        %1961 = vmatpush.msra.mxu0 %v1935
        %1962 = vmatmul.f32.gmra.mxu0 %v1941
        %v1963 = vpop.f32.mrf.mxu0
        %v1964 = vadd.f32 0.0, %v1963
        %1965 = vmatmul.f32.gmra.mxu0 %v1944
        %v1966 = vpop.f32.mrf.mxu0
        %v1967 = vadd.f32 0.0, %v1966
        %1968 = vdwg.mxu0
        %1969 = vrot.lane.b32.xlu0 %v644, 64
        %v1970 = vpop.permute.xlu0 %1969
        %1971 = vrot.lane.b32.xlu0 %v647, 64
        %v1972 = vpop.permute.xlu0 %1971
        %v1976 = vsel %vm1112, %v1583, 0
        %v1979 = vsel %vm1112, %v1598, 0
        %1981 = vmatpush.msra.mxu0 0.0
        %1982 = vmatpush.msra.mxu0 0.0
        %1983 = vmatpush.msra.mxu0 0.0
        %1984 = vmatpush.msra.mxu0 0.0
        %1985 = vmatpush.msra.mxu0 0.0
        %1986 = vmatpush.msra.mxu0 0.0
        %1987 = vmatpush.msra.mxu0 0.0
        %1988 = vmatpush.msra.mxu0 0.0
        %1989 = vmatpush.msra.mxu0 0.0
        %1990 = vmatpush.msra.mxu0 0.0
        %1991 = vmatpush.msra.mxu0 0.0
        %1992 = vmatpush.msra.mxu0 0.0
        %1993 = vmatpush.msra.mxu0 0.0
        %1994 = vmatpush.msra.mxu0 0.0
        %1995 = vmatpush.msra.mxu0 %v1972
        %1996 = vmatpush.msra.mxu0 %v1970
        %1997 = vmatmul.f32.gmra.mxu0 %v1976
        %v1998 = vpop.f32.mrf.mxu0
        %v1999 = vadd.f32 0.0, %v1998
        %2000 = vmatmul.f32.gmra.mxu0 %v1979
        %v2001 = vpop.f32.mrf.mxu0
        %v2002 = vadd.f32 0.0, %v2001
        %2003 = vdwg.mxu0
        %2004 = vrot.lane.b32.xlu0 %v650, 64
        %v2005 = vpop.permute.xlu0 %2004
        %2006 = vrot.lane.b32.xlu0 %v653, 64
        %v2007 = vpop.permute.xlu0 %2006
        %v2011 = vsel %vm1112, %v1613, 0
        %v2014 = vsel %vm1112, %v1628, 0
        %2016 = vmatpush.msra.mxu0 0.0
        %2017 = vmatpush.msra.mxu0 0.0
        %2018 = vmatpush.msra.mxu0 0.0
        %2019 = vmatpush.msra.mxu0 0.0
        %2020 = vmatpush.msra.mxu0 0.0
        %2021 = vmatpush.msra.mxu0 0.0
        %2022 = vmatpush.msra.mxu0 0.0
        %2023 = vmatpush.msra.mxu0 0.0
        %2024 = vmatpush.msra.mxu0 0.0
        %2025 = vmatpush.msra.mxu0 0.0
        %2026 = vmatpush.msra.mxu0 0.0
        %2027 = vmatpush.msra.mxu0 0.0
        %2028 = vmatpush.msra.mxu0 0.0
        %2029 = vmatpush.msra.mxu0 0.0
        %2030 = vmatpush.msra.mxu0 %v2007
        %2031 = vmatpush.msra.mxu0 %v2005
        %2032 = vmatmul.f32.gmra.mxu0 %v2011
        %v2033 = vpop.f32.mrf.mxu0
        %v2034 = vadd.f32 0.0, %v2033
        %2035 = vmatmul.f32.gmra.mxu0 %v2014
        %v2036 = vpop.f32.mrf.mxu0
        %v2037 = vadd.f32 0.0, %v2036
        %2038 = vdwg.mxu0
        %2039 = vrot.lane.b32.xlu0 %v656, 64
        %v2040 = vpop.permute.xlu0 %2039
        %2041 = vrot.lane.b32.xlu0 %v659, 64
        %v2042 = vpop.permute.xlu0 %2041
        %v2046 = vsel %vm1112, %v1643, 0
        %v2049 = vsel %vm1112, %v1658, 0
        %2051 = vmatpush.msra.mxu0 0.0
        %2052 = vmatpush.msra.mxu0 0.0
        %2053 = vmatpush.msra.mxu0 0.0
        %2054 = vmatpush.msra.mxu0 0.0
        %2055 = vmatpush.msra.mxu0 0.0
        %2056 = vmatpush.msra.mxu0 0.0
        %2057 = vmatpush.msra.mxu0 0.0
        %2058 = vmatpush.msra.mxu0 0.0
        %2059 = vmatpush.msra.mxu0 0.0
        %2060 = vmatpush.msra.mxu0 0.0
        %2061 = vmatpush.msra.mxu0 0.0
        %2062 = vmatpush.msra.mxu0 0.0
        %2063 = vmatpush.msra.mxu0 0.0
        %2064 = vmatpush.msra.mxu0 0.0
        %2065 = vmatpush.msra.mxu0 %v2042
        %2066 = vmatpush.msra.mxu0 %v2040
        %2067 = vmatmul.f32.gmra.mxu0 %v2046
        %v2068 = vpop.f32.mrf.mxu0
        %v2069 = vadd.f32 0.0, %v2068
        %2070 = vmatmul.f32.gmra.mxu0 %v2049
        %v2071 = vpop.f32.mrf.mxu0
        %v2072 = vadd.f32 0.0, %v2071
        %2073 = vdwg.mxu0
        %2074 = vrot.lane.b32.xlu0 %v662, 64
        %v2075 = vpop.permute.xlu0 %2074
        %2076 = vrot.lane.b32.xlu0 %v665, 64
        %v2077 = vpop.permute.xlu0 %2076
        %v2081 = vsel %vm1112, %v1673, 0
        %v2084 = vsel %vm1112, %v1688, 0
        %2086 = vmatpush.msra.mxu0 0.0
        %2087 = vmatpush.msra.mxu0 0.0
        %2088 = vmatpush.msra.mxu0 0.0
        %2089 = vmatpush.msra.mxu0 0.0
        %2090 = vmatpush.msra.mxu0 0.0
        %2091 = vmatpush.msra.mxu0 0.0
        %2092 = vmatpush.msra.mxu0 0.0
        %2093 = vmatpush.msra.mxu0 0.0
        %2094 = vmatpush.msra.mxu0 0.0
        %2095 = vmatpush.msra.mxu0 0.0
        %2096 = vmatpush.msra.mxu0 0.0
        %2097 = vmatpush.msra.mxu0 0.0
        %2098 = vmatpush.msra.mxu0 0.0
        %2099 = vmatpush.msra.mxu0 0.0
        %2100 = vmatpush.msra.mxu0 %v2077
        %2101 = vmatpush.msra.mxu0 %v2075
        %2102 = vmatmul.f32.gmra.mxu0 %v2081
        %v2103 = vpop.f32.mrf.mxu0
        %v2104 = vadd.f32 0.0, %v2103
        %2105 = vmatmul.f32.gmra.mxu0 %v2084
        %v2106 = vpop.f32.mrf.mxu0
        %v2107 = vadd.f32 0.0, %v2106
        %2108 = vdwg.mxu0
        %2109 = vrot.lane.b32.xlu0 %v596, 120
        %v2110 = vpop.permute.xlu0 %2109
        %2111 = vrot.lane.b32.xlu0 %v599, 120
        %v2112 = vpop.permute.xlu0 %2111
        %2113 = vrot.lane.b32.xlu0 %v596, 88
        %v2114 = vpop.permute.xlu0 %2113
        %2115 = vrot.lane.b32.xlu0 %v599, 88
        %v2116 = vpop.permute.xlu0 %2115
        %v2117 = vsel %vm673, %v2110, 0
        %v2119 = vsel %vm673, %v2112, 0
        %v2121 = vsel %vm673, %v2114, 0
        %v2123 = vsel %vm673, %v2116, 0
        %2125 = vmatpush.xpose.msra.mxu0 0.0
        %2126 = vmatpush.xpose.msra.mxu0 0.0
        %2127 = vmatpush.xpose.msra.mxu0 0.0
        %2128 = vmatpush.xpose.msra.mxu0 0.0
        %2129 = vmatpush.xpose.msra.mxu0 0.0
        %2130 = vmatpush.xpose.msra.mxu0 0.0
        %2131 = vmatpush.xpose.msra.mxu0 0.0
        %2132 = vmatpush.xpose.msra.mxu0 0.0
        %2133 = vmatpush.xpose.msra.mxu0 0.0
        %2134 = vmatpush.xpose.msra.mxu0 0.0
        %2135 = vmatpush.xpose.msra.mxu0 0.0
        %2136 = vmatpush.xpose.msra.mxu0 0.0
        %2137 = vmatpush.xpose.msra.mxu0 0.0
        %2138 = vmatpush.xpose.msra.mxu0 0.0
        %2139 = vmatpush.xpose.msra.mxu0 %v2123
        %2140 = vmatpush.xpose.msra.mxu0 %v2121
        %2141 = vmatmul.f32.gmra.mxu0 %v2117
        %v2142 = vpop.f32.mrf.mxu0
        %v2143 = vadd.f32 0.0, %v2142
        %2144 = vmatmul.f32.gmra.mxu0 %v2119
        %v2145 = vpop.f32.mrf.mxu0
        %v2146 = vadd.f32 0.0, %v2145
        %2147 = vdwg.mxu0
        %2148 = vrot.lane.b32.xlu0 %v602, 120
        %v2149 = vpop.permute.xlu0 %2148
        %2150 = vrot.lane.b32.xlu0 %v605, 120
        %v2151 = vpop.permute.xlu0 %2150
        %2152 = vrot.lane.b32.xlu0 %v602, 88
        %v2153 = vpop.permute.xlu0 %2152
        %2154 = vrot.lane.b32.xlu0 %v605, 88
        %v2155 = vpop.permute.xlu0 %2154
        %v2156 = vsel %vm673, %v2149, 0
        %v2158 = vsel %vm673, %v2151, 0
        %v2160 = vsel %vm673, %v2153, 0
        %v2162 = vsel %vm673, %v2155, 0
        %2164 = vmatpush.xpose.msra.mxu0 0.0
        %2165 = vmatpush.xpose.msra.mxu0 0.0
        %2166 = vmatpush.xpose.msra.mxu0 0.0
        %2167 = vmatpush.xpose.msra.mxu0 0.0
        %2168 = vmatpush.xpose.msra.mxu0 0.0
        %2169 = vmatpush.xpose.msra.mxu0 0.0
        %2170 = vmatpush.xpose.msra.mxu0 0.0
        %2171 = vmatpush.xpose.msra.mxu0 0.0
        %2172 = vmatpush.xpose.msra.mxu0 0.0
        %2173 = vmatpush.xpose.msra.mxu0 0.0
        %2174 = vmatpush.xpose.msra.mxu0 0.0
        %2175 = vmatpush.xpose.msra.mxu0 0.0
        %2176 = vmatpush.xpose.msra.mxu0 0.0
        %2177 = vmatpush.xpose.msra.mxu0 0.0
        %2178 = vmatpush.xpose.msra.mxu0 %v2162
        %2179 = vmatpush.xpose.msra.mxu0 %v2160
        %2180 = vmatmul.f32.gmra.mxu0 %v2156
        %v2181 = vpop.f32.mrf.mxu0
        %v2182 = vadd.f32 0.0, %v2181
        %2183 = vmatmul.f32.gmra.mxu0 %v2158
        %v2184 = vpop.f32.mrf.mxu0
        %v2185 = vadd.f32 0.0, %v2184
        %2186 = vdwg.mxu0
        %2187 = vrot.lane.b32.xlu0 %v608, 120
        %v2188 = vpop.permute.xlu0 %2187
        %2189 = vrot.lane.b32.xlu0 %v611, 120
        %v2190 = vpop.permute.xlu0 %2189
        %2191 = vrot.lane.b32.xlu0 %v608, 88
        %v2192 = vpop.permute.xlu0 %2191
        %2193 = vrot.lane.b32.xlu0 %v611, 88
        %v2194 = vpop.permute.xlu0 %2193
        %v2195 = vsel %vm673, %v2188, 0
        %v2197 = vsel %vm673, %v2190, 0
        %v2199 = vsel %vm673, %v2192, 0
        %v2201 = vsel %vm673, %v2194, 0
        %2203 = vmatpush.xpose.msra.mxu0 0.0
        %2204 = vmatpush.xpose.msra.mxu0 0.0
        %2205 = vmatpush.xpose.msra.mxu0 0.0
        %2206 = vmatpush.xpose.msra.mxu0 0.0
        %2207 = vmatpush.xpose.msra.mxu0 0.0
        %2208 = vmatpush.xpose.msra.mxu0 0.0
        %2209 = vmatpush.xpose.msra.mxu0 0.0
        %2210 = vmatpush.xpose.msra.mxu0 0.0
        %2211 = vmatpush.xpose.msra.mxu0 0.0
        %2212 = vmatpush.xpose.msra.mxu0 0.0
        %2213 = vmatpush.xpose.msra.mxu0 0.0
        %2214 = vmatpush.xpose.msra.mxu0 0.0
        %2215 = vmatpush.xpose.msra.mxu0 0.0
        %2216 = vmatpush.xpose.msra.mxu0 0.0
        %2217 = vmatpush.xpose.msra.mxu0 %v2201
        %2218 = vmatpush.xpose.msra.mxu0 %v2199
        %2219 = vmatmul.f32.gmra.mxu0 %v2195
        %v2220 = vpop.f32.mrf.mxu0
        %v2221 = vadd.f32 0.0, %v2220
        %2222 = vmatmul.f32.gmra.mxu0 %v2197
        %v2223 = vpop.f32.mrf.mxu0
        %v2224 = vadd.f32 0.0, %v2223
        %2225 = vdwg.mxu0
        %2226 = vrot.lane.b32.xlu0 %v614, 120
        %v2227 = vpop.permute.xlu0 %2226
        %2228 = vrot.lane.b32.xlu0 %v617, 120
        %v2229 = vpop.permute.xlu0 %2228
        %2230 = vrot.lane.b32.xlu0 %v614, 88
        %v2231 = vpop.permute.xlu0 %2230
        %2232 = vrot.lane.b32.xlu0 %v617, 88
        %v2233 = vpop.permute.xlu0 %2232
        %v2234 = vsel %vm673, %v2227, 0
        %v2236 = vsel %vm673, %v2229, 0
        %v2238 = vsel %vm673, %v2231, 0
        %v2240 = vsel %vm673, %v2233, 0
        %2242 = vmatpush.xpose.msra.mxu0 0.0
        %2243 = vmatpush.xpose.msra.mxu0 0.0
        %2244 = vmatpush.xpose.msra.mxu0 0.0
        %2245 = vmatpush.xpose.msra.mxu0 0.0
        %2246 = vmatpush.xpose.msra.mxu0 0.0
        %2247 = vmatpush.xpose.msra.mxu0 0.0
        %2248 = vmatpush.xpose.msra.mxu0 0.0
        %2249 = vmatpush.xpose.msra.mxu0 0.0
        %2250 = vmatpush.xpose.msra.mxu0 0.0
        %2251 = vmatpush.xpose.msra.mxu0 0.0
        %2252 = vmatpush.xpose.msra.mxu0 0.0
        %2253 = vmatpush.xpose.msra.mxu0 0.0
        %2254 = vmatpush.xpose.msra.mxu0 0.0
        %2255 = vmatpush.xpose.msra.mxu0 0.0
        %2256 = vmatpush.xpose.msra.mxu0 %v2240
        %2257 = vmatpush.xpose.msra.mxu0 %v2238
        %2258 = vmatmul.f32.gmra.mxu0 %v2234
        %v2259 = vpop.f32.mrf.mxu0
        %v2260 = vadd.f32 0.0, %v2259
        %2261 = vmatmul.f32.gmra.mxu0 %v2236
        %v2262 = vpop.f32.mrf.mxu0
        %v2263 = vadd.f32 0.0, %v2262
        %2264 = vdwg.mxu0
        %2265 = vrot.lane.b32.xlu0 %v620, 120
        %v2266 = vpop.permute.xlu0 %2265
        %2267 = vrot.lane.b32.xlu0 %v623, 120
        %v2268 = vpop.permute.xlu0 %2267
        %2269 = vrot.lane.b32.xlu0 %v620, 88
        %v2270 = vpop.permute.xlu0 %2269
        %2271 = vrot.lane.b32.xlu0 %v623, 88
        %v2272 = vpop.permute.xlu0 %2271
        %v2273 = vsel %vm673, %v2266, 0
        %v2275 = vsel %vm673, %v2268, 0
        %v2277 = vsel %vm673, %v2270, 0
        %v2279 = vsel %vm673, %v2272, 0
        %2281 = vmatpush.xpose.msra.mxu0 0.0
        %2282 = vmatpush.xpose.msra.mxu0 0.0
        %2283 = vmatpush.xpose.msra.mxu0 0.0
        %2284 = vmatpush.xpose.msra.mxu0 0.0
        %2285 = vmatpush.xpose.msra.mxu0 0.0
        %2286 = vmatpush.xpose.msra.mxu0 0.0
        %2287 = vmatpush.xpose.msra.mxu0 0.0
        %2288 = vmatpush.xpose.msra.mxu0 0.0
        %2289 = vmatpush.xpose.msra.mxu0 0.0
        %2290 = vmatpush.xpose.msra.mxu0 0.0
        %2291 = vmatpush.xpose.msra.mxu0 0.0
        %2292 = vmatpush.xpose.msra.mxu0 0.0
        %2293 = vmatpush.xpose.msra.mxu0 0.0
        %2294 = vmatpush.xpose.msra.mxu0 0.0
        %2295 = vmatpush.xpose.msra.mxu0 %v2279
        %2296 = vmatpush.xpose.msra.mxu0 %v2277
        %2297 = vmatmul.f32.gmra.mxu0 %v2273
        %v2298 = vpop.f32.mrf.mxu0
        %v2299 = vadd.f32 0.0, %v2298
        %2300 = vmatmul.f32.gmra.mxu0 %v2275
        %v2301 = vpop.f32.mrf.mxu0
        %v2302 = vadd.f32 0.0, %v2301
        %2303 = vdwg.mxu0
        %2304 = vrot.lane.b32.xlu0 %v626, 120
        %v2305 = vpop.permute.xlu0 %2304
        %2306 = vrot.lane.b32.xlu0 %v629, 120
        %v2307 = vpop.permute.xlu0 %2306
        %2308 = vrot.lane.b32.xlu0 %v626, 88
        %v2309 = vpop.permute.xlu0 %2308
        %2310 = vrot.lane.b32.xlu0 %v629, 88
        %v2311 = vpop.permute.xlu0 %2310
        %v2312 = vsel %vm673, %v2305, 0
        %v2314 = vsel %vm673, %v2307, 0
        %v2316 = vsel %vm673, %v2309, 0
        %v2318 = vsel %vm673, %v2311, 0
        %2320 = vmatpush.xpose.msra.mxu0 0.0
        %2321 = vmatpush.xpose.msra.mxu0 0.0
        %2322 = vmatpush.xpose.msra.mxu0 0.0
        %2323 = vmatpush.xpose.msra.mxu0 0.0
        %2324 = vmatpush.xpose.msra.mxu0 0.0
        %2325 = vmatpush.xpose.msra.mxu0 0.0
        %2326 = vmatpush.xpose.msra.mxu0 0.0
        %2327 = vmatpush.xpose.msra.mxu0 0.0
        %2328 = vmatpush.xpose.msra.mxu0 0.0
        %2329 = vmatpush.xpose.msra.mxu0 0.0
        %2330 = vmatpush.xpose.msra.mxu0 0.0
        %2331 = vmatpush.xpose.msra.mxu0 0.0
        %2332 = vmatpush.xpose.msra.mxu0 0.0
        %2333 = vmatpush.xpose.msra.mxu0 0.0
        %2334 = vmatpush.xpose.msra.mxu0 %v2318
        %2335 = vmatpush.xpose.msra.mxu0 %v2316
        %2336 = vmatmul.f32.gmra.mxu0 %v2312
        %v2337 = vpop.f32.mrf.mxu0
        %v2338 = vadd.f32 0.0, %v2337
        %2339 = vmatmul.f32.gmra.mxu0 %v2314
        %v2340 = vpop.f32.mrf.mxu0
        %v2341 = vadd.f32 0.0, %v2340
        %2342 = vdwg.mxu0
        %2343 = vrot.lane.b32.xlu0 %v632, 120
        %v2344 = vpop.permute.xlu0 %2343
        %2345 = vrot.lane.b32.xlu0 %v635, 120
        %v2346 = vpop.permute.xlu0 %2345
        %2347 = vrot.lane.b32.xlu0 %v632, 88
        %v2348 = vpop.permute.xlu0 %2347
        %2349 = vrot.lane.b32.xlu0 %v635, 88
        %v2350 = vpop.permute.xlu0 %2349
        %v2351 = vsel %vm673, %v2344, 0
        %v2353 = vsel %vm673, %v2346, 0
        %v2355 = vsel %vm673, %v2348, 0
        %v2357 = vsel %vm673, %v2350, 0
        %2359 = vmatpush.xpose.msra.mxu0 0.0
        %2360 = vmatpush.xpose.msra.mxu0 0.0
        %2361 = vmatpush.xpose.msra.mxu0 0.0
        %2362 = vmatpush.xpose.msra.mxu0 0.0
        %2363 = vmatpush.xpose.msra.mxu0 0.0
        %2364 = vmatpush.xpose.msra.mxu0 0.0
        %2365 = vmatpush.xpose.msra.mxu0 0.0
        %2366 = vmatpush.xpose.msra.mxu0 0.0
        %2367 = vmatpush.xpose.msra.mxu0 0.0
        %2368 = vmatpush.xpose.msra.mxu0 0.0
        %2369 = vmatpush.xpose.msra.mxu0 0.0
        %2370 = vmatpush.xpose.msra.mxu0 0.0
        %2371 = vmatpush.xpose.msra.mxu0 0.0
        %2372 = vmatpush.xpose.msra.mxu0 0.0
        %2373 = vmatpush.xpose.msra.mxu0 %v2357
        %2374 = vmatpush.xpose.msra.mxu0 %v2355
        %2375 = vmatmul.f32.gmra.mxu0 %v2351
        %v2376 = vpop.f32.mrf.mxu0
        %v2377 = vadd.f32 0.0, %v2376
        %2378 = vmatmul.f32.gmra.mxu0 %v2353
        %v2379 = vpop.f32.mrf.mxu0
        %v2380 = vadd.f32 0.0, %v2379
        %2381 = vdwg.mxu0
        %2382 = vrot.lane.b32.xlu0 %v638, 120
        %v2383 = vpop.permute.xlu0 %2382
        %2384 = vrot.lane.b32.xlu0 %v641, 120
        %v2385 = vpop.permute.xlu0 %2384
        %2386 = vrot.lane.b32.xlu0 %v638, 88
        %v2387 = vpop.permute.xlu0 %2386
        %2388 = vrot.lane.b32.xlu0 %v641, 88
        %v2389 = vpop.permute.xlu0 %2388
        %v2390 = vsel %vm673, %v2383, 0
        %v2392 = vsel %vm673, %v2385, 0
        %v2394 = vsel %vm673, %v2387, 0
        %v2396 = vsel %vm673, %v2389, 0
        %2398 = vmatpush.xpose.msra.mxu0 0.0
        %2399 = vmatpush.xpose.msra.mxu0 0.0
        %2400 = vmatpush.xpose.msra.mxu0 0.0
        %2401 = vmatpush.xpose.msra.mxu0 0.0
        %2402 = vmatpush.xpose.msra.mxu0 0.0
        %2403 = vmatpush.xpose.msra.mxu0 0.0
        %2404 = vmatpush.xpose.msra.mxu0 0.0
        %2405 = vmatpush.xpose.msra.mxu0 0.0
        %2406 = vmatpush.xpose.msra.mxu0 0.0
        %2407 = vmatpush.xpose.msra.mxu0 0.0
        %2408 = vmatpush.xpose.msra.mxu0 0.0
        %2409 = vmatpush.xpose.msra.mxu0 0.0
        %2410 = vmatpush.xpose.msra.mxu0 0.0
        %2411 = vmatpush.xpose.msra.mxu0 0.0
        %2412 = vmatpush.xpose.msra.mxu0 %v2396
        %2413 = vmatpush.xpose.msra.mxu0 %v2394
        %2414 = vmatmul.f32.gmra.mxu0 %v2390
        %v2415 = vpop.f32.mrf.mxu0
        %v2416 = vadd.f32 0.0, %v2415
        %2417 = vmatmul.f32.gmra.mxu0 %v2392
        %v2418 = vpop.f32.mrf.mxu0
        %v2419 = vadd.f32 0.0, %v2418
        %2420 = vdwg.mxu0
        %2421 = vrot.lane.b32.xlu0 %v644, 120
        %v2422 = vpop.permute.xlu0 %2421
        %2423 = vrot.lane.b32.xlu0 %v647, 120
        %v2424 = vpop.permute.xlu0 %2423
        %2425 = vrot.lane.b32.xlu0 %v644, 88
        %v2426 = vpop.permute.xlu0 %2425
        %2427 = vrot.lane.b32.xlu0 %v647, 88
        %v2428 = vpop.permute.xlu0 %2427
        %v2429 = vsel %vm673, %v2422, 0
        %v2431 = vsel %vm673, %v2424, 0
        %v2433 = vsel %vm673, %v2426, 0
        %v2435 = vsel %vm673, %v2428, 0
        %2437 = vmatpush.xpose.msra.mxu0 0.0
        %2438 = vmatpush.xpose.msra.mxu0 0.0
        %2439 = vmatpush.xpose.msra.mxu0 0.0
        %2440 = vmatpush.xpose.msra.mxu0 0.0
        %2441 = vmatpush.xpose.msra.mxu0 0.0
        %2442 = vmatpush.xpose.msra.mxu0 0.0
        %2443 = vmatpush.xpose.msra.mxu0 0.0
        %2444 = vmatpush.xpose.msra.mxu0 0.0
        %2445 = vmatpush.xpose.msra.mxu0 0.0
        %2446 = vmatpush.xpose.msra.mxu0 0.0
        %2447 = vmatpush.xpose.msra.mxu0 0.0
        %2448 = vmatpush.xpose.msra.mxu0 0.0
        %2449 = vmatpush.xpose.msra.mxu0 0.0
        %2450 = vmatpush.xpose.msra.mxu0 0.0
        %2451 = vmatpush.xpose.msra.mxu0 %v2435
        %2452 = vmatpush.xpose.msra.mxu0 %v2433
        %2453 = vmatmul.f32.gmra.mxu0 %v2429
        %v2454 = vpop.f32.mrf.mxu0
        %v2455 = vadd.f32 0.0, %v2454
        %2456 = vmatmul.f32.gmra.mxu0 %v2431
        %v2457 = vpop.f32.mrf.mxu0
        %v2458 = vadd.f32 0.0, %v2457
        %2459 = vdwg.mxu0
        %2460 = vrot.lane.b32.xlu0 %v650, 120
        %v2461 = vpop.permute.xlu0 %2460
        %2462 = vrot.lane.b32.xlu0 %v653, 120
        %v2463 = vpop.permute.xlu0 %2462
        %2464 = vrot.lane.b32.xlu0 %v650, 88
        %v2465 = vpop.permute.xlu0 %2464
        %2466 = vrot.lane.b32.xlu0 %v653, 88
        %v2467 = vpop.permute.xlu0 %2466
        %v2468 = vsel %vm673, %v2461, 0
        %v2470 = vsel %vm673, %v2463, 0
        %v2472 = vsel %vm673, %v2465, 0
        %v2474 = vsel %vm673, %v2467, 0
        %2476 = vmatpush.xpose.msra.mxu0 0.0
        %2477 = vmatpush.xpose.msra.mxu0 0.0
        %2478 = vmatpush.xpose.msra.mxu0 0.0
        %2479 = vmatpush.xpose.msra.mxu0 0.0
        %2480 = vmatpush.xpose.msra.mxu0 0.0
        %2481 = vmatpush.xpose.msra.mxu0 0.0
        %2482 = vmatpush.xpose.msra.mxu0 0.0
        %2483 = vmatpush.xpose.msra.mxu0 0.0
        %2484 = vmatpush.xpose.msra.mxu0 0.0
        %2485 = vmatpush.xpose.msra.mxu0 0.0
        %2486 = vmatpush.xpose.msra.mxu0 0.0
        %2487 = vmatpush.xpose.msra.mxu0 0.0
        %2488 = vmatpush.xpose.msra.mxu0 0.0
        %2489 = vmatpush.xpose.msra.mxu0 0.0
        %2490 = vmatpush.xpose.msra.mxu0 %v2474
        %2491 = vmatpush.xpose.msra.mxu0 %v2472
        %2492 = vmatmul.f32.gmra.mxu0 %v2468
        %v2493 = vpop.f32.mrf.mxu0
        %v2494 = vadd.f32 0.0, %v2493
        %2495 = vmatmul.f32.gmra.mxu0 %v2470
        %v2496 = vpop.f32.mrf.mxu0
        %v2497 = vadd.f32 0.0, %v2496
        %2498 = vdwg.mxu0
        %2499 = vrot.lane.b32.xlu0 %v656, 120
        %v2500 = vpop.permute.xlu0 %2499
        %2501 = vrot.lane.b32.xlu0 %v659, 120
        %v2502 = vpop.permute.xlu0 %2501
        %2503 = vrot.lane.b32.xlu0 %v656, 88
        %v2504 = vpop.permute.xlu0 %2503
        %2505 = vrot.lane.b32.xlu0 %v659, 88
        %v2506 = vpop.permute.xlu0 %2505
        %v2507 = vsel %vm673, %v2500, 0
        %v2509 = vsel %vm673, %v2502, 0
        %v2511 = vsel %vm673, %v2504, 0
        %v2513 = vsel %vm673, %v2506, 0
        %2515 = vmatpush.xpose.msra.mxu0 0.0
        %2516 = vmatpush.xpose.msra.mxu0 0.0
        %2517 = vmatpush.xpose.msra.mxu0 0.0
        %2518 = vmatpush.xpose.msra.mxu0 0.0
        %2519 = vmatpush.xpose.msra.mxu0 0.0
        %2520 = vmatpush.xpose.msra.mxu0 0.0
        %2521 = vmatpush.xpose.msra.mxu0 0.0
        %2522 = vmatpush.xpose.msra.mxu0 0.0
        %2523 = vmatpush.xpose.msra.mxu0 0.0
        %2524 = vmatpush.xpose.msra.mxu0 0.0
        %2525 = vmatpush.xpose.msra.mxu0 0.0
        %2526 = vmatpush.xpose.msra.mxu0 0.0
        %2527 = vmatpush.xpose.msra.mxu0 0.0
        %2528 = vmatpush.xpose.msra.mxu0 0.0
        %2529 = vmatpush.xpose.msra.mxu0 %v2513
        %2530 = vmatpush.xpose.msra.mxu0 %v2511
        %2531 = vmatmul.f32.gmra.mxu0 %v2507
        %v2532 = vpop.f32.mrf.mxu0
        %v2533 = vadd.f32 0.0, %v2532
        %2534 = vmatmul.f32.gmra.mxu0 %v2509
        %v2535 = vpop.f32.mrf.mxu0
        %v2536 = vadd.f32 0.0, %v2535
        %2537 = vdwg.mxu0
        %2538 = vrot.lane.b32.xlu0 %v662, 120
        %v2539 = vpop.permute.xlu0 %2538
        %2540 = vrot.lane.b32.xlu0 %v665, 120
        %v2541 = vpop.permute.xlu0 %2540
        %2542 = vrot.lane.b32.xlu0 %v662, 88
        %v2543 = vpop.permute.xlu0 %2542
        %2544 = vrot.lane.b32.xlu0 %v665, 88
        %v2545 = vpop.permute.xlu0 %2544
        %v2546 = vsel %vm673, %v2539, 0
        %v2548 = vsel %vm673, %v2541, 0
        %v2550 = vsel %vm673, %v2543, 0
        %v2552 = vsel %vm673, %v2545, 0
        %2554 = vmatpush.xpose.msra.mxu0 0.0
        %2555 = vmatpush.xpose.msra.mxu0 0.0
        %2556 = vmatpush.xpose.msra.mxu0 0.0
        %2557 = vmatpush.xpose.msra.mxu0 0.0
        %2558 = vmatpush.xpose.msra.mxu0 0.0
        %2559 = vmatpush.xpose.msra.mxu0 0.0
        %2560 = vmatpush.xpose.msra.mxu0 0.0
        %2561 = vmatpush.xpose.msra.mxu0 0.0
        %2562 = vmatpush.xpose.msra.mxu0 0.0
        %2563 = vmatpush.xpose.msra.mxu0 0.0
        %2564 = vmatpush.xpose.msra.mxu0 0.0
        %2565 = vmatpush.xpose.msra.mxu0 0.0
        %2566 = vmatpush.xpose.msra.mxu0 0.0
        %2567 = vmatpush.xpose.msra.mxu0 0.0
        %2568 = vmatpush.xpose.msra.mxu0 %v2552
        %2569 = vmatpush.xpose.msra.mxu0 %v2550
        %2570 = vmatmul.f32.gmra.mxu0 %v2546
        %v2571 = vpop.f32.mrf.mxu0
        %v2572 = vadd.f32 0.0, %v2571
        %2573 = vmatmul.f32.gmra.mxu0 %v2548
        %v2574 = vpop.f32.mrf.mxu0
        %v2575 = vadd.f32 0.0, %v2574
        %2576 = vdwg.mxu0
        %v2577 = vsel %vm1112, %v2143, -inf
        %2578 = vmax.xlane.f32.xlu0 %v2577
        %v2579 = vpop.xlane.xlu0 %2578
        %v2580 = vsel %vm1112, %v2146, -inf
        %2581 = vmax.xlane.f32.xlu0 %v2580
        %v2582 = vpop.xlane.xlu0 %2581
        %v2583 = vsel %vm1112, %v2182, -inf
        %2584 = vmax.xlane.f32.xlu0 %v2583
        %v2585 = vpop.xlane.xlu0 %2584
        %v2586 = vsel %vm1112, %v2185, -inf
        %2587 = vmax.xlane.f32.xlu0 %v2586
        %v2588 = vpop.xlane.xlu0 %2587
        %v2589 = vsel %vm1112, %v2221, -inf
        %2590 = vmax.xlane.f32.xlu0 %v2589
        %v2591 = vpop.xlane.xlu0 %2590
        %v2592 = vsel %vm1112, %v2224, -inf
        %2593 = vmax.xlane.f32.xlu0 %v2592
        %v2594 = vpop.xlane.xlu0 %2593
        %v2595 = vsel %vm1112, %v2260, -inf
        %2596 = vmax.xlane.f32.xlu0 %v2595
        %v2597 = vpop.xlane.xlu0 %2596
        %v2598 = vsel %vm1112, %v2263, -inf
        %2599 = vmax.xlane.f32.xlu0 %v2598
        %v2600 = vpop.xlane.xlu0 %2599
        %v2601 = vsel %vm1112, %v2299, -inf
        %2602 = vmax.xlane.f32.xlu0 %v2601
        %v2603 = vpop.xlane.xlu0 %2602
        %v2604 = vsel %vm1112, %v2302, -inf
        %2605 = vmax.xlane.f32.xlu0 %v2604
        %v2606 = vpop.xlane.xlu0 %2605
        %v2607 = vsel %vm1112, %v2338, -inf
        %2608 = vmax.xlane.f32.xlu0 %v2607
        %v2609 = vpop.xlane.xlu0 %2608
        %v2610 = vsel %vm1112, %v2341, -inf
        %2611 = vmax.xlane.f32.xlu0 %v2610
        %v2612 = vpop.xlane.xlu0 %2611
        %v2613 = vsel %vm1112, %v2377, -inf
        %2614 = vmax.xlane.f32.xlu0 %v2613
        %v2615 = vpop.xlane.xlu0 %2614
        %v2616 = vsel %vm1112, %v2380, -inf
        %2617 = vmax.xlane.f32.xlu0 %v2616
        %v2618 = vpop.xlane.xlu0 %2617
        %v2619 = vsel %vm1112, %v2416, -inf
        %2620 = vmax.xlane.f32.xlu0 %v2619
        %v2621 = vpop.xlane.xlu0 %2620
        %v2622 = vsel %vm1112, %v2419, -inf
        %2623 = vmax.xlane.f32.xlu0 %v2622
        %v2624 = vpop.xlane.xlu0 %2623
        %v2625 = vsel %vm1112, %v2455, -inf
        %2626 = vmax.xlane.f32.xlu0 %v2625
        %v2627 = vpop.xlane.xlu0 %2626
        %v2628 = vsel %vm1112, %v2458, -inf
        %2629 = vmax.xlane.f32.xlu0 %v2628
        %v2630 = vpop.xlane.xlu0 %2629
        %v2631 = vsel %vm1112, %v2494, -inf
        %2632 = vmax.xlane.f32.xlu0 %v2631
        %v2633 = vpop.xlane.xlu0 %2632
        %v2634 = vsel %vm1112, %v2497, -inf
        %2635 = vmax.xlane.f32.xlu0 %v2634
        %v2636 = vpop.xlane.xlu0 %2635
        %v2637 = vsel %vm1112, %v2533, -inf
        %2638 = vmax.xlane.f32.xlu0 %v2637
        %v2639 = vpop.xlane.xlu0 %2638
        %v2640 = vsel %vm1112, %v2536, -inf
        %2641 = vmax.xlane.f32.xlu0 %v2640
        %v2642 = vpop.xlane.xlu0 %2641
        %v2643 = vsel %vm1112, %v2572, -inf
        %2644 = vmax.xlane.f32.xlu0 %v2643
        %v2645 = vpop.xlane.xlu0 %2644
        %v2646 = vsel %vm1112, %v2575, -inf
        %2647 = vmax.xlane.f32.xlu0 %v2646
        %v2648 = vpop.xlane.xlu0 %2647
        %v2649 = vsub.f32 %v2143, %v2579
        %v2650 = vsub.f32 %v2146, %v2582
        %v2651 = vsub.f32 %v2182, %v2585
        %v2652 = vsub.f32 %v2185, %v2588
        %v2653 = vsub.f32 %v2221, %v2591
        %v2654 = vsub.f32 %v2224, %v2594
        %v2655 = vsub.f32 %v2260, %v2597
        %v2656 = vsub.f32 %v2263, %v2600
        %v2657 = vsub.f32 %v2299, %v2603
        %v2658 = vsub.f32 %v2302, %v2606
        %v2659 = vsub.f32 %v2338, %v2609
        %v2660 = vsub.f32 %v2341, %v2612
        %v2661 = vsub.f32 %v2377, %v2615
        %v2662 = vsub.f32 %v2380, %v2618
        %v2663 = vsub.f32 %v2416, %v2621
        %v2664 = vsub.f32 %v2419, %v2624
        %v2665 = vsub.f32 %v2455, %v2627
        %v2666 = vsub.f32 %v2458, %v2630
        %v2667 = vsub.f32 %v2494, %v2633
        %v2668 = vsub.f32 %v2497, %v2636
        %v2669 = vsub.f32 %v2533, %v2639
        %v2670 = vsub.f32 %v2536, %v2642
        %v2671 = vsub.f32 %v2572, %v2645
        %v2672 = vsub.f32 %v2575, %v2648
        %v2673 = vmul.f32 %v2649, 1.442695
        %v2674 = vpow.pop %v2673
        %v2675 = vmul.f32 %v2650, 1.442695
        %v2676 = vpow.pop %v2675
        %v2677 = vmul.f32 %v2651, 1.442695
        %v2678 = vpow.pop %v2677
        %v2679 = vmul.f32 %v2652, 1.442695
        %v2680 = vpow.pop %v2679
        %v2681 = vmul.f32 %v2653, 1.442695
        %v2682 = vpow.pop %v2681
        %v2683 = vmul.f32 %v2654, 1.442695
        %v2684 = vpow.pop %v2683
        %v2685 = vmul.f32 %v2655, 1.442695
        %v2686 = vpow.pop %v2685
        %v2687 = vmul.f32 %v2656, 1.442695
        %v2688 = vpow.pop %v2687
        %v2689 = vmul.f32 %v2657, 1.442695
        %v2690 = vpow.pop %v2689
        %v2691 = vmul.f32 %v2658, 1.442695
        %v2692 = vpow.pop %v2691
        %v2693 = vmul.f32 %v2659, 1.442695
        %v2694 = vpow.pop %v2693
        %v2695 = vmul.f32 %v2660, 1.442695
        %v2696 = vpow.pop %v2695
        %v2697 = vmul.f32 %v2661, 1.442695
        %v2698 = vpow.pop %v2697
        %v2699 = vmul.f32 %v2662, 1.442695
        %v2700 = vpow.pop %v2699
        %v2701 = vmul.f32 %v2663, 1.442695
        %v2702 = vpow.pop %v2701
        %v2703 = vmul.f32 %v2664, 1.442695
        %v2704 = vpow.pop %v2703
        %v2705 = vmul.f32 %v2665, 1.442695
        %v2706 = vpow.pop %v2705
        %v2707 = vmul.f32 %v2666, 1.442695
        %v2708 = vpow.pop %v2707
        %v2709 = vmul.f32 %v2667, 1.442695
        %v2710 = vpow.pop %v2709
        %v2711 = vmul.f32 %v2668, 1.442695
        %v2712 = vpow.pop %v2711
        %v2713 = vmul.f32 %v2669, 1.442695
        %v2714 = vpow.pop %v2713
        %v2715 = vmul.f32 %v2670, 1.442695
        %v2716 = vpow.pop %v2715
        %v2717 = vmul.f32 %v2671, 1.442695
        %v2718 = vpow.pop %v2717
        %v2719 = vmul.f32 %v2672, 1.442695
        %v2720 = vpow.pop %v2719
        %v2721 = vsel %vm1112, %v2674, 0.0
        %2722 = vadd.xlane.f32.xlu0 %v2721
        %v2723 = vpop.xlane.xlu0 %2722
        %v2724 = vsel %vm1112, %v2676, 0.0
        %2725 = vadd.xlane.f32.xlu0 %v2724
        %v2726 = vpop.xlane.xlu0 %2725
        %v2727 = vsel %vm1112, %v2678, 0.0
        %2728 = vadd.xlane.f32.xlu0 %v2727
        %v2729 = vpop.xlane.xlu0 %2728
        %v2730 = vsel %vm1112, %v2680, 0.0
        %2731 = vadd.xlane.f32.xlu0 %v2730
        %v2732 = vpop.xlane.xlu0 %2731
        %v2733 = vsel %vm1112, %v2682, 0.0
        %2734 = vadd.xlane.f32.xlu0 %v2733
        %v2735 = vpop.xlane.xlu0 %2734
        %v2736 = vsel %vm1112, %v2684, 0.0
        %2737 = vadd.xlane.f32.xlu0 %v2736
        %v2738 = vpop.xlane.xlu0 %2737
        %v2739 = vsel %vm1112, %v2686, 0.0
        %2740 = vadd.xlane.f32.xlu0 %v2739
        %v2741 = vpop.xlane.xlu0 %2740
        %v2742 = vsel %vm1112, %v2688, 0.0
        %2743 = vadd.xlane.f32.xlu0 %v2742
        %v2744 = vpop.xlane.xlu0 %2743
        %v2745 = vsel %vm1112, %v2690, 0.0
        %2746 = vadd.xlane.f32.xlu0 %v2745
        %v2747 = vpop.xlane.xlu0 %2746
        %v2748 = vsel %vm1112, %v2692, 0.0
        %2749 = vadd.xlane.f32.xlu0 %v2748
        %v2750 = vpop.xlane.xlu0 %2749
        %v2751 = vsel %vm1112, %v2694, 0.0
        %2752 = vadd.xlane.f32.xlu0 %v2751
        %v2753 = vpop.xlane.xlu0 %2752
        %v2754 = vsel %vm1112, %v2696, 0.0
        %2755 = vadd.xlane.f32.xlu0 %v2754
        %v2756 = vpop.xlane.xlu0 %2755
        %v2757 = vsel %vm1112, %v2698, 0.0
        %2758 = vadd.xlane.f32.xlu0 %v2757
        %v2759 = vpop.xlane.xlu0 %2758
        %v2760 = vsel %vm1112, %v2700, 0.0
        %2761 = vadd.xlane.f32.xlu0 %v2760
        %v2762 = vpop.xlane.xlu0 %2761
        %v2763 = vsel %vm1112, %v2702, 0.0
        %2764 = vadd.xlane.f32.xlu0 %v2763
        %v2765 = vpop.xlane.xlu0 %2764
        %v2766 = vsel %vm1112, %v2704, 0.0
        %2767 = vadd.xlane.f32.xlu0 %v2766
        %v2768 = vpop.xlane.xlu0 %2767
        %v2769 = vsel %vm1112, %v2706, 0.0
        %2770 = vadd.xlane.f32.xlu0 %v2769
        %v2771 = vpop.xlane.xlu0 %2770
        %v2772 = vsel %vm1112, %v2708, 0.0
        %2773 = vadd.xlane.f32.xlu0 %v2772
        %v2774 = vpop.xlane.xlu0 %2773
        %v2775 = vsel %vm1112, %v2710, 0.0
        %2776 = vadd.xlane.f32.xlu0 %v2775
        %v2777 = vpop.xlane.xlu0 %2776
        %v2778 = vsel %vm1112, %v2712, 0.0
        %2779 = vadd.xlane.f32.xlu0 %v2778
        %v2780 = vpop.xlane.xlu0 %2779
        %v2781 = vsel %vm1112, %v2714, 0.0
        %2782 = vadd.xlane.f32.xlu0 %v2781
        %v2783 = vpop.xlane.xlu0 %2782
        %v2784 = vsel %vm1112, %v2716, 0.0
        %2785 = vadd.xlane.f32.xlu0 %v2784
        %v2786 = vpop.xlane.xlu0 %2785
        %v2787 = vsel %vm1112, %v2718, 0.0
        %2788 = vadd.xlane.f32.xlu0 %v2787
        %v2789 = vpop.xlane.xlu0 %2788
        %v2790 = vsel %vm1112, %v2720, 0.0
        %2791 = vadd.xlane.f32.xlu0 %v2790
        %v2792 = vpop.xlane.xlu0 %2791
        %v2793 = vrcp.pop %v2723
        %v2794 = vmul.f32 %v2723, %v2793
        %v2795 = vsub.f32 1.0, %v2794
        %v2796 = vmul.f32 %v2793, %v2795
        %v2797 = vadd.f32 %v2793, %v2796
        %vm2798 = vweird.f32 %v2723
        %vm2799 = vweird.f32 %v2793
        %vm2800 = vmor %vm2798, %vm2799
        %v2801 = vsel %vm2800, %v2793, %v2797
        %v2802 = vand.u32 2147483647, %v2723
        %vm2803 = vcmp.eq.f32.partialorder %v2802, 8.507059e+37
        %v2804 = vand.u32 %v2723, 2147483648
        %v2805 = vor.u32 1.1754944e-38, %v2804
        %v2806 = vsel %vm2803, %v2805, %v2801
        %v2807 = vmul.f32 %v2674, %v2806
        %v2808 = vrcp.pop %v2726
        %v2809 = vmul.f32 %v2726, %v2808
        %v2810 = vsub.f32 1.0, %v2809
        %v2811 = vmul.f32 %v2808, %v2810
        %v2812 = vadd.f32 %v2808, %v2811
        %vm2813 = vweird.f32 %v2726
        %vm2814 = vweird.f32 %v2808
        %vm2815 = vmor %vm2813, %vm2814
        %v2816 = vsel %vm2815, %v2808, %v2812
        %v2817 = vand.u32 2147483647, %v2726
        %vm2818 = vcmp.eq.f32.partialorder %v2817, 8.507059e+37
        %v2819 = vand.u32 %v2726, 2147483648
        %v2820 = vor.u32 1.1754944e-38, %v2819
        %v2821 = vsel %vm2818, %v2820, %v2816
        %v2822 = vmul.f32 %v2676, %v2821
        %v2823 = vrcp.pop %v2729
        %v2824 = vmul.f32 %v2729, %v2823
        %v2825 = vsub.f32 1.0, %v2824
        %v2826 = vmul.f32 %v2823, %v2825
        %v2827 = vadd.f32 %v2823, %v2826
        %vm2828 = vweird.f32 %v2729
        %vm2829 = vweird.f32 %v2823
        %vm2830 = vmor %vm2828, %vm2829
        %v2831 = vsel %vm2830, %v2823, %v2827
        %v2832 = vand.u32 2147483647, %v2729
        %vm2833 = vcmp.eq.f32.partialorder %v2832, 8.507059e+37
        %v2834 = vand.u32 %v2729, 2147483648
        %v2835 = vor.u32 1.1754944e-38, %v2834
        %v2836 = vsel %vm2833, %v2835, %v2831
        %v2837 = vmul.f32 %v2678, %v2836
        %v2838 = vrcp.pop %v2732
        %v2839 = vmul.f32 %v2732, %v2838
        %v2840 = vsub.f32 1.0, %v2839
        %v2841 = vmul.f32 %v2838, %v2840
        %v2842 = vadd.f32 %v2838, %v2841
        %vm2843 = vweird.f32 %v2732
        %vm2844 = vweird.f32 %v2838
        %vm2845 = vmor %vm2843, %vm2844
        %v2846 = vsel %vm2845, %v2838, %v2842
        %v2847 = vand.u32 2147483647, %v2732
        %vm2848 = vcmp.eq.f32.partialorder %v2847, 8.507059e+37
        %v2849 = vand.u32 %v2732, 2147483648
        %v2850 = vor.u32 1.1754944e-38, %v2849
        %v2851 = vsel %vm2848, %v2850, %v2846
        %v2852 = vmul.f32 %v2680, %v2851
        %v2853 = vrcp.pop %v2735
        %v2854 = vmul.f32 %v2735, %v2853
        %v2855 = vsub.f32 1.0, %v2854
        %v2856 = vmul.f32 %v2853, %v2855
        %v2857 = vadd.f32 %v2853, %v2856
        %vm2858 = vweird.f32 %v2735
        %vm2859 = vweird.f32 %v2853
        %vm2860 = vmor %vm2858, %vm2859
        %v2861 = vsel %vm2860, %v2853, %v2857
        %v2862 = vand.u32 2147483647, %v2735
        %vm2863 = vcmp.eq.f32.partialorder %v2862, 8.507059e+37
        %v2864 = vand.u32 %v2735, 2147483648
        %v2865 = vor.u32 1.1754944e-38, %v2864
        %v2866 = vsel %vm2863, %v2865, %v2861
        %v2867 = vmul.f32 %v2682, %v2866
        %v2868 = vrcp.pop %v2738
        %v2869 = vmul.f32 %v2738, %v2868
        %v2870 = vsub.f32 1.0, %v2869
        %v2871 = vmul.f32 %v2868, %v2870
        %v2872 = vadd.f32 %v2868, %v2871
        %vm2873 = vweird.f32 %v2738
        %vm2874 = vweird.f32 %v2868
        %vm2875 = vmor %vm2873, %vm2874
        %v2876 = vsel %vm2875, %v2868, %v2872
        %v2877 = vand.u32 2147483647, %v2738
        %vm2878 = vcmp.eq.f32.partialorder %v2877, 8.507059e+37
        %v2879 = vand.u32 %v2738, 2147483648
        %v2880 = vor.u32 1.1754944e-38, %v2879
        %v2881 = vsel %vm2878, %v2880, %v2876
        %v2882 = vmul.f32 %v2684, %v2881
        %v2883 = vrcp.pop %v2741
        %v2884 = vmul.f32 %v2741, %v2883
        %v2885 = vsub.f32 1.0, %v2884
        %v2886 = vmul.f32 %v2883, %v2885
        %v2887 = vadd.f32 %v2883, %v2886
        %vm2888 = vweird.f32 %v2741
        %vm2889 = vweird.f32 %v2883
        %vm2890 = vmor %vm2888, %vm2889
        %v2891 = vsel %vm2890, %v2883, %v2887
        %v2892 = vand.u32 2147483647, %v2741
        %vm2893 = vcmp.eq.f32.partialorder %v2892, 8.507059e+37
        %v2894 = vand.u32 %v2741, 2147483648
        %v2895 = vor.u32 1.1754944e-38, %v2894
        %v2896 = vsel %vm2893, %v2895, %v2891
        %v2897 = vmul.f32 %v2686, %v2896
        %v2898 = vrcp.pop %v2744
        %v2899 = vmul.f32 %v2744, %v2898
        %v2900 = vsub.f32 1.0, %v2899
        %v2901 = vmul.f32 %v2898, %v2900
        %v2902 = vadd.f32 %v2898, %v2901
        %vm2903 = vweird.f32 %v2744
        %vm2904 = vweird.f32 %v2898
        %vm2905 = vmor %vm2903, %vm2904
        %v2906 = vsel %vm2905, %v2898, %v2902
        %v2907 = vand.u32 2147483647, %v2744
        %vm2908 = vcmp.eq.f32.partialorder %v2907, 8.507059e+37
        %v2909 = vand.u32 %v2744, 2147483648
        %v2910 = vor.u32 1.1754944e-38, %v2909
        %v2911 = vsel %vm2908, %v2910, %v2906
        %v2912 = vmul.f32 %v2688, %v2911
        %v2913 = vrcp.pop %v2747
        %v2914 = vmul.f32 %v2747, %v2913
        %v2915 = vsub.f32 1.0, %v2914
        %v2916 = vmul.f32 %v2913, %v2915
        %v2917 = vadd.f32 %v2913, %v2916
        %vm2918 = vweird.f32 %v2747
        %vm2919 = vweird.f32 %v2913
        %vm2920 = vmor %vm2918, %vm2919
        %v2921 = vsel %vm2920, %v2913, %v2917
        %v2922 = vand.u32 2147483647, %v2747
        %vm2923 = vcmp.eq.f32.partialorder %v2922, 8.507059e+37
        %v2924 = vand.u32 %v2747, 2147483648
        %v2925 = vor.u32 1.1754944e-38, %v2924
        %v2926 = vsel %vm2923, %v2925, %v2921
        %v2927 = vmul.f32 %v2690, %v2926
        %v2928 = vrcp.pop %v2750
        %v2929 = vmul.f32 %v2750, %v2928
        %v2930 = vsub.f32 1.0, %v2929
        %v2931 = vmul.f32 %v2928, %v2930
        %v2932 = vadd.f32 %v2928, %v2931
        %vm2933 = vweird.f32 %v2750
        %vm2934 = vweird.f32 %v2928
        %vm2935 = vmor %vm2933, %vm2934
        %v2936 = vsel %vm2935, %v2928, %v2932
        %v2937 = vand.u32 2147483647, %v2750
        %vm2938 = vcmp.eq.f32.partialorder %v2937, 8.507059e+37
        %v2939 = vand.u32 %v2750, 2147483648
        %v2940 = vor.u32 1.1754944e-38, %v2939
        %v2941 = vsel %vm2938, %v2940, %v2936
        %v2942 = vmul.f32 %v2692, %v2941
        %v2943 = vrcp.pop %v2753
        %v2944 = vmul.f32 %v2753, %v2943
        %v2945 = vsub.f32 1.0, %v2944
        %v2946 = vmul.f32 %v2943, %v2945
        %v2947 = vadd.f32 %v2943, %v2946
        %vm2948 = vweird.f32 %v2753
        %vm2949 = vweird.f32 %v2943
        %vm2950 = vmor %vm2948, %vm2949
        %v2951 = vsel %vm2950, %v2943, %v2947
        %v2952 = vand.u32 2147483647, %v2753
        %vm2953 = vcmp.eq.f32.partialorder %v2952, 8.507059e+37
        %v2954 = vand.u32 %v2753, 2147483648
        %v2955 = vor.u32 1.1754944e-38, %v2954
        %v2956 = vsel %vm2953, %v2955, %v2951
        %v2957 = vmul.f32 %v2694, %v2956
        %v2958 = vrcp.pop %v2756
        %v2959 = vmul.f32 %v2756, %v2958
        %v2960 = vsub.f32 1.0, %v2959
        %v2961 = vmul.f32 %v2958, %v2960
        %v2962 = vadd.f32 %v2958, %v2961
        %vm2963 = vweird.f32 %v2756
        %vm2964 = vweird.f32 %v2958
        %vm2965 = vmor %vm2963, %vm2964
        %v2966 = vsel %vm2965, %v2958, %v2962
        %v2967 = vand.u32 2147483647, %v2756
        %vm2968 = vcmp.eq.f32.partialorder %v2967, 8.507059e+37
        %v2969 = vand.u32 %v2756, 2147483648
        %v2970 = vor.u32 1.1754944e-38, %v2969
        %v2971 = vsel %vm2968, %v2970, %v2966
        %v2972 = vmul.f32 %v2696, %v2971
        %v2973 = vrcp.pop %v2759
        %v2974 = vmul.f32 %v2759, %v2973
        %v2975 = vsub.f32 1.0, %v2974
        %v2976 = vmul.f32 %v2973, %v2975
        %v2977 = vadd.f32 %v2973, %v2976
        %vm2978 = vweird.f32 %v2759
        %vm2979 = vweird.f32 %v2973
        %vm2980 = vmor %vm2978, %vm2979
        %v2981 = vsel %vm2980, %v2973, %v2977
        %v2982 = vand.u32 2147483647, %v2759
        %vm2983 = vcmp.eq.f32.partialorder %v2982, 8.507059e+37
        %v2984 = vand.u32 %v2759, 2147483648
        %v2985 = vor.u32 1.1754944e-38, %v2984
        %v2986 = vsel %vm2983, %v2985, %v2981
        %v2987 = vmul.f32 %v2698, %v2986
        %v2988 = vrcp.pop %v2762
        %v2989 = vmul.f32 %v2762, %v2988
        %v2990 = vsub.f32 1.0, %v2989
        %v2991 = vmul.f32 %v2988, %v2990
        %v2992 = vadd.f32 %v2988, %v2991
        %vm2993 = vweird.f32 %v2762
        %vm2994 = vweird.f32 %v2988
        %vm2995 = vmor %vm2993, %vm2994
        %v2996 = vsel %vm2995, %v2988, %v2992
        %v2997 = vand.u32 2147483647, %v2762
        %vm2998 = vcmp.eq.f32.partialorder %v2997, 8.507059e+37
        %v2999 = vand.u32 %v2762, 2147483648
        %v3000 = vor.u32 1.1754944e-38, %v2999
        %v3001 = vsel %vm2998, %v3000, %v2996
        %v3002 = vmul.f32 %v2700, %v3001
        %v3003 = vrcp.pop %v2765
        %v3004 = vmul.f32 %v2765, %v3003
        %v3005 = vsub.f32 1.0, %v3004
        %v3006 = vmul.f32 %v3003, %v3005
        %v3007 = vadd.f32 %v3003, %v3006
        %vm3008 = vweird.f32 %v2765
        %vm3009 = vweird.f32 %v3003
        %vm3010 = vmor %vm3008, %vm3009
        %v3011 = vsel %vm3010, %v3003, %v3007
        %v3012 = vand.u32 2147483647, %v2765
        %vm3013 = vcmp.eq.f32.partialorder %v3012, 8.507059e+37
        %v3014 = vand.u32 %v2765, 2147483648
        %v3015 = vor.u32 1.1754944e-38, %v3014
        %v3016 = vsel %vm3013, %v3015, %v3011
        %v3017 = vmul.f32 %v2702, %v3016
        %v3018 = vrcp.pop %v2768
        %v3019 = vmul.f32 %v2768, %v3018
        %v3020 = vsub.f32 1.0, %v3019
        %v3021 = vmul.f32 %v3018, %v3020
        %v3022 = vadd.f32 %v3018, %v3021
        %vm3023 = vweird.f32 %v2768
        %vm3024 = vweird.f32 %v3018
        %vm3025 = vmor %vm3023, %vm3024
        %v3026 = vsel %vm3025, %v3018, %v3022
        %v3027 = vand.u32 2147483647, %v2768
        %vm3028 = vcmp.eq.f32.partialorder %v3027, 8.507059e+37
        %v3029 = vand.u32 %v2768, 2147483648
        %v3030 = vor.u32 1.1754944e-38, %v3029
        %v3031 = vsel %vm3028, %v3030, %v3026
        %v3032 = vmul.f32 %v2704, %v3031
        %v3033 = vrcp.pop %v2771
        %v3034 = vmul.f32 %v2771, %v3033
        %v3035 = vsub.f32 1.0, %v3034
        %v3036 = vmul.f32 %v3033, %v3035
        %v3037 = vadd.f32 %v3033, %v3036
        %vm3038 = vweird.f32 %v2771
        %vm3039 = vweird.f32 %v3033
        %vm3040 = vmor %vm3038, %vm3039
        %v3041 = vsel %vm3040, %v3033, %v3037
        %v3042 = vand.u32 2147483647, %v2771
        %vm3043 = vcmp.eq.f32.partialorder %v3042, 8.507059e+37
        %v3044 = vand.u32 %v2771, 2147483648
        %v3045 = vor.u32 1.1754944e-38, %v3044
        %v3046 = vsel %vm3043, %v3045, %v3041
        %v3047 = vmul.f32 %v2706, %v3046
        %v3048 = vrcp.pop %v2774
        %v3049 = vmul.f32 %v2774, %v3048
        %v3050 = vsub.f32 1.0, %v3049
        %v3051 = vmul.f32 %v3048, %v3050
        %v3052 = vadd.f32 %v3048, %v3051
        %vm3053 = vweird.f32 %v2774
        %vm3054 = vweird.f32 %v3048
        %vm3055 = vmor %vm3053, %vm3054
        %v3056 = vsel %vm3055, %v3048, %v3052
        %v3057 = vand.u32 2147483647, %v2774
        %vm3058 = vcmp.eq.f32.partialorder %v3057, 8.507059e+37
        %v3059 = vand.u32 %v2774, 2147483648
        %v3060 = vor.u32 1.1754944e-38, %v3059
        %v3061 = vsel %vm3058, %v3060, %v3056
        %v3062 = vmul.f32 %v2708, %v3061
        %v3063 = vrcp.pop %v2777
        %v3064 = vmul.f32 %v2777, %v3063
        %v3065 = vsub.f32 1.0, %v3064
        %v3066 = vmul.f32 %v3063, %v3065
        %v3067 = vadd.f32 %v3063, %v3066
        %vm3068 = vweird.f32 %v2777
        %vm3069 = vweird.f32 %v3063
        %vm3070 = vmor %vm3068, %vm3069
        %v3071 = vsel %vm3070, %v3063, %v3067
        %v3072 = vand.u32 2147483647, %v2777
        %vm3073 = vcmp.eq.f32.partialorder %v3072, 8.507059e+37
        %v3074 = vand.u32 %v2777, 2147483648
        %v3075 = vor.u32 1.1754944e-38, %v3074
        %v3076 = vsel %vm3073, %v3075, %v3071
        %v3077 = vmul.f32 %v2710, %v3076
        %v3078 = vrcp.pop %v2780
        %v3079 = vmul.f32 %v2780, %v3078
        %v3080 = vsub.f32 1.0, %v3079
        %v3081 = vmul.f32 %v3078, %v3080
        %v3082 = vadd.f32 %v3078, %v3081
        %vm3083 = vweird.f32 %v2780
        %vm3084 = vweird.f32 %v3078
        %vm3085 = vmor %vm3083, %vm3084
        %v3086 = vsel %vm3085, %v3078, %v3082
        %v3087 = vand.u32 2147483647, %v2780
        %vm3088 = vcmp.eq.f32.partialorder %v3087, 8.507059e+37
        %v3089 = vand.u32 %v2780, 2147483648
        %v3090 = vor.u32 1.1754944e-38, %v3089
        %v3091 = vsel %vm3088, %v3090, %v3086
        %v3092 = vmul.f32 %v2712, %v3091
        %v3093 = vrcp.pop %v2783
        %v3094 = vmul.f32 %v2783, %v3093
        %v3095 = vsub.f32 1.0, %v3094
        %v3096 = vmul.f32 %v3093, %v3095
        %v3097 = vadd.f32 %v3093, %v3096
        %vm3098 = vweird.f32 %v2783
        %vm3099 = vweird.f32 %v3093
        %vm3100 = vmor %vm3098, %vm3099
        %v3101 = vsel %vm3100, %v3093, %v3097
        %v3102 = vand.u32 2147483647, %v2783
        %vm3103 = vcmp.eq.f32.partialorder %v3102, 8.507059e+37
        %v3104 = vand.u32 %v2783, 2147483648
        %v3105 = vor.u32 1.1754944e-38, %v3104
        %v3106 = vsel %vm3103, %v3105, %v3101
        %v3107 = vmul.f32 %v2714, %v3106
        %v3108 = vrcp.pop %v2786
        %v3109 = vmul.f32 %v2786, %v3108
        %v3110 = vsub.f32 1.0, %v3109
        %v3111 = vmul.f32 %v3108, %v3110
        %v3112 = vadd.f32 %v3108, %v3111
        %vm3113 = vweird.f32 %v2786
        %vm3114 = vweird.f32 %v3108
        %vm3115 = vmor %vm3113, %vm3114
        %v3116 = vsel %vm3115, %v3108, %v3112
        %v3117 = vand.u32 2147483647, %v2786
        %vm3118 = vcmp.eq.f32.partialorder %v3117, 8.507059e+37
        %v3119 = vand.u32 %v2786, 2147483648
        %v3120 = vor.u32 1.1754944e-38, %v3119
        %v3121 = vsel %vm3118, %v3120, %v3116
        %v3122 = vmul.f32 %v2716, %v3121
        %v3123 = vrcp.pop %v2789
        %v3124 = vmul.f32 %v2789, %v3123
        %v3125 = vsub.f32 1.0, %v3124
        %v3126 = vmul.f32 %v3123, %v3125
        %v3127 = vadd.f32 %v3123, %v3126
        %vm3128 = vweird.f32 %v2789
        %vm3129 = vweird.f32 %v3123
        %vm3130 = vmor %vm3128, %vm3129
        %v3131 = vsel %vm3130, %v3123, %v3127
        %v3132 = vand.u32 2147483647, %v2789
        %vm3133 = vcmp.eq.f32.partialorder %v3132, 8.507059e+37
        %v3134 = vand.u32 %v2789, 2147483648
        %v3135 = vor.u32 1.1754944e-38, %v3134
        %v3136 = vsel %vm3133, %v3135, %v3131
        %v3137 = vmul.f32 %v2718, %v3136
        %v3138 = vrcp.pop %v2792
        %v3139 = vmul.f32 %v2792, %v3138
        %v3140 = vsub.f32 1.0, %v3139
        %v3141 = vmul.f32 %v3138, %v3140
        %v3142 = vadd.f32 %v3138, %v3141
        %vm3143 = vweird.f32 %v2792
        %vm3144 = vweird.f32 %v3138
        %vm3145 = vmor %vm3143, %vm3144
        %v3146 = vsel %vm3145, %v3138, %v3142
        %v3147 = vand.u32 2147483647, %v2792
        %vm3148 = vcmp.eq.f32.partialorder %v3147, 8.507059e+37
        %v3149 = vand.u32 %v2792, 2147483648
        %v3150 = vor.u32 1.1754944e-38, %v3149
        %v3151 = vsel %vm3148, %v3150, %v3146
        %v3152 = vmul.f32 %v2720, %v3151
        %3153 = vrot.lane.b32.xlu0 %v596, 56
        %v3154 = vpop.permute.xlu0 %3153
        %3155 = vrot.lane.b32.xlu0 %v599, 56
        %v3156 = vpop.permute.xlu0 %3155
        %v3160 = vsel %vm1112, %v2807, 0
        %v3163 = vsel %vm1112, %v2822, 0
        %3165 = vmatpush.msra.mxu0 0.0
        %3166 = vmatpush.msra.mxu0 0.0
        %3167 = vmatpush.msra.mxu0 0.0
        %3168 = vmatpush.msra.mxu0 0.0
        %3169 = vmatpush.msra.mxu0 0.0
        %3170 = vmatpush.msra.mxu0 0.0
        %3171 = vmatpush.msra.mxu0 0.0
        %3172 = vmatpush.msra.mxu0 0.0
        %3173 = vmatpush.msra.mxu0 0.0
        %3174 = vmatpush.msra.mxu0 0.0
        %3175 = vmatpush.msra.mxu0 0.0
        %3176 = vmatpush.msra.mxu0 0.0
        %3177 = vmatpush.msra.mxu0 0.0
        %3178 = vmatpush.msra.mxu0 0.0
        %3179 = vmatpush.msra.mxu0 %v3156
        %3180 = vmatpush.msra.mxu0 %v3154
        %3181 = vmatmul.f32.gmra.mxu0 %v3160
        %v3182 = vpop.f32.mrf.mxu0
        %v3183 = vadd.f32 0.0, %v3182
        %3184 = vmatmul.f32.gmra.mxu0 %v3163
        %v3185 = vpop.f32.mrf.mxu0
        %v3186 = vadd.f32 0.0, %v3185
        %3187 = vdwg.mxu0
        %3188 = vrot.lane.b32.xlu0 %v602, 56
        %v3189 = vpop.permute.xlu0 %3188
        %3190 = vrot.lane.b32.xlu0 %v605, 56
        %v3191 = vpop.permute.xlu0 %3190
        %v3195 = vsel %vm1112, %v2837, 0
        %v3198 = vsel %vm1112, %v2852, 0
        %3200 = vmatpush.msra.mxu0 0.0
        %3201 = vmatpush.msra.mxu0 0.0
        %3202 = vmatpush.msra.mxu0 0.0
        %3203 = vmatpush.msra.mxu0 0.0
        %3204 = vmatpush.msra.mxu0 0.0
        %3205 = vmatpush.msra.mxu0 0.0
        %3206 = vmatpush.msra.mxu0 0.0
        %3207 = vmatpush.msra.mxu0 0.0
        %3208 = vmatpush.msra.mxu0 0.0
        %3209 = vmatpush.msra.mxu0 0.0
        %3210 = vmatpush.msra.mxu0 0.0
        %3211 = vmatpush.msra.mxu0 0.0
        %3212 = vmatpush.msra.mxu0 0.0
        %3213 = vmatpush.msra.mxu0 0.0
        %3214 = vmatpush.msra.mxu0 %v3191
        %3215 = vmatpush.msra.mxu0 %v3189
        %3216 = vmatmul.f32.gmra.mxu0 %v3195
        %v3217 = vpop.f32.mrf.mxu0
        %v3218 = vadd.f32 0.0, %v3217
        %3219 = vmatmul.f32.gmra.mxu0 %v3198
        %v3220 = vpop.f32.mrf.mxu0
        %v3221 = vadd.f32 0.0, %v3220
        %3222 = vdwg.mxu0
        %3223 = vrot.lane.b32.xlu0 %v608, 56
        %v3224 = vpop.permute.xlu0 %3223
        %3225 = vrot.lane.b32.xlu0 %v611, 56
        %v3226 = vpop.permute.xlu0 %3225
        %v3230 = vsel %vm1112, %v2867, 0
        %v3233 = vsel %vm1112, %v2882, 0
        %3235 = vmatpush.msra.mxu0 0.0
        %3236 = vmatpush.msra.mxu0 0.0
        %3237 = vmatpush.msra.mxu0 0.0
        %3238 = vmatpush.msra.mxu0 0.0
        %3239 = vmatpush.msra.mxu0 0.0
        %3240 = vmatpush.msra.mxu0 0.0
        %3241 = vmatpush.msra.mxu0 0.0
        %3242 = vmatpush.msra.mxu0 0.0
        %3243 = vmatpush.msra.mxu0 0.0
        %3244 = vmatpush.msra.mxu0 0.0
        %3245 = vmatpush.msra.mxu0 0.0
        %3246 = vmatpush.msra.mxu0 0.0
        %3247 = vmatpush.msra.mxu0 0.0
        %3248 = vmatpush.msra.mxu0 0.0
        %3249 = vmatpush.msra.mxu0 %v3226
        %3250 = vmatpush.msra.mxu0 %v3224
        %3251 = vmatmul.f32.gmra.mxu0 %v3230
        %v3252 = vpop.f32.mrf.mxu0
        %v3253 = vadd.f32 0.0, %v3252
        %3254 = vmatmul.f32.gmra.mxu0 %v3233
        %v3255 = vpop.f32.mrf.mxu0
        %v3256 = vadd.f32 0.0, %v3255
        %3257 = vdwg.mxu0
        %3258 = vrot.lane.b32.xlu0 %v614, 56
        %v3259 = vpop.permute.xlu0 %3258
        %3260 = vrot.lane.b32.xlu0 %v617, 56
        %v3261 = vpop.permute.xlu0 %3260
        %v3265 = vsel %vm1112, %v2897, 0
        %v3268 = vsel %vm1112, %v2912, 0
        %3270 = vmatpush.msra.mxu0 0.0
        %3271 = vmatpush.msra.mxu0 0.0
        %3272 = vmatpush.msra.mxu0 0.0
        %3273 = vmatpush.msra.mxu0 0.0
        %3274 = vmatpush.msra.mxu0 0.0
        %3275 = vmatpush.msra.mxu0 0.0
        %3276 = vmatpush.msra.mxu0 0.0
        %3277 = vmatpush.msra.mxu0 0.0
        %3278 = vmatpush.msra.mxu0 0.0
        %3279 = vmatpush.msra.mxu0 0.0
        %3280 = vmatpush.msra.mxu0 0.0
        %3281 = vmatpush.msra.mxu0 0.0
        %3282 = vmatpush.msra.mxu0 0.0
        %3283 = vmatpush.msra.mxu0 0.0
        %3284 = vmatpush.msra.mxu0 %v3261
        %3285 = vmatpush.msra.mxu0 %v3259
        %3286 = vmatmul.f32.gmra.mxu0 %v3265
        %v3287 = vpop.f32.mrf.mxu0
        %v3288 = vadd.f32 0.0, %v3287
        %3289 = vmatmul.f32.gmra.mxu0 %v3268
        %v3290 = vpop.f32.mrf.mxu0
        %v3291 = vadd.f32 0.0, %v3290
        %3292 = vdwg.mxu0
        %3293 = vrot.lane.b32.xlu0 %v620, 56
        %v3294 = vpop.permute.xlu0 %3293
        %3295 = vrot.lane.b32.xlu0 %v623, 56
        %v3296 = vpop.permute.xlu0 %3295
        %v3300 = vsel %vm1112, %v2927, 0
        %v3303 = vsel %vm1112, %v2942, 0
        %3305 = vmatpush.msra.mxu0 0.0
        %3306 = vmatpush.msra.mxu0 0.0
        %3307 = vmatpush.msra.mxu0 0.0
        %3308 = vmatpush.msra.mxu0 0.0
        %3309 = vmatpush.msra.mxu0 0.0
        %3310 = vmatpush.msra.mxu0 0.0
        %3311 = vmatpush.msra.mxu0 0.0
        %3312 = vmatpush.msra.mxu0 0.0
        %3313 = vmatpush.msra.mxu0 0.0
        %3314 = vmatpush.msra.mxu0 0.0
        %3315 = vmatpush.msra.mxu0 0.0
        %3316 = vmatpush.msra.mxu0 0.0
        %3317 = vmatpush.msra.mxu0 0.0
        %3318 = vmatpush.msra.mxu0 0.0
        %3319 = vmatpush.msra.mxu0 %v3296
        %3320 = vmatpush.msra.mxu0 %v3294
        %3321 = vmatmul.f32.gmra.mxu0 %v3300
        %v3322 = vpop.f32.mrf.mxu0
        %v3323 = vadd.f32 0.0, %v3322
        %3324 = vmatmul.f32.gmra.mxu0 %v3303
        %v3325 = vpop.f32.mrf.mxu0
        %v3326 = vadd.f32 0.0, %v3325
        %3327 = vdwg.mxu0
        %3328 = vrot.lane.b32.xlu0 %v626, 56
        %v3329 = vpop.permute.xlu0 %3328
        %3330 = vrot.lane.b32.xlu0 %v629, 56
        %v3331 = vpop.permute.xlu0 %3330
        %v3335 = vsel %vm1112, %v2957, 0
        %v3338 = vsel %vm1112, %v2972, 0
        %3340 = vmatpush.msra.mxu0 0.0
        %3341 = vmatpush.msra.mxu0 0.0
        %3342 = vmatpush.msra.mxu0 0.0
        %3343 = vmatpush.msra.mxu0 0.0
        %3344 = vmatpush.msra.mxu0 0.0
        %3345 = vmatpush.msra.mxu0 0.0
        %3346 = vmatpush.msra.mxu0 0.0
        %3347 = vmatpush.msra.mxu0 0.0
        %3348 = vmatpush.msra.mxu0 0.0
        %3349 = vmatpush.msra.mxu0 0.0
        %3350 = vmatpush.msra.mxu0 0.0
        %3351 = vmatpush.msra.mxu0 0.0
        %3352 = vmatpush.msra.mxu0 0.0
        %3353 = vmatpush.msra.mxu0 0.0
        %3354 = vmatpush.msra.mxu0 %v3331
        %3355 = vmatpush.msra.mxu0 %v3329
        %3356 = vmatmul.f32.gmra.mxu0 %v3335
        %v3357 = vpop.f32.mrf.mxu0
        %v3358 = vadd.f32 0.0, %v3357
        %3359 = vmatmul.f32.gmra.mxu0 %v3338
        %v3360 = vpop.f32.mrf.mxu0
        %v3361 = vadd.f32 0.0, %v3360
        %3362 = vdwg.mxu0
        %3363 = vrot.lane.b32.xlu0 %v632, 56
        %v3364 = vpop.permute.xlu0 %3363
        %3365 = vrot.lane.b32.xlu0 %v635, 56
        %v3366 = vpop.permute.xlu0 %3365
        %v3370 = vsel %vm1112, %v2987, 0
        %v3373 = vsel %vm1112, %v3002, 0
        %3375 = vmatpush.msra.mxu0 0.0
        %3376 = vmatpush.msra.mxu0 0.0
        %3377 = vmatpush.msra.mxu0 0.0
        %3378 = vmatpush.msra.mxu0 0.0
        %3379 = vmatpush.msra.mxu0 0.0
        %3380 = vmatpush.msra.mxu0 0.0
        %3381 = vmatpush.msra.mxu0 0.0
        %3382 = vmatpush.msra.mxu0 0.0
        %3383 = vmatpush.msra.mxu0 0.0
        %3384 = vmatpush.msra.mxu0 0.0
        %3385 = vmatpush.msra.mxu0 0.0
        %3386 = vmatpush.msra.mxu0 0.0
        %3387 = vmatpush.msra.mxu0 0.0
        %3388 = vmatpush.msra.mxu0 0.0
        %3389 = vmatpush.msra.mxu0 %v3366
        %3390 = vmatpush.msra.mxu0 %v3364
        %3391 = vmatmul.f32.gmra.mxu0 %v3370
        %v3392 = vpop.f32.mrf.mxu0
        %v3393 = vadd.f32 0.0, %v3392
        %3394 = vmatmul.f32.gmra.mxu0 %v3373
        %v3395 = vpop.f32.mrf.mxu0
        %v3396 = vadd.f32 0.0, %v3395
        %3397 = vdwg.mxu0
        %3398 = vrot.lane.b32.xlu0 %v638, 56
        %v3399 = vpop.permute.xlu0 %3398
        %3400 = vrot.lane.b32.xlu0 %v641, 56
        %v3401 = vpop.permute.xlu0 %3400
        %v3405 = vsel %vm1112, %v3017, 0
        %v3408 = vsel %vm1112, %v3032, 0
        %3410 = vmatpush.msra.mxu0 0.0
        %3411 = vmatpush.msra.mxu0 0.0
        %3412 = vmatpush.msra.mxu0 0.0
        %3413 = vmatpush.msra.mxu0 0.0
        %3414 = vmatpush.msra.mxu0 0.0
        %3415 = vmatpush.msra.mxu0 0.0
        %3416 = vmatpush.msra.mxu0 0.0
        %3417 = vmatpush.msra.mxu0 0.0
        %3418 = vmatpush.msra.mxu0 0.0
        %3419 = vmatpush.msra.mxu0 0.0
        %3420 = vmatpush.msra.mxu0 0.0
        %3421 = vmatpush.msra.mxu0 0.0
        %3422 = vmatpush.msra.mxu0 0.0
        %3423 = vmatpush.msra.mxu0 0.0
        %3424 = vmatpush.msra.mxu0 %v3401
        %3425 = vmatpush.msra.mxu0 %v3399
        %3426 = vmatmul.f32.gmra.mxu0 %v3405
        %v3427 = vpop.f32.mrf.mxu0
        %v3428 = vadd.f32 0.0, %v3427
        %3429 = vmatmul.f32.gmra.mxu0 %v3408
        %v3430 = vpop.f32.mrf.mxu0
        %v3431 = vadd.f32 0.0, %v3430
        %3432 = vdwg.mxu0
        %3433 = vrot.lane.b32.xlu0 %v644, 56
        %v3434 = vpop.permute.xlu0 %3433
        %3435 = vrot.lane.b32.xlu0 %v647, 56
        %v3436 = vpop.permute.xlu0 %3435
        %v3440 = vsel %vm1112, %v3047, 0
        %v3443 = vsel %vm1112, %v3062, 0
        %3445 = vmatpush.msra.mxu0 0.0
        %3446 = vmatpush.msra.mxu0 0.0
        %3447 = vmatpush.msra.mxu0 0.0
        %3448 = vmatpush.msra.mxu0 0.0
        %3449 = vmatpush.msra.mxu0 0.0
        %3450 = vmatpush.msra.mxu0 0.0
        %3451 = vmatpush.msra.mxu0 0.0
        %3452 = vmatpush.msra.mxu0 0.0
        %3453 = vmatpush.msra.mxu0 0.0
        %3454 = vmatpush.msra.mxu0 0.0
        %3455 = vmatpush.msra.mxu0 0.0
        %3456 = vmatpush.msra.mxu0 0.0
        %3457 = vmatpush.msra.mxu0 0.0
        %3458 = vmatpush.msra.mxu0 0.0
        %3459 = vmatpush.msra.mxu0 %v3436
        %3460 = vmatpush.msra.mxu0 %v3434
        %3461 = vmatmul.f32.gmra.mxu0 %v3440
        %v3462 = vpop.f32.mrf.mxu0
        %v3463 = vadd.f32 0.0, %v3462
        %3464 = vmatmul.f32.gmra.mxu0 %v3443
        %v3465 = vpop.f32.mrf.mxu0
        %v3466 = vadd.f32 0.0, %v3465
        %3467 = vdwg.mxu0
        %3468 = vrot.lane.b32.xlu0 %v650, 56
        %v3469 = vpop.permute.xlu0 %3468
        %3470 = vrot.lane.b32.xlu0 %v653, 56
        %v3471 = vpop.permute.xlu0 %3470
        %v3475 = vsel %vm1112, %v3077, 0
        %v3478 = vsel %vm1112, %v3092, 0
        %3480 = vmatpush.msra.mxu0 0.0
        %3481 = vmatpush.msra.mxu0 0.0
        %3482 = vmatpush.msra.mxu0 0.0
        %3483 = vmatpush.msra.mxu0 0.0
        %3484 = vmatpush.msra.mxu0 0.0
        %3485 = vmatpush.msra.mxu0 0.0
        %3486 = vmatpush.msra.mxu0 0.0
        %3487 = vmatpush.msra.mxu0 0.0
        %3488 = vmatpush.msra.mxu0 0.0
        %3489 = vmatpush.msra.mxu0 0.0
        %3490 = vmatpush.msra.mxu0 0.0
        %3491 = vmatpush.msra.mxu0 0.0
        %3492 = vmatpush.msra.mxu0 0.0
        %3493 = vmatpush.msra.mxu0 0.0
        %3494 = vmatpush.msra.mxu0 %v3471
        %3495 = vmatpush.msra.mxu0 %v3469
        %3496 = vmatmul.f32.gmra.mxu0 %v3475
        %v3497 = vpop.f32.mrf.mxu0
        %v3498 = vadd.f32 0.0, %v3497
        %3499 = vmatmul.f32.gmra.mxu0 %v3478
        %v3500 = vpop.f32.mrf.mxu0
        %v3501 = vadd.f32 0.0, %v3500
        %3502 = vdwg.mxu0
        %3503 = vrot.lane.b32.xlu0 %v656, 56
        %v3504 = vpop.permute.xlu0 %3503
        %3505 = vrot.lane.b32.xlu0 %v659, 56
        %v3506 = vpop.permute.xlu0 %3505
        %v3510 = vsel %vm1112, %v3107, 0
        %v3513 = vsel %vm1112, %v3122, 0
        %3515 = vmatpush.msra.mxu0 0.0
        %3516 = vmatpush.msra.mxu0 0.0
        %3517 = vmatpush.msra.mxu0 0.0
        %3518 = vmatpush.msra.mxu0 0.0
        %3519 = vmatpush.msra.mxu0 0.0
        %3520 = vmatpush.msra.mxu0 0.0
        %3521 = vmatpush.msra.mxu0 0.0
        %3522 = vmatpush.msra.mxu0 0.0
        %3523 = vmatpush.msra.mxu0 0.0
        %3524 = vmatpush.msra.mxu0 0.0
        %3525 = vmatpush.msra.mxu0 0.0
        %3526 = vmatpush.msra.mxu0 0.0
        %3527 = vmatpush.msra.mxu0 0.0
        %3528 = vmatpush.msra.mxu0 0.0
        %3529 = vmatpush.msra.mxu0 %v3506
        %3530 = vmatpush.msra.mxu0 %v3504
        %3531 = vmatmul.f32.gmra.mxu0 %v3510
        %v3532 = vpop.f32.mrf.mxu0
        %v3533 = vadd.f32 0.0, %v3532
        %3534 = vmatmul.f32.gmra.mxu0 %v3513
        %v3535 = vpop.f32.mrf.mxu0
        %v3536 = vadd.f32 0.0, %v3535
        %3537 = vdwg.mxu0
        %3538 = vrot.lane.b32.xlu0 %v662, 56
        %v3539 = vpop.permute.xlu0 %3538
        %3540 = vrot.lane.b32.xlu0 %v665, 56
        %v3541 = vpop.permute.xlu0 %3540
        %v3545 = vsel %vm1112, %v3137, 0
        %v3548 = vsel %vm1112, %v3152, 0
        %3550 = vmatpush.msra.mxu0 0.0
        %3551 = vmatpush.msra.mxu0 0.0
        %3552 = vmatpush.msra.mxu0 0.0
        %3553 = vmatpush.msra.mxu0 0.0
        %3554 = vmatpush.msra.mxu0 0.0
        %3555 = vmatpush.msra.mxu0 0.0
        %3556 = vmatpush.msra.mxu0 0.0
        %3557 = vmatpush.msra.mxu0 0.0
        %3558 = vmatpush.msra.mxu0 0.0
        %3559 = vmatpush.msra.mxu0 0.0
        %3560 = vmatpush.msra.mxu0 0.0
        %3561 = vmatpush.msra.mxu0 0.0
        %3562 = vmatpush.msra.mxu0 0.0
        %3563 = vmatpush.msra.mxu0 0.0
        %3564 = vmatpush.msra.mxu0 %v3541
        %3565 = vmatpush.msra.mxu0 %v3539
        %3566 = vmatmul.f32.gmra.mxu0 %v3545
        %v3567 = vpop.f32.mrf.mxu0
        %v3568 = vadd.f32 0.0, %v3567
        %3569 = vmatmul.f32.gmra.mxu0 %v3548
        %v3570 = vpop.f32.mrf.mxu0
        %v3571 = vadd.f32 0.0, %v3570
        %3572 = vdwg.mxu0
        %3573 = vrot.lane.b32.xlu0 %v596, 112
        %v3574 = vpop.permute.xlu0 %3573
        %3575 = vrot.lane.b32.xlu0 %v599, 112
        %v3576 = vpop.permute.xlu0 %3575
        %3577 = vrot.lane.b32.xlu0 %v596, 80
        %v3578 = vpop.permute.xlu0 %3577
        %3579 = vrot.lane.b32.xlu0 %v599, 80
        %v3580 = vpop.permute.xlu0 %3579
        %v3581 = vsel %vm673, %v3574, 0
        %v3583 = vsel %vm673, %v3576, 0
        %v3585 = vsel %vm673, %v3578, 0
        %v3587 = vsel %vm673, %v3580, 0
        %3589 = vmatpush.xpose.msra.mxu0 0.0
        %3590 = vmatpush.xpose.msra.mxu0 0.0
        %3591 = vmatpush.xpose.msra.mxu0 0.0
        %3592 = vmatpush.xpose.msra.mxu0 0.0
        %3593 = vmatpush.xpose.msra.mxu0 0.0
        %3594 = vmatpush.xpose.msra.mxu0 0.0
        %3595 = vmatpush.xpose.msra.mxu0 0.0
        %3596 = vmatpush.xpose.msra.mxu0 0.0
        %3597 = vmatpush.xpose.msra.mxu0 0.0
        %3598 = vmatpush.xpose.msra.mxu0 0.0
        %3599 = vmatpush.xpose.msra.mxu0 0.0
        %3600 = vmatpush.xpose.msra.mxu0 0.0
        %3601 = vmatpush.xpose.msra.mxu0 0.0
        %3602 = vmatpush.xpose.msra.mxu0 0.0
        %3603 = vmatpush.xpose.msra.mxu0 %v3587
        %3604 = vmatpush.xpose.msra.mxu0 %v3585
        %3605 = vmatmul.f32.gmra.mxu0 %v3581
        %v3606 = vpop.f32.mrf.mxu0
        %v3607 = vadd.f32 0.0, %v3606
        %3608 = vmatmul.f32.gmra.mxu0 %v3583
        %v3609 = vpop.f32.mrf.mxu0
        %v3610 = vadd.f32 0.0, %v3609
        %3611 = vdwg.mxu0
        %3612 = vrot.lane.b32.xlu0 %v602, 112
        %v3613 = vpop.permute.xlu0 %3612
        %3614 = vrot.lane.b32.xlu0 %v605, 112
        %v3615 = vpop.permute.xlu0 %3614
        %3616 = vrot.lane.b32.xlu0 %v602, 80
        %v3617 = vpop.permute.xlu0 %3616
        %3618 = vrot.lane.b32.xlu0 %v605, 80
        %v3619 = vpop.permute.xlu0 %3618
        %v3620 = vsel %vm673, %v3613, 0
        %v3622 = vsel %vm673, %v3615, 0
        %v3624 = vsel %vm673, %v3617, 0
        %v3626 = vsel %vm673, %v3619, 0
        %3628 = vmatpush.xpose.msra.mxu0 0.0
        %3629 = vmatpush.xpose.msra.mxu0 0.0
        %3630 = vmatpush.xpose.msra.mxu0 0.0
        %3631 = vmatpush.xpose.msra.mxu0 0.0
        %3632 = vmatpush.xpose.msra.mxu0 0.0
        %3633 = vmatpush.xpose.msra.mxu0 0.0
        %3634 = vmatpush.xpose.msra.mxu0 0.0
        %3635 = vmatpush.xpose.msra.mxu0 0.0
        %3636 = vmatpush.xpose.msra.mxu0 0.0
        %3637 = vmatpush.xpose.msra.mxu0 0.0
        %3638 = vmatpush.xpose.msra.mxu0 0.0
        %3639 = vmatpush.xpose.msra.mxu0 0.0
        %3640 = vmatpush.xpose.msra.mxu0 0.0
        %3641 = vmatpush.xpose.msra.mxu0 0.0
        %3642 = vmatpush.xpose.msra.mxu0 %v3626
        %3643 = vmatpush.xpose.msra.mxu0 %v3624
        %3644 = vmatmul.f32.gmra.mxu0 %v3620
        %v3645 = vpop.f32.mrf.mxu0
        %v3646 = vadd.f32 0.0, %v3645
        %3647 = vmatmul.f32.gmra.mxu0 %v3622
        %v3648 = vpop.f32.mrf.mxu0
        %v3649 = vadd.f32 0.0, %v3648
        %3650 = vdwg.mxu0
        %3651 = vrot.lane.b32.xlu0 %v608, 112
        %v3652 = vpop.permute.xlu0 %3651
        %3653 = vrot.lane.b32.xlu0 %v611, 112
        %v3654 = vpop.permute.xlu0 %3653
        %3655 = vrot.lane.b32.xlu0 %v608, 80
        %v3656 = vpop.permute.xlu0 %3655
        %3657 = vrot.lane.b32.xlu0 %v611, 80
        %v3658 = vpop.permute.xlu0 %3657
        %v3659 = vsel %vm673, %v3652, 0
        %v3661 = vsel %vm673, %v3654, 0
        %v3663 = vsel %vm673, %v3656, 0
        %v3665 = vsel %vm673, %v3658, 0
        %3667 = vmatpush.xpose.msra.mxu0 0.0
        %3668 = vmatpush.xpose.msra.mxu0 0.0
        %3669 = vmatpush.xpose.msra.mxu0 0.0
        %3670 = vmatpush.xpose.msra.mxu0 0.0
        %3671 = vmatpush.xpose.msra.mxu0 0.0
        %3672 = vmatpush.xpose.msra.mxu0 0.0
        %3673 = vmatpush.xpose.msra.mxu0 0.0
        %3674 = vmatpush.xpose.msra.mxu0 0.0
        %3675 = vmatpush.xpose.msra.mxu0 0.0
        %3676 = vmatpush.xpose.msra.mxu0 0.0
        %3677 = vmatpush.xpose.msra.mxu0 0.0
        %3678 = vmatpush.xpose.msra.mxu0 0.0
        %3679 = vmatpush.xpose.msra.mxu0 0.0
        %3680 = vmatpush.xpose.msra.mxu0 0.0
        %3681 = vmatpush.xpose.msra.mxu0 %v3665
        %3682 = vmatpush.xpose.msra.mxu0 %v3663
        %3683 = vmatmul.f32.gmra.mxu0 %v3659
        %v3684 = vpop.f32.mrf.mxu0
        %v3685 = vadd.f32 0.0, %v3684
        %3686 = vmatmul.f32.gmra.mxu0 %v3661
        %v3687 = vpop.f32.mrf.mxu0
        %v3688 = vadd.f32 0.0, %v3687
        %3689 = vdwg.mxu0
        %3690 = vrot.lane.b32.xlu0 %v614, 112
        %v3691 = vpop.permute.xlu0 %3690
        %3692 = vrot.lane.b32.xlu0 %v617, 112
        %v3693 = vpop.permute.xlu0 %3692
        %3694 = vrot.lane.b32.xlu0 %v614, 80
        %v3695 = vpop.permute.xlu0 %3694
        %3696 = vrot.lane.b32.xlu0 %v617, 80
        %v3697 = vpop.permute.xlu0 %3696
        %v3698 = vsel %vm673, %v3691, 0
        %v3700 = vsel %vm673, %v3693, 0
        %v3702 = vsel %vm673, %v3695, 0
        %v3704 = vsel %vm673, %v3697, 0
        %3706 = vmatpush.xpose.msra.mxu0 0.0
        %3707 = vmatpush.xpose.msra.mxu0 0.0
        %3708 = vmatpush.xpose.msra.mxu0 0.0
        %3709 = vmatpush.xpose.msra.mxu0 0.0
        %3710 = vmatpush.xpose.msra.mxu0 0.0
        %3711 = vmatpush.xpose.msra.mxu0 0.0
        %3712 = vmatpush.xpose.msra.mxu0 0.0
        %3713 = vmatpush.xpose.msra.mxu0 0.0
        %3714 = vmatpush.xpose.msra.mxu0 0.0
        %3715 = vmatpush.xpose.msra.mxu0 0.0
        %3716 = vmatpush.xpose.msra.mxu0 0.0
        %3717 = vmatpush.xpose.msra.mxu0 0.0
        %3718 = vmatpush.xpose.msra.mxu0 0.0
        %3719 = vmatpush.xpose.msra.mxu0 0.0
        %3720 = vmatpush.xpose.msra.mxu0 %v3704
        %3721 = vmatpush.xpose.msra.mxu0 %v3702
        %3722 = vmatmul.f32.gmra.mxu0 %v3698
        %v3723 = vpop.f32.mrf.mxu0
        %v3724 = vadd.f32 0.0, %v3723
        %3725 = vmatmul.f32.gmra.mxu0 %v3700
        %v3726 = vpop.f32.mrf.mxu0
        %v3727 = vadd.f32 0.0, %v3726
        %3728 = vdwg.mxu0
        %3729 = vrot.lane.b32.xlu0 %v620, 112
        %v3730 = vpop.permute.xlu0 %3729
        %3731 = vrot.lane.b32.xlu0 %v623, 112
        %v3732 = vpop.permute.xlu0 %3731
        %3733 = vrot.lane.b32.xlu0 %v620, 80
        %v3734 = vpop.permute.xlu0 %3733
        %3735 = vrot.lane.b32.xlu0 %v623, 80
        %v3736 = vpop.permute.xlu0 %3735
        %v3737 = vsel %vm673, %v3730, 0
        %v3739 = vsel %vm673, %v3732, 0
        %v3741 = vsel %vm673, %v3734, 0
        %v3743 = vsel %vm673, %v3736, 0
        %3745 = vmatpush.xpose.msra.mxu0 0.0
        %3746 = vmatpush.xpose.msra.mxu0 0.0
        %3747 = vmatpush.xpose.msra.mxu0 0.0
        %3748 = vmatpush.xpose.msra.mxu0 0.0
        %3749 = vmatpush.xpose.msra.mxu0 0.0
        %3750 = vmatpush.xpose.msra.mxu0 0.0
        %3751 = vmatpush.xpose.msra.mxu0 0.0
        %3752 = vmatpush.xpose.msra.mxu0 0.0
        %3753 = vmatpush.xpose.msra.mxu0 0.0
        %3754 = vmatpush.xpose.msra.mxu0 0.0
        %3755 = vmatpush.xpose.msra.mxu0 0.0
        %3756 = vmatpush.xpose.msra.mxu0 0.0
        %3757 = vmatpush.xpose.msra.mxu0 0.0
        %3758 = vmatpush.xpose.msra.mxu0 0.0
        %3759 = vmatpush.xpose.msra.mxu0 %v3743
        %3760 = vmatpush.xpose.msra.mxu0 %v3741
        %3761 = vmatmul.f32.gmra.mxu0 %v3737
        %v3762 = vpop.f32.mrf.mxu0
        %v3763 = vadd.f32 0.0, %v3762
        %3764 = vmatmul.f32.gmra.mxu0 %v3739
        %v3765 = vpop.f32.mrf.mxu0
        %v3766 = vadd.f32 0.0, %v3765
        %3767 = vdwg.mxu0
        %3768 = vrot.lane.b32.xlu0 %v626, 112
        %v3769 = vpop.permute.xlu0 %3768
        %3770 = vrot.lane.b32.xlu0 %v629, 112
        %v3771 = vpop.permute.xlu0 %3770
        %3772 = vrot.lane.b32.xlu0 %v626, 80
        %v3773 = vpop.permute.xlu0 %3772
        %3774 = vrot.lane.b32.xlu0 %v629, 80
        %v3775 = vpop.permute.xlu0 %3774
        %v3776 = vsel %vm673, %v3769, 0
        %v3778 = vsel %vm673, %v3771, 0
        %v3780 = vsel %vm673, %v3773, 0
        %v3782 = vsel %vm673, %v3775, 0
        %3784 = vmatpush.xpose.msra.mxu0 0.0
        %3785 = vmatpush.xpose.msra.mxu0 0.0
        %3786 = vmatpush.xpose.msra.mxu0 0.0
        %3787 = vmatpush.xpose.msra.mxu0 0.0
        %3788 = vmatpush.xpose.msra.mxu0 0.0
        %3789 = vmatpush.xpose.msra.mxu0 0.0
        %3790 = vmatpush.xpose.msra.mxu0 0.0
        %3791 = vmatpush.xpose.msra.mxu0 0.0
        %3792 = vmatpush.xpose.msra.mxu0 0.0
        %3793 = vmatpush.xpose.msra.mxu0 0.0
        %3794 = vmatpush.xpose.msra.mxu0 0.0
        %3795 = vmatpush.xpose.msra.mxu0 0.0
        %3796 = vmatpush.xpose.msra.mxu0 0.0
        %3797 = vmatpush.xpose.msra.mxu0 0.0
        %3798 = vmatpush.xpose.msra.mxu0 %v3782
        %3799 = vmatpush.xpose.msra.mxu0 %v3780
        %3800 = vmatmul.f32.gmra.mxu0 %v3776
        %v3801 = vpop.f32.mrf.mxu0
        %v3802 = vadd.f32 0.0, %v3801
        %3803 = vmatmul.f32.gmra.mxu0 %v3778
        %v3804 = vpop.f32.mrf.mxu0
        %v3805 = vadd.f32 0.0, %v3804
        %3806 = vdwg.mxu0
        %3807 = vrot.lane.b32.xlu0 %v632, 112
        %v3808 = vpop.permute.xlu0 %3807
        %3809 = vrot.lane.b32.xlu0 %v635, 112
        %v3810 = vpop.permute.xlu0 %3809
        %3811 = vrot.lane.b32.xlu0 %v632, 80
        %v3812 = vpop.permute.xlu0 %3811
        %3813 = vrot.lane.b32.xlu0 %v635, 80
        %v3814 = vpop.permute.xlu0 %3813
        %v3815 = vsel %vm673, %v3808, 0
        %v3817 = vsel %vm673, %v3810, 0
        %v3819 = vsel %vm673, %v3812, 0
        %v3821 = vsel %vm673, %v3814, 0
        %3823 = vmatpush.xpose.msra.mxu0 0.0
        %3824 = vmatpush.xpose.msra.mxu0 0.0
        %3825 = vmatpush.xpose.msra.mxu0 0.0
        %3826 = vmatpush.xpose.msra.mxu0 0.0
        %3827 = vmatpush.xpose.msra.mxu0 0.0
        %3828 = vmatpush.xpose.msra.mxu0 0.0
        %3829 = vmatpush.xpose.msra.mxu0 0.0
        %3830 = vmatpush.xpose.msra.mxu0 0.0
        %3831 = vmatpush.xpose.msra.mxu0 0.0
        %3832 = vmatpush.xpose.msra.mxu0 0.0
        %3833 = vmatpush.xpose.msra.mxu0 0.0
        %3834 = vmatpush.xpose.msra.mxu0 0.0
        %3835 = vmatpush.xpose.msra.mxu0 0.0
        %3836 = vmatpush.xpose.msra.mxu0 0.0
        %3837 = vmatpush.xpose.msra.mxu0 %v3821
        %3838 = vmatpush.xpose.msra.mxu0 %v3819
        %3839 = vmatmul.f32.gmra.mxu0 %v3815
        %v3840 = vpop.f32.mrf.mxu0
        %v3841 = vadd.f32 0.0, %v3840
        %3842 = vmatmul.f32.gmra.mxu0 %v3817
        %v3843 = vpop.f32.mrf.mxu0
        %v3844 = vadd.f32 0.0, %v3843
        %3845 = vdwg.mxu0
        %3846 = vrot.lane.b32.xlu0 %v638, 112
        %v3847 = vpop.permute.xlu0 %3846
        %3848 = vrot.lane.b32.xlu0 %v641, 112
        %v3849 = vpop.permute.xlu0 %3848
        %3850 = vrot.lane.b32.xlu0 %v638, 80
        %v3851 = vpop.permute.xlu0 %3850
        %3852 = vrot.lane.b32.xlu0 %v641, 80
        %v3853 = vpop.permute.xlu0 %3852
        %v3854 = vsel %vm673, %v3847, 0
        %v3856 = vsel %vm673, %v3849, 0
        %v3858 = vsel %vm673, %v3851, 0
        %v3860 = vsel %vm673, %v3853, 0
        %3862 = vmatpush.xpose.msra.mxu0 0.0
        %3863 = vmatpush.xpose.msra.mxu0 0.0
        %3864 = vmatpush.xpose.msra.mxu0 0.0
        %3865 = vmatpush.xpose.msra.mxu0 0.0
        %3866 = vmatpush.xpose.msra.mxu0 0.0
        %3867 = vmatpush.xpose.msra.mxu0 0.0
        %3868 = vmatpush.xpose.msra.mxu0 0.0
        %3869 = vmatpush.xpose.msra.mxu0 0.0
        %3870 = vmatpush.xpose.msra.mxu0 0.0
        %3871 = vmatpush.xpose.msra.mxu0 0.0
        %3872 = vmatpush.xpose.msra.mxu0 0.0
        %3873 = vmatpush.xpose.msra.mxu0 0.0
        %3874 = vmatpush.xpose.msra.mxu0 0.0
        %3875 = vmatpush.xpose.msra.mxu0 0.0
        %3876 = vmatpush.xpose.msra.mxu0 %v3860
        %3877 = vmatpush.xpose.msra.mxu0 %v3858
        %3878 = vmatmul.f32.gmra.mxu0 %v3854
        %v3879 = vpop.f32.mrf.mxu0
        %v3880 = vadd.f32 0.0, %v3879
        %3881 = vmatmul.f32.gmra.mxu0 %v3856
        %v3882 = vpop.f32.mrf.mxu0
        %v3883 = vadd.f32 0.0, %v3882
        %3884 = vdwg.mxu0
        %3885 = vrot.lane.b32.xlu0 %v644, 112
        %v3886 = vpop.permute.xlu0 %3885
        %3887 = vrot.lane.b32.xlu0 %v647, 112
        %v3888 = vpop.permute.xlu0 %3887
        %3889 = vrot.lane.b32.xlu0 %v644, 80
        %v3890 = vpop.permute.xlu0 %3889
        %3891 = vrot.lane.b32.xlu0 %v647, 80
        %v3892 = vpop.permute.xlu0 %3891
        %v3893 = vsel %vm673, %v3886, 0
        %v3895 = vsel %vm673, %v3888, 0
        %v3897 = vsel %vm673, %v3890, 0
        %v3899 = vsel %vm673, %v3892, 0
        %3901 = vmatpush.xpose.msra.mxu0 0.0
        %3902 = vmatpush.xpose.msra.mxu0 0.0
        %3903 = vmatpush.xpose.msra.mxu0 0.0
        %3904 = vmatpush.xpose.msra.mxu0 0.0
        %3905 = vmatpush.xpose.msra.mxu0 0.0
        %3906 = vmatpush.xpose.msra.mxu0 0.0
        %3907 = vmatpush.xpose.msra.mxu0 0.0
        %3908 = vmatpush.xpose.msra.mxu0 0.0
        %3909 = vmatpush.xpose.msra.mxu0 0.0
        %3910 = vmatpush.xpose.msra.mxu0 0.0
        %3911 = vmatpush.xpose.msra.mxu0 0.0
        %3912 = vmatpush.xpose.msra.mxu0 0.0
        %3913 = vmatpush.xpose.msra.mxu0 0.0
        %3914 = vmatpush.xpose.msra.mxu0 0.0
        %3915 = vmatpush.xpose.msra.mxu0 %v3899
        %3916 = vmatpush.xpose.msra.mxu0 %v3897
        %3917 = vmatmul.f32.gmra.mxu0 %v3893
        %v3918 = vpop.f32.mrf.mxu0
        %v3919 = vadd.f32 0.0, %v3918
        %3920 = vmatmul.f32.gmra.mxu0 %v3895
        %v3921 = vpop.f32.mrf.mxu0
        %v3922 = vadd.f32 0.0, %v3921
        %3923 = vdwg.mxu0
        %3924 = vrot.lane.b32.xlu0 %v650, 112
        %v3925 = vpop.permute.xlu0 %3924
        %3926 = vrot.lane.b32.xlu0 %v653, 112
        %v3927 = vpop.permute.xlu0 %3926
        %3928 = vrot.lane.b32.xlu0 %v650, 80
        %v3929 = vpop.permute.xlu0 %3928
        %3930 = vrot.lane.b32.xlu0 %v653, 80
        %v3931 = vpop.permute.xlu0 %3930
        %v3932 = vsel %vm673, %v3925, 0
        %v3934 = vsel %vm673, %v3927, 0
        %v3936 = vsel %vm673, %v3929, 0
        %v3938 = vsel %vm673, %v3931, 0
        %3940 = vmatpush.xpose.msra.mxu0 0.0
        %3941 = vmatpush.xpose.msra.mxu0 0.0
        %3942 = vmatpush.xpose.msra.mxu0 0.0
        %3943 = vmatpush.xpose.msra.mxu0 0.0
        %3944 = vmatpush.xpose.msra.mxu0 0.0
        %3945 = vmatpush.xpose.msra.mxu0 0.0
        %3946 = vmatpush.xpose.msra.mxu0 0.0
        %3947 = vmatpush.xpose.msra.mxu0 0.0
        %3948 = vmatpush.xpose.msra.mxu0 0.0
        %3949 = vmatpush.xpose.msra.mxu0 0.0
        %3950 = vmatpush.xpose.msra.mxu0 0.0
        %3951 = vmatpush.xpose.msra.mxu0 0.0
        %3952 = vmatpush.xpose.msra.mxu0 0.0
        %3953 = vmatpush.xpose.msra.mxu0 0.0
        %3954 = vmatpush.xpose.msra.mxu0 %v3938
        %3955 = vmatpush.xpose.msra.mxu0 %v3936
        %3956 = vmatmul.f32.gmra.mxu0 %v3932
        %v3957 = vpop.f32.mrf.mxu0
        %v3958 = vadd.f32 0.0, %v3957
        %3959 = vmatmul.f32.gmra.mxu0 %v3934
        %v3960 = vpop.f32.mrf.mxu0
        %v3961 = vadd.f32 0.0, %v3960
        %3962 = vdwg.mxu0
        %3963 = vrot.lane.b32.xlu0 %v656, 112
        %v3964 = vpop.permute.xlu0 %3963
        %3965 = vrot.lane.b32.xlu0 %v659, 112
        %v3966 = vpop.permute.xlu0 %3965
        %3967 = vrot.lane.b32.xlu0 %v656, 80
        %v3968 = vpop.permute.xlu0 %3967
        %3969 = vrot.lane.b32.xlu0 %v659, 80
        %v3970 = vpop.permute.xlu0 %3969
        %v3971 = vsel %vm673, %v3964, 0
        %v3973 = vsel %vm673, %v3966, 0
        %v3975 = vsel %vm673, %v3968, 0
        %v3977 = vsel %vm673, %v3970, 0
        %3979 = vmatpush.xpose.msra.mxu0 0.0
        %3980 = vmatpush.xpose.msra.mxu0 0.0
        %3981 = vmatpush.xpose.msra.mxu0 0.0
        %3982 = vmatpush.xpose.msra.mxu0 0.0
        %3983 = vmatpush.xpose.msra.mxu0 0.0
        %3984 = vmatpush.xpose.msra.mxu0 0.0
        %3985 = vmatpush.xpose.msra.mxu0 0.0
        %3986 = vmatpush.xpose.msra.mxu0 0.0
        %3987 = vmatpush.xpose.msra.mxu0 0.0
        %3988 = vmatpush.xpose.msra.mxu0 0.0
        %3989 = vmatpush.xpose.msra.mxu0 0.0
        %3990 = vmatpush.xpose.msra.mxu0 0.0
        %3991 = vmatpush.xpose.msra.mxu0 0.0
        %3992 = vmatpush.xpose.msra.mxu0 0.0
        %3993 = vmatpush.xpose.msra.mxu0 %v3977
        %3994 = vmatpush.xpose.msra.mxu0 %v3975
        %3995 = vmatmul.f32.gmra.mxu0 %v3971
        %v3996 = vpop.f32.mrf.mxu0
        %v3997 = vadd.f32 0.0, %v3996
        %3998 = vmatmul.f32.gmra.mxu0 %v3973
        %v3999 = vpop.f32.mrf.mxu0
        %v4000 = vadd.f32 0.0, %v3999
        %4001 = vdwg.mxu0
        %4002 = vrot.lane.b32.xlu0 %v662, 112
        %v4003 = vpop.permute.xlu0 %4002
        %4004 = vrot.lane.b32.xlu0 %v665, 112
        %v4005 = vpop.permute.xlu0 %4004
        %4006 = vrot.lane.b32.xlu0 %v662, 80
        %v4007 = vpop.permute.xlu0 %4006
        %4008 = vrot.lane.b32.xlu0 %v665, 80
        %v4009 = vpop.permute.xlu0 %4008
        %v4010 = vsel %vm673, %v4003, 0
        %v4012 = vsel %vm673, %v4005, 0
        %v4014 = vsel %vm673, %v4007, 0
        %v4016 = vsel %vm673, %v4009, 0
        %4018 = vmatpush.xpose.msra.mxu0 0.0
        %4019 = vmatpush.xpose.msra.mxu0 0.0
        %4020 = vmatpush.xpose.msra.mxu0 0.0
        %4021 = vmatpush.xpose.msra.mxu0 0.0
        %4022 = vmatpush.xpose.msra.mxu0 0.0
        %4023 = vmatpush.xpose.msra.mxu0 0.0
        %4024 = vmatpush.xpose.msra.mxu0 0.0
        %4025 = vmatpush.xpose.msra.mxu0 0.0
        %4026 = vmatpush.xpose.msra.mxu0 0.0
        %4027 = vmatpush.xpose.msra.mxu0 0.0
        %4028 = vmatpush.xpose.msra.mxu0 0.0
        %4029 = vmatpush.xpose.msra.mxu0 0.0
        %4030 = vmatpush.xpose.msra.mxu0 0.0
        %4031 = vmatpush.xpose.msra.mxu0 0.0
        %4032 = vmatpush.xpose.msra.mxu0 %v4016
        %4033 = vmatpush.xpose.msra.mxu0 %v4014
        %4034 = vmatmul.f32.gmra.mxu0 %v4010
        %v4035 = vpop.f32.mrf.mxu0
        %v4036 = vadd.f32 0.0, %v4035
        %4037 = vmatmul.f32.gmra.mxu0 %v4012
        %v4038 = vpop.f32.mrf.mxu0
        %v4039 = vadd.f32 0.0, %v4038
        %4040 = vdwg.mxu0
        %v4041 = vsel %vm1112, %v3607, -inf
        %4042 = vmax.xlane.f32.xlu0 %v4041
        %v4043 = vpop.xlane.xlu0 %4042
        %v4044 = vsel %vm1112, %v3610, -inf
        %4045 = vmax.xlane.f32.xlu0 %v4044
        %v4046 = vpop.xlane.xlu0 %4045
        %v4047 = vsel %vm1112, %v3646, -inf
        %4048 = vmax.xlane.f32.xlu0 %v4047
        %v4049 = vpop.xlane.xlu0 %4048
        %v4050 = vsel %vm1112, %v3649, -inf
        %4051 = vmax.xlane.f32.xlu0 %v4050
        %v4052 = vpop.xlane.xlu0 %4051
        %v4053 = vsel %vm1112, %v3685, -inf
        %4054 = vmax.xlane.f32.xlu0 %v4053
        %v4055 = vpop.xlane.xlu0 %4054
        %v4056 = vsel %vm1112, %v3688, -inf
        %4057 = vmax.xlane.f32.xlu0 %v4056
        %v4058 = vpop.xlane.xlu0 %4057
        %v4059 = vsel %vm1112, %v3724, -inf
        %4060 = vmax.xlane.f32.xlu0 %v4059
        %v4061 = vpop.xlane.xlu0 %4060
        %v4062 = vsel %vm1112, %v3727, -inf
        %4063 = vmax.xlane.f32.xlu0 %v4062
        %v4064 = vpop.xlane.xlu0 %4063
        %v4065 = vsel %vm1112, %v3763, -inf
        %4066 = vmax.xlane.f32.xlu0 %v4065
        %v4067 = vpop.xlane.xlu0 %4066
        %v4068 = vsel %vm1112, %v3766, -inf
        %4069 = vmax.xlane.f32.xlu0 %v4068
        %v4070 = vpop.xlane.xlu0 %4069
        %v4071 = vsel %vm1112, %v3802, -inf
        %4072 = vmax.xlane.f32.xlu0 %v4071
        %v4073 = vpop.xlane.xlu0 %4072
        %v4074 = vsel %vm1112, %v3805, -inf
        %4075 = vmax.xlane.f32.xlu0 %v4074
        %v4076 = vpop.xlane.xlu0 %4075
        %v4077 = vsel %vm1112, %v3841, -inf
        %4078 = vmax.xlane.f32.xlu0 %v4077
        %v4079 = vpop.xlane.xlu0 %4078
        %v4080 = vsel %vm1112, %v3844, -inf
        %4081 = vmax.xlane.f32.xlu0 %v4080
        %v4082 = vpop.xlane.xlu0 %4081
        %v4083 = vsel %vm1112, %v3880, -inf
        %4084 = vmax.xlane.f32.xlu0 %v4083
        %v4085 = vpop.xlane.xlu0 %4084
        %v4086 = vsel %vm1112, %v3883, -inf
        %4087 = vmax.xlane.f32.xlu0 %v4086
        %v4088 = vpop.xlane.xlu0 %4087
        %v4089 = vsel %vm1112, %v3919, -inf
        %4090 = vmax.xlane.f32.xlu0 %v4089
        %v4091 = vpop.xlane.xlu0 %4090
        %v4092 = vsel %vm1112, %v3922, -inf
        %4093 = vmax.xlane.f32.xlu0 %v4092
        %v4094 = vpop.xlane.xlu0 %4093
        %v4095 = vsel %vm1112, %v3958, -inf
        %4096 = vmax.xlane.f32.xlu0 %v4095
        %v4097 = vpop.xlane.xlu0 %4096
        %v4098 = vsel %vm1112, %v3961, -inf
        %4099 = vmax.xlane.f32.xlu0 %v4098
        %v4100 = vpop.xlane.xlu0 %4099
        %v4101 = vsel %vm1112, %v3997, -inf
        %4102 = vmax.xlane.f32.xlu0 %v4101
        %v4103 = vpop.xlane.xlu0 %4102
        %v4104 = vsel %vm1112, %v4000, -inf
        %4105 = vmax.xlane.f32.xlu0 %v4104
        %v4106 = vpop.xlane.xlu0 %4105
        %v4107 = vsel %vm1112, %v4036, -inf
        %4108 = vmax.xlane.f32.xlu0 %v4107
        %v4109 = vpop.xlane.xlu0 %4108
        %v4110 = vsel %vm1112, %v4039, -inf
        %4111 = vmax.xlane.f32.xlu0 %v4110
        %v4112 = vpop.xlane.xlu0 %4111
        %v4113 = vsub.f32 %v3607, %v4043
        %v4114 = vsub.f32 %v3610, %v4046
        %v4115 = vsub.f32 %v3646, %v4049
        %v4116 = vsub.f32 %v3649, %v4052
        %v4117 = vsub.f32 %v3685, %v4055
        %v4118 = vsub.f32 %v3688, %v4058
        %v4119 = vsub.f32 %v3724, %v4061
        %v4120 = vsub.f32 %v3727, %v4064
        %v4121 = vsub.f32 %v3763, %v4067
        %v4122 = vsub.f32 %v3766, %v4070
        %v4123 = vsub.f32 %v3802, %v4073
        %v4124 = vsub.f32 %v3805, %v4076
        %v4125 = vsub.f32 %v3841, %v4079
        %v4126 = vsub.f32 %v3844, %v4082
        %v4127 = vsub.f32 %v3880, %v4085
        %v4128 = vsub.f32 %v3883, %v4088
        %v4129 = vsub.f32 %v3919, %v4091
        %v4130 = vsub.f32 %v3922, %v4094
        %v4131 = vsub.f32 %v3958, %v4097
        %v4132 = vsub.f32 %v3961, %v4100
        %v4133 = vsub.f32 %v3997, %v4103
        %v4134 = vsub.f32 %v4000, %v4106
        %v4135 = vsub.f32 %v4036, %v4109
        %v4136 = vsub.f32 %v4039, %v4112
        %v4137 = vmul.f32 %v4113, 1.442695
        %v4138 = vpow.pop %v4137
        %v4139 = vmul.f32 %v4114, 1.442695
        %v4140 = vpow.pop %v4139
        %v4141 = vmul.f32 %v4115, 1.442695
        %v4142 = vpow.pop %v4141
        %v4143 = vmul.f32 %v4116, 1.442695
        %v4144 = vpow.pop %v4143
        %v4145 = vmul.f32 %v4117, 1.442695
        %v4146 = vpow.pop %v4145
        %v4147 = vmul.f32 %v4118, 1.442695
        %v4148 = vpow.pop %v4147
        %v4149 = vmul.f32 %v4119, 1.442695
        %v4150 = vpow.pop %v4149
        %v4151 = vmul.f32 %v4120, 1.442695
        %v4152 = vpow.pop %v4151
        %v4153 = vmul.f32 %v4121, 1.442695
        %v4154 = vpow.pop %v4153
        %v4155 = vmul.f32 %v4122, 1.442695
        %v4156 = vpow.pop %v4155
        %v4157 = vmul.f32 %v4123, 1.442695
        %v4158 = vpow.pop %v4157
        %v4159 = vmul.f32 %v4124, 1.442695
        %v4160 = vpow.pop %v4159
        %v4161 = vmul.f32 %v4125, 1.442695
        %v4162 = vpow.pop %v4161
        %v4163 = vmul.f32 %v4126, 1.442695
        %v4164 = vpow.pop %v4163
        %v4165 = vmul.f32 %v4127, 1.442695
        %v4166 = vpow.pop %v4165
        %v4167 = vmul.f32 %v4128, 1.442695
        %v4168 = vpow.pop %v4167
        %v4169 = vmul.f32 %v4129, 1.442695
        %v4170 = vpow.pop %v4169
        %v4171 = vmul.f32 %v4130, 1.442695
        %v4172 = vpow.pop %v4171
        %v4173 = vmul.f32 %v4131, 1.442695
        %v4174 = vpow.pop %v4173
        %v4175 = vmul.f32 %v4132, 1.442695
        %v4176 = vpow.pop %v4175
        %v4177 = vmul.f32 %v4133, 1.442695
        %v4178 = vpow.pop %v4177
        %v4179 = vmul.f32 %v4134, 1.442695
        %v4180 = vpow.pop %v4179
        %v4181 = vmul.f32 %v4135, 1.442695
        %v4182 = vpow.pop %v4181
        %v4183 = vmul.f32 %v4136, 1.442695
        %v4184 = vpow.pop %v4183
        %v4185 = vsel %vm1112, %v4138, 0.0
        %4186 = vadd.xlane.f32.xlu0 %v4185
        %v4187 = vpop.xlane.xlu0 %4186
        %v4188 = vsel %vm1112, %v4140, 0.0
        %4189 = vadd.xlane.f32.xlu0 %v4188
        %v4190 = vpop.xlane.xlu0 %4189
        %v4191 = vsel %vm1112, %v4142, 0.0
        %4192 = vadd.xlane.f32.xlu0 %v4191
        %v4193 = vpop.xlane.xlu0 %4192
        %v4194 = vsel %vm1112, %v4144, 0.0
        %4195 = vadd.xlane.f32.xlu0 %v4194
        %v4196 = vpop.xlane.xlu0 %4195
        %v4197 = vsel %vm1112, %v4146, 0.0
        %4198 = vadd.xlane.f32.xlu0 %v4197
        %v4199 = vpop.xlane.xlu0 %4198
        %v4200 = vsel %vm1112, %v4148, 0.0
        %4201 = vadd.xlane.f32.xlu0 %v4200
        %v4202 = vpop.xlane.xlu0 %4201
        %v4203 = vsel %vm1112, %v4150, 0.0
        %4204 = vadd.xlane.f32.xlu0 %v4203
        %v4205 = vpop.xlane.xlu0 %4204
        %v4206 = vsel %vm1112, %v4152, 0.0
        %4207 = vadd.xlane.f32.xlu0 %v4206
        %v4208 = vpop.xlane.xlu0 %4207
        %v4209 = vsel %vm1112, %v4154, 0.0
        %4210 = vadd.xlane.f32.xlu0 %v4209
        %v4211 = vpop.xlane.xlu0 %4210
        %v4212 = vsel %vm1112, %v4156, 0.0
        %4213 = vadd.xlane.f32.xlu0 %v4212
        %v4214 = vpop.xlane.xlu0 %4213
        %v4215 = vsel %vm1112, %v4158, 0.0
        %4216 = vadd.xlane.f32.xlu0 %v4215
        %v4217 = vpop.xlane.xlu0 %4216
        %v4218 = vsel %vm1112, %v4160, 0.0
        %4219 = vadd.xlane.f32.xlu0 %v4218
        %v4220 = vpop.xlane.xlu0 %4219
        %v4221 = vsel %vm1112, %v4162, 0.0
        %4222 = vadd.xlane.f32.xlu0 %v4221
        %v4223 = vpop.xlane.xlu0 %4222
        %v4224 = vsel %vm1112, %v4164, 0.0
        %4225 = vadd.xlane.f32.xlu0 %v4224
        %v4226 = vpop.xlane.xlu0 %4225
        %v4227 = vsel %vm1112, %v4166, 0.0
        %4228 = vadd.xlane.f32.xlu0 %v4227
        %v4229 = vpop.xlane.xlu0 %4228
        %v4230 = vsel %vm1112, %v4168, 0.0
        %4231 = vadd.xlane.f32.xlu0 %v4230
        %v4232 = vpop.xlane.xlu0 %4231
        %v4233 = vsel %vm1112, %v4170, 0.0
        %4234 = vadd.xlane.f32.xlu0 %v4233
        %v4235 = vpop.xlane.xlu0 %4234
        %v4236 = vsel %vm1112, %v4172, 0.0
        %4237 = vadd.xlane.f32.xlu0 %v4236
        %v4238 = vpop.xlane.xlu0 %4237
        %v4239 = vsel %vm1112, %v4174, 0.0
        %4240 = vadd.xlane.f32.xlu0 %v4239
        %v4241 = vpop.xlane.xlu0 %4240
        %v4242 = vsel %vm1112, %v4176, 0.0
        %4243 = vadd.xlane.f32.xlu0 %v4242
        %v4244 = vpop.xlane.xlu0 %4243
        %v4245 = vsel %vm1112, %v4178, 0.0
        %4246 = vadd.xlane.f32.xlu0 %v4245
        %v4247 = vpop.xlane.xlu0 %4246
        %v4248 = vsel %vm1112, %v4180, 0.0
        %4249 = vadd.xlane.f32.xlu0 %v4248
        %v4250 = vpop.xlane.xlu0 %4249
        %v4251 = vsel %vm1112, %v4182, 0.0
        %4252 = vadd.xlane.f32.xlu0 %v4251
        %v4253 = vpop.xlane.xlu0 %4252
        %v4254 = vsel %vm1112, %v4184, 0.0
        %4255 = vadd.xlane.f32.xlu0 %v4254
        %v4256 = vpop.xlane.xlu0 %4255
        %v4257 = vrcp.pop %v4187
        %v4258 = vmul.f32 %v4187, %v4257
        %v4259 = vsub.f32 1.0, %v4258
        %v4260 = vmul.f32 %v4257, %v4259
        %v4261 = vadd.f32 %v4257, %v4260
        %vm4262 = vweird.f32 %v4187
        %vm4263 = vweird.f32 %v4257
        %vm4264 = vmor %vm4262, %vm4263
        %v4265 = vsel %vm4264, %v4257, %v4261
        %v4266 = vand.u32 2147483647, %v4187
        %vm4267 = vcmp.eq.f32.partialorder %v4266, 8.507059e+37
        %v4268 = vand.u32 %v4187, 2147483648
        %v4269 = vor.u32 1.1754944e-38, %v4268
        %v4270 = vsel %vm4267, %v4269, %v4265
        %v4271 = vmul.f32 %v4138, %v4270
        %v4272 = vrcp.pop %v4190
        %v4273 = vmul.f32 %v4190, %v4272
        %v4274 = vsub.f32 1.0, %v4273
        %v4275 = vmul.f32 %v4272, %v4274
        %v4276 = vadd.f32 %v4272, %v4275
        %vm4277 = vweird.f32 %v4190
        %vm4278 = vweird.f32 %v4272
        %vm4279 = vmor %vm4277, %vm4278
        %v4280 = vsel %vm4279, %v4272, %v4276
        %v4281 = vand.u32 2147483647, %v4190
        %vm4282 = vcmp.eq.f32.partialorder %v4281, 8.507059e+37
        %v4283 = vand.u32 %v4190, 2147483648
        %v4284 = vor.u32 1.1754944e-38, %v4283
        %v4285 = vsel %vm4282, %v4284, %v4280
        %v4286 = vmul.f32 %v4140, %v4285
        %v4287 = vrcp.pop %v4193
        %v4288 = vmul.f32 %v4193, %v4287
        %v4289 = vsub.f32 1.0, %v4288
        %v4290 = vmul.f32 %v4287, %v4289
        %v4291 = vadd.f32 %v4287, %v4290
        %vm4292 = vweird.f32 %v4193
        %vm4293 = vweird.f32 %v4287
        %vm4294 = vmor %vm4292, %vm4293
        %v4295 = vsel %vm4294, %v4287, %v4291
        %v4296 = vand.u32 2147483647, %v4193
        %vm4297 = vcmp.eq.f32.partialorder %v4296, 8.507059e+37
        %v4298 = vand.u32 %v4193, 2147483648
        %v4299 = vor.u32 1.1754944e-38, %v4298
        %v4300 = vsel %vm4297, %v4299, %v4295
        %v4301 = vmul.f32 %v4142, %v4300
        %v4302 = vrcp.pop %v4196
        %v4303 = vmul.f32 %v4196, %v4302
        %v4304 = vsub.f32 1.0, %v4303
        %v4305 = vmul.f32 %v4302, %v4304
        %v4306 = vadd.f32 %v4302, %v4305
        %vm4307 = vweird.f32 %v4196
        %vm4308 = vweird.f32 %v4302
        %vm4309 = vmor %vm4307, %vm4308
        %v4310 = vsel %vm4309, %v4302, %v4306
        %v4311 = vand.u32 2147483647, %v4196
        %vm4312 = vcmp.eq.f32.partialorder %v4311, 8.507059e+37
        %v4313 = vand.u32 %v4196, 2147483648
        %v4314 = vor.u32 1.1754944e-38, %v4313
        %v4315 = vsel %vm4312, %v4314, %v4310
        %v4316 = vmul.f32 %v4144, %v4315
        %v4317 = vrcp.pop %v4199
        %v4318 = vmul.f32 %v4199, %v4317
        %v4319 = vsub.f32 1.0, %v4318
        %v4320 = vmul.f32 %v4317, %v4319
        %v4321 = vadd.f32 %v4317, %v4320
        %vm4322 = vweird.f32 %v4199
        %vm4323 = vweird.f32 %v4317
        %vm4324 = vmor %vm4322, %vm4323
        %v4325 = vsel %vm4324, %v4317, %v4321
        %v4326 = vand.u32 2147483647, %v4199
        %vm4327 = vcmp.eq.f32.partialorder %v4326, 8.507059e+37
        %v4328 = vand.u32 %v4199, 2147483648
        %v4329 = vor.u32 1.1754944e-38, %v4328
        %v4330 = vsel %vm4327, %v4329, %v4325
        %v4331 = vmul.f32 %v4146, %v4330
        %v4332 = vrcp.pop %v4202
        %v4333 = vmul.f32 %v4202, %v4332
        %v4334 = vsub.f32 1.0, %v4333
        %v4335 = vmul.f32 %v4332, %v4334
        %v4336 = vadd.f32 %v4332, %v4335
        %vm4337 = vweird.f32 %v4202
        %vm4338 = vweird.f32 %v4332
        %vm4339 = vmor %vm4337, %vm4338
        %v4340 = vsel %vm4339, %v4332, %v4336
        %v4341 = vand.u32 2147483647, %v4202
        %vm4342 = vcmp.eq.f32.partialorder %v4341, 8.507059e+37
        %v4343 = vand.u32 %v4202, 2147483648
        %v4344 = vor.u32 1.1754944e-38, %v4343
        %v4345 = vsel %vm4342, %v4344, %v4340
        %v4346 = vmul.f32 %v4148, %v4345
        %v4347 = vrcp.pop %v4205
        %v4348 = vmul.f32 %v4205, %v4347
        %v4349 = vsub.f32 1.0, %v4348
        %v4350 = vmul.f32 %v4347, %v4349
        %v4351 = vadd.f32 %v4347, %v4350
        %vm4352 = vweird.f32 %v4205
        %vm4353 = vweird.f32 %v4347
        %vm4354 = vmor %vm4352, %vm4353
        %v4355 = vsel %vm4354, %v4347, %v4351
        %v4356 = vand.u32 2147483647, %v4205
        %vm4357 = vcmp.eq.f32.partialorder %v4356, 8.507059e+37
        %v4358 = vand.u32 %v4205, 2147483648
        %v4359 = vor.u32 1.1754944e-38, %v4358
        %v4360 = vsel %vm4357, %v4359, %v4355
        %v4361 = vmul.f32 %v4150, %v4360
        %v4362 = vrcp.pop %v4208
        %v4363 = vmul.f32 %v4208, %v4362
        %v4364 = vsub.f32 1.0, %v4363
        %v4365 = vmul.f32 %v4362, %v4364
        %v4366 = vadd.f32 %v4362, %v4365
        %vm4367 = vweird.f32 %v4208
        %vm4368 = vweird.f32 %v4362
        %vm4369 = vmor %vm4367, %vm4368
        %v4370 = vsel %vm4369, %v4362, %v4366
        %v4371 = vand.u32 2147483647, %v4208
        %vm4372 = vcmp.eq.f32.partialorder %v4371, 8.507059e+37
        %v4373 = vand.u32 %v4208, 2147483648
        %v4374 = vor.u32 1.1754944e-38, %v4373
        %v4375 = vsel %vm4372, %v4374, %v4370
        %v4376 = vmul.f32 %v4152, %v4375
        %v4377 = vrcp.pop %v4211
        %v4378 = vmul.f32 %v4211, %v4377
        %v4379 = vsub.f32 1.0, %v4378
        %v4380 = vmul.f32 %v4377, %v4379
        %v4381 = vadd.f32 %v4377, %v4380
        %vm4382 = vweird.f32 %v4211
        %vm4383 = vweird.f32 %v4377
        %vm4384 = vmor %vm4382, %vm4383
        %v4385 = vsel %vm4384, %v4377, %v4381
        %v4386 = vand.u32 2147483647, %v4211
        %vm4387 = vcmp.eq.f32.partialorder %v4386, 8.507059e+37
        %v4388 = vand.u32 %v4211, 2147483648
        %v4389 = vor.u32 1.1754944e-38, %v4388
        %v4390 = vsel %vm4387, %v4389, %v4385
        %v4391 = vmul.f32 %v4154, %v4390
        %v4392 = vrcp.pop %v4214
        %v4393 = vmul.f32 %v4214, %v4392
        %v4394 = vsub.f32 1.0, %v4393
        %v4395 = vmul.f32 %v4392, %v4394
        %v4396 = vadd.f32 %v4392, %v4395
        %vm4397 = vweird.f32 %v4214
        %vm4398 = vweird.f32 %v4392
        %vm4399 = vmor %vm4397, %vm4398
        %v4400 = vsel %vm4399, %v4392, %v4396
        %v4401 = vand.u32 2147483647, %v4214
        %vm4402 = vcmp.eq.f32.partialorder %v4401, 8.507059e+37
        %v4403 = vand.u32 %v4214, 2147483648
        %v4404 = vor.u32 1.1754944e-38, %v4403
        %v4405 = vsel %vm4402, %v4404, %v4400
        %v4406 = vmul.f32 %v4156, %v4405
        %v4407 = vrcp.pop %v4217
        %v4408 = vmul.f32 %v4217, %v4407
        %v4409 = vsub.f32 1.0, %v4408
        %v4410 = vmul.f32 %v4407, %v4409
        %v4411 = vadd.f32 %v4407, %v4410
        %vm4412 = vweird.f32 %v4217
        %vm4413 = vweird.f32 %v4407
        %vm4414 = vmor %vm4412, %vm4413
        %v4415 = vsel %vm4414, %v4407, %v4411
        %v4416 = vand.u32 2147483647, %v4217
        %vm4417 = vcmp.eq.f32.partialorder %v4416, 8.507059e+37
        %v4418 = vand.u32 %v4217, 2147483648
        %v4419 = vor.u32 1.1754944e-38, %v4418
        %v4420 = vsel %vm4417, %v4419, %v4415
        %v4421 = vmul.f32 %v4158, %v4420
        %v4422 = vrcp.pop %v4220
        %v4423 = vmul.f32 %v4220, %v4422
        %v4424 = vsub.f32 1.0, %v4423
        %v4425 = vmul.f32 %v4422, %v4424
        %v4426 = vadd.f32 %v4422, %v4425
        %vm4427 = vweird.f32 %v4220
        %vm4428 = vweird.f32 %v4422
        %vm4429 = vmor %vm4427, %vm4428
        %v4430 = vsel %vm4429, %v4422, %v4426
        %v4431 = vand.u32 2147483647, %v4220
        %vm4432 = vcmp.eq.f32.partialorder %v4431, 8.507059e+37
        %v4433 = vand.u32 %v4220, 2147483648
        %v4434 = vor.u32 1.1754944e-38, %v4433
        %v4435 = vsel %vm4432, %v4434, %v4430
        %v4436 = vmul.f32 %v4160, %v4435
        %v4437 = vrcp.pop %v4223
        %v4438 = vmul.f32 %v4223, %v4437
        %v4439 = vsub.f32 1.0, %v4438
        %v4440 = vmul.f32 %v4437, %v4439
        %v4441 = vadd.f32 %v4437, %v4440
        %vm4442 = vweird.f32 %v4223
        %vm4443 = vweird.f32 %v4437
        %vm4444 = vmor %vm4442, %vm4443
        %v4445 = vsel %vm4444, %v4437, %v4441
        %v4446 = vand.u32 2147483647, %v4223
        %vm4447 = vcmp.eq.f32.partialorder %v4446, 8.507059e+37
        %v4448 = vand.u32 %v4223, 2147483648
        %v4449 = vor.u32 1.1754944e-38, %v4448
        %v4450 = vsel %vm4447, %v4449, %v4445
        %v4451 = vmul.f32 %v4162, %v4450
        %v4452 = vrcp.pop %v4226
        %v4453 = vmul.f32 %v4226, %v4452
        %v4454 = vsub.f32 1.0, %v4453
        %v4455 = vmul.f32 %v4452, %v4454
        %v4456 = vadd.f32 %v4452, %v4455
        %vm4457 = vweird.f32 %v4226
        %vm4458 = vweird.f32 %v4452
        %vm4459 = vmor %vm4457, %vm4458
        %v4460 = vsel %vm4459, %v4452, %v4456
        %v4461 = vand.u32 2147483647, %v4226
        %vm4462 = vcmp.eq.f32.partialorder %v4461, 8.507059e+37
        %v4463 = vand.u32 %v4226, 2147483648
        %v4464 = vor.u32 1.1754944e-38, %v4463
        %v4465 = vsel %vm4462, %v4464, %v4460
        %v4466 = vmul.f32 %v4164, %v4465
        %v4467 = vrcp.pop %v4229
        %v4468 = vmul.f32 %v4229, %v4467
        %v4469 = vsub.f32 1.0, %v4468
        %v4470 = vmul.f32 %v4467, %v4469
        %v4471 = vadd.f32 %v4467, %v4470
        %vm4472 = vweird.f32 %v4229
        %vm4473 = vweird.f32 %v4467
        %vm4474 = vmor %vm4472, %vm4473
        %v4475 = vsel %vm4474, %v4467, %v4471
        %v4476 = vand.u32 2147483647, %v4229
        %vm4477 = vcmp.eq.f32.partialorder %v4476, 8.507059e+37
        %v4478 = vand.u32 %v4229, 2147483648
        %v4479 = vor.u32 1.1754944e-38, %v4478
        %v4480 = vsel %vm4477, %v4479, %v4475
        %v4481 = vmul.f32 %v4166, %v4480
        %v4482 = vrcp.pop %v4232
        %v4483 = vmul.f32 %v4232, %v4482
        %v4484 = vsub.f32 1.0, %v4483
        %v4485 = vmul.f32 %v4482, %v4484
        %v4486 = vadd.f32 %v4482, %v4485
        %vm4487 = vweird.f32 %v4232
        %vm4488 = vweird.f32 %v4482
        %vm4489 = vmor %vm4487, %vm4488
        %v4490 = vsel %vm4489, %v4482, %v4486
        %v4491 = vand.u32 2147483647, %v4232
        %vm4492 = vcmp.eq.f32.partialorder %v4491, 8.507059e+37
        %v4493 = vand.u32 %v4232, 2147483648
        %v4494 = vor.u32 1.1754944e-38, %v4493
        %v4495 = vsel %vm4492, %v4494, %v4490
        %v4496 = vmul.f32 %v4168, %v4495
        %v4497 = vrcp.pop %v4235
        %v4498 = vmul.f32 %v4235, %v4497
        %v4499 = vsub.f32 1.0, %v4498
        %v4500 = vmul.f32 %v4497, %v4499
        %v4501 = vadd.f32 %v4497, %v4500
        %vm4502 = vweird.f32 %v4235
        %vm4503 = vweird.f32 %v4497
        %vm4504 = vmor %vm4502, %vm4503
        %v4505 = vsel %vm4504, %v4497, %v4501
        %v4506 = vand.u32 2147483647, %v4235
        %vm4507 = vcmp.eq.f32.partialorder %v4506, 8.507059e+37
        %v4508 = vand.u32 %v4235, 2147483648
        %v4509 = vor.u32 1.1754944e-38, %v4508
        %v4510 = vsel %vm4507, %v4509, %v4505
        %v4511 = vmul.f32 %v4170, %v4510
        %v4512 = vrcp.pop %v4238
        %v4513 = vmul.f32 %v4238, %v4512
        %v4514 = vsub.f32 1.0, %v4513
        %v4515 = vmul.f32 %v4512, %v4514
        %v4516 = vadd.f32 %v4512, %v4515
        %vm4517 = vweird.f32 %v4238
        %vm4518 = vweird.f32 %v4512
        %vm4519 = vmor %vm4517, %vm4518
        %v4520 = vsel %vm4519, %v4512, %v4516
        %v4521 = vand.u32 2147483647, %v4238
        %vm4522 = vcmp.eq.f32.partialorder %v4521, 8.507059e+37
        %v4523 = vand.u32 %v4238, 2147483648
        %v4524 = vor.u32 1.1754944e-38, %v4523
        %v4525 = vsel %vm4522, %v4524, %v4520
        %v4526 = vmul.f32 %v4172, %v4525
        %v4527 = vrcp.pop %v4241
        %v4528 = vmul.f32 %v4241, %v4527
        %v4529 = vsub.f32 1.0, %v4528
        %v4530 = vmul.f32 %v4527, %v4529
        %v4531 = vadd.f32 %v4527, %v4530
        %vm4532 = vweird.f32 %v4241
        %vm4533 = vweird.f32 %v4527
        %vm4534 = vmor %vm4532, %vm4533
        %v4535 = vsel %vm4534, %v4527, %v4531
        %v4536 = vand.u32 2147483647, %v4241
        %vm4537 = vcmp.eq.f32.partialorder %v4536, 8.507059e+37
        %v4538 = vand.u32 %v4241, 2147483648
        %v4539 = vor.u32 1.1754944e-38, %v4538
        %v4540 = vsel %vm4537, %v4539, %v4535
        %v4541 = vmul.f32 %v4174, %v4540
        %v4542 = vrcp.pop %v4244
        %v4543 = vmul.f32 %v4244, %v4542
        %v4544 = vsub.f32 1.0, %v4543
        %v4545 = vmul.f32 %v4542, %v4544
        %v4546 = vadd.f32 %v4542, %v4545
        %vm4547 = vweird.f32 %v4244
        %vm4548 = vweird.f32 %v4542
        %vm4549 = vmor %vm4547, %vm4548
        %v4550 = vsel %vm4549, %v4542, %v4546
        %v4551 = vand.u32 2147483647, %v4244
        %vm4552 = vcmp.eq.f32.partialorder %v4551, 8.507059e+37
        %v4553 = vand.u32 %v4244, 2147483648
        %v4554 = vor.u32 1.1754944e-38, %v4553
        %v4555 = vsel %vm4552, %v4554, %v4550
        %v4556 = vmul.f32 %v4176, %v4555
        %v4557 = vrcp.pop %v4247
        %v4558 = vmul.f32 %v4247, %v4557
        %v4559 = vsub.f32 1.0, %v4558
        %v4560 = vmul.f32 %v4557, %v4559
        %v4561 = vadd.f32 %v4557, %v4560
        %vm4562 = vweird.f32 %v4247
        %vm4563 = vweird.f32 %v4557
        %vm4564 = vmor %vm4562, %vm4563
        %v4565 = vsel %vm4564, %v4557, %v4561
        %v4566 = vand.u32 2147483647, %v4247
        %vm4567 = vcmp.eq.f32.partialorder %v4566, 8.507059e+37
        %v4568 = vand.u32 %v4247, 2147483648
        %v4569 = vor.u32 1.1754944e-38, %v4568
        %v4570 = vsel %vm4567, %v4569, %v4565
        %v4571 = vmul.f32 %v4178, %v4570
        %v4572 = vrcp.pop %v4250
        %v4573 = vmul.f32 %v4250, %v4572
        %v4574 = vsub.f32 1.0, %v4573
        %v4575 = vmul.f32 %v4572, %v4574
        %v4576 = vadd.f32 %v4572, %v4575
        %vm4577 = vweird.f32 %v4250
        %vm4578 = vweird.f32 %v4572
        %vm4579 = vmor %vm4577, %vm4578
        %v4580 = vsel %vm4579, %v4572, %v4576
        %v4581 = vand.u32 2147483647, %v4250
        %vm4582 = vcmp.eq.f32.partialorder %v4581, 8.507059e+37
        %v4583 = vand.u32 %v4250, 2147483648
        %v4584 = vor.u32 1.1754944e-38, %v4583
        %v4585 = vsel %vm4582, %v4584, %v4580
        %v4586 = vmul.f32 %v4180, %v4585
        %v4587 = vrcp.pop %v4253
        %v4588 = vmul.f32 %v4253, %v4587
        %v4589 = vsub.f32 1.0, %v4588
        %v4590 = vmul.f32 %v4587, %v4589
        %v4591 = vadd.f32 %v4587, %v4590
        %vm4592 = vweird.f32 %v4253
        %vm4593 = vweird.f32 %v4587
        %vm4594 = vmor %vm4592, %vm4593
        %v4595 = vsel %vm4594, %v4587, %v4591
        %v4596 = vand.u32 2147483647, %v4253
        %vm4597 = vcmp.eq.f32.partialorder %v4596, 8.507059e+37
        %v4598 = vand.u32 %v4253, 2147483648
        %v4599 = vor.u32 1.1754944e-38, %v4598
        %v4600 = vsel %vm4597, %v4599, %v4595
        %v4601 = vmul.f32 %v4182, %v4600
        %v4602 = vrcp.pop %v4256
        %v4603 = vmul.f32 %v4256, %v4602
        %v4604 = vsub.f32 1.0, %v4603
        %v4605 = vmul.f32 %v4602, %v4604
        %v4606 = vadd.f32 %v4602, %v4605
        %vm4607 = vweird.f32 %v4256
        %vm4608 = vweird.f32 %v4602
        %vm4609 = vmor %vm4607, %vm4608
        %v4610 = vsel %vm4609, %v4602, %v4606
        %v4611 = vand.u32 2147483647, %v4256
        %vm4612 = vcmp.eq.f32.partialorder %v4611, 8.507059e+37
        %v4613 = vand.u32 %v4256, 2147483648
        %v4614 = vor.u32 1.1754944e-38, %v4613
        %v4615 = vsel %vm4612, %v4614, %v4610
        %v4616 = vmul.f32 %v4184, %v4615
        %4617 = vrot.lane.b32.xlu0 %v596, 48
        %v4618 = vpop.permute.xlu0 %4617
        %4619 = vrot.lane.b32.xlu0 %v599, 48
        %v4620 = vpop.permute.xlu0 %4619
        %v4624 = vsel %vm1112, %v4271, 0
        %v4627 = vsel %vm1112, %v4286, 0
        %4629 = vmatpush.msra.mxu0 0.0
        %4630 = vmatpush.msra.mxu0 0.0
        %4631 = vmatpush.msra.mxu0 0.0
        %4632 = vmatpush.msra.mxu0 0.0
        %4633 = vmatpush.msra.mxu0 0.0
        %4634 = vmatpush.msra.mxu0 0.0
        %4635 = vmatpush.msra.mxu0 0.0
        %4636 = vmatpush.msra.mxu0 0.0
        %4637 = vmatpush.msra.mxu0 0.0
        %4638 = vmatpush.msra.mxu0 0.0
        %4639 = vmatpush.msra.mxu0 0.0
        %4640 = vmatpush.msra.mxu0 0.0
        %4641 = vmatpush.msra.mxu0 0.0
        %4642 = vmatpush.msra.mxu0 0.0
        %4643 = vmatpush.msra.mxu0 %v4620
        %4644 = vmatpush.msra.mxu0 %v4618
        %4645 = vmatmul.f32.gmra.mxu0 %v4624
        %v4646 = vpop.f32.mrf.mxu0
        %v4647 = vadd.f32 0.0, %v4646
        %4648 = vmatmul.f32.gmra.mxu0 %v4627
        %v4649 = vpop.f32.mrf.mxu0
        %v4650 = vadd.f32 0.0, %v4649
        %4651 = vdwg.mxu0
        %4652 = vrot.lane.b32.xlu0 %v602, 48
        %v4653 = vpop.permute.xlu0 %4652
        %4654 = vrot.lane.b32.xlu0 %v605, 48
        %v4655 = vpop.permute.xlu0 %4654
        %v4659 = vsel %vm1112, %v4301, 0
        %v4662 = vsel %vm1112, %v4316, 0
        %4664 = vmatpush.msra.mxu0 0.0
        %4665 = vmatpush.msra.mxu0 0.0
        %4666 = vmatpush.msra.mxu0 0.0
        %4667 = vmatpush.msra.mxu0 0.0
        %4668 = vmatpush.msra.mxu0 0.0
        %4669 = vmatpush.msra.mxu0 0.0
        %4670 = vmatpush.msra.mxu0 0.0
        %4671 = vmatpush.msra.mxu0 0.0
        %4672 = vmatpush.msra.mxu0 0.0
        %4673 = vmatpush.msra.mxu0 0.0
        %4674 = vmatpush.msra.mxu0 0.0
        %4675 = vmatpush.msra.mxu0 0.0
        %4676 = vmatpush.msra.mxu0 0.0
        %4677 = vmatpush.msra.mxu0 0.0
        %4678 = vmatpush.msra.mxu0 %v4655
        %4679 = vmatpush.msra.mxu0 %v4653
        %4680 = vmatmul.f32.gmra.mxu0 %v4659
        %v4681 = vpop.f32.mrf.mxu0
        %v4682 = vadd.f32 0.0, %v4681
        %4683 = vmatmul.f32.gmra.mxu0 %v4662
        %v4684 = vpop.f32.mrf.mxu0
        %v4685 = vadd.f32 0.0, %v4684
        %4686 = vdwg.mxu0
        %4687 = vrot.lane.b32.xlu0 %v608, 48
        %v4688 = vpop.permute.xlu0 %4687
        %4689 = vrot.lane.b32.xlu0 %v611, 48
        %v4690 = vpop.permute.xlu0 %4689
        %v4694 = vsel %vm1112, %v4331, 0
        %v4697 = vsel %vm1112, %v4346, 0
        %4699 = vmatpush.msra.mxu0 0.0
        %4700 = vmatpush.msra.mxu0 0.0
        %4701 = vmatpush.msra.mxu0 0.0
        %4702 = vmatpush.msra.mxu0 0.0
        %4703 = vmatpush.msra.mxu0 0.0
        %4704 = vmatpush.msra.mxu0 0.0
        %4705 = vmatpush.msra.mxu0 0.0
        %4706 = vmatpush.msra.mxu0 0.0
        %4707 = vmatpush.msra.mxu0 0.0
        %4708 = vmatpush.msra.mxu0 0.0
        %4709 = vmatpush.msra.mxu0 0.0
        %4710 = vmatpush.msra.mxu0 0.0
        %4711 = vmatpush.msra.mxu0 0.0
        %4712 = vmatpush.msra.mxu0 0.0
        %4713 = vmatpush.msra.mxu0 %v4690
        %4714 = vmatpush.msra.mxu0 %v4688
        %4715 = vmatmul.f32.gmra.mxu0 %v4694
        %v4716 = vpop.f32.mrf.mxu0
        %v4717 = vadd.f32 0.0, %v4716
        %4718 = vmatmul.f32.gmra.mxu0 %v4697
        %v4719 = vpop.f32.mrf.mxu0
        %v4720 = vadd.f32 0.0, %v4719
        %4721 = vdwg.mxu0
        %4722 = vrot.lane.b32.xlu0 %v614, 48
        %v4723 = vpop.permute.xlu0 %4722
        %4724 = vrot.lane.b32.xlu0 %v617, 48
        %v4725 = vpop.permute.xlu0 %4724
        %v4729 = vsel %vm1112, %v4361, 0
        %v4732 = vsel %vm1112, %v4376, 0
        %4734 = vmatpush.msra.mxu0 0.0
        %4735 = vmatpush.msra.mxu0 0.0
        %4736 = vmatpush.msra.mxu0 0.0
        %4737 = vmatpush.msra.mxu0 0.0
        %4738 = vmatpush.msra.mxu0 0.0
        %4739 = vmatpush.msra.mxu0 0.0
        %4740 = vmatpush.msra.mxu0 0.0
        %4741 = vmatpush.msra.mxu0 0.0
        %4742 = vmatpush.msra.mxu0 0.0
        %4743 = vmatpush.msra.mxu0 0.0
        %4744 = vmatpush.msra.mxu0 0.0
        %4745 = vmatpush.msra.mxu0 0.0
        %4746 = vmatpush.msra.mxu0 0.0
        %4747 = vmatpush.msra.mxu0 0.0
        %4748 = vmatpush.msra.mxu0 %v4725
        %4749 = vmatpush.msra.mxu0 %v4723
        %4750 = vmatmul.f32.gmra.mxu0 %v4729
        %v4751 = vpop.f32.mrf.mxu0
        %v4752 = vadd.f32 0.0, %v4751
        %4753 = vmatmul.f32.gmra.mxu0 %v4732
        %v4754 = vpop.f32.mrf.mxu0
        %v4755 = vadd.f32 0.0, %v4754
        %4756 = vdwg.mxu0
        %4757 = vrot.lane.b32.xlu0 %v620, 48
        %v4758 = vpop.permute.xlu0 %4757
        %4759 = vrot.lane.b32.xlu0 %v623, 48
        %v4760 = vpop.permute.xlu0 %4759
        %v4764 = vsel %vm1112, %v4391, 0
        %v4767 = vsel %vm1112, %v4406, 0
        %4769 = vmatpush.msra.mxu0 0.0
        %4770 = vmatpush.msra.mxu0 0.0
        %4771 = vmatpush.msra.mxu0 0.0
        %4772 = vmatpush.msra.mxu0 0.0
        %4773 = vmatpush.msra.mxu0 0.0
        %4774 = vmatpush.msra.mxu0 0.0
        %4775 = vmatpush.msra.mxu0 0.0
        %4776 = vmatpush.msra.mxu0 0.0
        %4777 = vmatpush.msra.mxu0 0.0
        %4778 = vmatpush.msra.mxu0 0.0
        %4779 = vmatpush.msra.mxu0 0.0
        %4780 = vmatpush.msra.mxu0 0.0
        %4781 = vmatpush.msra.mxu0 0.0
        %4782 = vmatpush.msra.mxu0 0.0
        %4783 = vmatpush.msra.mxu0 %v4760
        %4784 = vmatpush.msra.mxu0 %v4758
        %4785 = vmatmul.f32.gmra.mxu0 %v4764
        %v4786 = vpop.f32.mrf.mxu0
        %v4787 = vadd.f32 0.0, %v4786
        %4788 = vmatmul.f32.gmra.mxu0 %v4767
        %v4789 = vpop.f32.mrf.mxu0
        %v4790 = vadd.f32 0.0, %v4789
        %4791 = vdwg.mxu0
        %4792 = vrot.lane.b32.xlu0 %v626, 48
        %v4793 = vpop.permute.xlu0 %4792
        %4794 = vrot.lane.b32.xlu0 %v629, 48
        %v4795 = vpop.permute.xlu0 %4794
        %v4799 = vsel %vm1112, %v4421, 0
        %v4802 = vsel %vm1112, %v4436, 0
        %4804 = vmatpush.msra.mxu0 0.0
        %4805 = vmatpush.msra.mxu0 0.0
        %4806 = vmatpush.msra.mxu0 0.0
        %4807 = vmatpush.msra.mxu0 0.0
        %4808 = vmatpush.msra.mxu0 0.0
        %4809 = vmatpush.msra.mxu0 0.0
        %4810 = vmatpush.msra.mxu0 0.0
        %4811 = vmatpush.msra.mxu0 0.0
        %4812 = vmatpush.msra.mxu0 0.0
        %4813 = vmatpush.msra.mxu0 0.0
        %4814 = vmatpush.msra.mxu0 0.0
        %4815 = vmatpush.msra.mxu0 0.0
        %4816 = vmatpush.msra.mxu0 0.0
        %4817 = vmatpush.msra.mxu0 0.0
        %4818 = vmatpush.msra.mxu0 %v4795
        %4819 = vmatpush.msra.mxu0 %v4793
        %4820 = vmatmul.f32.gmra.mxu0 %v4799
        %v4821 = vpop.f32.mrf.mxu0
        %v4822 = vadd.f32 0.0, %v4821
        %4823 = vmatmul.f32.gmra.mxu0 %v4802
        %v4824 = vpop.f32.mrf.mxu0
        %v4825 = vadd.f32 0.0, %v4824
        %4826 = vdwg.mxu0
        %4827 = vrot.lane.b32.xlu0 %v632, 48
        %v4828 = vpop.permute.xlu0 %4827
        %4829 = vrot.lane.b32.xlu0 %v635, 48
        %v4830 = vpop.permute.xlu0 %4829
        %v4834 = vsel %vm1112, %v4451, 0
        %v4837 = vsel %vm1112, %v4466, 0
        %4839 = vmatpush.msra.mxu0 0.0
        %4840 = vmatpush.msra.mxu0 0.0
        %4841 = vmatpush.msra.mxu0 0.0
        %4842 = vmatpush.msra.mxu0 0.0
        %4843 = vmatpush.msra.mxu0 0.0
        %4844 = vmatpush.msra.mxu0 0.0
        %4845 = vmatpush.msra.mxu0 0.0
        %4846 = vmatpush.msra.mxu0 0.0
        %4847 = vmatpush.msra.mxu0 0.0
        %4848 = vmatpush.msra.mxu0 0.0
        %4849 = vmatpush.msra.mxu0 0.0
        %4850 = vmatpush.msra.mxu0 0.0
        %4851 = vmatpush.msra.mxu0 0.0
        %4852 = vmatpush.msra.mxu0 0.0
        %4853 = vmatpush.msra.mxu0 %v4830
        %4854 = vmatpush.msra.mxu0 %v4828
        %4855 = vmatmul.f32.gmra.mxu0 %v4834
        %v4856 = vpop.f32.mrf.mxu0
        %v4857 = vadd.f32 0.0, %v4856
        %4858 = vmatmul.f32.gmra.mxu0 %v4837
        %v4859 = vpop.f32.mrf.mxu0
        %v4860 = vadd.f32 0.0, %v4859
        %4861 = vdwg.mxu0
        %4862 = vrot.lane.b32.xlu0 %v638, 48
        %v4863 = vpop.permute.xlu0 %4862
        %4864 = vrot.lane.b32.xlu0 %v641, 48
        %v4865 = vpop.permute.xlu0 %4864
        %v4869 = vsel %vm1112, %v4481, 0
        %v4872 = vsel %vm1112, %v4496, 0
        %4874 = vmatpush.msra.mxu0 0.0
        %4875 = vmatpush.msra.mxu0 0.0
        %4876 = vmatpush.msra.mxu0 0.0
        %4877 = vmatpush.msra.mxu0 0.0
        %4878 = vmatpush.msra.mxu0 0.0
        %4879 = vmatpush.msra.mxu0 0.0
        %4880 = vmatpush.msra.mxu0 0.0
        %4881 = vmatpush.msra.mxu0 0.0
        %4882 = vmatpush.msra.mxu0 0.0
        %4883 = vmatpush.msra.mxu0 0.0
        %4884 = vmatpush.msra.mxu0 0.0
        %4885 = vmatpush.msra.mxu0 0.0
        %4886 = vmatpush.msra.mxu0 0.0
        %4887 = vmatpush.msra.mxu0 0.0
        %4888 = vmatpush.msra.mxu0 %v4865
        %4889 = vmatpush.msra.mxu0 %v4863
        %4890 = vmatmul.f32.gmra.mxu0 %v4869
        %v4891 = vpop.f32.mrf.mxu0
        %v4892 = vadd.f32 0.0, %v4891
        %4893 = vmatmul.f32.gmra.mxu0 %v4872
        %v4894 = vpop.f32.mrf.mxu0
        %v4895 = vadd.f32 0.0, %v4894
        %4896 = vdwg.mxu0
        %4897 = vrot.lane.b32.xlu0 %v644, 48
        %v4898 = vpop.permute.xlu0 %4897
        %4899 = vrot.lane.b32.xlu0 %v647, 48
        %v4900 = vpop.permute.xlu0 %4899
        %v4904 = vsel %vm1112, %v4511, 0
        %v4907 = vsel %vm1112, %v4526, 0
        %4909 = vmatpush.msra.mxu0 0.0
        %4910 = vmatpush.msra.mxu0 0.0
        %4911 = vmatpush.msra.mxu0 0.0
        %4912 = vmatpush.msra.mxu0 0.0
        %4913 = vmatpush.msra.mxu0 0.0
        %4914 = vmatpush.msra.mxu0 0.0
        %4915 = vmatpush.msra.mxu0 0.0
        %4916 = vmatpush.msra.mxu0 0.0
        %4917 = vmatpush.msra.mxu0 0.0
        %4918 = vmatpush.msra.mxu0 0.0
        %4919 = vmatpush.msra.mxu0 0.0
        %4920 = vmatpush.msra.mxu0 0.0
        %4921 = vmatpush.msra.mxu0 0.0
        %4922 = vmatpush.msra.mxu0 0.0
        %4923 = vmatpush.msra.mxu0 %v4900
        %4924 = vmatpush.msra.mxu0 %v4898
        %4925 = vmatmul.f32.gmra.mxu0 %v4904
        %v4926 = vpop.f32.mrf.mxu0
        %v4927 = vadd.f32 0.0, %v4926
        %4928 = vmatmul.f32.gmra.mxu0 %v4907
        %v4929 = vpop.f32.mrf.mxu0
        %v4930 = vadd.f32 0.0, %v4929
        %4931 = vdwg.mxu0
        %4932 = vrot.lane.b32.xlu0 %v650, 48
        %v4933 = vpop.permute.xlu0 %4932
        %4934 = vrot.lane.b32.xlu0 %v653, 48
        %v4935 = vpop.permute.xlu0 %4934
        %v4939 = vsel %vm1112, %v4541, 0
        %v4942 = vsel %vm1112, %v4556, 0
        %4944 = vmatpush.msra.mxu0 0.0
        %4945 = vmatpush.msra.mxu0 0.0
        %4946 = vmatpush.msra.mxu0 0.0
        %4947 = vmatpush.msra.mxu0 0.0
        %4948 = vmatpush.msra.mxu0 0.0
        %4949 = vmatpush.msra.mxu0 0.0
        %4950 = vmatpush.msra.mxu0 0.0
        %4951 = vmatpush.msra.mxu0 0.0
        %4952 = vmatpush.msra.mxu0 0.0
        %4953 = vmatpush.msra.mxu0 0.0
        %4954 = vmatpush.msra.mxu0 0.0
        %4955 = vmatpush.msra.mxu0 0.0
        %4956 = vmatpush.msra.mxu0 0.0
        %4957 = vmatpush.msra.mxu0 0.0
        %4958 = vmatpush.msra.mxu0 %v4935
        %4959 = vmatpush.msra.mxu0 %v4933
        %4960 = vmatmul.f32.gmra.mxu0 %v4939
        %v4961 = vpop.f32.mrf.mxu0
        %v4962 = vadd.f32 0.0, %v4961
        %4963 = vmatmul.f32.gmra.mxu0 %v4942
        %v4964 = vpop.f32.mrf.mxu0
        %v4965 = vadd.f32 0.0, %v4964
        %4966 = vdwg.mxu0
        %4967 = vrot.lane.b32.xlu0 %v656, 48
        %v4968 = vpop.permute.xlu0 %4967
        %4969 = vrot.lane.b32.xlu0 %v659, 48
        %v4970 = vpop.permute.xlu0 %4969
        %v4974 = vsel %vm1112, %v4571, 0
        %v4977 = vsel %vm1112, %v4586, 0
        %4979 = vmatpush.msra.mxu0 0.0
        %4980 = vmatpush.msra.mxu0 0.0
        %4981 = vmatpush.msra.mxu0 0.0
        %4982 = vmatpush.msra.mxu0 0.0
        %4983 = vmatpush.msra.mxu0 0.0
        %4984 = vmatpush.msra.mxu0 0.0
        %4985 = vmatpush.msra.mxu0 0.0
        %4986 = vmatpush.msra.mxu0 0.0
        %4987 = vmatpush.msra.mxu0 0.0
        %4988 = vmatpush.msra.mxu0 0.0
        %4989 = vmatpush.msra.mxu0 0.0
        %4990 = vmatpush.msra.mxu0 0.0
        %4991 = vmatpush.msra.mxu0 0.0
        %4992 = vmatpush.msra.mxu0 0.0
        %4993 = vmatpush.msra.mxu0 %v4970
        %4994 = vmatpush.msra.mxu0 %v4968
        %4995 = vmatmul.f32.gmra.mxu0 %v4974
        %v4996 = vpop.f32.mrf.mxu0
        %v4997 = vadd.f32 0.0, %v4996
        %4998 = vmatmul.f32.gmra.mxu0 %v4977
        %v4999 = vpop.f32.mrf.mxu0
        %v5000 = vadd.f32 0.0, %v4999
        %5001 = vdwg.mxu0
        %5002 = vrot.lane.b32.xlu0 %v662, 48
        %v5003 = vpop.permute.xlu0 %5002
        %5004 = vrot.lane.b32.xlu0 %v665, 48
        %v5005 = vpop.permute.xlu0 %5004
        %v5009 = vsel %vm1112, %v4601, 0
        %v5012 = vsel %vm1112, %v4616, 0
        %5014 = vmatpush.msra.mxu0 0.0
        %5015 = vmatpush.msra.mxu0 0.0
        %5016 = vmatpush.msra.mxu0 0.0
        %5017 = vmatpush.msra.mxu0 0.0
        %5018 = vmatpush.msra.mxu0 0.0
        %5019 = vmatpush.msra.mxu0 0.0
        %5020 = vmatpush.msra.mxu0 0.0
        %5021 = vmatpush.msra.mxu0 0.0
        %5022 = vmatpush.msra.mxu0 0.0
        %5023 = vmatpush.msra.mxu0 0.0
        %5024 = vmatpush.msra.mxu0 0.0
        %5025 = vmatpush.msra.mxu0 0.0
        %5026 = vmatpush.msra.mxu0 0.0
        %5027 = vmatpush.msra.mxu0 0.0
        %5028 = vmatpush.msra.mxu0 %v5005
        %5029 = vmatpush.msra.mxu0 %v5003
        %5030 = vmatmul.f32.gmra.mxu0 %v5009
        %v5031 = vpop.f32.mrf.mxu0
        %v5032 = vadd.f32 0.0, %v5031
        %5033 = vmatmul.f32.gmra.mxu0 %v5012
        %v5034 = vpop.f32.mrf.mxu0
        %v5035 = vadd.f32 0.0, %v5034
        %5036 = vdwg.mxu0
        %5037 = vrot.lane.b32.xlu0 %v596, 104
        %v5038 = vpop.permute.xlu0 %5037
        %5039 = vrot.lane.b32.xlu0 %v599, 104
        %v5040 = vpop.permute.xlu0 %5039
        %5041 = vrot.lane.b32.xlu0 %v596, 72
        %v5042 = vpop.permute.xlu0 %5041
        %5043 = vrot.lane.b32.xlu0 %v599, 72
        %v5044 = vpop.permute.xlu0 %5043
        %v5045 = vsel %vm673, %v5038, 0
        %v5047 = vsel %vm673, %v5040, 0
        %v5049 = vsel %vm673, %v5042, 0
        %v5051 = vsel %vm673, %v5044, 0
        %5053 = vmatpush.xpose.msra.mxu0 0.0
        %5054 = vmatpush.xpose.msra.mxu0 0.0
        %5055 = vmatpush.xpose.msra.mxu0 0.0
        %5056 = vmatpush.xpose.msra.mxu0 0.0
        %5057 = vmatpush.xpose.msra.mxu0 0.0
        %5058 = vmatpush.xpose.msra.mxu0 0.0
        %5059 = vmatpush.xpose.msra.mxu0 0.0
        %5060 = vmatpush.xpose.msra.mxu0 0.0
        %5061 = vmatpush.xpose.msra.mxu0 0.0
        %5062 = vmatpush.xpose.msra.mxu0 0.0
        %5063 = vmatpush.xpose.msra.mxu0 0.0
        %5064 = vmatpush.xpose.msra.mxu0 0.0
        %5065 = vmatpush.xpose.msra.mxu0 0.0
        %5066 = vmatpush.xpose.msra.mxu0 0.0
        %5067 = vmatpush.xpose.msra.mxu0 %v5051
        %5068 = vmatpush.xpose.msra.mxu0 %v5049
        %5069 = vmatmul.f32.gmra.mxu0 %v5045
        %v5070 = vpop.f32.mrf.mxu0
        %v5071 = vadd.f32 0.0, %v5070
        %5072 = vmatmul.f32.gmra.mxu0 %v5047
        %v5073 = vpop.f32.mrf.mxu0
        %v5074 = vadd.f32 0.0, %v5073
        %5075 = vdwg.mxu0
        %5076 = vrot.lane.b32.xlu0 %v602, 104
        %v5077 = vpop.permute.xlu0 %5076
        %5078 = vrot.lane.b32.xlu0 %v605, 104
        %v5079 = vpop.permute.xlu0 %5078
        %5080 = vrot.lane.b32.xlu0 %v602, 72
        %v5081 = vpop.permute.xlu0 %5080
        %5082 = vrot.lane.b32.xlu0 %v605, 72
        %v5083 = vpop.permute.xlu0 %5082
        %v5084 = vsel %vm673, %v5077, 0
        %v5086 = vsel %vm673, %v5079, 0
        %v5088 = vsel %vm673, %v5081, 0
        %v5090 = vsel %vm673, %v5083, 0
        %5092 = vmatpush.xpose.msra.mxu0 0.0
        %5093 = vmatpush.xpose.msra.mxu0 0.0
        %5094 = vmatpush.xpose.msra.mxu0 0.0
        %5095 = vmatpush.xpose.msra.mxu0 0.0
        %5096 = vmatpush.xpose.msra.mxu0 0.0
        %5097 = vmatpush.xpose.msra.mxu0 0.0
        %5098 = vmatpush.xpose.msra.mxu0 0.0
        %5099 = vmatpush.xpose.msra.mxu0 0.0
        %5100 = vmatpush.xpose.msra.mxu0 0.0
        %5101 = vmatpush.xpose.msra.mxu0 0.0
        %5102 = vmatpush.xpose.msra.mxu0 0.0
        %5103 = vmatpush.xpose.msra.mxu0 0.0
        %5104 = vmatpush.xpose.msra.mxu0 0.0
        %5105 = vmatpush.xpose.msra.mxu0 0.0
        %5106 = vmatpush.xpose.msra.mxu0 %v5090
        %5107 = vmatpush.xpose.msra.mxu0 %v5088
        %5108 = vmatmul.f32.gmra.mxu0 %v5084
        %v5109 = vpop.f32.mrf.mxu0
        %v5110 = vadd.f32 0.0, %v5109
        %5111 = vmatmul.f32.gmra.mxu0 %v5086
        %v5112 = vpop.f32.mrf.mxu0
        %v5113 = vadd.f32 0.0, %v5112
        %5114 = vdwg.mxu0
        %5115 = vrot.lane.b32.xlu0 %v608, 104
        %v5116 = vpop.permute.xlu0 %5115
        %5117 = vrot.lane.b32.xlu0 %v611, 104
        %v5118 = vpop.permute.xlu0 %5117
        %5119 = vrot.lane.b32.xlu0 %v608, 72
        %v5120 = vpop.permute.xlu0 %5119
        %5121 = vrot.lane.b32.xlu0 %v611, 72
        %v5122 = vpop.permute.xlu0 %5121
        %v5123 = vsel %vm673, %v5116, 0
        %v5125 = vsel %vm673, %v5118, 0
        %v5127 = vsel %vm673, %v5120, 0
        %v5129 = vsel %vm673, %v5122, 0
        %5131 = vmatpush.xpose.msra.mxu0 0.0
        %5132 = vmatpush.xpose.msra.mxu0 0.0
        %5133 = vmatpush.xpose.msra.mxu0 0.0
        %5134 = vmatpush.xpose.msra.mxu0 0.0
        %5135 = vmatpush.xpose.msra.mxu0 0.0
        %5136 = vmatpush.xpose.msra.mxu0 0.0
        %5137 = vmatpush.xpose.msra.mxu0 0.0
        %5138 = vmatpush.xpose.msra.mxu0 0.0
        %5139 = vmatpush.xpose.msra.mxu0 0.0
        %5140 = vmatpush.xpose.msra.mxu0 0.0
        %5141 = vmatpush.xpose.msra.mxu0 0.0
        %5142 = vmatpush.xpose.msra.mxu0 0.0
        %5143 = vmatpush.xpose.msra.mxu0 0.0
        %5144 = vmatpush.xpose.msra.mxu0 0.0
        %5145 = vmatpush.xpose.msra.mxu0 %v5129
        %5146 = vmatpush.xpose.msra.mxu0 %v5127
        %5147 = vmatmul.f32.gmra.mxu0 %v5123
        %v5148 = vpop.f32.mrf.mxu0
        %v5149 = vadd.f32 0.0, %v5148
        %5150 = vmatmul.f32.gmra.mxu0 %v5125
        %v5151 = vpop.f32.mrf.mxu0
        %v5152 = vadd.f32 0.0, %v5151
        %5153 = vdwg.mxu0
        %5154 = vrot.lane.b32.xlu0 %v614, 104
        %v5155 = vpop.permute.xlu0 %5154
        %5156 = vrot.lane.b32.xlu0 %v617, 104
        %v5157 = vpop.permute.xlu0 %5156
        %5158 = vrot.lane.b32.xlu0 %v614, 72
        %v5159 = vpop.permute.xlu0 %5158
        %5160 = vrot.lane.b32.xlu0 %v617, 72
        %v5161 = vpop.permute.xlu0 %5160
        %v5162 = vsel %vm673, %v5155, 0
        %v5164 = vsel %vm673, %v5157, 0
        %v5166 = vsel %vm673, %v5159, 0
        %v5168 = vsel %vm673, %v5161, 0
        %5170 = vmatpush.xpose.msra.mxu0 0.0
        %5171 = vmatpush.xpose.msra.mxu0 0.0
        %5172 = vmatpush.xpose.msra.mxu0 0.0
        %5173 = vmatpush.xpose.msra.mxu0 0.0
        %5174 = vmatpush.xpose.msra.mxu0 0.0
        %5175 = vmatpush.xpose.msra.mxu0 0.0
        %5176 = vmatpush.xpose.msra.mxu0 0.0
        %5177 = vmatpush.xpose.msra.mxu0 0.0
        %5178 = vmatpush.xpose.msra.mxu0 0.0
        %5179 = vmatpush.xpose.msra.mxu0 0.0
        %5180 = vmatpush.xpose.msra.mxu0 0.0
        %5181 = vmatpush.xpose.msra.mxu0 0.0
        %5182 = vmatpush.xpose.msra.mxu0 0.0
        %5183 = vmatpush.xpose.msra.mxu0 0.0
        %5184 = vmatpush.xpose.msra.mxu0 %v5168
        %5185 = vmatpush.xpose.msra.mxu0 %v5166
        %5186 = vmatmul.f32.gmra.mxu0 %v5162
        %v5187 = vpop.f32.mrf.mxu0
        %v5188 = vadd.f32 0.0, %v5187
        %5189 = vmatmul.f32.gmra.mxu0 %v5164
        %v5190 = vpop.f32.mrf.mxu0
        %v5191 = vadd.f32 0.0, %v5190
        %5192 = vdwg.mxu0
        %5193 = vrot.lane.b32.xlu0 %v620, 104
        %v5194 = vpop.permute.xlu0 %5193
        %5195 = vrot.lane.b32.xlu0 %v623, 104
        %v5196 = vpop.permute.xlu0 %5195
        %5197 = vrot.lane.b32.xlu0 %v620, 72
        %v5198 = vpop.permute.xlu0 %5197
        %5199 = vrot.lane.b32.xlu0 %v623, 72
        %v5200 = vpop.permute.xlu0 %5199
        %v5201 = vsel %vm673, %v5194, 0
        %v5203 = vsel %vm673, %v5196, 0
        %v5205 = vsel %vm673, %v5198, 0
        %v5207 = vsel %vm673, %v5200, 0
        %5209 = vmatpush.xpose.msra.mxu0 0.0
        %5210 = vmatpush.xpose.msra.mxu0 0.0
        %5211 = vmatpush.xpose.msra.mxu0 0.0
        %5212 = vmatpush.xpose.msra.mxu0 0.0
        %5213 = vmatpush.xpose.msra.mxu0 0.0
        %5214 = vmatpush.xpose.msra.mxu0 0.0
        %5215 = vmatpush.xpose.msra.mxu0 0.0
        %5216 = vmatpush.xpose.msra.mxu0 0.0
        %5217 = vmatpush.xpose.msra.mxu0 0.0
        %5218 = vmatpush.xpose.msra.mxu0 0.0
        %5219 = vmatpush.xpose.msra.mxu0 0.0
        %5220 = vmatpush.xpose.msra.mxu0 0.0
        %5221 = vmatpush.xpose.msra.mxu0 0.0
        %5222 = vmatpush.xpose.msra.mxu0 0.0
        %5223 = vmatpush.xpose.msra.mxu0 %v5207
        %5224 = vmatpush.xpose.msra.mxu0 %v5205
        %5225 = vmatmul.f32.gmra.mxu0 %v5201
        %v5226 = vpop.f32.mrf.mxu0
        %v5227 = vadd.f32 0.0, %v5226
        %5228 = vmatmul.f32.gmra.mxu0 %v5203
        %v5229 = vpop.f32.mrf.mxu0
        %v5230 = vadd.f32 0.0, %v5229
        %5231 = vdwg.mxu0
        %5232 = vrot.lane.b32.xlu0 %v626, 104
        %v5233 = vpop.permute.xlu0 %5232
        %5234 = vrot.lane.b32.xlu0 %v629, 104
        %v5235 = vpop.permute.xlu0 %5234
        %5236 = vrot.lane.b32.xlu0 %v626, 72
        %v5237 = vpop.permute.xlu0 %5236
        %5238 = vrot.lane.b32.xlu0 %v629, 72
        %v5239 = vpop.permute.xlu0 %5238
        %v5240 = vsel %vm673, %v5233, 0
        %v5242 = vsel %vm673, %v5235, 0
        %v5244 = vsel %vm673, %v5237, 0
        %v5246 = vsel %vm673, %v5239, 0
        %5248 = vmatpush.xpose.msra.mxu0 0.0
        %5249 = vmatpush.xpose.msra.mxu0 0.0
        %5250 = vmatpush.xpose.msra.mxu0 0.0
        %5251 = vmatpush.xpose.msra.mxu0 0.0
        %5252 = vmatpush.xpose.msra.mxu0 0.0
        %5253 = vmatpush.xpose.msra.mxu0 0.0
        %5254 = vmatpush.xpose.msra.mxu0 0.0
        %5255 = vmatpush.xpose.msra.mxu0 0.0
        %5256 = vmatpush.xpose.msra.mxu0 0.0
        %5257 = vmatpush.xpose.msra.mxu0 0.0
        %5258 = vmatpush.xpose.msra.mxu0 0.0
        %5259 = vmatpush.xpose.msra.mxu0 0.0
        %5260 = vmatpush.xpose.msra.mxu0 0.0
        %5261 = vmatpush.xpose.msra.mxu0 0.0
        %5262 = vmatpush.xpose.msra.mxu0 %v5246
        %5263 = vmatpush.xpose.msra.mxu0 %v5244
        %5264 = vmatmul.f32.gmra.mxu0 %v5240
        %v5265 = vpop.f32.mrf.mxu0
        %v5266 = vadd.f32 0.0, %v5265
        %5267 = vmatmul.f32.gmra.mxu0 %v5242
        %v5268 = vpop.f32.mrf.mxu0
        %v5269 = vadd.f32 0.0, %v5268
        %5270 = vdwg.mxu0
        %5271 = vrot.lane.b32.xlu0 %v632, 104
        %v5272 = vpop.permute.xlu0 %5271
        %5273 = vrot.lane.b32.xlu0 %v635, 104
        %v5274 = vpop.permute.xlu0 %5273
        %5275 = vrot.lane.b32.xlu0 %v632, 72
        %v5276 = vpop.permute.xlu0 %5275
        %5277 = vrot.lane.b32.xlu0 %v635, 72
        %v5278 = vpop.permute.xlu0 %5277
        %v5279 = vsel %vm673, %v5272, 0
        %v5281 = vsel %vm673, %v5274, 0
        %v5283 = vsel %vm673, %v5276, 0
        %v5285 = vsel %vm673, %v5278, 0
        %5287 = vmatpush.xpose.msra.mxu0 0.0
        %5288 = vmatpush.xpose.msra.mxu0 0.0
        %5289 = vmatpush.xpose.msra.mxu0 0.0
        %5290 = vmatpush.xpose.msra.mxu0 0.0
        %5291 = vmatpush.xpose.msra.mxu0 0.0
        %5292 = vmatpush.xpose.msra.mxu0 0.0
        %5293 = vmatpush.xpose.msra.mxu0 0.0
        %5294 = vmatpush.xpose.msra.mxu0 0.0
        %5295 = vmatpush.xpose.msra.mxu0 0.0
        %5296 = vmatpush.xpose.msra.mxu0 0.0
        %5297 = vmatpush.xpose.msra.mxu0 0.0
        %5298 = vmatpush.xpose.msra.mxu0 0.0
        %5299 = vmatpush.xpose.msra.mxu0 0.0
        %5300 = vmatpush.xpose.msra.mxu0 0.0
        %5301 = vmatpush.xpose.msra.mxu0 %v5285
        %5302 = vmatpush.xpose.msra.mxu0 %v5283
        %5303 = vmatmul.f32.gmra.mxu0 %v5279
        %v5304 = vpop.f32.mrf.mxu0
        %v5305 = vadd.f32 0.0, %v5304
        %5306 = vmatmul.f32.gmra.mxu0 %v5281
        %v5307 = vpop.f32.mrf.mxu0
        %v5308 = vadd.f32 0.0, %v5307
        %5309 = vdwg.mxu0
        %5310 = vrot.lane.b32.xlu0 %v638, 104
        %v5311 = vpop.permute.xlu0 %5310
        %5312 = vrot.lane.b32.xlu0 %v641, 104
        %v5313 = vpop.permute.xlu0 %5312
        %5314 = vrot.lane.b32.xlu0 %v638, 72
        %v5315 = vpop.permute.xlu0 %5314
        %5316 = vrot.lane.b32.xlu0 %v641, 72
        %v5317 = vpop.permute.xlu0 %5316
        %v5318 = vsel %vm673, %v5311, 0
        %v5320 = vsel %vm673, %v5313, 0
        %v5322 = vsel %vm673, %v5315, 0
        %v5324 = vsel %vm673, %v5317, 0
        %5326 = vmatpush.xpose.msra.mxu0 0.0
        %5327 = vmatpush.xpose.msra.mxu0 0.0
        %5328 = vmatpush.xpose.msra.mxu0 0.0
        %5329 = vmatpush.xpose.msra.mxu0 0.0
        %5330 = vmatpush.xpose.msra.mxu0 0.0
        %5331 = vmatpush.xpose.msra.mxu0 0.0
        %5332 = vmatpush.xpose.msra.mxu0 0.0
        %5333 = vmatpush.xpose.msra.mxu0 0.0
        %5334 = vmatpush.xpose.msra.mxu0 0.0
        %5335 = vmatpush.xpose.msra.mxu0 0.0
        %5336 = vmatpush.xpose.msra.mxu0 0.0
        %5337 = vmatpush.xpose.msra.mxu0 0.0
        %5338 = vmatpush.xpose.msra.mxu0 0.0
        %5339 = vmatpush.xpose.msra.mxu0 0.0
        %5340 = vmatpush.xpose.msra.mxu0 %v5324
        %5341 = vmatpush.xpose.msra.mxu0 %v5322
        %5342 = vmatmul.f32.gmra.mxu0 %v5318
        %v5343 = vpop.f32.mrf.mxu0
        %v5344 = vadd.f32 0.0, %v5343
        %5345 = vmatmul.f32.gmra.mxu0 %v5320
        %v5346 = vpop.f32.mrf.mxu0
        %v5347 = vadd.f32 0.0, %v5346
        %5348 = vdwg.mxu0
        %5349 = vrot.lane.b32.xlu0 %v644, 104
        %v5350 = vpop.permute.xlu0 %5349
        %5351 = vrot.lane.b32.xlu0 %v647, 104
        %v5352 = vpop.permute.xlu0 %5351
        %5353 = vrot.lane.b32.xlu0 %v644, 72
        %v5354 = vpop.permute.xlu0 %5353
        %5355 = vrot.lane.b32.xlu0 %v647, 72
        %v5356 = vpop.permute.xlu0 %5355
        %v5357 = vsel %vm673, %v5350, 0
        %v5359 = vsel %vm673, %v5352, 0
        %v5361 = vsel %vm673, %v5354, 0
        %v5363 = vsel %vm673, %v5356, 0
        %5365 = vmatpush.xpose.msra.mxu0 0.0
        %5366 = vmatpush.xpose.msra.mxu0 0.0
        %5367 = vmatpush.xpose.msra.mxu0 0.0
        %5368 = vmatpush.xpose.msra.mxu0 0.0
        %5369 = vmatpush.xpose.msra.mxu0 0.0
        %5370 = vmatpush.xpose.msra.mxu0 0.0
        %5371 = vmatpush.xpose.msra.mxu0 0.0
        %5372 = vmatpush.xpose.msra.mxu0 0.0
        %5373 = vmatpush.xpose.msra.mxu0 0.0
        %5374 = vmatpush.xpose.msra.mxu0 0.0
        %5375 = vmatpush.xpose.msra.mxu0 0.0
        %5376 = vmatpush.xpose.msra.mxu0 0.0
        %5377 = vmatpush.xpose.msra.mxu0 0.0
        %5378 = vmatpush.xpose.msra.mxu0 0.0
        %5379 = vmatpush.xpose.msra.mxu0 %v5363
        %5380 = vmatpush.xpose.msra.mxu0 %v5361
        %5381 = vmatmul.f32.gmra.mxu0 %v5357
        %v5382 = vpop.f32.mrf.mxu0
        %v5383 = vadd.f32 0.0, %v5382
        %5384 = vmatmul.f32.gmra.mxu0 %v5359
        %v5385 = vpop.f32.mrf.mxu0
        %v5386 = vadd.f32 0.0, %v5385
        %5387 = vdwg.mxu0
        %5388 = vrot.lane.b32.xlu0 %v650, 104
        %v5389 = vpop.permute.xlu0 %5388
        %5390 = vrot.lane.b32.xlu0 %v653, 104
        %v5391 = vpop.permute.xlu0 %5390
        %5392 = vrot.lane.b32.xlu0 %v650, 72
        %v5393 = vpop.permute.xlu0 %5392
        %5394 = vrot.lane.b32.xlu0 %v653, 72
        %v5395 = vpop.permute.xlu0 %5394
        %v5396 = vsel %vm673, %v5389, 0
        %v5398 = vsel %vm673, %v5391, 0
        %v5400 = vsel %vm673, %v5393, 0
        %v5402 = vsel %vm673, %v5395, 0
        %5404 = vmatpush.xpose.msra.mxu0 0.0
        %5405 = vmatpush.xpose.msra.mxu0 0.0
        %5406 = vmatpush.xpose.msra.mxu0 0.0
        %5407 = vmatpush.xpose.msra.mxu0 0.0
        %5408 = vmatpush.xpose.msra.mxu0 0.0
        %5409 = vmatpush.xpose.msra.mxu0 0.0
        %5410 = vmatpush.xpose.msra.mxu0 0.0
        %5411 = vmatpush.xpose.msra.mxu0 0.0
        %5412 = vmatpush.xpose.msra.mxu0 0.0
        %5413 = vmatpush.xpose.msra.mxu0 0.0
        %5414 = vmatpush.xpose.msra.mxu0 0.0
        %5415 = vmatpush.xpose.msra.mxu0 0.0
        %5416 = vmatpush.xpose.msra.mxu0 0.0
        %5417 = vmatpush.xpose.msra.mxu0 0.0
        %5418 = vmatpush.xpose.msra.mxu0 %v5402
        %5419 = vmatpush.xpose.msra.mxu0 %v5400
        %5420 = vmatmul.f32.gmra.mxu0 %v5396
        %v5421 = vpop.f32.mrf.mxu0
        %v5422 = vadd.f32 0.0, %v5421
        %5423 = vmatmul.f32.gmra.mxu0 %v5398
        %v5424 = vpop.f32.mrf.mxu0
        %v5425 = vadd.f32 0.0, %v5424
        %5426 = vdwg.mxu0
        %5427 = vrot.lane.b32.xlu0 %v656, 104
        %v5428 = vpop.permute.xlu0 %5427
        %5429 = vrot.lane.b32.xlu0 %v659, 104
        %v5430 = vpop.permute.xlu0 %5429
        %5431 = vrot.lane.b32.xlu0 %v656, 72
        %v5432 = vpop.permute.xlu0 %5431
        %5433 = vrot.lane.b32.xlu0 %v659, 72
        %v5434 = vpop.permute.xlu0 %5433
        %v5435 = vsel %vm673, %v5428, 0
        %v5437 = vsel %vm673, %v5430, 0
        %v5439 = vsel %vm673, %v5432, 0
        %v5441 = vsel %vm673, %v5434, 0
        %5443 = vmatpush.xpose.msra.mxu0 0.0
        %5444 = vmatpush.xpose.msra.mxu0 0.0
        %5445 = vmatpush.xpose.msra.mxu0 0.0
        %5446 = vmatpush.xpose.msra.mxu0 0.0
        %5447 = vmatpush.xpose.msra.mxu0 0.0
        %5448 = vmatpush.xpose.msra.mxu0 0.0
        %5449 = vmatpush.xpose.msra.mxu0 0.0
        %5450 = vmatpush.xpose.msra.mxu0 0.0
        %5451 = vmatpush.xpose.msra.mxu0 0.0
        %5452 = vmatpush.xpose.msra.mxu0 0.0
        %5453 = vmatpush.xpose.msra.mxu0 0.0
        %5454 = vmatpush.xpose.msra.mxu0 0.0
        %5455 = vmatpush.xpose.msra.mxu0 0.0
        %5456 = vmatpush.xpose.msra.mxu0 0.0
        %5457 = vmatpush.xpose.msra.mxu0 %v5441
        %5458 = vmatpush.xpose.msra.mxu0 %v5439
        %5459 = vmatmul.f32.gmra.mxu0 %v5435
        %v5460 = vpop.f32.mrf.mxu0
        %v5461 = vadd.f32 0.0, %v5460
        %5462 = vmatmul.f32.gmra.mxu0 %v5437
        %v5463 = vpop.f32.mrf.mxu0
        %v5464 = vadd.f32 0.0, %v5463
        %5465 = vdwg.mxu0
        %5466 = vrot.lane.b32.xlu0 %v662, 104
        %v5467 = vpop.permute.xlu0 %5466
        %5468 = vrot.lane.b32.xlu0 %v665, 104
        %v5469 = vpop.permute.xlu0 %5468
        %5470 = vrot.lane.b32.xlu0 %v662, 72
        %v5471 = vpop.permute.xlu0 %5470
        %5472 = vrot.lane.b32.xlu0 %v665, 72
        %v5473 = vpop.permute.xlu0 %5472
        %v5474 = vsel %vm673, %v5467, 0
        %v5476 = vsel %vm673, %v5469, 0
        %v5478 = vsel %vm673, %v5471, 0
        %v5480 = vsel %vm673, %v5473, 0
        %5482 = vmatpush.xpose.msra.mxu0 0.0
        %5483 = vmatpush.xpose.msra.mxu0 0.0
        %5484 = vmatpush.xpose.msra.mxu0 0.0
        %5485 = vmatpush.xpose.msra.mxu0 0.0
        %5486 = vmatpush.xpose.msra.mxu0 0.0
        %5487 = vmatpush.xpose.msra.mxu0 0.0
        %5488 = vmatpush.xpose.msra.mxu0 0.0
        %5489 = vmatpush.xpose.msra.mxu0 0.0
        %5490 = vmatpush.xpose.msra.mxu0 0.0
        %5491 = vmatpush.xpose.msra.mxu0 0.0
        %5492 = vmatpush.xpose.msra.mxu0 0.0
        %5493 = vmatpush.xpose.msra.mxu0 0.0
        %5494 = vmatpush.xpose.msra.mxu0 0.0
        %5495 = vmatpush.xpose.msra.mxu0 0.0
        %5496 = vmatpush.xpose.msra.mxu0 %v5480
        %5497 = vmatpush.xpose.msra.mxu0 %v5478
        %5498 = vmatmul.f32.gmra.mxu0 %v5474
        %v5499 = vpop.f32.mrf.mxu0
        %v5500 = vadd.f32 0.0, %v5499
        %5501 = vmatmul.f32.gmra.mxu0 %v5476
        %v5502 = vpop.f32.mrf.mxu0
        %v5503 = vadd.f32 0.0, %v5502
        %5504 = vdwg.mxu0
        %v5505 = vsel %vm1112, %v5071, -inf
        %5506 = vmax.xlane.f32.xlu0 %v5505
        %v5507 = vpop.xlane.xlu0 %5506
        %v5508 = vsel %vm1112, %v5074, -inf
        %5509 = vmax.xlane.f32.xlu0 %v5508
        %v5510 = vpop.xlane.xlu0 %5509
        %v5511 = vsel %vm1112, %v5110, -inf
        %5512 = vmax.xlane.f32.xlu0 %v5511
        %v5513 = vpop.xlane.xlu0 %5512
        %v5514 = vsel %vm1112, %v5113, -inf
        %5515 = vmax.xlane.f32.xlu0 %v5514
        %v5516 = vpop.xlane.xlu0 %5515
        %v5517 = vsel %vm1112, %v5149, -inf
        %5518 = vmax.xlane.f32.xlu0 %v5517
        %v5519 = vpop.xlane.xlu0 %5518
        %v5520 = vsel %vm1112, %v5152, -inf
        %5521 = vmax.xlane.f32.xlu0 %v5520
        %v5522 = vpop.xlane.xlu0 %5521
        %v5523 = vsel %vm1112, %v5188, -inf
        %5524 = vmax.xlane.f32.xlu0 %v5523
        %v5525 = vpop.xlane.xlu0 %5524
        %v5526 = vsel %vm1112, %v5191, -inf
        %5527 = vmax.xlane.f32.xlu0 %v5526
        %v5528 = vpop.xlane.xlu0 %5527
        %v5529 = vsel %vm1112, %v5227, -inf
        %5530 = vmax.xlane.f32.xlu0 %v5529
        %v5531 = vpop.xlane.xlu0 %5530
        %v5532 = vsel %vm1112, %v5230, -inf
        %5533 = vmax.xlane.f32.xlu0 %v5532
        %v5534 = vpop.xlane.xlu0 %5533
        %v5535 = vsel %vm1112, %v5266, -inf
        %5536 = vmax.xlane.f32.xlu0 %v5535
        %v5537 = vpop.xlane.xlu0 %5536
        %v5538 = vsel %vm1112, %v5269, -inf
        %5539 = vmax.xlane.f32.xlu0 %v5538
        %v5540 = vpop.xlane.xlu0 %5539
        %v5541 = vsel %vm1112, %v5305, -inf
        %5542 = vmax.xlane.f32.xlu0 %v5541
        %v5543 = vpop.xlane.xlu0 %5542
        %v5544 = vsel %vm1112, %v5308, -inf
        %5545 = vmax.xlane.f32.xlu0 %v5544
        %v5546 = vpop.xlane.xlu0 %5545
        %v5547 = vsel %vm1112, %v5344, -inf
        %5548 = vmax.xlane.f32.xlu0 %v5547
        %v5549 = vpop.xlane.xlu0 %5548
        %v5550 = vsel %vm1112, %v5347, -inf
        %5551 = vmax.xlane.f32.xlu0 %v5550
        %v5552 = vpop.xlane.xlu0 %5551
        %v5553 = vsel %vm1112, %v5383, -inf
        %5554 = vmax.xlane.f32.xlu0 %v5553
        %v5555 = vpop.xlane.xlu0 %5554
        %v5556 = vsel %vm1112, %v5386, -inf
        %5557 = vmax.xlane.f32.xlu0 %v5556
        %v5558 = vpop.xlane.xlu0 %5557
        %v5559 = vsel %vm1112, %v5422, -inf
        %5560 = vmax.xlane.f32.xlu0 %v5559
        %v5561 = vpop.xlane.xlu0 %5560
        %v5562 = vsel %vm1112, %v5425, -inf
        %5563 = vmax.xlane.f32.xlu0 %v5562
        %v5564 = vpop.xlane.xlu0 %5563
        %v5565 = vsel %vm1112, %v5461, -inf
        %5566 = vmax.xlane.f32.xlu0 %v5565
        %v5567 = vpop.xlane.xlu0 %5566
        %v5568 = vsel %vm1112, %v5464, -inf
        %5569 = vmax.xlane.f32.xlu0 %v5568
        %v5570 = vpop.xlane.xlu0 %5569
        %v5571 = vsel %vm1112, %v5500, -inf
        %5572 = vmax.xlane.f32.xlu0 %v5571
        %v5573 = vpop.xlane.xlu0 %5572
        %v5574 = vsel %vm1112, %v5503, -inf
        %5575 = vmax.xlane.f32.xlu0 %v5574
        %v5576 = vpop.xlane.xlu0 %5575
        %v5577 = vsub.f32 %v5071, %v5507
        %v5578 = vsub.f32 %v5074, %v5510
        %v5579 = vsub.f32 %v5110, %v5513
        %v5580 = vsub.f32 %v5113, %v5516
        %v5581 = vsub.f32 %v5149, %v5519
        %v5582 = vsub.f32 %v5152, %v5522
        %v5583 = vsub.f32 %v5188, %v5525
        %v5584 = vsub.f32 %v5191, %v5528
        %v5585 = vsub.f32 %v5227, %v5531
        %v5586 = vsub.f32 %v5230, %v5534
        %v5587 = vsub.f32 %v5266, %v5537
        %v5588 = vsub.f32 %v5269, %v5540
        %v5589 = vsub.f32 %v5305, %v5543
        %v5590 = vsub.f32 %v5308, %v5546
        %v5591 = vsub.f32 %v5344, %v5549
        %v5592 = vsub.f32 %v5347, %v5552
        %v5593 = vsub.f32 %v5383, %v5555
        %v5594 = vsub.f32 %v5386, %v5558
        %v5595 = vsub.f32 %v5422, %v5561
        %v5596 = vsub.f32 %v5425, %v5564
        %v5597 = vsub.f32 %v5461, %v5567
        %v5598 = vsub.f32 %v5464, %v5570
        %v5599 = vsub.f32 %v5500, %v5573
        %v5600 = vsub.f32 %v5503, %v5576
        %v5601 = vmul.f32 %v5577, 1.442695
        %v5602 = vpow.pop %v5601
        %v5603 = vmul.f32 %v5578, 1.442695
        %v5604 = vpow.pop %v5603
        %v5605 = vmul.f32 %v5579, 1.442695
        %v5606 = vpow.pop %v5605
        %v5607 = vmul.f32 %v5580, 1.442695
        %v5608 = vpow.pop %v5607
        %v5609 = vmul.f32 %v5581, 1.442695
        %v5610 = vpow.pop %v5609
        %v5611 = vmul.f32 %v5582, 1.442695
        %v5612 = vpow.pop %v5611
        %v5613 = vmul.f32 %v5583, 1.442695
        %v5614 = vpow.pop %v5613
        %v5615 = vmul.f32 %v5584, 1.442695
        %v5616 = vpow.pop %v5615
        %v5617 = vmul.f32 %v5585, 1.442695
        %v5618 = vpow.pop %v5617
        %v5619 = vmul.f32 %v5586, 1.442695
        %v5620 = vpow.pop %v5619
        %v5621 = vmul.f32 %v5587, 1.442695
        %v5622 = vpow.pop %v5621
        %v5623 = vmul.f32 %v5588, 1.442695
        %v5624 = vpow.pop %v5623
        %v5625 = vmul.f32 %v5589, 1.442695
        %v5626 = vpow.pop %v5625
        %v5627 = vmul.f32 %v5590, 1.442695
        %v5628 = vpow.pop %v5627
        %v5629 = vmul.f32 %v5591, 1.442695
        %v5630 = vpow.pop %v5629
        %v5631 = vmul.f32 %v5592, 1.442695
        %v5632 = vpow.pop %v5631
        %v5633 = vmul.f32 %v5593, 1.442695
        %v5634 = vpow.pop %v5633
        %v5635 = vmul.f32 %v5594, 1.442695
        %v5636 = vpow.pop %v5635
        %v5637 = vmul.f32 %v5595, 1.442695
        %v5638 = vpow.pop %v5637
        %v5639 = vmul.f32 %v5596, 1.442695
        %v5640 = vpow.pop %v5639
        %v5641 = vmul.f32 %v5597, 1.442695
        %v5642 = vpow.pop %v5641
        %v5643 = vmul.f32 %v5598, 1.442695
        %v5644 = vpow.pop %v5643
        %v5645 = vmul.f32 %v5599, 1.442695
        %v5646 = vpow.pop %v5645
        %v5647 = vmul.f32 %v5600, 1.442695
        %v5648 = vpow.pop %v5647
        %v5649 = vsel %vm1112, %v5602, 0.0
        %5650 = vadd.xlane.f32.xlu0 %v5649
        %v5651 = vpop.xlane.xlu0 %5650
        %v5652 = vsel %vm1112, %v5604, 0.0
        %5653 = vadd.xlane.f32.xlu0 %v5652
        %v5654 = vpop.xlane.xlu0 %5653
        %v5655 = vsel %vm1112, %v5606, 0.0
        %5656 = vadd.xlane.f32.xlu0 %v5655
        %v5657 = vpop.xlane.xlu0 %5656
        %v5658 = vsel %vm1112, %v5608, 0.0
        %5659 = vadd.xlane.f32.xlu0 %v5658
        %v5660 = vpop.xlane.xlu0 %5659
        %v5661 = vsel %vm1112, %v5610, 0.0
        %5662 = vadd.xlane.f32.xlu0 %v5661
        %v5663 = vpop.xlane.xlu0 %5662
        %v5664 = vsel %vm1112, %v5612, 0.0
        %5665 = vadd.xlane.f32.xlu0 %v5664
        %v5666 = vpop.xlane.xlu0 %5665
        %v5667 = vsel %vm1112, %v5614, 0.0
        %5668 = vadd.xlane.f32.xlu0 %v5667
        %v5669 = vpop.xlane.xlu0 %5668
        %v5670 = vsel %vm1112, %v5616, 0.0
        %5671 = vadd.xlane.f32.xlu0 %v5670
        %v5672 = vpop.xlane.xlu0 %5671
        %v5673 = vsel %vm1112, %v5618, 0.0
        %5674 = vadd.xlane.f32.xlu0 %v5673
        %v5675 = vpop.xlane.xlu0 %5674
        %v5676 = vsel %vm1112, %v5620, 0.0
        %5677 = vadd.xlane.f32.xlu0 %v5676
        %v5678 = vpop.xlane.xlu0 %5677
        %v5679 = vsel %vm1112, %v5622, 0.0
        %5680 = vadd.xlane.f32.xlu0 %v5679
        %v5681 = vpop.xlane.xlu0 %5680
        %v5682 = vsel %vm1112, %v5624, 0.0
        %5683 = vadd.xlane.f32.xlu0 %v5682
        %v5684 = vpop.xlane.xlu0 %5683
        %v5685 = vsel %vm1112, %v5626, 0.0
        %5686 = vadd.xlane.f32.xlu0 %v5685
        %v5687 = vpop.xlane.xlu0 %5686
        %v5688 = vsel %vm1112, %v5628, 0.0
        %5689 = vadd.xlane.f32.xlu0 %v5688
        %v5690 = vpop.xlane.xlu0 %5689
        %v5691 = vsel %vm1112, %v5630, 0.0
        %5692 = vadd.xlane.f32.xlu0 %v5691
        %v5693 = vpop.xlane.xlu0 %5692
        %v5694 = vsel %vm1112, %v5632, 0.0
        %5695 = vadd.xlane.f32.xlu0 %v5694
        %v5696 = vpop.xlane.xlu0 %5695
        %v5697 = vsel %vm1112, %v5634, 0.0
        %5698 = vadd.xlane.f32.xlu0 %v5697
        %v5699 = vpop.xlane.xlu0 %5698
        %v5700 = vsel %vm1112, %v5636, 0.0
        %5701 = vadd.xlane.f32.xlu0 %v5700
        %v5702 = vpop.xlane.xlu0 %5701
        %v5703 = vsel %vm1112, %v5638, 0.0
        %5704 = vadd.xlane.f32.xlu0 %v5703
        %v5705 = vpop.xlane.xlu0 %5704
        %v5706 = vsel %vm1112, %v5640, 0.0
        %5707 = vadd.xlane.f32.xlu0 %v5706
        %v5708 = vpop.xlane.xlu0 %5707
        %v5709 = vsel %vm1112, %v5642, 0.0
        %5710 = vadd.xlane.f32.xlu0 %v5709
        %v5711 = vpop.xlane.xlu0 %5710
        %v5712 = vsel %vm1112, %v5644, 0.0
        %5713 = vadd.xlane.f32.xlu0 %v5712
        %v5714 = vpop.xlane.xlu0 %5713
        %v5715 = vsel %vm1112, %v5646, 0.0
        %5716 = vadd.xlane.f32.xlu0 %v5715
        %v5717 = vpop.xlane.xlu0 %5716
        %v5718 = vsel %vm1112, %v5648, 0.0
        %5719 = vadd.xlane.f32.xlu0 %v5718
        %v5720 = vpop.xlane.xlu0 %5719
        %v5721 = vrcp.pop %v5651
        %v5722 = vmul.f32 %v5651, %v5721
        %v5723 = vsub.f32 1.0, %v5722
        %v5724 = vmul.f32 %v5721, %v5723
        %v5725 = vadd.f32 %v5721, %v5724
        %vm5726 = vweird.f32 %v5651
        %vm5727 = vweird.f32 %v5721
        %vm5728 = vmor %vm5726, %vm5727
        %v5729 = vsel %vm5728, %v5721, %v5725
        %v5730 = vand.u32 2147483647, %v5651
        %vm5731 = vcmp.eq.f32.partialorder %v5730, 8.507059e+37
        %v5732 = vand.u32 %v5651, 2147483648
        %v5733 = vor.u32 1.1754944e-38, %v5732
        %v5734 = vsel %vm5731, %v5733, %v5729
        %v5735 = vmul.f32 %v5602, %v5734
        %v5736 = vrcp.pop %v5654
        %v5737 = vmul.f32 %v5654, %v5736
        %v5738 = vsub.f32 1.0, %v5737
        %v5739 = vmul.f32 %v5736, %v5738
        %v5740 = vadd.f32 %v5736, %v5739
        %vm5741 = vweird.f32 %v5654
        %vm5742 = vweird.f32 %v5736
        %vm5743 = vmor %vm5741, %vm5742
        %v5744 = vsel %vm5743, %v5736, %v5740
        %v5745 = vand.u32 2147483647, %v5654
        %vm5746 = vcmp.eq.f32.partialorder %v5745, 8.507059e+37
        %v5747 = vand.u32 %v5654, 2147483648
        %v5748 = vor.u32 1.1754944e-38, %v5747
        %v5749 = vsel %vm5746, %v5748, %v5744
        %v5750 = vmul.f32 %v5604, %v5749
        %v5751 = vrcp.pop %v5657
        %v5752 = vmul.f32 %v5657, %v5751
        %v5753 = vsub.f32 1.0, %v5752
        %v5754 = vmul.f32 %v5751, %v5753
        %v5755 = vadd.f32 %v5751, %v5754
        %vm5756 = vweird.f32 %v5657
        %vm5757 = vweird.f32 %v5751
        %vm5758 = vmor %vm5756, %vm5757
        %v5759 = vsel %vm5758, %v5751, %v5755
        %v5760 = vand.u32 2147483647, %v5657
        %vm5761 = vcmp.eq.f32.partialorder %v5760, 8.507059e+37
        %v5762 = vand.u32 %v5657, 2147483648
        %v5763 = vor.u32 1.1754944e-38, %v5762
        %v5764 = vsel %vm5761, %v5763, %v5759
        %v5765 = vmul.f32 %v5606, %v5764
        %v5766 = vrcp.pop %v5660
        %v5767 = vmul.f32 %v5660, %v5766
        %v5768 = vsub.f32 1.0, %v5767
        %v5769 = vmul.f32 %v5766, %v5768
        %v5770 = vadd.f32 %v5766, %v5769
        %vm5771 = vweird.f32 %v5660
        %vm5772 = vweird.f32 %v5766
        %vm5773 = vmor %vm5771, %vm5772
        %v5774 = vsel %vm5773, %v5766, %v5770
        %v5775 = vand.u32 2147483647, %v5660
        %vm5776 = vcmp.eq.f32.partialorder %v5775, 8.507059e+37
        %v5777 = vand.u32 %v5660, 2147483648
        %v5778 = vor.u32 1.1754944e-38, %v5777
        %v5779 = vsel %vm5776, %v5778, %v5774
        %v5780 = vmul.f32 %v5608, %v5779
        %v5781 = vrcp.pop %v5663
        %v5782 = vmul.f32 %v5663, %v5781
        %v5783 = vsub.f32 1.0, %v5782
        %v5784 = vmul.f32 %v5781, %v5783
        %v5785 = vadd.f32 %v5781, %v5784
        %vm5786 = vweird.f32 %v5663
        %vm5787 = vweird.f32 %v5781
        %vm5788 = vmor %vm5786, %vm5787
        %v5789 = vsel %vm5788, %v5781, %v5785
        %v5790 = vand.u32 2147483647, %v5663
        %vm5791 = vcmp.eq.f32.partialorder %v5790, 8.507059e+37
        %v5792 = vand.u32 %v5663, 2147483648
        %v5793 = vor.u32 1.1754944e-38, %v5792
        %v5794 = vsel %vm5791, %v5793, %v5789
        %v5795 = vmul.f32 %v5610, %v5794
        %v5796 = vrcp.pop %v5666
        %v5797 = vmul.f32 %v5666, %v5796
        %v5798 = vsub.f32 1.0, %v5797
        %v5799 = vmul.f32 %v5796, %v5798
        %v5800 = vadd.f32 %v5796, %v5799
        %vm5801 = vweird.f32 %v5666
        %vm5802 = vweird.f32 %v5796
        %vm5803 = vmor %vm5801, %vm5802
        %v5804 = vsel %vm5803, %v5796, %v5800
        %v5805 = vand.u32 2147483647, %v5666
        %vm5806 = vcmp.eq.f32.partialorder %v5805, 8.507059e+37
        %v5807 = vand.u32 %v5666, 2147483648
        %v5808 = vor.u32 1.1754944e-38, %v5807
        %v5809 = vsel %vm5806, %v5808, %v5804
        %v5810 = vmul.f32 %v5612, %v5809
        %v5811 = vrcp.pop %v5669
        %v5812 = vmul.f32 %v5669, %v5811
        %v5813 = vsub.f32 1.0, %v5812
        %v5814 = vmul.f32 %v5811, %v5813
        %v5815 = vadd.f32 %v5811, %v5814
        %vm5816 = vweird.f32 %v5669
        %vm5817 = vweird.f32 %v5811
        %vm5818 = vmor %vm5816, %vm5817
        %v5819 = vsel %vm5818, %v5811, %v5815
        %v5820 = vand.u32 2147483647, %v5669
        %vm5821 = vcmp.eq.f32.partialorder %v5820, 8.507059e+37
        %v5822 = vand.u32 %v5669, 2147483648
        %v5823 = vor.u32 1.1754944e-38, %v5822
        %v5824 = vsel %vm5821, %v5823, %v5819
        %v5825 = vmul.f32 %v5614, %v5824
        %v5826 = vrcp.pop %v5672
        %v5827 = vmul.f32 %v5672, %v5826
        %v5828 = vsub.f32 1.0, %v5827
        %v5829 = vmul.f32 %v5826, %v5828
        %v5830 = vadd.f32 %v5826, %v5829
        %vm5831 = vweird.f32 %v5672
        %vm5832 = vweird.f32 %v5826
        %vm5833 = vmor %vm5831, %vm5832
        %v5834 = vsel %vm5833, %v5826, %v5830
        %v5835 = vand.u32 2147483647, %v5672
        %vm5836 = vcmp.eq.f32.partialorder %v5835, 8.507059e+37
        %v5837 = vand.u32 %v5672, 2147483648
        %v5838 = vor.u32 1.1754944e-38, %v5837
        %v5839 = vsel %vm5836, %v5838, %v5834
        %v5840 = vmul.f32 %v5616, %v5839
        %v5841 = vrcp.pop %v5675
        %v5842 = vmul.f32 %v5675, %v5841
        %v5843 = vsub.f32 1.0, %v5842
        %v5844 = vmul.f32 %v5841, %v5843
        %v5845 = vadd.f32 %v5841, %v5844
        %vm5846 = vweird.f32 %v5675
        %vm5847 = vweird.f32 %v5841
        %vm5848 = vmor %vm5846, %vm5847
        %v5849 = vsel %vm5848, %v5841, %v5845
        %v5850 = vand.u32 2147483647, %v5675
        %vm5851 = vcmp.eq.f32.partialorder %v5850, 8.507059e+37
        %v5852 = vand.u32 %v5675, 2147483648
        %v5853 = vor.u32 1.1754944e-38, %v5852
        %v5854 = vsel %vm5851, %v5853, %v5849
        %v5855 = vmul.f32 %v5618, %v5854
        %v5856 = vrcp.pop %v5678
        %v5857 = vmul.f32 %v5678, %v5856
        %v5858 = vsub.f32 1.0, %v5857
        %v5859 = vmul.f32 %v5856, %v5858
        %v5860 = vadd.f32 %v5856, %v5859
        %vm5861 = vweird.f32 %v5678
        %vm5862 = vweird.f32 %v5856
        %vm5863 = vmor %vm5861, %vm5862
        %v5864 = vsel %vm5863, %v5856, %v5860
        %v5865 = vand.u32 2147483647, %v5678
        %vm5866 = vcmp.eq.f32.partialorder %v5865, 8.507059e+37
        %v5867 = vand.u32 %v5678, 2147483648
        %v5868 = vor.u32 1.1754944e-38, %v5867
        %v5869 = vsel %vm5866, %v5868, %v5864
        %v5870 = vmul.f32 %v5620, %v5869
        %v5871 = vrcp.pop %v5681
        %v5872 = vmul.f32 %v5681, %v5871
        %v5873 = vsub.f32 1.0, %v5872
        %v5874 = vmul.f32 %v5871, %v5873
        %v5875 = vadd.f32 %v5871, %v5874
        %vm5876 = vweird.f32 %v5681
        %vm5877 = vweird.f32 %v5871
        %vm5878 = vmor %vm5876, %vm5877
        %v5879 = vsel %vm5878, %v5871, %v5875
        %v5880 = vand.u32 2147483647, %v5681
        %vm5881 = vcmp.eq.f32.partialorder %v5880, 8.507059e+37
        %v5882 = vand.u32 %v5681, 2147483648
        %v5883 = vor.u32 1.1754944e-38, %v5882
        %v5884 = vsel %vm5881, %v5883, %v5879
        %v5885 = vmul.f32 %v5622, %v5884
        %v5886 = vrcp.pop %v5684
        %v5887 = vmul.f32 %v5684, %v5886
        %v5888 = vsub.f32 1.0, %v5887
        %v5889 = vmul.f32 %v5886, %v5888
        %v5890 = vadd.f32 %v5886, %v5889
        %vm5891 = vweird.f32 %v5684
        %vm5892 = vweird.f32 %v5886
        %vm5893 = vmor %vm5891, %vm5892
        %v5894 = vsel %vm5893, %v5886, %v5890
        %v5895 = vand.u32 2147483647, %v5684
        %vm5896 = vcmp.eq.f32.partialorder %v5895, 8.507059e+37
        %v5897 = vand.u32 %v5684, 2147483648
        %v5898 = vor.u32 1.1754944e-38, %v5897
        %v5899 = vsel %vm5896, %v5898, %v5894
        %v5900 = vmul.f32 %v5624, %v5899
        %v5901 = vrcp.pop %v5687
        %v5902 = vmul.f32 %v5687, %v5901
        %v5903 = vsub.f32 1.0, %v5902
        %v5904 = vmul.f32 %v5901, %v5903
        %v5905 = vadd.f32 %v5901, %v5904
        %vm5906 = vweird.f32 %v5687
        %vm5907 = vweird.f32 %v5901
        %vm5908 = vmor %vm5906, %vm5907
        %v5909 = vsel %vm5908, %v5901, %v5905
        %v5910 = vand.u32 2147483647, %v5687
        %vm5911 = vcmp.eq.f32.partialorder %v5910, 8.507059e+37
        %v5912 = vand.u32 %v5687, 2147483648
        %v5913 = vor.u32 1.1754944e-38, %v5912
        %v5914 = vsel %vm5911, %v5913, %v5909
        %v5915 = vmul.f32 %v5626, %v5914
        %v5916 = vrcp.pop %v5690
        %v5917 = vmul.f32 %v5690, %v5916
        %v5918 = vsub.f32 1.0, %v5917
        %v5919 = vmul.f32 %v5916, %v5918
        %v5920 = vadd.f32 %v5916, %v5919
        %vm5921 = vweird.f32 %v5690
        %vm5922 = vweird.f32 %v5916
        %vm5923 = vmor %vm5921, %vm5922
        %v5924 = vsel %vm5923, %v5916, %v5920
        %v5925 = vand.u32 2147483647, %v5690
        %vm5926 = vcmp.eq.f32.partialorder %v5925, 8.507059e+37
        %v5927 = vand.u32 %v5690, 2147483648
        %v5928 = vor.u32 1.1754944e-38, %v5927
        %v5929 = vsel %vm5926, %v5928, %v5924
        %v5930 = vmul.f32 %v5628, %v5929
        %v5931 = vrcp.pop %v5693
        %v5932 = vmul.f32 %v5693, %v5931
        %v5933 = vsub.f32 1.0, %v5932
        %v5934 = vmul.f32 %v5931, %v5933
        %v5935 = vadd.f32 %v5931, %v5934
        %vm5936 = vweird.f32 %v5693
        %vm5937 = vweird.f32 %v5931
        %vm5938 = vmor %vm5936, %vm5937
        %v5939 = vsel %vm5938, %v5931, %v5935
        %v5940 = vand.u32 2147483647, %v5693
        %vm5941 = vcmp.eq.f32.partialorder %v5940, 8.507059e+37
        %v5942 = vand.u32 %v5693, 2147483648
        %v5943 = vor.u32 1.1754944e-38, %v5942
        %v5944 = vsel %vm5941, %v5943, %v5939
        %v5945 = vmul.f32 %v5630, %v5944
        %v5946 = vrcp.pop %v5696
        %v5947 = vmul.f32 %v5696, %v5946
        %v5948 = vsub.f32 1.0, %v5947
        %v5949 = vmul.f32 %v5946, %v5948
        %v5950 = vadd.f32 %v5946, %v5949
        %vm5951 = vweird.f32 %v5696
        %vm5952 = vweird.f32 %v5946
        %vm5953 = vmor %vm5951, %vm5952
        %v5954 = vsel %vm5953, %v5946, %v5950
        %v5955 = vand.u32 2147483647, %v5696
        %vm5956 = vcmp.eq.f32.partialorder %v5955, 8.507059e+37
        %v5957 = vand.u32 %v5696, 2147483648
        %v5958 = vor.u32 1.1754944e-38, %v5957
        %v5959 = vsel %vm5956, %v5958, %v5954
        %v5960 = vmul.f32 %v5632, %v5959
        %v5961 = vrcp.pop %v5699
        %v5962 = vmul.f32 %v5699, %v5961
        %v5963 = vsub.f32 1.0, %v5962
        %v5964 = vmul.f32 %v5961, %v5963
        %v5965 = vadd.f32 %v5961, %v5964
        %vm5966 = vweird.f32 %v5699
        %vm5967 = vweird.f32 %v5961
        %vm5968 = vmor %vm5966, %vm5967
        %v5969 = vsel %vm5968, %v5961, %v5965
        %v5970 = vand.u32 2147483647, %v5699
        %vm5971 = vcmp.eq.f32.partialorder %v5970, 8.507059e+37
        %v5972 = vand.u32 %v5699, 2147483648
        %v5973 = vor.u32 1.1754944e-38, %v5972
        %v5974 = vsel %vm5971, %v5973, %v5969
        %v5975 = vmul.f32 %v5634, %v5974
        %v5976 = vrcp.pop %v5702
        %v5977 = vmul.f32 %v5702, %v5976
        %v5978 = vsub.f32 1.0, %v5977
        %v5979 = vmul.f32 %v5976, %v5978
        %v5980 = vadd.f32 %v5976, %v5979
        %vm5981 = vweird.f32 %v5702
        %vm5982 = vweird.f32 %v5976
        %vm5983 = vmor %vm5981, %vm5982
        %v5984 = vsel %vm5983, %v5976, %v5980
        %v5985 = vand.u32 2147483647, %v5702
        %vm5986 = vcmp.eq.f32.partialorder %v5985, 8.507059e+37
        %v5987 = vand.u32 %v5702, 2147483648
        %v5988 = vor.u32 1.1754944e-38, %v5987
        %v5989 = vsel %vm5986, %v5988, %v5984
        %v5990 = vmul.f32 %v5636, %v5989
        %v5991 = vrcp.pop %v5705
        %v5992 = vmul.f32 %v5705, %v5991
        %v5993 = vsub.f32 1.0, %v5992
        %v5994 = vmul.f32 %v5991, %v5993
        %v5995 = vadd.f32 %v5991, %v5994
        %vm5996 = vweird.f32 %v5705
        %vm5997 = vweird.f32 %v5991
        %vm5998 = vmor %vm5996, %vm5997
        %v5999 = vsel %vm5998, %v5991, %v5995
        %v6000 = vand.u32 2147483647, %v5705
        %vm6001 = vcmp.eq.f32.partialorder %v6000, 8.507059e+37
        %v6002 = vand.u32 %v5705, 2147483648
        %v6003 = vor.u32 1.1754944e-38, %v6002
        %v6004 = vsel %vm6001, %v6003, %v5999
        %v6005 = vmul.f32 %v5638, %v6004
        %v6006 = vrcp.pop %v5708
        %v6007 = vmul.f32 %v5708, %v6006
        %v6008 = vsub.f32 1.0, %v6007
        %v6009 = vmul.f32 %v6006, %v6008
        %v6010 = vadd.f32 %v6006, %v6009
        %vm6011 = vweird.f32 %v5708
        %vm6012 = vweird.f32 %v6006
        %vm6013 = vmor %vm6011, %vm6012
        %v6014 = vsel %vm6013, %v6006, %v6010
        %v6015 = vand.u32 2147483647, %v5708
        %vm6016 = vcmp.eq.f32.partialorder %v6015, 8.507059e+37
        %v6017 = vand.u32 %v5708, 2147483648
        %v6018 = vor.u32 1.1754944e-38, %v6017
        %v6019 = vsel %vm6016, %v6018, %v6014
        %v6020 = vmul.f32 %v5640, %v6019
        %v6021 = vrcp.pop %v5711
        %v6022 = vmul.f32 %v5711, %v6021
        %v6023 = vsub.f32 1.0, %v6022
        %v6024 = vmul.f32 %v6021, %v6023
        %v6025 = vadd.f32 %v6021, %v6024
        %vm6026 = vweird.f32 %v5711
        %vm6027 = vweird.f32 %v6021
        %vm6028 = vmor %vm6026, %vm6027
        %v6029 = vsel %vm6028, %v6021, %v6025
        %v6030 = vand.u32 2147483647, %v5711
        %vm6031 = vcmp.eq.f32.partialorder %v6030, 8.507059e+37
        %v6032 = vand.u32 %v5711, 2147483648
        %v6033 = vor.u32 1.1754944e-38, %v6032
        %v6034 = vsel %vm6031, %v6033, %v6029
        %v6035 = vmul.f32 %v5642, %v6034
        %v6036 = vrcp.pop %v5714
        %v6037 = vmul.f32 %v5714, %v6036
        %v6038 = vsub.f32 1.0, %v6037
        %v6039 = vmul.f32 %v6036, %v6038
        %v6040 = vadd.f32 %v6036, %v6039
        %vm6041 = vweird.f32 %v5714
        %vm6042 = vweird.f32 %v6036
        %vm6043 = vmor %vm6041, %vm6042
        %v6044 = vsel %vm6043, %v6036, %v6040
        %v6045 = vand.u32 2147483647, %v5714
        %vm6046 = vcmp.eq.f32.partialorder %v6045, 8.507059e+37
        %v6047 = vand.u32 %v5714, 2147483648
        %v6048 = vor.u32 1.1754944e-38, %v6047
        %v6049 = vsel %vm6046, %v6048, %v6044
        %v6050 = vmul.f32 %v5644, %v6049
        %v6051 = vrcp.pop %v5717
        %v6052 = vmul.f32 %v5717, %v6051
        %v6053 = vsub.f32 1.0, %v6052
        %v6054 = vmul.f32 %v6051, %v6053
        %v6055 = vadd.f32 %v6051, %v6054
        %vm6056 = vweird.f32 %v5717
        %vm6057 = vweird.f32 %v6051
        %vm6058 = vmor %vm6056, %vm6057
        %v6059 = vsel %vm6058, %v6051, %v6055
        %v6060 = vand.u32 2147483647, %v5717
        %vm6061 = vcmp.eq.f32.partialorder %v6060, 8.507059e+37
        %v6062 = vand.u32 %v5717, 2147483648
        %v6063 = vor.u32 1.1754944e-38, %v6062
        %v6064 = vsel %vm6061, %v6063, %v6059
        %v6065 = vmul.f32 %v5646, %v6064
        %v6066 = vrcp.pop %v5720
        %v6067 = vmul.f32 %v5720, %v6066
        %v6068 = vsub.f32 1.0, %v6067
        %v6069 = vmul.f32 %v6066, %v6068
        %v6070 = vadd.f32 %v6066, %v6069
        %vm6071 = vweird.f32 %v5720
        %vm6072 = vweird.f32 %v6066
        %vm6073 = vmor %vm6071, %vm6072
        %v6074 = vsel %vm6073, %v6066, %v6070
        %v6075 = vand.u32 2147483647, %v5720
        %vm6076 = vcmp.eq.f32.partialorder %v6075, 8.507059e+37
        %v6077 = vand.u32 %v5720, 2147483648
        %v6078 = vor.u32 1.1754944e-38, %v6077
        %v6079 = vsel %vm6076, %v6078, %v6074
        %v6080 = vmul.f32 %v5648, %v6079
        %6081 = vrot.lane.b32.xlu0 %v596, 40
        %v6082 = vpop.permute.xlu0 %6081
        %6083 = vrot.lane.b32.xlu0 %v599, 40
        %v6084 = vpop.permute.xlu0 %6083
        %v6088 = vsel %vm1112, %v5735, 0
        %v6091 = vsel %vm1112, %v5750, 0
        %6093 = vmatpush.msra.mxu0 0.0
        %6094 = vmatpush.msra.mxu0 0.0
        %6095 = vmatpush.msra.mxu0 0.0
        %6096 = vmatpush.msra.mxu0 0.0
        %6097 = vmatpush.msra.mxu0 0.0
        %6098 = vmatpush.msra.mxu0 0.0
        %6099 = vmatpush.msra.mxu0 0.0
        %6100 = vmatpush.msra.mxu0 0.0
        %6101 = vmatpush.msra.mxu0 0.0
        %6102 = vmatpush.msra.mxu0 0.0
        %6103 = vmatpush.msra.mxu0 0.0
        %6104 = vmatpush.msra.mxu0 0.0
        %6105 = vmatpush.msra.mxu0 0.0
        %6106 = vmatpush.msra.mxu0 0.0
        %6107 = vmatpush.msra.mxu0 %v6084
        %6108 = vmatpush.msra.mxu0 %v6082
        %6109 = vmatmul.f32.gmra.mxu0 %v6088
        %v6110 = vpop.f32.mrf.mxu0
        %v6111 = vadd.f32 0.0, %v6110
        %6112 = vmatmul.f32.gmra.mxu0 %v6091
        %v6113 = vpop.f32.mrf.mxu0
        %v6114 = vadd.f32 0.0, %v6113
        %6115 = vdwg.mxu0
        %6116 = vrot.lane.b32.xlu0 %v602, 40
        %v6117 = vpop.permute.xlu0 %6116
        %6118 = vrot.lane.b32.xlu0 %v605, 40
        %v6119 = vpop.permute.xlu0 %6118
        %v6123 = vsel %vm1112, %v5765, 0
        %v6126 = vsel %vm1112, %v5780, 0
        %6128 = vmatpush.msra.mxu0 0.0
        %6129 = vmatpush.msra.mxu0 0.0
        %6130 = vmatpush.msra.mxu0 0.0
        %6131 = vmatpush.msra.mxu0 0.0
        %6132 = vmatpush.msra.mxu0 0.0
        %6133 = vmatpush.msra.mxu0 0.0
        %6134 = vmatpush.msra.mxu0 0.0
        %6135 = vmatpush.msra.mxu0 0.0
        %6136 = vmatpush.msra.mxu0 0.0
        %6137 = vmatpush.msra.mxu0 0.0
        %6138 = vmatpush.msra.mxu0 0.0
        %6139 = vmatpush.msra.mxu0 0.0
        %6140 = vmatpush.msra.mxu0 0.0
        %6141 = vmatpush.msra.mxu0 0.0
        %6142 = vmatpush.msra.mxu0 %v6119
        %6143 = vmatpush.msra.mxu0 %v6117
        %6144 = vmatmul.f32.gmra.mxu0 %v6123
        %v6145 = vpop.f32.mrf.mxu0
        %v6146 = vadd.f32 0.0, %v6145
        %6147 = vmatmul.f32.gmra.mxu0 %v6126
        %v6148 = vpop.f32.mrf.mxu0
        %v6149 = vadd.f32 0.0, %v6148
        %6150 = vdwg.mxu0
        %6151 = vrot.lane.b32.xlu0 %v608, 40
        %v6152 = vpop.permute.xlu0 %6151
        %6153 = vrot.lane.b32.xlu0 %v611, 40
        %v6154 = vpop.permute.xlu0 %6153
        %v6158 = vsel %vm1112, %v5795, 0
        %v6161 = vsel %vm1112, %v5810, 0
        %6163 = vmatpush.msra.mxu0 0.0
        %6164 = vmatpush.msra.mxu0 0.0
        %6165 = vmatpush.msra.mxu0 0.0
        %6166 = vmatpush.msra.mxu0 0.0
        %6167 = vmatpush.msra.mxu0 0.0
        %6168 = vmatpush.msra.mxu0 0.0
        %6169 = vmatpush.msra.mxu0 0.0
        %6170 = vmatpush.msra.mxu0 0.0
        %6171 = vmatpush.msra.mxu0 0.0
        %6172 = vmatpush.msra.mxu0 0.0
        %6173 = vmatpush.msra.mxu0 0.0
        %6174 = vmatpush.msra.mxu0 0.0
        %6175 = vmatpush.msra.mxu0 0.0
        %6176 = vmatpush.msra.mxu0 0.0
        %6177 = vmatpush.msra.mxu0 %v6154
        %6178 = vmatpush.msra.mxu0 %v6152
        %6179 = vmatmul.f32.gmra.mxu0 %v6158
        %v6180 = vpop.f32.mrf.mxu0
        %v6181 = vadd.f32 0.0, %v6180
        %6182 = vmatmul.f32.gmra.mxu0 %v6161
        %v6183 = vpop.f32.mrf.mxu0
        %v6184 = vadd.f32 0.0, %v6183
        %6185 = vdwg.mxu0
        %6186 = vrot.lane.b32.xlu0 %v614, 40
        %v6187 = vpop.permute.xlu0 %6186
        %6188 = vrot.lane.b32.xlu0 %v617, 40
        %v6189 = vpop.permute.xlu0 %6188
        %v6193 = vsel %vm1112, %v5825, 0
        %v6196 = vsel %vm1112, %v5840, 0
        %6198 = vmatpush.msra.mxu0 0.0
        %6199 = vmatpush.msra.mxu0 0.0
        %6200 = vmatpush.msra.mxu0 0.0
        %6201 = vmatpush.msra.mxu0 0.0
        %6202 = vmatpush.msra.mxu0 0.0
        %6203 = vmatpush.msra.mxu0 0.0
        %6204 = vmatpush.msra.mxu0 0.0
        %6205 = vmatpush.msra.mxu0 0.0
        %6206 = vmatpush.msra.mxu0 0.0
        %6207 = vmatpush.msra.mxu0 0.0
        %6208 = vmatpush.msra.mxu0 0.0
        %6209 = vmatpush.msra.mxu0 0.0
        %6210 = vmatpush.msra.mxu0 0.0
        %6211 = vmatpush.msra.mxu0 0.0
        %6212 = vmatpush.msra.mxu0 %v6189
        %6213 = vmatpush.msra.mxu0 %v6187
        %6214 = vmatmul.f32.gmra.mxu0 %v6193
        %v6215 = vpop.f32.mrf.mxu0
        %v6216 = vadd.f32 0.0, %v6215
        %6217 = vmatmul.f32.gmra.mxu0 %v6196
        %v6218 = vpop.f32.mrf.mxu0
        %v6219 = vadd.f32 0.0, %v6218
        %6220 = vdwg.mxu0
        %6221 = vrot.lane.b32.xlu0 %v620, 40
        %v6222 = vpop.permute.xlu0 %6221
        %6223 = vrot.lane.b32.xlu0 %v623, 40
        %v6224 = vpop.permute.xlu0 %6223
        %v6228 = vsel %vm1112, %v5855, 0
        %v6231 = vsel %vm1112, %v5870, 0
        %6233 = vmatpush.msra.mxu0 0.0
        %6234 = vmatpush.msra.mxu0 0.0
        %6235 = vmatpush.msra.mxu0 0.0
        %6236 = vmatpush.msra.mxu0 0.0
        %6237 = vmatpush.msra.mxu0 0.0
        %6238 = vmatpush.msra.mxu0 0.0
        %6239 = vmatpush.msra.mxu0 0.0
        %6240 = vmatpush.msra.mxu0 0.0
        %6241 = vmatpush.msra.mxu0 0.0
        %6242 = vmatpush.msra.mxu0 0.0
        %6243 = vmatpush.msra.mxu0 0.0
        %6244 = vmatpush.msra.mxu0 0.0
        %6245 = vmatpush.msra.mxu0 0.0
        %6246 = vmatpush.msra.mxu0 0.0
        %6247 = vmatpush.msra.mxu0 %v6224
        %6248 = vmatpush.msra.mxu0 %v6222
        %6249 = vmatmul.f32.gmra.mxu0 %v6228
        %v6250 = vpop.f32.mrf.mxu0
        %v6251 = vadd.f32 0.0, %v6250
        %6252 = vmatmul.f32.gmra.mxu0 %v6231
        %v6253 = vpop.f32.mrf.mxu0
        %v6254 = vadd.f32 0.0, %v6253
        %6255 = vdwg.mxu0
        %6256 = vrot.lane.b32.xlu0 %v626, 40
        %v6257 = vpop.permute.xlu0 %6256
        %6258 = vrot.lane.b32.xlu0 %v629, 40
        %v6259 = vpop.permute.xlu0 %6258
        %v6263 = vsel %vm1112, %v5885, 0
        %v6266 = vsel %vm1112, %v5900, 0
        %6268 = vmatpush.msra.mxu0 0.0
        %6269 = vmatpush.msra.mxu0 0.0
        %6270 = vmatpush.msra.mxu0 0.0
        %6271 = vmatpush.msra.mxu0 0.0
        %6272 = vmatpush.msra.mxu0 0.0
        %6273 = vmatpush.msra.mxu0 0.0
        %6274 = vmatpush.msra.mxu0 0.0
        %6275 = vmatpush.msra.mxu0 0.0
        %6276 = vmatpush.msra.mxu0 0.0
        %6277 = vmatpush.msra.mxu0 0.0
        %6278 = vmatpush.msra.mxu0 0.0
        %6279 = vmatpush.msra.mxu0 0.0
        %6280 = vmatpush.msra.mxu0 0.0
        %6281 = vmatpush.msra.mxu0 0.0
        %6282 = vmatpush.msra.mxu0 %v6259
        %6283 = vmatpush.msra.mxu0 %v6257
        %6284 = vmatmul.f32.gmra.mxu0 %v6263
        %v6285 = vpop.f32.mrf.mxu0
        %v6286 = vadd.f32 0.0, %v6285
        %6287 = vmatmul.f32.gmra.mxu0 %v6266
        %v6288 = vpop.f32.mrf.mxu0
        %v6289 = vadd.f32 0.0, %v6288
        %6290 = vdwg.mxu0
        %6291 = vrot.lane.b32.xlu0 %v632, 40
        %v6292 = vpop.permute.xlu0 %6291
        %6293 = vrot.lane.b32.xlu0 %v635, 40
        %v6294 = vpop.permute.xlu0 %6293
        %v6298 = vsel %vm1112, %v5915, 0
        %v6301 = vsel %vm1112, %v5930, 0
        %6303 = vmatpush.msra.mxu0 0.0
        %6304 = vmatpush.msra.mxu0 0.0
        %6305 = vmatpush.msra.mxu0 0.0
        %6306 = vmatpush.msra.mxu0 0.0
        %6307 = vmatpush.msra.mxu0 0.0
        %6308 = vmatpush.msra.mxu0 0.0
        %6309 = vmatpush.msra.mxu0 0.0
        %6310 = vmatpush.msra.mxu0 0.0
        %6311 = vmatpush.msra.mxu0 0.0
        %6312 = vmatpush.msra.mxu0 0.0
        %6313 = vmatpush.msra.mxu0 0.0
        %6314 = vmatpush.msra.mxu0 0.0
        %6315 = vmatpush.msra.mxu0 0.0
        %6316 = vmatpush.msra.mxu0 0.0
        %6317 = vmatpush.msra.mxu0 %v6294
        %6318 = vmatpush.msra.mxu0 %v6292
        %6319 = vmatmul.f32.gmra.mxu0 %v6298
        %v6320 = vpop.f32.mrf.mxu0
        %v6321 = vadd.f32 0.0, %v6320
        %6322 = vmatmul.f32.gmra.mxu0 %v6301
        %v6323 = vpop.f32.mrf.mxu0
        %v6324 = vadd.f32 0.0, %v6323
        %6325 = vdwg.mxu0
        %6326 = vrot.lane.b32.xlu0 %v638, 40
        %v6327 = vpop.permute.xlu0 %6326
        %6328 = vrot.lane.b32.xlu0 %v641, 40
        %v6329 = vpop.permute.xlu0 %6328
        %v6333 = vsel %vm1112, %v5945, 0
        %v6336 = vsel %vm1112, %v5960, 0
        %6338 = vmatpush.msra.mxu0 0.0
        %6339 = vmatpush.msra.mxu0 0.0
        %6340 = vmatpush.msra.mxu0 0.0
        %6341 = vmatpush.msra.mxu0 0.0
        %6342 = vmatpush.msra.mxu0 0.0
        %6343 = vmatpush.msra.mxu0 0.0
        %6344 = vmatpush.msra.mxu0 0.0
        %6345 = vmatpush.msra.mxu0 0.0
        %6346 = vmatpush.msra.mxu0 0.0
        %6347 = vmatpush.msra.mxu0 0.0
        %6348 = vmatpush.msra.mxu0 0.0
        %6349 = vmatpush.msra.mxu0 0.0
        %6350 = vmatpush.msra.mxu0 0.0
        %6351 = vmatpush.msra.mxu0 0.0
        %6352 = vmatpush.msra.mxu0 %v6329
        %6353 = vmatpush.msra.mxu0 %v6327
        %6354 = vmatmul.f32.gmra.mxu0 %v6333
        %v6355 = vpop.f32.mrf.mxu0
        %v6356 = vadd.f32 0.0, %v6355
        %6357 = vmatmul.f32.gmra.mxu0 %v6336
        %v6358 = vpop.f32.mrf.mxu0
        %v6359 = vadd.f32 0.0, %v6358
        %6360 = vdwg.mxu0
        %6361 = vrot.lane.b32.xlu0 %v644, 40
        %v6362 = vpop.permute.xlu0 %6361
        %6363 = vrot.lane.b32.xlu0 %v647, 40
        %v6364 = vpop.permute.xlu0 %6363
        %v6368 = vsel %vm1112, %v5975, 0
        %v6371 = vsel %vm1112, %v5990, 0
        %6373 = vmatpush.msra.mxu0 0.0
        %6374 = vmatpush.msra.mxu0 0.0
        %6375 = vmatpush.msra.mxu0 0.0
        %6376 = vmatpush.msra.mxu0 0.0
        %6377 = vmatpush.msra.mxu0 0.0
        %6378 = vmatpush.msra.mxu0 0.0
        %6379 = vmatpush.msra.mxu0 0.0
        %6380 = vmatpush.msra.mxu0 0.0
        %6381 = vmatpush.msra.mxu0 0.0
        %6382 = vmatpush.msra.mxu0 0.0
        %6383 = vmatpush.msra.mxu0 0.0
        %6384 = vmatpush.msra.mxu0 0.0
        %6385 = vmatpush.msra.mxu0 0.0
        %6386 = vmatpush.msra.mxu0 0.0
        %6387 = vmatpush.msra.mxu0 %v6364
        %6388 = vmatpush.msra.mxu0 %v6362
        %6389 = vmatmul.f32.gmra.mxu0 %v6368
        %v6390 = vpop.f32.mrf.mxu0
        %v6391 = vadd.f32 0.0, %v6390
        %6392 = vmatmul.f32.gmra.mxu0 %v6371
        %v6393 = vpop.f32.mrf.mxu0
        %v6394 = vadd.f32 0.0, %v6393
        %6395 = vdwg.mxu0
        %6396 = vrot.lane.b32.xlu0 %v650, 40
        %v6397 = vpop.permute.xlu0 %6396
        %6398 = vrot.lane.b32.xlu0 %v653, 40
        %v6399 = vpop.permute.xlu0 %6398
        %v6403 = vsel %vm1112, %v6005, 0
        %v6406 = vsel %vm1112, %v6020, 0
        %6408 = vmatpush.msra.mxu0 0.0
        %6409 = vmatpush.msra.mxu0 0.0
        %6410 = vmatpush.msra.mxu0 0.0
        %6411 = vmatpush.msra.mxu0 0.0
        %6412 = vmatpush.msra.mxu0 0.0
        %6413 = vmatpush.msra.mxu0 0.0
        %6414 = vmatpush.msra.mxu0 0.0
        %6415 = vmatpush.msra.mxu0 0.0
        %6416 = vmatpush.msra.mxu0 0.0
        %6417 = vmatpush.msra.mxu0 0.0
        %6418 = vmatpush.msra.mxu0 0.0
        %6419 = vmatpush.msra.mxu0 0.0
        %6420 = vmatpush.msra.mxu0 0.0
        %6421 = vmatpush.msra.mxu0 0.0
        %6422 = vmatpush.msra.mxu0 %v6399
        %6423 = vmatpush.msra.mxu0 %v6397
        %6424 = vmatmul.f32.gmra.mxu0 %v6403
        %v6425 = vpop.f32.mrf.mxu0
        %v6426 = vadd.f32 0.0, %v6425
        %6427 = vmatmul.f32.gmra.mxu0 %v6406
        %v6428 = vpop.f32.mrf.mxu0
        %v6429 = vadd.f32 0.0, %v6428
        %6430 = vdwg.mxu0
        %6431 = vrot.lane.b32.xlu0 %v656, 40
        %v6432 = vpop.permute.xlu0 %6431
        %6433 = vrot.lane.b32.xlu0 %v659, 40
        %v6434 = vpop.permute.xlu0 %6433
        %v6438 = vsel %vm1112, %v6035, 0
        %v6441 = vsel %vm1112, %v6050, 0
        %6443 = vmatpush.msra.mxu0 0.0
        %6444 = vmatpush.msra.mxu0 0.0
        %6445 = vmatpush.msra.mxu0 0.0
        %6446 = vmatpush.msra.mxu0 0.0
        %6447 = vmatpush.msra.mxu0 0.0
        %6448 = vmatpush.msra.mxu0 0.0
        %6449 = vmatpush.msra.mxu0 0.0
        %6450 = vmatpush.msra.mxu0 0.0
        %6451 = vmatpush.msra.mxu0 0.0
        %6452 = vmatpush.msra.mxu0 0.0
        %6453 = vmatpush.msra.mxu0 0.0
        %6454 = vmatpush.msra.mxu0 0.0
        %6455 = vmatpush.msra.mxu0 0.0
        %6456 = vmatpush.msra.mxu0 0.0
        %6457 = vmatpush.msra.mxu0 %v6434
        %6458 = vmatpush.msra.mxu0 %v6432
        %6459 = vmatmul.f32.gmra.mxu0 %v6438
        %v6460 = vpop.f32.mrf.mxu0
        %v6461 = vadd.f32 0.0, %v6460
        %6462 = vmatmul.f32.gmra.mxu0 %v6441
        %v6463 = vpop.f32.mrf.mxu0
        %v6464 = vadd.f32 0.0, %v6463
        %6465 = vdwg.mxu0
        %6466 = vrot.lane.b32.xlu0 %v662, 40
        %v6467 = vpop.permute.xlu0 %6466
        %6468 = vrot.lane.b32.xlu0 %v665, 40
        %v6469 = vpop.permute.xlu0 %6468
        %v6473 = vsel %vm1112, %v6065, 0
        %v6476 = vsel %vm1112, %v6080, 0
        %6478 = vmatpush.msra.mxu0 0.0
        %6479 = vmatpush.msra.mxu0 0.0
        %6480 = vmatpush.msra.mxu0 0.0
        %6481 = vmatpush.msra.mxu0 0.0
        %6482 = vmatpush.msra.mxu0 0.0
        %6483 = vmatpush.msra.mxu0 0.0
        %6484 = vmatpush.msra.mxu0 0.0
        %6485 = vmatpush.msra.mxu0 0.0
        %6486 = vmatpush.msra.mxu0 0.0
        %6487 = vmatpush.msra.mxu0 0.0
        %6488 = vmatpush.msra.mxu0 0.0
        %6489 = vmatpush.msra.mxu0 0.0
        %6490 = vmatpush.msra.mxu0 0.0
        %6491 = vmatpush.msra.mxu0 0.0
        %6492 = vmatpush.msra.mxu0 %v6469
        %6493 = vmatpush.msra.mxu0 %v6467
        %6494 = vmatmul.f32.gmra.mxu0 %v6473
        %v6495 = vpop.f32.mrf.mxu0
        %v6496 = vadd.f32 0.0, %v6495
        %6497 = vmatmul.f32.gmra.mxu0 %v6476
        %v6498 = vpop.f32.mrf.mxu0
        %v6499 = vadd.f32 0.0, %v6498
        %6500 = vdwg.mxu0
        %6525 = vrot.lane.b32.xlu0 %v3183, 8
        %v6526 = vpop.permute.xlu0 %6525
        %6527 = vrot.lane.b32.xlu0 %v3186, 8
        %v6528 = vpop.permute.xlu0 %6527
        %6529 = vrot.lane.b32.xlu0 %v3218, 8
        %v6530 = vpop.permute.xlu0 %6529
        %6531 = vrot.lane.b32.xlu0 %v3221, 8
        %v6532 = vpop.permute.xlu0 %6531
        %6533 = vrot.lane.b32.xlu0 %v3253, 8
        %v6534 = vpop.permute.xlu0 %6533
        %6535 = vrot.lane.b32.xlu0 %v3256, 8
        %v6536 = vpop.permute.xlu0 %6535
        %6537 = vrot.lane.b32.xlu0 %v3288, 8
        %v6538 = vpop.permute.xlu0 %6537
        %6539 = vrot.lane.b32.xlu0 %v3291, 8
        %v6540 = vpop.permute.xlu0 %6539
        %6541 = vrot.lane.b32.xlu0 %v3323, 8
        %v6542 = vpop.permute.xlu0 %6541
        %6543 = vrot.lane.b32.xlu0 %v3326, 8
        %v6544 = vpop.permute.xlu0 %6543
        %6545 = vrot.lane.b32.xlu0 %v3358, 8
        %v6546 = vpop.permute.xlu0 %6545
        %6547 = vrot.lane.b32.xlu0 %v3361, 8
        %v6548 = vpop.permute.xlu0 %6547
        %6549 = vrot.lane.b32.xlu0 %v3393, 8
        %v6550 = vpop.permute.xlu0 %6549
        %6551 = vrot.lane.b32.xlu0 %v3396, 8
        %v6552 = vpop.permute.xlu0 %6551
        %6553 = vrot.lane.b32.xlu0 %v3428, 8
        %v6554 = vpop.permute.xlu0 %6553
        %6555 = vrot.lane.b32.xlu0 %v3431, 8
        %v6556 = vpop.permute.xlu0 %6555
        %6557 = vrot.lane.b32.xlu0 %v3463, 8
        %v6558 = vpop.permute.xlu0 %6557
        %6559 = vrot.lane.b32.xlu0 %v3466, 8
        %v6560 = vpop.permute.xlu0 %6559
        %6561 = vrot.lane.b32.xlu0 %v3498, 8
        %v6562 = vpop.permute.xlu0 %6561
        %6563 = vrot.lane.b32.xlu0 %v3501, 8
        %v6564 = vpop.permute.xlu0 %6563
        %6565 = vrot.lane.b32.xlu0 %v3533, 8
        %v6566 = vpop.permute.xlu0 %6565
        %6567 = vrot.lane.b32.xlu0 %v3536, 8
        %v6568 = vpop.permute.xlu0 %6567
        %6569 = vrot.lane.b32.xlu0 %v3568, 8
        %v6570 = vpop.permute.xlu0 %6569
        %6571 = vrot.lane.b32.xlu0 %v3571, 8
        %v6572 = vpop.permute.xlu0 %6571
        %6621 = vrot.lane.b32.xlu0 %v4647, 16
        %v6622 = vpop.permute.xlu0 %6621
        %6623 = vrot.lane.b32.xlu0 %v4650, 16
        %v6624 = vpop.permute.xlu0 %6623
        %6625 = vrot.lane.b32.xlu0 %v4682, 16
        %v6626 = vpop.permute.xlu0 %6625
        %6627 = vrot.lane.b32.xlu0 %v4685, 16
        %v6628 = vpop.permute.xlu0 %6627
        %6629 = vrot.lane.b32.xlu0 %v4717, 16
        %v6630 = vpop.permute.xlu0 %6629
        %6631 = vrot.lane.b32.xlu0 %v4720, 16
        %v6632 = vpop.permute.xlu0 %6631
        %6633 = vrot.lane.b32.xlu0 %v4752, 16
        %v6634 = vpop.permute.xlu0 %6633
        %6635 = vrot.lane.b32.xlu0 %v4755, 16
        %v6636 = vpop.permute.xlu0 %6635
        %6637 = vrot.lane.b32.xlu0 %v4787, 16
        %v6638 = vpop.permute.xlu0 %6637
        %6639 = vrot.lane.b32.xlu0 %v4790, 16
        %v6640 = vpop.permute.xlu0 %6639
        %6641 = vrot.lane.b32.xlu0 %v4822, 16
        %v6642 = vpop.permute.xlu0 %6641
        %6643 = vrot.lane.b32.xlu0 %v4825, 16
        %v6644 = vpop.permute.xlu0 %6643
        %6645 = vrot.lane.b32.xlu0 %v4857, 16
        %v6646 = vpop.permute.xlu0 %6645
        %6647 = vrot.lane.b32.xlu0 %v4860, 16
        %v6648 = vpop.permute.xlu0 %6647
        %6649 = vrot.lane.b32.xlu0 %v4892, 16
        %v6650 = vpop.permute.xlu0 %6649
        %6651 = vrot.lane.b32.xlu0 %v4895, 16
        %v6652 = vpop.permute.xlu0 %6651
        %6653 = vrot.lane.b32.xlu0 %v4927, 16
        %v6654 = vpop.permute.xlu0 %6653
        %6655 = vrot.lane.b32.xlu0 %v4930, 16
        %v6656 = vpop.permute.xlu0 %6655
        %6657 = vrot.lane.b32.xlu0 %v4962, 16
        %v6658 = vpop.permute.xlu0 %6657
        %6659 = vrot.lane.b32.xlu0 %v4965, 16
        %v6660 = vpop.permute.xlu0 %6659
        %6661 = vrot.lane.b32.xlu0 %v4997, 16
        %v6662 = vpop.permute.xlu0 %6661
        %6663 = vrot.lane.b32.xlu0 %v5000, 16
        %v6664 = vpop.permute.xlu0 %6663
        %6665 = vrot.lane.b32.xlu0 %v5032, 16
        %v6666 = vpop.permute.xlu0 %6665
        %6667 = vrot.lane.b32.xlu0 %v5035, 16
        %v6668 = vpop.permute.xlu0 %6667
        %6717 = vrot.lane.b32.xlu0 %v6111, 24
        %v6718 = vpop.permute.xlu0 %6717
        %6719 = vrot.lane.b32.xlu0 %v6114, 24
        %v6720 = vpop.permute.xlu0 %6719
        %6721 = vrot.lane.b32.xlu0 %v6146, 24
        %v6722 = vpop.permute.xlu0 %6721
        %6723 = vrot.lane.b32.xlu0 %v6149, 24
        %v6724 = vpop.permute.xlu0 %6723
        %6725 = vrot.lane.b32.xlu0 %v6181, 24
        %v6726 = vpop.permute.xlu0 %6725
        %6727 = vrot.lane.b32.xlu0 %v6184, 24
        %v6728 = vpop.permute.xlu0 %6727
        %6729 = vrot.lane.b32.xlu0 %v6216, 24
        %v6730 = vpop.permute.xlu0 %6729
        %6731 = vrot.lane.b32.xlu0 %v6219, 24
        %v6732 = vpop.permute.xlu0 %6731
        %6733 = vrot.lane.b32.xlu0 %v6251, 24
        %v6734 = vpop.permute.xlu0 %6733
        %6735 = vrot.lane.b32.xlu0 %v6254, 24
        %v6736 = vpop.permute.xlu0 %6735
        %6737 = vrot.lane.b32.xlu0 %v6286, 24
        %v6738 = vpop.permute.xlu0 %6737
        %6739 = vrot.lane.b32.xlu0 %v6289, 24
        %v6740 = vpop.permute.xlu0 %6739
        %6741 = vrot.lane.b32.xlu0 %v6321, 24
        %v6742 = vpop.permute.xlu0 %6741
        %6743 = vrot.lane.b32.xlu0 %v6324, 24
        %v6744 = vpop.permute.xlu0 %6743
        %6745 = vrot.lane.b32.xlu0 %v6356, 24
        %v6746 = vpop.permute.xlu0 %6745
        %6747 = vrot.lane.b32.xlu0 %v6359, 24
        %v6748 = vpop.permute.xlu0 %6747
        %6749 = vrot.lane.b32.xlu0 %v6391, 24
        %v6750 = vpop.permute.xlu0 %6749
        %6751 = vrot.lane.b32.xlu0 %v6394, 24
        %v6752 = vpop.permute.xlu0 %6751
        %6753 = vrot.lane.b32.xlu0 %v6426, 24
        %v6754 = vpop.permute.xlu0 %6753
        %6755 = vrot.lane.b32.xlu0 %v6429, 24
        %v6756 = vpop.permute.xlu0 %6755
        %6757 = vrot.lane.b32.xlu0 %v6461, 24
        %v6758 = vpop.permute.xlu0 %6757
        %6759 = vrot.lane.b32.xlu0 %v6464, 24
        %v6760 = vpop.permute.xlu0 %6759
        %6761 = vrot.lane.b32.xlu0 %v6496, 24
        %v6762 = vpop.permute.xlu0 %6761
        %6763 = vrot.lane.b32.xlu0 %v6499, 24
        %v6764 = vpop.permute.xlu0 %6763
        %v6789 = vsel %vm673, %v1719, %v6526
        %v6790 = vsel %vm673, %v1722, %v6528
        %v6791 = vsel %vm673, %v1754, %v6530
        %v6792 = vsel %vm673, %v1757, %v6532
        %v6793 = vsel %vm673, %v1789, %v6534
        %v6794 = vsel %vm673, %v1792, %v6536
        %v6795 = vsel %vm673, %v1824, %v6538
        %v6796 = vsel %vm673, %v1827, %v6540
        %v6797 = vsel %vm673, %v1859, %v6542
        %v6798 = vsel %vm673, %v1862, %v6544
        %v6799 = vsel %vm673, %v1894, %v6546
        %v6800 = vsel %vm673, %v1897, %v6548
        %v6801 = vsel %vm673, %v1929, %v6550
        %v6802 = vsel %vm673, %v1932, %v6552
        %v6803 = vsel %vm673, %v1964, %v6554
        %v6804 = vsel %vm673, %v1967, %v6556
        %v6805 = vsel %vm673, %v1999, %v6558
        %v6806 = vsel %vm673, %v2002, %v6560
        %v6807 = vsel %vm673, %v2034, %v6562
        %v6808 = vsel %vm673, %v2037, %v6564
        %v6809 = vsel %vm673, %v2069, %v6566
        %v6810 = vsel %vm673, %v2072, %v6568
        %v6811 = vsel %vm673, %v2104, %v6570
        %v6812 = vsel %vm673, %v2107, %v6572
        %v6813 = vsel %vm1112, %v6789, %v6622
        %v6814 = vsel %vm1112, %v6790, %v6624
        %v6815 = vsel %vm1112, %v6791, %v6626
        %v6816 = vsel %vm1112, %v6792, %v6628
        %v6817 = vsel %vm1112, %v6793, %v6630
        %v6818 = vsel %vm1112, %v6794, %v6632
        %v6819 = vsel %vm1112, %v6795, %v6634
        %v6820 = vsel %vm1112, %v6796, %v6636
        %v6821 = vsel %vm1112, %v6797, %v6638
        %v6822 = vsel %vm1112, %v6798, %v6640
        %v6823 = vsel %vm1112, %v6799, %v6642
        %v6824 = vsel %vm1112, %v6800, %v6644
        %v6825 = vsel %vm1112, %v6801, %v6646
        %v6826 = vsel %vm1112, %v6802, %v6648
        %v6827 = vsel %vm1112, %v6803, %v6650
        %v6828 = vsel %vm1112, %v6804, %v6652
        %v6829 = vsel %vm1112, %v6805, %v6654
        %v6830 = vsel %vm1112, %v6806, %v6656
        %v6831 = vsel %vm1112, %v6807, %v6658
        %v6832 = vsel %vm1112, %v6808, %v6660
        %v6833 = vsel %vm1112, %v6809, %v6662
        %v6834 = vsel %vm1112, %v6810, %v6664
        %v6835 = vsel %vm1112, %v6811, %v6666
        %v6836 = vsel %vm1112, %v6812, %v6668
        %vm6837 = vcmask 195584
        %v6838 = vsel %vm6837, %v6813, %v6718
        %v6839 = vsel %vm6837, %v6814, %v6720
        %v6840 = vsel %vm6837, %v6815, %v6722
        %v6841 = vsel %vm6837, %v6816, %v6724
        %v6842 = vsel %vm6837, %v6817, %v6726
        %v6843 = vsel %vm6837, %v6818, %v6728
        %v6844 = vsel %vm6837, %v6819, %v6730
        %v6845 = vsel %vm6837, %v6820, %v6732
        %v6846 = vsel %vm6837, %v6821, %v6734
        %v6847 = vsel %vm6837, %v6822, %v6736
        %v6848 = vsel %vm6837, %v6823, %v6738
        %v6849 = vsel %vm6837, %v6824, %v6740
        %v6850 = vsel %vm6837, %v6825, %v6742
        %v6851 = vsel %vm6837, %v6826, %v6744
        %v6852 = vsel %vm6837, %v6827, %v6746
        %v6853 = vsel %vm6837, %v6828, %v6748
        %v6854 = vsel %vm6837, %v6829, %v6750
        %v6855 = vsel %vm6837, %v6830, %v6752
        %v6856 = vsel %vm6837, %v6831, %v6754
        %v6857 = vsel %vm6837, %v6832, %v6756
        %v6858 = vsel %vm6837, %v6833, %v6758
        %v6859 = vsel %vm6837, %v6834, %v6760
        %v6860 = vsel %vm6837, %v6835, %v6762
        %v6861 = vsel %vm6837, %v6836, %v6764
        %v6862 = vld [vmem:[%s3] sm:$0xff]
        %v6863 = vld [vmem:[%s3 + $0x8] sm:$0xff]
        %v6864 = vld [vmem:[%s3 + $0x10] sm:$0xff]
        %v6865 = vld [vmem:[%s3 + $0x18] sm:$0xff]
        %v6866 = vld [vmem:[%s4] sm:$0x1]
        %v6868 = vperm.slane %v6866, 0
        %v6871 = vsel %vm505, %v6838, 0
        %v6874 = vsel %vm505, %v6839, 0
        %v6877 = vsel %vm505, %v6840, 0
        %v6880 = vsel %vm505, %v6841, 0
        %v6883 = vsel %vm505, %v6842, 0
        %v6886 = vsel %vm505, %v6843, 0
        %v6889 = vsel %vm505, %v6844, 0
        %v6892 = vsel %vm505, %v6845, 0
        %v6895 = vsel %vm505, %v6846, 0
        %v6898 = vsel %vm505, %v6847, 0
        %v6901 = vsel %vm505, %v6848, 0
        %v6904 = vsel %vm505, %v6849, 0
        %v6907 = vsel %vm505, %v6850, 0
        %v6910 = vsel %vm505, %v6851, 0
        %v6913 = vsel %vm505, %v6852, 0
        %v6916 = vsel %vm505, %v6853, 0
        %v6919 = vsel %vm505, %v6854, 0
        %v6922 = vsel %vm505, %v6855, 0
        %v6925 = vsel %vm505, %v6856, 0
        %v6928 = vsel %vm505, %v6857, 0
        %v6931 = vsel %vm505, %v6858, 0
        %v6934 = vsel %vm505, %v6859, 0
        %v6937 = vsel %vm505, %v6860, 0
        %v6940 = vsel %vm505, %v6861, 0
        %6942 = vmatpush.msra.mxu0 0.0
        %6943 = vmatpush.msra.mxu0 0.0
        %6944 = vmatpush.msra.mxu0 0.0
        %6945 = vmatpush.msra.mxu0 0.0
        %6946 = vmatpush.msra.mxu0 0.0
        %6947 = vmatpush.msra.mxu0 0.0
        %6948 = vmatpush.msra.mxu0 0.0
        %6949 = vmatpush.msra.mxu0 0.0
        %6950 = vmatpush.msra.mxu0 0.0
        %6951 = vmatpush.msra.mxu0 0.0
        %6952 = vmatpush.msra.mxu0 0.0
        %6953 = vmatpush.msra.mxu0 0.0
        %6954 = vmatpush.msra.mxu0 %v6865
        %6955 = vmatpush.msra.mxu0 %v6864
        %6956 = vmatpush.msra.mxu0 %v6863
        %6957 = vmatpush.msra.mxu0 %v6862
        %6958 = vmatmul.f32.gmra.mxu0 %v6871
        %v6959 = vpop.f32.mrf.mxu0
        %v6960 = vadd.f32 %v6868, %v6959
        %6961 = vmatmul.f32.gmra.mxu0 %v6874
        %v6962 = vpop.f32.mrf.mxu0
        %v6963 = vadd.f32 %v6868, %v6962
        %6964 = vmatmul.f32.gmra.mxu0 %v6877
        %v6965 = vpop.f32.mrf.mxu0
        %v6966 = vadd.f32 %v6868, %v6965
        %6967 = vmatmul.f32.gmra.mxu0 %v6880
        %v6968 = vpop.f32.mrf.mxu0
        %v6969 = vadd.f32 %v6868, %v6968
        %6970 = vmatmul.f32.gmra.mxu0 %v6883
        %v6971 = vpop.f32.mrf.mxu0
        %v6972 = vadd.f32 %v6868, %v6971
        %6973 = vmatmul.f32.gmra.mxu0 %v6886
        %v6974 = vpop.f32.mrf.mxu0
        %v6975 = vadd.f32 %v6868, %v6974
        %6976 = vmatmul.f32.gmra.mxu0 %v6889
        %v6977 = vpop.f32.mrf.mxu0
        %v6978 = vadd.f32 %v6868, %v6977
        %6979 = vmatmul.f32.gmra.mxu0 %v6892
        %v6980 = vpop.f32.mrf.mxu0
        %v6981 = vadd.f32 %v6868, %v6980
        %6982 = vmatmul.f32.gmra.mxu0 %v6895
        %v6983 = vpop.f32.mrf.mxu0
        %v6984 = vadd.f32 %v6868, %v6983
        %6985 = vmatmul.f32.gmra.mxu0 %v6898
        %v6986 = vpop.f32.mrf.mxu0
        %v6987 = vadd.f32 %v6868, %v6986
        %6988 = vmatmul.f32.gmra.mxu0 %v6901
        %v6989 = vpop.f32.mrf.mxu0
        %v6990 = vadd.f32 %v6868, %v6989
        %6991 = vmatmul.f32.gmra.mxu0 %v6904
        %v6992 = vpop.f32.mrf.mxu0
        %v6993 = vadd.f32 %v6868, %v6992
        %6994 = vmatmul.f32.gmra.mxu0 %v6907
        %v6995 = vpop.f32.mrf.mxu0
        %v6996 = vadd.f32 %v6868, %v6995
        %6997 = vmatmul.f32.gmra.mxu0 %v6910
        %v6998 = vpop.f32.mrf.mxu0
        %v6999 = vadd.f32 %v6868, %v6998
        %7000 = vmatmul.f32.gmra.mxu0 %v6913
        %v7001 = vpop.f32.mrf.mxu0
        %v7002 = vadd.f32 %v6868, %v7001
        %7003 = vmatmul.f32.gmra.mxu0 %v6916
        %v7004 = vpop.f32.mrf.mxu0
        %v7005 = vadd.f32 %v6868, %v7004
        %7006 = vmatmul.f32.gmra.mxu0 %v6919
        %v7007 = vpop.f32.mrf.mxu0
        %v7008 = vadd.f32 %v6868, %v7007
        %7009 = vmatmul.f32.gmra.mxu0 %v6922
        %v7010 = vpop.f32.mrf.mxu0
        %v7011 = vadd.f32 %v6868, %v7010
        %7012 = vmatmul.f32.gmra.mxu0 %v6925
        %v7013 = vpop.f32.mrf.mxu0
        %v7014 = vadd.f32 %v6868, %v7013
        %7015 = vmatmul.f32.gmra.mxu0 %v6928
        %v7016 = vpop.f32.mrf.mxu0
        %v7017 = vadd.f32 %v6868, %v7016
        %7018 = vmatmul.f32.gmra.mxu0 %v6931
        %v7019 = vpop.f32.mrf.mxu0
        %v7020 = vadd.f32 %v6868, %v7019
        %7021 = vmatmul.f32.gmra.mxu0 %v6934
        %v7022 = vpop.f32.mrf.mxu0
        %v7023 = vadd.f32 %v6868, %v7022
        %7024 = vmatmul.f32.gmra.mxu0 %v6937
        %v7025 = vpop.f32.mrf.mxu0
        %v7026 = vadd.f32 %v6868, %v7025
        %7027 = vmatmul.f32.gmra.mxu0 %v6940
        %v7028 = vpop.f32.mrf.mxu0
        %v7029 = vadd.f32 %v6868, %v7028
        %7030 = vdwg.mxu0
        %v7031 = vpack.c.bf16 %v6960, %v6960
        %v7032 = vpack.c.bf16 %v6963, %v6963
        %v7033 = vpack.c.bf16 %v6966, %v6966
        %v7034 = vpack.c.bf16 %v6969, %v6969
        %v7035 = vpack.c.bf16 %v6972, %v6972
        %v7036 = vpack.c.bf16 %v6975, %v6975
        %v7037 = vpack.c.bf16 %v6978, %v6978
        %v7038 = vpack.c.bf16 %v6981, %v6981
        %v7039 = vpack.c.bf16 %v6984, %v6984
        %v7040 = vpack.c.bf16 %v6987, %v6987
        %v7041 = vpack.c.bf16 %v6990, %v6990
        %v7042 = vpack.c.bf16 %v6993, %v6993
        %v7043 = vpack.c.bf16 %v6996, %v6996
        %v7044 = vpack.c.bf16 %v6999, %v6999
        %v7045 = vpack.c.bf16 %v7002, %v7002
        %v7046 = vpack.c.bf16 %v7005, %v7005
        %v7047 = vpack.c.bf16 %v7008, %v7008
        %v7048 = vpack.c.bf16 %v7011, %v7011
        %v7049 = vpack.c.bf16 %v7014, %v7014
        %v7050 = vpack.c.bf16 %v7017, %v7017
        %v7051 = vpack.c.bf16 %v7020, %v7020
        %v7052 = vpack.c.bf16 %v7023, %v7023
        %v7053 = vpack.c.bf16 %v7026, %v7026
        %v7054 = vpack.c.bf16 %v7029, %v7029
        %v7055 = vld [vmem:[%s5] sm:$0xff]
        %v7056 = vld [vmem:[%s5 + $0x8] sm:$0xf]
        %v7057 = vld [vmem:[%s5 + $0xc] sm:$0xff]
        %v7058 = vld [vmem:[%s5 + $0x14] sm:$0xf]
        %v7059 = vld [vmem:[%s5 + $0x18] sm:$0xff]
        %v7060 = vld [vmem:[%s5 + $0x20] sm:$0xf]
        %v7061 = vld [vmem:[%s5 + $0x24] sm:$0xff]
        %v7062 = vld [vmem:[%s5 + $0x2c] sm:$0xf]
        %s7063 = scalar_lea.vmem %s5, 48
        %v7064 = vld [vmem:[%s7063] sm:$0xff]
        %v7065 = vld [vmem:[%s7063 + $0x8] sm:$0xf]
        %v7066 = vld [vmem:[%s7063 + $0xc] sm:$0xff]
        %v7067 = vld [vmem:[%s7063 + $0x14] sm:$0xf]
        %v7068 = vld [vmem:[%s7063 + $0x18] sm:$0xff]
        %v7069 = vld [vmem:[%s7063 + $0x20] sm:$0xf]
        %v7070 = vld [vmem:[%s7063 + $0x24] sm:$0xff]
        %v7071 = vld [vmem:[%s7063 + $0x2c] sm:$0xf]
        %v7074 = vunpack.c.l.b16 %v7033
        %v7075 = vunpack.c.l.b16 %v7034
        %v7076 = vpack.c.b16 %v7075, %v7074
        %v7085 = vunpack.c.l.b16 %v7064
        %v7086 = vunpack.c.h.b16 %v7064
        %v7087 = vunpack.c.l.b16 %v7065
        %v7088 = vunpack.c.l.b16 %v7066
        %v7089 = vunpack.c.h.b16 %v7066
        %v7090 = vunpack.c.l.b16 %v7067
        %v7091 = vunpack.c.l.b16 %v7068
        %v7092 = vunpack.c.h.b16 %v7068
        %v7093 = vunpack.c.l.b16 %v7069
        %v7094 = vunpack.c.l.b16 %v7070
        %v7095 = vunpack.c.h.b16 %v7070
        %v7096 = vunpack.c.l.b16 %v7071
        %v7097 = vpack.c.b16 %v7088, %v7085
        %v7098 = vpack.c.b16 %v7089, %v7086
        %v7099 = vpack.c.b16 %v7090, %v7087
        %v7100 = vpack.c.b16 %v7094, %v7091
        %v7101 = vpack.c.b16 %v7095, %v7092
        %v7102 = vpack.c.b16 %v7096, %v7093
        %v7110 = vsel %vm505, %v7076, 0
        %7112 = vmatpush.bf16.msra.mxu0 0
        %7113 = vmatpush.bf16.msra.mxu0 0
        %7114 = vmatpush.bf16.msra.mxu0 0
        %7115 = vmatpush.bf16.msra.mxu0 0
        %7116 = vmatpush.bf16.msra.mxu0 0
        %7117 = vmatpush.bf16.msra.mxu0 0
        %7118 = vmatpush.bf16.msra.mxu0 %v7100
        %7119 = vmatpush.bf16.msra.mxu0 %v7097
        %7120 = vmatmul.bf16.gmra.mxu0 %v7110
        %v7121 = vpop.f32.mrf.mxu0
        %v7122 = vadd.f32 0.0, %v7121
        %v7123 = vpop.f32.mrf.mxu0
        %v7124 = vadd.f32 0.0, %v7123
        %7125 = vdwg.mxu0
        %7126 = vmatpush.bf16.msra.mxu0 0
        %7127 = vmatpush.bf16.msra.mxu0 0
        %7128 = vmatpush.bf16.msra.mxu0 0
        %7129 = vmatpush.bf16.msra.mxu0 0
        %7130 = vmatpush.bf16.msra.mxu0 0
        %7131 = vmatpush.bf16.msra.mxu0 0
        %7132 = vmatpush.bf16.msra.mxu0 %v7101
        %7133 = vmatpush.bf16.msra.mxu0 %v7098
        %7134 = vmatmul.bf16.gmra.mxu0 %v7110
        %v7135 = vpop.f32.mrf.mxu0
        %v7136 = vadd.f32 0.0, %v7135
        %v7137 = vpop.f32.mrf.mxu0
        %v7138 = vadd.f32 0.0, %v7137
        %7139 = vdwg.mxu0
        %7140 = vmatpush.bf16.msra.mxu0 0
        %7141 = vmatpush.bf16.msra.mxu0 0
        %7142 = vmatpush.bf16.msra.mxu0 0
        %7143 = vmatpush.bf16.msra.mxu0 0
        %7144 = vmatpush.bf16.msra.mxu0 0
        %7145 = vmatpush.bf16.msra.mxu0 0
        %7146 = vmatpush.bf16.msra.mxu0 %v7102
        %7147 = vmatpush.bf16.msra.mxu0 %v7099
        %7148 = vmatmul.bf16.gmra.mxu0 %v7110
        %v7149 = vpop.f32.mrf.mxu0
        %v7150 = vadd.f32 0.0, %v7149
        %v7151 = vpop.f32.mrf.mxu0
        %v7152 = vadd.f32 0.0, %v7151
        %7153 = vdwg.mxu0
        %v7156 = vunpack.c.l.b16 %v7031
        %v7157 = vunpack.c.l.b16 %v7032
        %v7158 = vpack.c.b16 %v7157, %v7156
        %v7167 = vunpack.c.l.b16 %v7055
        %v7168 = vunpack.c.h.b16 %v7055
        %v7169 = vunpack.c.l.b16 %v7056
        %v7170 = vunpack.c.l.b16 %v7057
        %v7171 = vunpack.c.h.b16 %v7057
        %v7172 = vunpack.c.l.b16 %v7058
        %v7173 = vunpack.c.l.b16 %v7059
        %v7174 = vunpack.c.h.b16 %v7059
        %v7175 = vunpack.c.l.b16 %v7060
        %v7176 = vunpack.c.l.b16 %v7061
        %v7177 = vunpack.c.h.b16 %v7061
        %v7178 = vunpack.c.l.b16 %v7062
        %v7179 = vpack.c.b16 %v7170, %v7167
        %v7180 = vpack.c.b16 %v7171, %v7168
        %v7181 = vpack.c.b16 %v7172, %v7169
        %v7182 = vpack.c.b16 %v7176, %v7173
        %v7183 = vpack.c.b16 %v7177, %v7174
        %v7184 = vpack.c.b16 %v7178, %v7175
        %v7192 = vsel %vm505, %v7158, 0
        %7194 = vmatpush.bf16.msra.mxu0 0
        %7195 = vmatpush.bf16.msra.mxu0 0
        %7196 = vmatpush.bf16.msra.mxu0 0
        %7197 = vmatpush.bf16.msra.mxu0 0
        %7198 = vmatpush.bf16.msra.mxu0 0
        %7199 = vmatpush.bf16.msra.mxu0 0
        %7200 = vmatpush.bf16.msra.mxu0 %v7182
        %7201 = vmatpush.bf16.msra.mxu0 %v7179
        %7202 = vmatmul.bf16.gmra.mxu0 %v7192
        %v7203 = vpop.f32.mrf.mxu0
        %v7204 = vadd.f32 %v7122, %v7203
        %v7205 = vpop.f32.mrf.mxu0
        %v7206 = vadd.f32 %v7124, %v7205
        %7207 = vdwg.mxu0
        %7208 = vmatpush.bf16.msra.mxu0 0
        %7209 = vmatpush.bf16.msra.mxu0 0
        %7210 = vmatpush.bf16.msra.mxu0 0
        %7211 = vmatpush.bf16.msra.mxu0 0
        %7212 = vmatpush.bf16.msra.mxu0 0
        %7213 = vmatpush.bf16.msra.mxu0 0
        %7214 = vmatpush.bf16.msra.mxu0 %v7183
        %7215 = vmatpush.bf16.msra.mxu0 %v7180
        %7216 = vmatmul.bf16.gmra.mxu0 %v7192
        %v7217 = vpop.f32.mrf.mxu0
        %v7218 = vadd.f32 %v7136, %v7217
        %v7219 = vpop.f32.mrf.mxu0
        %v7220 = vadd.f32 %v7138, %v7219
        %7221 = vdwg.mxu0
        %7222 = vmatpush.bf16.msra.mxu0 0
        %7223 = vmatpush.bf16.msra.mxu0 0
        %7224 = vmatpush.bf16.msra.mxu0 0
        %7225 = vmatpush.bf16.msra.mxu0 0
        %7226 = vmatpush.bf16.msra.mxu0 0
        %7227 = vmatpush.bf16.msra.mxu0 0
        %7228 = vmatpush.bf16.msra.mxu0 %v7184
        %7229 = vmatpush.bf16.msra.mxu0 %v7181
        %7230 = vmatmul.bf16.gmra.mxu0 %v7192
        %v7231 = vpop.f32.mrf.mxu0
        %v7232 = vadd.f32 %v7150, %v7231
        %v7233 = vpop.f32.mrf.mxu0
        %v7234 = vadd.f32 %v7152, %v7233
        %7235 = vdwg.mxu0
        %s7236 = scalar_lea.vmem %s5, 96
        %v7237 = vld [vmem:[%s7236] sm:$0xff]
        %v7238 = vld [vmem:[%s7236 + $0x8] sm:$0xf]
        %v7239 = vld [vmem:[%s7236 + $0xc] sm:$0xff]
        %v7240 = vld [vmem:[%s7236 + $0x14] sm:$0xf]
        %v7241 = vld [vmem:[%s7236 + $0x18] sm:$0xff]
        %v7242 = vld [vmem:[%s7236 + $0x20] sm:$0xf]
        %v7243 = vld [vmem:[%s7236 + $0x24] sm:$0xff]
        %v7244 = vld [vmem:[%s7236 + $0x2c] sm:$0xf]
        %v7247 = vunpack.c.l.b16 %v7035
        %v7248 = vunpack.c.l.b16 %v7036
        %v7249 = vpack.c.b16 %v7248, %v7247
        %v7258 = vunpack.c.l.b16 %v7237
        %v7259 = vunpack.c.h.b16 %v7237
        %v7260 = vunpack.c.l.b16 %v7238
        %v7261 = vunpack.c.l.b16 %v7239
        %v7262 = vunpack.c.h.b16 %v7239
        %v7263 = vunpack.c.l.b16 %v7240
        %v7264 = vunpack.c.l.b16 %v7241
        %v7265 = vunpack.c.h.b16 %v7241
        %v7266 = vunpack.c.l.b16 %v7242
        %v7267 = vunpack.c.l.b16 %v7243
        %v7268 = vunpack.c.h.b16 %v7243
        %v7269 = vunpack.c.l.b16 %v7244
        %v7270 = vpack.c.b16 %v7261, %v7258
        %v7271 = vpack.c.b16 %v7262, %v7259
        %v7272 = vpack.c.b16 %v7263, %v7260
        %v7273 = vpack.c.b16 %v7267, %v7264
        %v7274 = vpack.c.b16 %v7268, %v7265
        %v7275 = vpack.c.b16 %v7269, %v7266
        %v7283 = vsel %vm505, %v7249, 0
        %7285 = vmatpush.bf16.msra.mxu0 0
        %7286 = vmatpush.bf16.msra.mxu0 0
        %7287 = vmatpush.bf16.msra.mxu0 0
        %7288 = vmatpush.bf16.msra.mxu0 0
        %7289 = vmatpush.bf16.msra.mxu0 0
        %7290 = vmatpush.bf16.msra.mxu0 0
        %7291 = vmatpush.bf16.msra.mxu0 %v7273
        %7292 = vmatpush.bf16.msra.mxu0 %v7270
        %7293 = vmatmul.bf16.gmra.mxu0 %v7283
        %v7294 = vpop.f32.mrf.mxu0
        %v7295 = vadd.f32 0.0, %v7294
        %v7296 = vpop.f32.mrf.mxu0
        %v7297 = vadd.f32 0.0, %v7296
        %7298 = vdwg.mxu0
        %7299 = vmatpush.bf16.msra.mxu0 0
        %7300 = vmatpush.bf16.msra.mxu0 0
        %7301 = vmatpush.bf16.msra.mxu0 0
        %7302 = vmatpush.bf16.msra.mxu0 0
        %7303 = vmatpush.bf16.msra.mxu0 0
        %7304 = vmatpush.bf16.msra.mxu0 0
        %7305 = vmatpush.bf16.msra.mxu0 %v7274
        %7306 = vmatpush.bf16.msra.mxu0 %v7271
        %7307 = vmatmul.bf16.gmra.mxu0 %v7283
        %v7308 = vpop.f32.mrf.mxu0
        %v7309 = vadd.f32 0.0, %v7308
        %v7310 = vpop.f32.mrf.mxu0
        %v7311 = vadd.f32 0.0, %v7310
        %7312 = vdwg.mxu0
        %7313 = vmatpush.bf16.msra.mxu0 0
        %7314 = vmatpush.bf16.msra.mxu0 0
        %7315 = vmatpush.bf16.msra.mxu0 0
        %7316 = vmatpush.bf16.msra.mxu0 0
        %7317 = vmatpush.bf16.msra.mxu0 0
        %7318 = vmatpush.bf16.msra.mxu0 0
        %7319 = vmatpush.bf16.msra.mxu0 %v7275
        %7320 = vmatpush.bf16.msra.mxu0 %v7272
        %7321 = vmatmul.bf16.gmra.mxu0 %v7283
        %v7322 = vpop.f32.mrf.mxu0
        %v7323 = vadd.f32 0.0, %v7322
        %v7324 = vpop.f32.mrf.mxu0
        %v7325 = vadd.f32 0.0, %v7324
        %7326 = vdwg.mxu0
        %v7327 = vadd.f32 %v7204, %v7295
        %v7328 = vadd.f32 %v7218, %v7309
        %v7329 = vadd.f32 %v7232, %v7323
        %v7330 = vadd.f32 %v7206, %v7297
        %v7331 = vadd.f32 %v7220, %v7311
        %v7332 = vadd.f32 %v7234, %v7325
        %s7333 = scalar_lea.vmem %s5, 144
        %v7334 = vld [vmem:[%s7333] sm:$0xff]
        %v7335 = vld [vmem:[%s7333 + $0x8] sm:$0xf]
        %v7336 = vld [vmem:[%s7333 + $0xc] sm:$0xff]
        %v7337 = vld [vmem:[%s7333 + $0x14] sm:$0xf]
        %v7338 = vld [vmem:[%s7333 + $0x18] sm:$0xff]
        %v7339 = vld [vmem:[%s7333 + $0x20] sm:$0xf]
        %v7340 = vld [vmem:[%s7333 + $0x24] sm:$0xff]
        %v7341 = vld [vmem:[%s7333 + $0x2c] sm:$0xf]
        %v7344 = vunpack.c.l.b16 %v7037
        %v7345 = vunpack.c.l.b16 %v7038
        %v7346 = vpack.c.b16 %v7345, %v7344
        %v7355 = vunpack.c.l.b16 %v7334
        %v7356 = vunpack.c.h.b16 %v7334
        %v7357 = vunpack.c.l.b16 %v7335
        %v7358 = vunpack.c.l.b16 %v7336
        %v7359 = vunpack.c.h.b16 %v7336
        %v7360 = vunpack.c.l.b16 %v7337
        %v7361 = vunpack.c.l.b16 %v7338
        %v7362 = vunpack.c.h.b16 %v7338
        %v7363 = vunpack.c.l.b16 %v7339
        %v7364 = vunpack.c.l.b16 %v7340
        %v7365 = vunpack.c.h.b16 %v7340
        %v7366 = vunpack.c.l.b16 %v7341
        %v7367 = vpack.c.b16 %v7358, %v7355
        %v7368 = vpack.c.b16 %v7359, %v7356
        %v7369 = vpack.c.b16 %v7360, %v7357
        %v7370 = vpack.c.b16 %v7364, %v7361
        %v7371 = vpack.c.b16 %v7365, %v7362
        %v7372 = vpack.c.b16 %v7366, %v7363
        %v7380 = vsel %vm505, %v7346, 0
        %7382 = vmatpush.bf16.msra.mxu0 0
        %7383 = vmatpush.bf16.msra.mxu0 0
        %7384 = vmatpush.bf16.msra.mxu0 0
        %7385 = vmatpush.bf16.msra.mxu0 0
        %7386 = vmatpush.bf16.msra.mxu0 0
        %7387 = vmatpush.bf16.msra.mxu0 0
        %7388 = vmatpush.bf16.msra.mxu0 %v7370
        %7389 = vmatpush.bf16.msra.mxu0 %v7367
        %7390 = vmatmul.bf16.gmra.mxu0 %v7380
        %v7391 = vpop.f32.mrf.mxu0
        %v7392 = vadd.f32 0.0, %v7391
        %v7393 = vpop.f32.mrf.mxu0
        %v7394 = vadd.f32 0.0, %v7393
        %7395 = vdwg.mxu0
        %7396 = vmatpush.bf16.msra.mxu0 0
        %7397 = vmatpush.bf16.msra.mxu0 0
        %7398 = vmatpush.bf16.msra.mxu0 0
        %7399 = vmatpush.bf16.msra.mxu0 0
        %7400 = vmatpush.bf16.msra.mxu0 0
        %7401 = vmatpush.bf16.msra.mxu0 0
        %7402 = vmatpush.bf16.msra.mxu0 %v7371
        %7403 = vmatpush.bf16.msra.mxu0 %v7368
        %7404 = vmatmul.bf16.gmra.mxu0 %v7380
        %v7405 = vpop.f32.mrf.mxu0
        %v7406 = vadd.f32 0.0, %v7405
        %v7407 = vpop.f32.mrf.mxu0
        %v7408 = vadd.f32 0.0, %v7407
        %7409 = vdwg.mxu0
        %7410 = vmatpush.bf16.msra.mxu0 0
        %7411 = vmatpush.bf16.msra.mxu0 0
        %7412 = vmatpush.bf16.msra.mxu0 0
        %7413 = vmatpush.bf16.msra.mxu0 0
        %7414 = vmatpush.bf16.msra.mxu0 0
        %7415 = vmatpush.bf16.msra.mxu0 0
        %7416 = vmatpush.bf16.msra.mxu0 %v7372
        %7417 = vmatpush.bf16.msra.mxu0 %v7369
        %7418 = vmatmul.bf16.gmra.mxu0 %v7380
        %v7419 = vpop.f32.mrf.mxu0
        %v7420 = vadd.f32 0.0, %v7419
        %v7421 = vpop.f32.mrf.mxu0
        %v7422 = vadd.f32 0.0, %v7421
        %7423 = vdwg.mxu0
        %v7424 = vadd.f32 %v7327, %v7392
        %v7425 = vadd.f32 %v7328, %v7406
        %v7426 = vadd.f32 %v7329, %v7420
        %v7427 = vadd.f32 %v7330, %v7394
        %v7428 = vadd.f32 %v7331, %v7408
        %v7429 = vadd.f32 %v7332, %v7422
        %s7430 = scalar_lea.vmem %s5, 192
        %v7431 = vld [vmem:[%s7430] sm:$0xff]
        %v7432 = vld [vmem:[%s7430 + $0x8] sm:$0xf]
        %v7433 = vld [vmem:[%s7430 + $0xc] sm:$0xff]
        %v7434 = vld [vmem:[%s7430 + $0x14] sm:$0xf]
        %v7435 = vld [vmem:[%s7430 + $0x18] sm:$0xff]
        %v7436 = vld [vmem:[%s7430 + $0x20] sm:$0xf]
        %v7437 = vld [vmem:[%s7430 + $0x24] sm:$0xff]
        %v7438 = vld [vmem:[%s7430 + $0x2c] sm:$0xf]
        %v7441 = vunpack.c.l.b16 %v7039
        %v7442 = vunpack.c.l.b16 %v7040
        %v7443 = vpack.c.b16 %v7442, %v7441
        %v7452 = vunpack.c.l.b16 %v7431
        %v7453 = vunpack.c.h.b16 %v7431
        %v7454 = vunpack.c.l.b16 %v7432
        %v7455 = vunpack.c.l.b16 %v7433
        %v7456 = vunpack.c.h.b16 %v7433
        %v7457 = vunpack.c.l.b16 %v7434
        %v7458 = vunpack.c.l.b16 %v7435
        %v7459 = vunpack.c.h.b16 %v7435
        %v7460 = vunpack.c.l.b16 %v7436
        %v7461 = vunpack.c.l.b16 %v7437
        %v7462 = vunpack.c.h.b16 %v7437
        %v7463 = vunpack.c.l.b16 %v7438
        %v7464 = vpack.c.b16 %v7455, %v7452
        %v7465 = vpack.c.b16 %v7456, %v7453
        %v7466 = vpack.c.b16 %v7457, %v7454
        %v7467 = vpack.c.b16 %v7461, %v7458
        %v7468 = vpack.c.b16 %v7462, %v7459
        %v7469 = vpack.c.b16 %v7463, %v7460
        %v7477 = vsel %vm505, %v7443, 0
        %7479 = vmatpush.bf16.msra.mxu0 0
        %7480 = vmatpush.bf16.msra.mxu0 0
        %7481 = vmatpush.bf16.msra.mxu0 0
        %7482 = vmatpush.bf16.msra.mxu0 0
        %7483 = vmatpush.bf16.msra.mxu0 0
        %7484 = vmatpush.bf16.msra.mxu0 0
        %7485 = vmatpush.bf16.msra.mxu0 %v7467
        %7486 = vmatpush.bf16.msra.mxu0 %v7464
        %7487 = vmatmul.bf16.gmra.mxu0 %v7477
        %v7488 = vpop.f32.mrf.mxu0
        %v7489 = vadd.f32 0.0, %v7488
        %v7490 = vpop.f32.mrf.mxu0
        %v7491 = vadd.f32 0.0, %v7490
        %7492 = vdwg.mxu0
        %7493 = vmatpush.bf16.msra.mxu0 0
        %7494 = vmatpush.bf16.msra.mxu0 0
        %7495 = vmatpush.bf16.msra.mxu0 0
        %7496 = vmatpush.bf16.msra.mxu0 0
        %7497 = vmatpush.bf16.msra.mxu0 0
        %7498 = vmatpush.bf16.msra.mxu0 0
        %7499 = vmatpush.bf16.msra.mxu0 %v7468
        %7500 = vmatpush.bf16.msra.mxu0 %v7465
        %7501 = vmatmul.bf16.gmra.mxu0 %v7477
        %v7502 = vpop.f32.mrf.mxu0
        %v7503 = vadd.f32 0.0, %v7502
        %v7504 = vpop.f32.mrf.mxu0
        %v7505 = vadd.f32 0.0, %v7504
        %7506 = vdwg.mxu0
        %7507 = vmatpush.bf16.msra.mxu0 0
        %7508 = vmatpush.bf16.msra.mxu0 0
        %7509 = vmatpush.bf16.msra.mxu0 0
        %7510 = vmatpush.bf16.msra.mxu0 0
        %7511 = vmatpush.bf16.msra.mxu0 0
        %7512 = vmatpush.bf16.msra.mxu0 0
        %7513 = vmatpush.bf16.msra.mxu0 %v7469
        %7514 = vmatpush.bf16.msra.mxu0 %v7466
        %7515 = vmatmul.bf16.gmra.mxu0 %v7477
        %v7516 = vpop.f32.mrf.mxu0
        %v7517 = vadd.f32 0.0, %v7516
        %v7518 = vpop.f32.mrf.mxu0
        %v7519 = vadd.f32 0.0, %v7518
        %7520 = vdwg.mxu0
        %v7521 = vadd.f32 %v7424, %v7489
        %v7522 = vadd.f32 %v7425, %v7503
        %v7523 = vadd.f32 %v7426, %v7517
        %v7524 = vadd.f32 %v7427, %v7491
        %v7525 = vadd.f32 %v7428, %v7505
        %v7526 = vadd.f32 %v7429, %v7519
        %s7527 = scalar_lea.vmem %s5, 240
        %v7528 = vld [vmem:[%s7527] sm:$0xff]
        %v7529 = vld [vmem:[%s7527 + $0x8] sm:$0xf]
        %v7530 = vld [vmem:[%s7527 + $0xc] sm:$0xff]
        %v7531 = vld [vmem:[%s7527 + $0x14] sm:$0xf]
        %v7532 = vld [vmem:[%s7527 + $0x18] sm:$0xff]
        %v7533 = vld [vmem:[%s7527 + $0x20] sm:$0xf]
        %v7534 = vld [vmem:[%s7527 + $0x24] sm:$0xff]
        %v7535 = vld [vmem:[%s7527 + $0x2c] sm:$0xf]
        %v7538 = vunpack.c.l.b16 %v7041
        %v7539 = vunpack.c.l.b16 %v7042
        %v7540 = vpack.c.b16 %v7539, %v7538
        %v7549 = vunpack.c.l.b16 %v7528
        %v7550 = vunpack.c.h.b16 %v7528
        %v7551 = vunpack.c.l.b16 %v7529
        %v7552 = vunpack.c.l.b16 %v7530
        %v7553 = vunpack.c.h.b16 %v7530
        %v7554 = vunpack.c.l.b16 %v7531
        %v7555 = vunpack.c.l.b16 %v7532
        %v7556 = vunpack.c.h.b16 %v7532
        %v7557 = vunpack.c.l.b16 %v7533
        %v7558 = vunpack.c.l.b16 %v7534
        %v7559 = vunpack.c.h.b16 %v7534
        %v7560 = vunpack.c.l.b16 %v7535
        %v7561 = vpack.c.b16 %v7552, %v7549
        %v7562 = vpack.c.b16 %v7553, %v7550
        %v7563 = vpack.c.b16 %v7554, %v7551
        %v7564 = vpack.c.b16 %v7558, %v7555
        %v7565 = vpack.c.b16 %v7559, %v7556
        %v7566 = vpack.c.b16 %v7560, %v7557
        %v7574 = vsel %vm505, %v7540, 0
        %7576 = vmatpush.bf16.msra.mxu0 0
        %7577 = vmatpush.bf16.msra.mxu0 0
        %7578 = vmatpush.bf16.msra.mxu0 0
        %7579 = vmatpush.bf16.msra.mxu0 0
        %7580 = vmatpush.bf16.msra.mxu0 0
        %7581 = vmatpush.bf16.msra.mxu0 0
        %7582 = vmatpush.bf16.msra.mxu0 %v7564
        %7583 = vmatpush.bf16.msra.mxu0 %v7561
        %7584 = vmatmul.bf16.gmra.mxu0 %v7574
        %v7585 = vpop.f32.mrf.mxu0
        %v7586 = vadd.f32 0.0, %v7585
        %v7587 = vpop.f32.mrf.mxu0
        %v7588 = vadd.f32 0.0, %v7587
        %7589 = vdwg.mxu0
        %7590 = vmatpush.bf16.msra.mxu0 0
        %7591 = vmatpush.bf16.msra.mxu0 0
        %7592 = vmatpush.bf16.msra.mxu0 0
        %7593 = vmatpush.bf16.msra.mxu0 0
        %7594 = vmatpush.bf16.msra.mxu0 0
        %7595 = vmatpush.bf16.msra.mxu0 0
        %7596 = vmatpush.bf16.msra.mxu0 %v7565
        %7597 = vmatpush.bf16.msra.mxu0 %v7562
        %7598 = vmatmul.bf16.gmra.mxu0 %v7574
        %v7599 = vpop.f32.mrf.mxu0
        %v7600 = vadd.f32 0.0, %v7599
        %v7601 = vpop.f32.mrf.mxu0
        %v7602 = vadd.f32 0.0, %v7601
        %7603 = vdwg.mxu0
        %7604 = vmatpush.bf16.msra.mxu0 0
        %7605 = vmatpush.bf16.msra.mxu0 0
        %7606 = vmatpush.bf16.msra.mxu0 0
        %7607 = vmatpush.bf16.msra.mxu0 0
        %7608 = vmatpush.bf16.msra.mxu0 0
        %7609 = vmatpush.bf16.msra.mxu0 0
        %7610 = vmatpush.bf16.msra.mxu0 %v7566
        %7611 = vmatpush.bf16.msra.mxu0 %v7563
        %7612 = vmatmul.bf16.gmra.mxu0 %v7574
        %v7613 = vpop.f32.mrf.mxu0
        %v7614 = vadd.f32 0.0, %v7613
        %v7615 = vpop.f32.mrf.mxu0
        %v7616 = vadd.f32 0.0, %v7615
        %7617 = vdwg.mxu0
        %v7618 = vadd.f32 %v7521, %v7586
        %v7619 = vadd.f32 %v7522, %v7600
        %v7620 = vadd.f32 %v7523, %v7614
        %v7621 = vadd.f32 %v7524, %v7588
        %v7622 = vadd.f32 %v7525, %v7602
        %v7623 = vadd.f32 %v7526, %v7616
        %s7624 = scalar_lea.vmem %s5, 288
        %v7625 = vld [vmem:[%s7624] sm:$0xff]
        %v7626 = vld [vmem:[%s7624 + $0x8] sm:$0xf]
        %v7627 = vld [vmem:[%s7624 + $0xc] sm:$0xff]
        %v7628 = vld [vmem:[%s7624 + $0x14] sm:$0xf]
        %v7629 = vld [vmem:[%s7624 + $0x18] sm:$0xff]
        %v7630 = vld [vmem:[%s7624 + $0x20] sm:$0xf]
        %v7631 = vld [vmem:[%s7624 + $0x24] sm:$0xff]
        %v7632 = vld [vmem:[%s7624 + $0x2c] sm:$0xf]
        %v7635 = vunpack.c.l.b16 %v7043
        %v7636 = vunpack.c.l.b16 %v7044
        %v7637 = vpack.c.b16 %v7636, %v7635
        %v7646 = vunpack.c.l.b16 %v7625
        %v7647 = vunpack.c.h.b16 %v7625
        %v7648 = vunpack.c.l.b16 %v7626
        %v7649 = vunpack.c.l.b16 %v7627
        %v7650 = vunpack.c.h.b16 %v7627
        %v7651 = vunpack.c.l.b16 %v7628
        %v7652 = vunpack.c.l.b16 %v7629
        %v7653 = vunpack.c.h.b16 %v7629
        %v7654 = vunpack.c.l.b16 %v7630
        %v7655 = vunpack.c.l.b16 %v7631
        %v7656 = vunpack.c.h.b16 %v7631
        %v7657 = vunpack.c.l.b16 %v7632
        %v7658 = vpack.c.b16 %v7649, %v7646
        %v7659 = vpack.c.b16 %v7650, %v7647
        %v7660 = vpack.c.b16 %v7651, %v7648
        %v7661 = vpack.c.b16 %v7655, %v7652
        %v7662 = vpack.c.b16 %v7656, %v7653
        %v7663 = vpack.c.b16 %v7657, %v7654
        %v7671 = vsel %vm505, %v7637, 0
        %7673 = vmatpush.bf16.msra.mxu0 0
        %7674 = vmatpush.bf16.msra.mxu0 0
        %7675 = vmatpush.bf16.msra.mxu0 0
        %7676 = vmatpush.bf16.msra.mxu0 0
        %7677 = vmatpush.bf16.msra.mxu0 0
        %7678 = vmatpush.bf16.msra.mxu0 0
        %7679 = vmatpush.bf16.msra.mxu0 %v7661
        %7680 = vmatpush.bf16.msra.mxu0 %v7658
        %7681 = vmatmul.bf16.gmra.mxu0 %v7671
        %v7682 = vpop.f32.mrf.mxu0
        %v7683 = vadd.f32 0.0, %v7682
        %v7684 = vpop.f32.mrf.mxu0
        %v7685 = vadd.f32 0.0, %v7684
        %7686 = vdwg.mxu0
        %7687 = vmatpush.bf16.msra.mxu0 0
        %7688 = vmatpush.bf16.msra.mxu0 0
        %7689 = vmatpush.bf16.msra.mxu0 0
        %7690 = vmatpush.bf16.msra.mxu0 0
        %7691 = vmatpush.bf16.msra.mxu0 0
        %7692 = vmatpush.bf16.msra.mxu0 0
        %7693 = vmatpush.bf16.msra.mxu0 %v7662
        %7694 = vmatpush.bf16.msra.mxu0 %v7659
        %7695 = vmatmul.bf16.gmra.mxu0 %v7671
        %v7696 = vpop.f32.mrf.mxu0
        %v7697 = vadd.f32 0.0, %v7696
        %v7698 = vpop.f32.mrf.mxu0
        %v7699 = vadd.f32 0.0, %v7698
        %7700 = vdwg.mxu0
        %7701 = vmatpush.bf16.msra.mxu0 0
        %7702 = vmatpush.bf16.msra.mxu0 0
        %7703 = vmatpush.bf16.msra.mxu0 0
        %7704 = vmatpush.bf16.msra.mxu0 0
        %7705 = vmatpush.bf16.msra.mxu0 0
        %7706 = vmatpush.bf16.msra.mxu0 0
        %7707 = vmatpush.bf16.msra.mxu0 %v7663
        %7708 = vmatpush.bf16.msra.mxu0 %v7660
        %7709 = vmatmul.bf16.gmra.mxu0 %v7671
        %v7710 = vpop.f32.mrf.mxu0
        %v7711 = vadd.f32 0.0, %v7710
        %v7712 = vpop.f32.mrf.mxu0
        %v7713 = vadd.f32 0.0, %v7712
        %7714 = vdwg.mxu0
        %v7715 = vadd.f32 %v7618, %v7683
        %v7716 = vadd.f32 %v7619, %v7697
        %v7717 = vadd.f32 %v7620, %v7711
        %v7718 = vadd.f32 %v7621, %v7685
        %v7719 = vadd.f32 %v7622, %v7699
        %v7720 = vadd.f32 %v7623, %v7713
        %s7721 = scalar_lea.vmem %s5, 336
        %v7722 = vld [vmem:[%s7721] sm:$0xff]
        %v7723 = vld [vmem:[%s7721 + $0x8] sm:$0xf]
        %v7724 = vld [vmem:[%s7721 + $0xc] sm:$0xff]
        %v7725 = vld [vmem:[%s7721 + $0x14] sm:$0xf]
        %v7726 = vld [vmem:[%s7721 + $0x18] sm:$0xff]
        %v7727 = vld [vmem:[%s7721 + $0x20] sm:$0xf]
        %v7728 = vld [vmem:[%s7721 + $0x24] sm:$0xff]
        %v7729 = vld [vmem:[%s7721 + $0x2c] sm:$0xf]
        %v7732 = vunpack.c.l.b16 %v7045
        %v7733 = vunpack.c.l.b16 %v7046
        %v7734 = vpack.c.b16 %v7733, %v7732
        %v7743 = vunpack.c.l.b16 %v7722
        %v7744 = vunpack.c.h.b16 %v7722
        %v7745 = vunpack.c.l.b16 %v7723
        %v7746 = vunpack.c.l.b16 %v7724
        %v7747 = vunpack.c.h.b16 %v7724
        %v7748 = vunpack.c.l.b16 %v7725
        %v7749 = vunpack.c.l.b16 %v7726
        %v7750 = vunpack.c.h.b16 %v7726
        %v7751 = vunpack.c.l.b16 %v7727
        %v7752 = vunpack.c.l.b16 %v7728
        %v7753 = vunpack.c.h.b16 %v7728
        %v7754 = vunpack.c.l.b16 %v7729
        %v7755 = vpack.c.b16 %v7746, %v7743
        %v7756 = vpack.c.b16 %v7747, %v7744
        %v7757 = vpack.c.b16 %v7748, %v7745
        %v7758 = vpack.c.b16 %v7752, %v7749
        %v7759 = vpack.c.b16 %v7753, %v7750
        %v7760 = vpack.c.b16 %v7754, %v7751
        %v7768 = vsel %vm505, %v7734, 0
        %7770 = vmatpush.bf16.msra.mxu0 0
        %7771 = vmatpush.bf16.msra.mxu0 0
        %7772 = vmatpush.bf16.msra.mxu0 0
        %7773 = vmatpush.bf16.msra.mxu0 0
        %7774 = vmatpush.bf16.msra.mxu0 0
        %7775 = vmatpush.bf16.msra.mxu0 0
        %7776 = vmatpush.bf16.msra.mxu0 %v7758
        %7777 = vmatpush.bf16.msra.mxu0 %v7755
        %7778 = vmatmul.bf16.gmra.mxu0 %v7768
        %v7779 = vpop.f32.mrf.mxu0
        %v7780 = vadd.f32 0.0, %v7779
        %v7781 = vpop.f32.mrf.mxu0
        %v7782 = vadd.f32 0.0, %v7781
        %7783 = vdwg.mxu0
        %7784 = vmatpush.bf16.msra.mxu0 0
        %7785 = vmatpush.bf16.msra.mxu0 0
        %7786 = vmatpush.bf16.msra.mxu0 0
        %7787 = vmatpush.bf16.msra.mxu0 0
        %7788 = vmatpush.bf16.msra.mxu0 0
        %7789 = vmatpush.bf16.msra.mxu0 0
        %7790 = vmatpush.bf16.msra.mxu0 %v7759
        %7791 = vmatpush.bf16.msra.mxu0 %v7756
        %7792 = vmatmul.bf16.gmra.mxu0 %v7768
        %v7793 = vpop.f32.mrf.mxu0
        %v7794 = vadd.f32 0.0, %v7793
        %v7795 = vpop.f32.mrf.mxu0
        %v7796 = vadd.f32 0.0, %v7795
        %7797 = vdwg.mxu0
        %7798 = vmatpush.bf16.msra.mxu0 0
        %7799 = vmatpush.bf16.msra.mxu0 0
        %7800 = vmatpush.bf16.msra.mxu0 0
        %7801 = vmatpush.bf16.msra.mxu0 0
        %7802 = vmatpush.bf16.msra.mxu0 0
        %7803 = vmatpush.bf16.msra.mxu0 0
        %7804 = vmatpush.bf16.msra.mxu0 %v7760
        %7805 = vmatpush.bf16.msra.mxu0 %v7757
        %7806 = vmatmul.bf16.gmra.mxu0 %v7768
        %v7807 = vpop.f32.mrf.mxu0
        %v7808 = vadd.f32 0.0, %v7807
        %v7809 = vpop.f32.mrf.mxu0
        %v7810 = vadd.f32 0.0, %v7809
        %7811 = vdwg.mxu0
        %v7812 = vadd.f32 %v7715, %v7780
        %v7813 = vadd.f32 %v7716, %v7794
        %v7814 = vadd.f32 %v7717, %v7808
        %v7815 = vadd.f32 %v7718, %v7782
        %v7816 = vadd.f32 %v7719, %v7796
        %v7817 = vadd.f32 %v7720, %v7810
        %s7818 = scalar_lea.vmem %s5, 384
        %v7819 = vld [vmem:[%s7818] sm:$0xff]
        %v7820 = vld [vmem:[%s7818 + $0x8] sm:$0xf]
        %v7821 = vld [vmem:[%s7818 + $0xc] sm:$0xff]
        %v7822 = vld [vmem:[%s7818 + $0x14] sm:$0xf]
        %v7823 = vld [vmem:[%s7818 + $0x18] sm:$0xff]
        %v7824 = vld [vmem:[%s7818 + $0x20] sm:$0xf]
        %v7825 = vld [vmem:[%s7818 + $0x24] sm:$0xff]
        %v7826 = vld [vmem:[%s7818 + $0x2c] sm:$0xf]
        %v7829 = vunpack.c.l.b16 %v7047
        %v7830 = vunpack.c.l.b16 %v7048
        %v7831 = vpack.c.b16 %v7830, %v7829
        %v7840 = vunpack.c.l.b16 %v7819
        %v7841 = vunpack.c.h.b16 %v7819
        %v7842 = vunpack.c.l.b16 %v7820
        %v7843 = vunpack.c.l.b16 %v7821
        %v7844 = vunpack.c.h.b16 %v7821
        %v7845 = vunpack.c.l.b16 %v7822
        %v7846 = vunpack.c.l.b16 %v7823
        %v7847 = vunpack.c.h.b16 %v7823
        %v7848 = vunpack.c.l.b16 %v7824
        %v7849 = vunpack.c.l.b16 %v7825
        %v7850 = vunpack.c.h.b16 %v7825
        %v7851 = vunpack.c.l.b16 %v7826
        %v7852 = vpack.c.b16 %v7843, %v7840
        %v7853 = vpack.c.b16 %v7844, %v7841
        %v7854 = vpack.c.b16 %v7845, %v7842
        %v7855 = vpack.c.b16 %v7849, %v7846
        %v7856 = vpack.c.b16 %v7850, %v7847
        %v7857 = vpack.c.b16 %v7851, %v7848
        %v7865 = vsel %vm505, %v7831, 0
        %7867 = vmatpush.bf16.msra.mxu0 0
        %7868 = vmatpush.bf16.msra.mxu0 0
        %7869 = vmatpush.bf16.msra.mxu0 0
        %7870 = vmatpush.bf16.msra.mxu0 0
        %7871 = vmatpush.bf16.msra.mxu0 0
        %7872 = vmatpush.bf16.msra.mxu0 0
        %7873 = vmatpush.bf16.msra.mxu0 %v7855
        %7874 = vmatpush.bf16.msra.mxu0 %v7852
        %7875 = vmatmul.bf16.gmra.mxu0 %v7865
        %v7876 = vpop.f32.mrf.mxu0
        %v7877 = vadd.f32 0.0, %v7876
        %v7878 = vpop.f32.mrf.mxu0
        %v7879 = vadd.f32 0.0, %v7878
        %7880 = vdwg.mxu0
        %7881 = vmatpush.bf16.msra.mxu0 0
        %7882 = vmatpush.bf16.msra.mxu0 0
        %7883 = vmatpush.bf16.msra.mxu0 0
        %7884 = vmatpush.bf16.msra.mxu0 0
        %7885 = vmatpush.bf16.msra.mxu0 0
        %7886 = vmatpush.bf16.msra.mxu0 0
        %7887 = vmatpush.bf16.msra.mxu0 %v7856
        %7888 = vmatpush.bf16.msra.mxu0 %v7853
        %7889 = vmatmul.bf16.gmra.mxu0 %v7865
        %v7890 = vpop.f32.mrf.mxu0
        %v7891 = vadd.f32 0.0, %v7890
        %v7892 = vpop.f32.mrf.mxu0
        %v7893 = vadd.f32 0.0, %v7892
        %7894 = vdwg.mxu0
        %7895 = vmatpush.bf16.msra.mxu0 0
        %7896 = vmatpush.bf16.msra.mxu0 0
        %7897 = vmatpush.bf16.msra.mxu0 0
        %7898 = vmatpush.bf16.msra.mxu0 0
        %7899 = vmatpush.bf16.msra.mxu0 0
        %7900 = vmatpush.bf16.msra.mxu0 0
        %7901 = vmatpush.bf16.msra.mxu0 %v7857
        %7902 = vmatpush.bf16.msra.mxu0 %v7854
        %7903 = vmatmul.bf16.gmra.mxu0 %v7865
        %v7904 = vpop.f32.mrf.mxu0
        %v7905 = vadd.f32 0.0, %v7904
        %v7906 = vpop.f32.mrf.mxu0
        %v7907 = vadd.f32 0.0, %v7906
        %7908 = vdwg.mxu0
        %v7909 = vadd.f32 %v7812, %v7877
        %v7910 = vadd.f32 %v7813, %v7891
        %v7911 = vadd.f32 %v7814, %v7905
        %v7912 = vadd.f32 %v7815, %v7879
        %v7913 = vadd.f32 %v7816, %v7893
        %v7914 = vadd.f32 %v7817, %v7907
        %s7915 = scalar_lea.vmem %s5, 432
        %v7916 = vld [vmem:[%s7915] sm:$0xff]
        %v7917 = vld [vmem:[%s7915 + $0x8] sm:$0xf]
        %v7918 = vld [vmem:[%s7915 + $0xc] sm:$0xff]
        %v7919 = vld [vmem:[%s7915 + $0x14] sm:$0xf]
        %v7920 = vld [vmem:[%s7915 + $0x18] sm:$0xff]
        %v7921 = vld [vmem:[%s7915 + $0x20] sm:$0xf]
        %v7922 = vld [vmem:[%s7915 + $0x24] sm:$0xff]
        %v7923 = vld [vmem:[%s7915 + $0x2c] sm:$0xf]
        %v7926 = vunpack.c.l.b16 %v7049
        %v7927 = vunpack.c.l.b16 %v7050
        %v7928 = vpack.c.b16 %v7927, %v7926
        %v7937 = vunpack.c.l.b16 %v7916
        %v7938 = vunpack.c.h.b16 %v7916
        %v7939 = vunpack.c.l.b16 %v7917
        %v7940 = vunpack.c.l.b16 %v7918
        %v7941 = vunpack.c.h.b16 %v7918
        %v7942 = vunpack.c.l.b16 %v7919
        %v7943 = vunpack.c.l.b16 %v7920
        %v7944 = vunpack.c.h.b16 %v7920
        %v7945 = vunpack.c.l.b16 %v7921
        %v7946 = vunpack.c.l.b16 %v7922
        %v7947 = vunpack.c.h.b16 %v7922
        %v7948 = vunpack.c.l.b16 %v7923
        %v7949 = vpack.c.b16 %v7940, %v7937
        %v7950 = vpack.c.b16 %v7941, %v7938
        %v7951 = vpack.c.b16 %v7942, %v7939
        %v7952 = vpack.c.b16 %v7946, %v7943
        %v7953 = vpack.c.b16 %v7947, %v7944
        %v7954 = vpack.c.b16 %v7948, %v7945
        %v7962 = vsel %vm505, %v7928, 0
        %7964 = vmatpush.bf16.msra.mxu0 0
        %7965 = vmatpush.bf16.msra.mxu0 0
        %7966 = vmatpush.bf16.msra.mxu0 0
        %7967 = vmatpush.bf16.msra.mxu0 0
        %7968 = vmatpush.bf16.msra.mxu0 0
        %7969 = vmatpush.bf16.msra.mxu0 0
        %7970 = vmatpush.bf16.msra.mxu0 %v7952
        %7971 = vmatpush.bf16.msra.mxu0 %v7949
        %7972 = vmatmul.bf16.gmra.mxu0 %v7962
        %v7973 = vpop.f32.mrf.mxu0
        %v7974 = vadd.f32 0.0, %v7973
        %v7975 = vpop.f32.mrf.mxu0
        %v7976 = vadd.f32 0.0, %v7975
        %7977 = vdwg.mxu0
        %7978 = vmatpush.bf16.msra.mxu0 0
        %7979 = vmatpush.bf16.msra.mxu0 0
        %7980 = vmatpush.bf16.msra.mxu0 0
        %7981 = vmatpush.bf16.msra.mxu0 0
        %7982 = vmatpush.bf16.msra.mxu0 0
        %7983 = vmatpush.bf16.msra.mxu0 0
        %7984 = vmatpush.bf16.msra.mxu0 %v7953
        %7985 = vmatpush.bf16.msra.mxu0 %v7950
        %7986 = vmatmul.bf16.gmra.mxu0 %v7962
        %v7987 = vpop.f32.mrf.mxu0
        %v7988 = vadd.f32 0.0, %v7987
        %v7989 = vpop.f32.mrf.mxu0
        %v7990 = vadd.f32 0.0, %v7989
        %7991 = vdwg.mxu0
        %7992 = vmatpush.bf16.msra.mxu0 0
        %7993 = vmatpush.bf16.msra.mxu0 0
        %7994 = vmatpush.bf16.msra.mxu0 0
        %7995 = vmatpush.bf16.msra.mxu0 0
        %7996 = vmatpush.bf16.msra.mxu0 0
        %7997 = vmatpush.bf16.msra.mxu0 0
        %7998 = vmatpush.bf16.msra.mxu0 %v7954
        %7999 = vmatpush.bf16.msra.mxu0 %v7951
        %8000 = vmatmul.bf16.gmra.mxu0 %v7962
        %v8001 = vpop.f32.mrf.mxu0
        %v8002 = vadd.f32 0.0, %v8001
        %v8003 = vpop.f32.mrf.mxu0
        %v8004 = vadd.f32 0.0, %v8003
        %8005 = vdwg.mxu0
        %v8006 = vadd.f32 %v7909, %v7974
        %v8007 = vadd.f32 %v7910, %v7988
        %v8008 = vadd.f32 %v7911, %v8002
        %v8009 = vadd.f32 %v7912, %v7976
        %v8010 = vadd.f32 %v7913, %v7990
        %v8011 = vadd.f32 %v7914, %v8004
        %s8012 = scalar_lea.vmem %s5, 480
        %v8013 = vld [vmem:[%s8012] sm:$0xff]
        %v8014 = vld [vmem:[%s8012 + $0x8] sm:$0xf]
        %v8015 = vld [vmem:[%s8012 + $0xc] sm:$0xff]
        %v8016 = vld [vmem:[%s8012 + $0x14] sm:$0xf]
        %v8017 = vld [vmem:[%s8012 + $0x18] sm:$0xff]
        %v8018 = vld [vmem:[%s8012 + $0x20] sm:$0xf]
        %v8019 = vld [vmem:[%s8012 + $0x24] sm:$0xff]
        %v8020 = vld [vmem:[%s8012 + $0x2c] sm:$0xf]
        %v8023 = vunpack.c.l.b16 %v7051
        %v8024 = vunpack.c.l.b16 %v7052
        %v8025 = vpack.c.b16 %v8024, %v8023
        %v8034 = vunpack.c.l.b16 %v8013
        %v8035 = vunpack.c.h.b16 %v8013
        %v8036 = vunpack.c.l.b16 %v8014
        %v8037 = vunpack.c.l.b16 %v8015
        %v8038 = vunpack.c.h.b16 %v8015
        %v8039 = vunpack.c.l.b16 %v8016
        %v8040 = vunpack.c.l.b16 %v8017
        %v8041 = vunpack.c.h.b16 %v8017
        %v8042 = vunpack.c.l.b16 %v8018
        %v8043 = vunpack.c.l.b16 %v8019
        %v8044 = vunpack.c.h.b16 %v8019
        %v8045 = vunpack.c.l.b16 %v8020
        %v8046 = vpack.c.b16 %v8037, %v8034
        %v8047 = vpack.c.b16 %v8038, %v8035
        %v8048 = vpack.c.b16 %v8039, %v8036
        %v8049 = vpack.c.b16 %v8043, %v8040
        %v8050 = vpack.c.b16 %v8044, %v8041
        %v8051 = vpack.c.b16 %v8045, %v8042
        %v8059 = vsel %vm505, %v8025, 0
        %8061 = vmatpush.bf16.msra.mxu0 0
        %8062 = vmatpush.bf16.msra.mxu0 0
        %8063 = vmatpush.bf16.msra.mxu0 0
        %8064 = vmatpush.bf16.msra.mxu0 0
        %8065 = vmatpush.bf16.msra.mxu0 0
        %8066 = vmatpush.bf16.msra.mxu0 0
        %8067 = vmatpush.bf16.msra.mxu0 %v8049
        %8068 = vmatpush.bf16.msra.mxu0 %v8046
        %8069 = vmatmul.bf16.gmra.mxu0 %v8059
        %v8070 = vpop.f32.mrf.mxu0
        %v8071 = vadd.f32 0.0, %v8070
        %v8072 = vpop.f32.mrf.mxu0
        %v8073 = vadd.f32 0.0, %v8072
        %8074 = vdwg.mxu0
        %8075 = vmatpush.bf16.msra.mxu0 0
        %8076 = vmatpush.bf16.msra.mxu0 0
        %8077 = vmatpush.bf16.msra.mxu0 0
        %8078 = vmatpush.bf16.msra.mxu0 0
        %8079 = vmatpush.bf16.msra.mxu0 0
        %8080 = vmatpush.bf16.msra.mxu0 0
        %8081 = vmatpush.bf16.msra.mxu0 %v8050
        %8082 = vmatpush.bf16.msra.mxu0 %v8047
        %8083 = vmatmul.bf16.gmra.mxu0 %v8059
        %v8084 = vpop.f32.mrf.mxu0
        %v8085 = vadd.f32 0.0, %v8084
        %v8086 = vpop.f32.mrf.mxu0
        %v8087 = vadd.f32 0.0, %v8086
        %8088 = vdwg.mxu0
        %8089 = vmatpush.bf16.msra.mxu0 0
        %8090 = vmatpush.bf16.msra.mxu0 0
        %8091 = vmatpush.bf16.msra.mxu0 0
        %8092 = vmatpush.bf16.msra.mxu0 0
        %8093 = vmatpush.bf16.msra.mxu0 0
        %8094 = vmatpush.bf16.msra.mxu0 0
        %8095 = vmatpush.bf16.msra.mxu0 %v8051
        %8096 = vmatpush.bf16.msra.mxu0 %v8048
        %8097 = vmatmul.bf16.gmra.mxu0 %v8059
        %v8098 = vpop.f32.mrf.mxu0
        %v8099 = vadd.f32 0.0, %v8098
        %v8100 = vpop.f32.mrf.mxu0
        %v8101 = vadd.f32 0.0, %v8100
        %8102 = vdwg.mxu0
        %v8103 = vadd.f32 %v8006, %v8071
        %v8104 = vadd.f32 %v8007, %v8085
        %v8105 = vadd.f32 %v8008, %v8099
        %v8106 = vadd.f32 %v8009, %v8073
        %v8107 = vadd.f32 %v8010, %v8087
        %v8108 = vadd.f32 %v8011, %v8101
        %s8109 = scalar_lea.vmem %s5, 528
        %v8110 = vld [vmem:[%s8109] sm:$0xff]
        %v8111 = vld [vmem:[%s8109 + $0x8] sm:$0xf]
        %v8112 = vld [vmem:[%s8109 + $0xc] sm:$0xff]
        %v8113 = vld [vmem:[%s8109 + $0x14] sm:$0xf]
        %v8114 = vld [vmem:[%s8109 + $0x18] sm:$0xff]
        %v8115 = vld [vmem:[%s8109 + $0x20] sm:$0xf]
        %v8116 = vld [vmem:[%s8109 + $0x24] sm:$0xff]
        %v8117 = vld [vmem:[%s8109 + $0x2c] sm:$0xf]
        %v8120 = vunpack.c.l.b16 %v7053
        %v8121 = vunpack.c.l.b16 %v7054
        %v8122 = vpack.c.b16 %v8121, %v8120
        %v8131 = vunpack.c.l.b16 %v8110
        %v8132 = vunpack.c.h.b16 %v8110
        %v8133 = vunpack.c.l.b16 %v8111
        %v8134 = vunpack.c.l.b16 %v8112
        %v8135 = vunpack.c.h.b16 %v8112
        %v8136 = vunpack.c.l.b16 %v8113
        %v8137 = vunpack.c.l.b16 %v8114
        %v8138 = vunpack.c.h.b16 %v8114
        %v8139 = vunpack.c.l.b16 %v8115
        %v8140 = vunpack.c.l.b16 %v8116
        %v8141 = vunpack.c.h.b16 %v8116
        %v8142 = vunpack.c.l.b16 %v8117
        %v8143 = vpack.c.b16 %v8134, %v8131
        %v8144 = vpack.c.b16 %v8135, %v8132
        %v8145 = vpack.c.b16 %v8136, %v8133
        %v8146 = vpack.c.b16 %v8140, %v8137
        %v8147 = vpack.c.b16 %v8141, %v8138
        %v8148 = vpack.c.b16 %v8142, %v8139
        %v8156 = vsel %vm505, %v8122, 0
        %8158 = vmatpush.bf16.msra.mxu0 0
        %8159 = vmatpush.bf16.msra.mxu0 0
        %8160 = vmatpush.bf16.msra.mxu0 0
        %8161 = vmatpush.bf16.msra.mxu0 0
        %8162 = vmatpush.bf16.msra.mxu0 0
        %8163 = vmatpush.bf16.msra.mxu0 0
        %8164 = vmatpush.bf16.msra.mxu0 %v8146
        %8165 = vmatpush.bf16.msra.mxu0 %v8143
        %8166 = vmatmul.bf16.gmra.mxu0 %v8156
        %v8167 = vpop.f32.mrf.mxu0
        %v8168 = vadd.f32 0.0, %v8167
        %v8169 = vpop.f32.mrf.mxu0
        %v8170 = vadd.f32 0.0, %v8169
        %8171 = vdwg.mxu0
        %8172 = vmatpush.bf16.msra.mxu0 0
        %8173 = vmatpush.bf16.msra.mxu0 0
        %8174 = vmatpush.bf16.msra.mxu0 0
        %8175 = vmatpush.bf16.msra.mxu0 0
        %8176 = vmatpush.bf16.msra.mxu0 0
        %8177 = vmatpush.bf16.msra.mxu0 0
        %8178 = vmatpush.bf16.msra.mxu0 %v8147
        %8179 = vmatpush.bf16.msra.mxu0 %v8144
        %8180 = vmatmul.bf16.gmra.mxu0 %v8156
        %v8181 = vpop.f32.mrf.mxu0
        %v8182 = vadd.f32 0.0, %v8181
        %v8183 = vpop.f32.mrf.mxu0
        %v8184 = vadd.f32 0.0, %v8183
        %8185 = vdwg.mxu0
        %8186 = vmatpush.bf16.msra.mxu0 0
        %8187 = vmatpush.bf16.msra.mxu0 0
        %8188 = vmatpush.bf16.msra.mxu0 0
        %8189 = vmatpush.bf16.msra.mxu0 0
        %8190 = vmatpush.bf16.msra.mxu0 0
        %8191 = vmatpush.bf16.msra.mxu0 0
        %8192 = vmatpush.bf16.msra.mxu0 %v8148
        %8193 = vmatpush.bf16.msra.mxu0 %v8145
        %8194 = vmatmul.bf16.gmra.mxu0 %v8156
        %v8195 = vpop.f32.mrf.mxu0
        %v8196 = vadd.f32 0.0, %v8195
        %v8197 = vpop.f32.mrf.mxu0
        %v8198 = vadd.f32 0.0, %v8197
        %8199 = vdwg.mxu0
        %v8200 = vadd.f32 %v8103, %v8168
        %v8201 = vadd.f32 %v8104, %v8182
        %v8202 = vadd.f32 %v8105, %v8196
        %v8203 = vadd.f32 %v8106, %v8170
        %v8204 = vadd.f32 %v8107, %v8184
        %v8205 = vadd.f32 %v8108, %v8198
        %v8206 = vld [vmem:[%s6] sm:$0x7]
        %v8208 = vperm.slane %v8206, 0
        %v8209 = vperm.slane %v8206, 1
        %v8210 = vperm.slane %v8206, 2
        %v8214 = vadd.f32 %v8200, %v8208
        %v8215 = vadd.f32 %v8201, %v8209
        %v8216 = vadd.f32 %v8202, %v8210
        %v8217 = vadd.f32 %v8203, %v8208
        %v8218 = vadd.f32 %v8204, %v8209
        %v8219 = vadd.f32 %v8205, %v8210
        %v8220 = vmax.f32 %v8214, 0.0
        %v8221 = vmax.f32 %v8215, 0.0
        %v8222 = vmax.f32 %v8216, 0.0
        %v8223 = vmax.f32 %v8217, 0.0
        %v8224 = vmax.f32 %v8218, 0.0
        %v8225 = vmax.f32 %v8219, 0.0
        %v8226 = vpack.c.bf16 %v8223, %v8220
        %v8227 = vpack.c.bf16 %v8224, %v8221
        %v8228 = vpack.c.bf16 %v8225, %v8222
        %v8229 = vld [vmem:[%s7] sm:$0xff]
        %v8230 = vld [vmem:[%s7 + $0x8] sm:$0xff]
        %v8231 = vld [vmem:[%s7 + $0x10] sm:$0xff]
        %v8232 = vld [vmem:[%s7 + $0x18] sm:$0xff]
        %v8233 = vld [vmem:[%s7 + $0x20] sm:$0xff]
        %v8234 = vld [vmem:[%s7 + $0x28] sm:$0xff]
        %v8235 = vld [vmem:[%s7 + $0x30] sm:$0xff]
        %v8236 = vld [vmem:[%s7 + $0x38] sm:$0xff]
        %v8237 = vld [vmem:[%s7 + $0x40] sm:$0xff]
        %v8238 = vld [vmem:[%s7 + $0x48] sm:$0xff]
        %v8239 = vld [vmem:[%s7 + $0x50] sm:$0xff]
        %v8240 = vld [vmem:[%s7 + $0x58] sm:$0xff]
        %v8241 = vld [vmem:[%s7 + $0x60] sm:$0xff]
        %v8242 = vld [vmem:[%s7 + $0x68] sm:$0xff]
        %v8243 = vld [vmem:[%s7 + $0x70] sm:$0xff]
        %v8244 = vld [vmem:[%s7 + $0x78] sm:$0xff]
        %v8245 = vld [vmem:[%s7 + $0x80] sm:$0xff]
        %v8246 = vld [vmem:[%s7 + $0x88] sm:$0xff]
        %v8247 = vld [vmem:[%s7 + $0x90] sm:$0xff]
        %v8248 = vld [vmem:[%s7 + $0x98] sm:$0xff]
        %v8249 = vld [vmem:[%s7 + $0xa0] sm:$0xff]
        %v8250 = vld [vmem:[%s7 + $0xa8] sm:$0xff]
        %v8251 = vld [vmem:[%s7 + $0xb0] sm:$0xff]
        %v8252 = vld [vmem:[%s7 + $0xb8] sm:$0xff]
        %v8253 = vld [vmem:[%s7 + $0xc0] sm:$0xff]
        %v8254 = vld [vmem:[%s7 + $0xc8] sm:$0xff]
        %v8255 = vld [vmem:[%s7 + $0xd0] sm:$0xff]
        %v8256 = vld [vmem:[%s7 + $0xd8] sm:$0xff]
        %v8257 = vld [vmem:[%s7 + $0xe0] sm:$0xff]
        %v8258 = vld [vmem:[%s7 + $0xe8] sm:$0xff]
        %v8259 = vld [vmem:[%s7 + $0xf0] sm:$0xff]
        %v8260 = vld [vmem:[%s7 + $0xf8] sm:$0xff]
        %v8261 = vld [vmem:[%s7 + $0x100] sm:$0xff]
        %v8262 = vld [vmem:[%s7 + $0x108] sm:$0xff]
        %v8263 = vld [vmem:[%s7 + $0x110] sm:$0xff]
        %v8264 = vld [vmem:[%s7 + $0x118] sm:$0xff]
        %v8265 = vld [vmem:[%s7 + $0x120] sm:$0xff]
        %v8266 = vld [vmem:[%s7 + $0x128] sm:$0xff]
        %v8267 = vld [vmem:[%s7 + $0x130] sm:$0xff]
        %v8268 = vld [vmem:[%s7 + $0x138] sm:$0xff]
        %v8269 = vld [vmem:[%s7 + $0x140] sm:$0xff]
        %v8270 = vld [vmem:[%s7 + $0x148] sm:$0xff]
        %v8271 = vld [vmem:[%s7 + $0x150] sm:$0xff]
        %v8272 = vld [vmem:[%s7 + $0x158] sm:$0xff]
        %v8273 = vld [vmem:[%s7 + $0x160] sm:$0xff]
        %v8274 = vld [vmem:[%s7 + $0x168] sm:$0xff]
        %v8275 = vld [vmem:[%s7 + $0x170] sm:$0xff]
        %v8276 = vld [vmem:[%s7 + $0x178] sm:$0xff]
        %v8277 = vld [vmem:[%s8] sm:$0x3]
        %v8279 = vperm.slane %v8277, 0
        %v8280 = vperm.slane %v8277, 1
        %v8331 = vunpack.c.l.b16 %v8229
        %v8332 = vunpack.c.h.b16 %v8229
        %v8333 = vunpack.c.l.b16 %v8230
        %v8334 = vunpack.c.h.b16 %v8230
        %v8335 = vunpack.c.l.b16 %v8231
        %v8336 = vunpack.c.h.b16 %v8231
        %v8337 = vunpack.c.l.b16 %v8232
        %v8338 = vunpack.c.h.b16 %v8232
        %v8339 = vunpack.c.l.b16 %v8233
        %v8340 = vunpack.c.h.b16 %v8233
        %v8341 = vunpack.c.l.b16 %v8234
        %v8342 = vunpack.c.h.b16 %v8234
        %v8343 = vunpack.c.l.b16 %v8235
        %v8344 = vunpack.c.h.b16 %v8235
        %v8345 = vunpack.c.l.b16 %v8236
        %v8346 = vunpack.c.h.b16 %v8236
        %v8347 = vunpack.c.l.b16 %v8237
        %v8348 = vunpack.c.h.b16 %v8237
        %v8349 = vunpack.c.l.b16 %v8238
        %v8350 = vunpack.c.h.b16 %v8238
        %v8351 = vunpack.c.l.b16 %v8239
        %v8352 = vunpack.c.h.b16 %v8239
        %v8353 = vunpack.c.l.b16 %v8240
        %v8354 = vunpack.c.h.b16 %v8240
        %v8355 = vunpack.c.l.b16 %v8241
        %v8356 = vunpack.c.h.b16 %v8241
        %v8357 = vunpack.c.l.b16 %v8242
        %v8358 = vunpack.c.h.b16 %v8242
        %v8359 = vunpack.c.l.b16 %v8243
        %v8360 = vunpack.c.h.b16 %v8243
        %v8361 = vunpack.c.l.b16 %v8244
        %v8362 = vunpack.c.h.b16 %v8244
        %v8363 = vunpack.c.l.b16 %v8245
        %v8364 = vunpack.c.h.b16 %v8245
        %v8365 = vunpack.c.l.b16 %v8246
        %v8366 = vunpack.c.h.b16 %v8246
        %v8367 = vunpack.c.l.b16 %v8247
        %v8368 = vunpack.c.h.b16 %v8247
        %v8369 = vunpack.c.l.b16 %v8248
        %v8370 = vunpack.c.h.b16 %v8248
        %v8371 = vunpack.c.l.b16 %v8249
        %v8372 = vunpack.c.h.b16 %v8249
        %v8373 = vunpack.c.l.b16 %v8250
        %v8374 = vunpack.c.h.b16 %v8250
        %v8375 = vunpack.c.l.b16 %v8251
        %v8376 = vunpack.c.h.b16 %v8251
        %v8377 = vunpack.c.l.b16 %v8252
        %v8378 = vunpack.c.h.b16 %v8252
        %v8379 = vunpack.c.l.b16 %v8253
        %v8380 = vunpack.c.h.b16 %v8253
        %v8381 = vunpack.c.l.b16 %v8254
        %v8382 = vunpack.c.h.b16 %v8254
        %v8383 = vunpack.c.l.b16 %v8255
        %v8384 = vunpack.c.h.b16 %v8255
        %v8385 = vunpack.c.l.b16 %v8256
        %v8386 = vunpack.c.h.b16 %v8256
        %v8387 = vunpack.c.l.b16 %v8257
        %v8388 = vunpack.c.h.b16 %v8257
        %v8389 = vunpack.c.l.b16 %v8258
        %v8390 = vunpack.c.h.b16 %v8258
        %v8391 = vunpack.c.l.b16 %v8259
        %v8392 = vunpack.c.h.b16 %v8259
        %v8393 = vunpack.c.l.b16 %v8260
        %v8394 = vunpack.c.h.b16 %v8260
        %v8395 = vunpack.c.l.b16 %v8261
        %v8396 = vunpack.c.h.b16 %v8261
        %v8397 = vunpack.c.l.b16 %v8262
        %v8398 = vunpack.c.h.b16 %v8262
        %v8399 = vunpack.c.l.b16 %v8263
        %v8400 = vunpack.c.h.b16 %v8263
        %v8401 = vunpack.c.l.b16 %v8264
        %v8402 = vunpack.c.h.b16 %v8264
        %v8403 = vunpack.c.l.b16 %v8265
        %v8404 = vunpack.c.h.b16 %v8265
        %v8405 = vunpack.c.l.b16 %v8266
        %v8406 = vunpack.c.h.b16 %v8266
        %v8407 = vunpack.c.l.b16 %v8267
        %v8408 = vunpack.c.h.b16 %v8267
        %v8409 = vunpack.c.l.b16 %v8268
        %v8410 = vunpack.c.h.b16 %v8268
        %v8411 = vunpack.c.l.b16 %v8269
        %v8412 = vunpack.c.h.b16 %v8269
        %v8413 = vunpack.c.l.b16 %v8270
        %v8414 = vunpack.c.h.b16 %v8270
        %v8415 = vunpack.c.l.b16 %v8271
        %v8416 = vunpack.c.h.b16 %v8271
        %v8417 = vunpack.c.l.b16 %v8272
        %v8418 = vunpack.c.h.b16 %v8272
        %v8419 = vunpack.c.l.b16 %v8273
        %v8420 = vunpack.c.h.b16 %v8273
        %v8421 = vunpack.c.l.b16 %v8274
        %v8422 = vunpack.c.h.b16 %v8274
        %v8423 = vunpack.c.l.b16 %v8275
        %v8424 = vunpack.c.h.b16 %v8275
        %v8425 = vunpack.c.l.b16 %v8276
        %v8426 = vunpack.c.h.b16 %v8276
        %v8427 = vpack.c.b16 %v8333, %v8331
        %v8428 = vpack.c.b16 %v8334, %v8332
        %v8429 = vpack.c.b16 %v8337, %v8335
        %v8430 = vpack.c.b16 %v8338, %v8336
        %v8431 = vpack.c.b16 %v8341, %v8339
        %v8432 = vpack.c.b16 %v8342, %v8340
        %v8433 = vpack.c.b16 %v8345, %v8343
        %v8434 = vpack.c.b16 %v8346, %v8344
        %v8435 = vpack.c.b16 %v8349, %v8347
        %v8436 = vpack.c.b16 %v8350, %v8348
        %v8437 = vpack.c.b16 %v8353, %v8351
        %v8438 = vpack.c.b16 %v8354, %v8352
        %v8439 = vpack.c.b16 %v8357, %v8355
        %v8440 = vpack.c.b16 %v8358, %v8356
        %v8441 = vpack.c.b16 %v8361, %v8359
        %v8442 = vpack.c.b16 %v8362, %v8360
        %v8443 = vpack.c.b16 %v8365, %v8363
        %v8444 = vpack.c.b16 %v8366, %v8364
        %v8445 = vpack.c.b16 %v8369, %v8367
        %v8446 = vpack.c.b16 %v8370, %v8368
        %v8447 = vpack.c.b16 %v8373, %v8371
        %v8448 = vpack.c.b16 %v8374, %v8372
        %v8449 = vpack.c.b16 %v8377, %v8375
        %v8450 = vpack.c.b16 %v8378, %v8376
        %v8451 = vpack.c.b16 %v8381, %v8379
        %v8452 = vpack.c.b16 %v8382, %v8380
        %v8453 = vpack.c.b16 %v8385, %v8383
        %v8454 = vpack.c.b16 %v8386, %v8384
        %v8455 = vpack.c.b16 %v8389, %v8387
        %v8456 = vpack.c.b16 %v8390, %v8388
        %v8457 = vpack.c.b16 %v8393, %v8391
        %v8458 = vpack.c.b16 %v8394, %v8392
        %v8459 = vpack.c.b16 %v8397, %v8395
        %v8460 = vpack.c.b16 %v8398, %v8396
        %v8461 = vpack.c.b16 %v8401, %v8399
        %v8462 = vpack.c.b16 %v8402, %v8400
        %v8463 = vpack.c.b16 %v8405, %v8403
        %v8464 = vpack.c.b16 %v8406, %v8404
        %v8465 = vpack.c.b16 %v8409, %v8407
        %v8466 = vpack.c.b16 %v8410, %v8408
        %v8467 = vpack.c.b16 %v8413, %v8411
        %v8468 = vpack.c.b16 %v8414, %v8412
        %v8469 = vpack.c.b16 %v8417, %v8415
        %v8470 = vpack.c.b16 %v8418, %v8416
        %v8471 = vpack.c.b16 %v8421, %v8419
        %v8472 = vpack.c.b16 %v8422, %v8420
        %v8473 = vpack.c.b16 %v8425, %v8423
        %v8474 = vpack.c.b16 %v8426, %v8424
        %8523 = vmatpush.bf16.msra.mxu0 %v8441
        %8524 = vmatpush.bf16.msra.mxu0 %v8439
        %8525 = vmatpush.bf16.msra.mxu0 %v8437
        %8526 = vmatpush.bf16.msra.mxu0 %v8435
        %8527 = vmatpush.bf16.msra.mxu0 %v8433
        %8528 = vmatpush.bf16.msra.mxu0 %v8431
        %8529 = vmatpush.bf16.msra.mxu0 %v8429
        %8530 = vmatpush.bf16.msra.mxu0 %v8427
        %8531 = vmatmul.bf16.gmra.mxu0 %v8226
        %v8532 = vpop.f32.mrf.mxu0
        %v8533 = vadd.f32 %v8279, %v8532
        %v8534 = vpop.f32.mrf.mxu0
        %v8535 = vadd.f32 %v8279, %v8534
        %8536 = vdwg.mxu0
        %8537 = vmatpush.bf16.msra.mxu0 %v8457
        %8538 = vmatpush.bf16.msra.mxu0 %v8455
        %8539 = vmatpush.bf16.msra.mxu0 %v8453
        %8540 = vmatpush.bf16.msra.mxu0 %v8451
        %8541 = vmatpush.bf16.msra.mxu0 %v8449
        %8542 = vmatpush.bf16.msra.mxu0 %v8447
        %8543 = vmatpush.bf16.msra.mxu0 %v8445
        %8544 = vmatpush.bf16.msra.mxu0 %v8443
        %8545 = vmatmul.bf16.gmra.mxu0 %v8227
        %v8546 = vpop.f32.mrf.mxu0
        %v8547 = vadd.f32 %v8533, %v8546
        %v8548 = vpop.f32.mrf.mxu0
        %v8549 = vadd.f32 %v8535, %v8548
        %8550 = vdwg.mxu0
        %8551 = vmatpush.bf16.msra.mxu0 %v8473
        %8552 = vmatpush.bf16.msra.mxu0 %v8471
        %8553 = vmatpush.bf16.msra.mxu0 %v8469
        %8554 = vmatpush.bf16.msra.mxu0 %v8467
        %8555 = vmatpush.bf16.msra.mxu0 %v8465
        %8556 = vmatpush.bf16.msra.mxu0 %v8463
        %8557 = vmatpush.bf16.msra.mxu0 %v8461
        %8558 = vmatpush.bf16.msra.mxu0 %v8459
        %8559 = vmatmul.bf16.gmra.mxu0 %v8228
        %v8560 = vpop.f32.mrf.mxu0
        %v8561 = vadd.f32 %v8547, %v8560
        %v8562 = vpop.f32.mrf.mxu0
        %v8563 = vadd.f32 %v8549, %v8562
        %8564 = vdwg.mxu0
        %8565 = vmatpush.bf16.msra.mxu0 %v8442
        %8566 = vmatpush.bf16.msra.mxu0 %v8440
        %8567 = vmatpush.bf16.msra.mxu0 %v8438
        %8568 = vmatpush.bf16.msra.mxu0 %v8436
        %8569 = vmatpush.bf16.msra.mxu0 %v8434
        %8570 = vmatpush.bf16.msra.mxu0 %v8432
        %8571 = vmatpush.bf16.msra.mxu0 %v8430
        %8572 = vmatpush.bf16.msra.mxu0 %v8428
        %8573 = vmatmul.bf16.gmra.mxu0 %v8226
        %v8574 = vpop.f32.mrf.mxu0
        %v8575 = vadd.f32 %v8280, %v8574
        %v8576 = vpop.f32.mrf.mxu0
        %v8577 = vadd.f32 %v8280, %v8576
        %8578 = vdwg.mxu0
        %8579 = vmatpush.bf16.msra.mxu0 %v8458
        %8580 = vmatpush.bf16.msra.mxu0 %v8456
        %8581 = vmatpush.bf16.msra.mxu0 %v8454
        %8582 = vmatpush.bf16.msra.mxu0 %v8452
        %8583 = vmatpush.bf16.msra.mxu0 %v8450
        %8584 = vmatpush.bf16.msra.mxu0 %v8448
        %8585 = vmatpush.bf16.msra.mxu0 %v8446
        %8586 = vmatpush.bf16.msra.mxu0 %v8444
        %8587 = vmatmul.bf16.gmra.mxu0 %v8227
        %v8588 = vpop.f32.mrf.mxu0
        %v8589 = vadd.f32 %v8575, %v8588
        %v8590 = vpop.f32.mrf.mxu0
        %v8591 = vadd.f32 %v8577, %v8590
        %8592 = vdwg.mxu0
        %8593 = vmatpush.bf16.msra.mxu0 %v8474
        %8594 = vmatpush.bf16.msra.mxu0 %v8472
        %8595 = vmatpush.bf16.msra.mxu0 %v8470
        %8596 = vmatpush.bf16.msra.mxu0 %v8468
        %8597 = vmatpush.bf16.msra.mxu0 %v8466
        %8598 = vmatpush.bf16.msra.mxu0 %v8464
        %8599 = vmatpush.bf16.msra.mxu0 %v8462
        %8600 = vmatpush.bf16.msra.mxu0 %v8460
        %8601 = vmatmul.bf16.gmra.mxu0 %v8228
        %v8602 = vpop.f32.mrf.mxu0
        %v8603 = vadd.f32 %v8589, %v8602
        %v8604 = vpop.f32.mrf.mxu0
        %v8605 = vadd.f32 %v8591, %v8604
        %8606 = vdwg.mxu0
        %v8607 = vmax.f32 %v8561, 0.0
        %v8608 = vmax.f32 %v8603, 0.0
        %v8609 = vmax.f32 %v8563, 0.0
        %v8610 = vmax.f32 %v8605, 0.0
        %v8611 = vld [vmem:[%s9] sm:$0x3]
        %v8613 = vperm.slane %v8611, 0
        %v8614 = vperm.slane %v8611, 1
        %v8617 = vmul.f32 %v8607, %v8613
        %v8618 = vmul.f32 %v8608, %v8614
        %v8619 = vmul.f32 %v8609, %v8613
        %v8620 = vmul.f32 %v8610, %v8614
        %vm8621 = vcmask 523264
        %v8622 = vsel %vm8621, %v8618, 0.0
        %v8623 = vadd.f32 %v8617, %v8622
        %8624 = vadd.xlane.f32.xlu0 %v8623
        %v8625 = vpop.xlane.xlu0 %8624
        %v8626 = vsel %vm8621, %v8620, 0.0
        %v8627 = vadd.f32 %v8619, %v8626
        %8628 = vadd.xlane.f32.xlu0 %v8627
        %v8629 = vpop.xlane.xlu0 %8628
        %v8630 = vld [vmem:[#allocation2] sm:$0x1]
        %v8632 = vperm.slane %v8630, 0
        %v8634 = vadd.f32 %v8625, %v8632
        %v8635 = vadd.f32 %v8629, %v8632
        %v8636 = vtanh.pop %v8634
        %v8637 = vtanh.pop %v8635
        %v8638 = vlaneseq
        %v8639 = vshrl.u32 %v8638, 7
        %v8640 = vadd.s32 %v8639, 8
        %v8641 = vlaneseq
        %v8642 = vand.u32 %v8641, 127
        %vm8643 = vcmp.eq.s32.totalorder %v8639, %v8642
        %vm8644 = vcmp.eq.s32.totalorder %v8640, %v8642
        %8646 = vset.pattern.permute.xlu0 0
        %8647 = vperm.xlu0 %8646, %v8636
        %v8648 = vpop.permute.xlu0 %8647
        %8651 = vset.pattern.permute.xlu0 0
        %8652 = vperm.xlu0 %8651, %v8637
        %v8653 = vpop.permute.xlu0 %8652
        %v8655 = vsel %vm8643, %v8648, 0.0
        %v8656 = vsel %vm8644, %v8653, 0.0
        %v8657 = vsel %vm1112, %v8655, 0.0
        %v8658 = vsel %vm1112, %v8656, 0.0
        %v8659 = vadd.f32 %v8657, %v8658
        %v8660 = vrot.slane %v8659, 4
        %v8661 = vadd.f32 %v8659, %v8660
        %v8662 = vrot.slane %v8661, 2
        %v8663 = vadd.f32 %v8661, %v8662
        %v8664 = vrot.slane %v8663, 1
        %v8665 = vadd.f32 %v8663, %v8664
        %vm8666 = vcmp.gt.f32.partialorder %v8665, %v8648
        %vm8667 = vcmp.gt.f32.partialorder %v8665, %v8653
        %vm8668 = vcmp.eq.f32.partialorder %v8665, %v8648
        %vm8669 = vcmp.eq.f32.partialorder %v8665, %v8653
        %vm8670 = vcmp.lt.s32.totalorder %v8642, %v8639
        %vm8671 = vcmp.lt.s32.totalorder %v8642, %v8640
        %vm8672 = vmand %vm8668, %vm8670
        %vm8673 = vmand %vm8669, %vm8671
        %vm8674 = vmor %vm8666, %vm8672
        %vm8675 = vmor %vm8667, %vm8673
        %v8676 = vsel %vm8674, 1, 0
        %v8677 = vsel %vm8675, 1, 0
        %v8678 = vsel %vm1112, %v8676, 0
        %v8679 = vand.u32 %v8678, 65535
        %v8680 = vshrl.u32 %v8678, 16
        %v8681 = vcvt.s32.f32 %v8679
        %v8682 = vcvt.s32.f32 %v8680
        %8683 = vadd.xlane.f32.xlu0 %v8681
        %v8684 = vpop.xlane.xlu0 %8683
        %8685 = vadd.xlane.f32.xlu0 %v8682
        %v8686 = vpop.xlane.xlu0 %8685
        %v8687 = vcvt.f32.s32 %v8684
        %v8688 = vcvt.f32.s32 %v8686
        %v8689 = vshll.u32 %v8688, 16
        %v8690 = vadd.s32 %v8689, %v8687
        %v8691 = vsel %vm1112, %v8677, 0
        %v8692 = vand.u32 %v8691, 65535
        %v8693 = vshrl.u32 %v8691, 16
        %v8694 = vcvt.s32.f32 %v8692
        %v8695 = vcvt.s32.f32 %v8693
        %8696 = vadd.xlane.f32.xlu0 %v8694
        %v8697 = vpop.xlane.xlu0 %8696
        %8698 = vadd.xlane.f32.xlu0 %v8695
        %v8699 = vpop.xlane.xlu0 %8698
        %v8700 = vcvt.f32.s32 %v8697
        %v8701 = vcvt.f32.s32 %v8699
        %v8702 = vshll.u32 %v8701, 16
        %v8703 = vadd.s32 %v8702, %v8700
        %vm8704 = vcmp.eq.s32.totalorder %v8690, %v8642
        %vm8705 = vcmp.eq.s32.totalorder %v8703, %v8642
        %v8706 = vsel %vm8704, %v8648, 0.0
        %v8707 = vsel %vm8705, %v8653, 0.0
        %v8708 = vsel %vm1112, %v8706, 0.0
        %v8709 = vsel %vm1112, %v8707, 0.0
        %v8710 = vadd.f32 %v8708, %v8709
        %v8711 = vrot.slane %v8710, 4
        %v8712 = vadd.f32 %v8710, %v8711
        %v8713 = vrot.slane %v8712, 2
        %v8714 = vadd.f32 %v8712, %v8713
        %v8715 = vrot.slane %v8714, 1
        %v8716 = vadd.f32 %v8714, %v8715
        %v8717 = vld [vmem:[%s11] sm:$0xff]
        %v8718 = vld [vmem:[%s11 + $0x8] sm:$0xff]
        %8719 = vset.pattern.permute.xlu0 0
        %8720 = vperm.xlu0 %8719, %v8717
        %v8721 = vpop.permute.xlu0 %8720
        %8722 = vset.pattern.permute.xlu0 0
        %8723 = vperm.xlu0 %8722, %v8718
        %v8724 = vpop.permute.xlu0 %8723
        %v8725 = vsel %vm8704, %v8721, 0
        %v8726 = vsel %vm8705, %v8724, 0
        %v8727 = vsel %vm1112, %v8725, 0
        %v8728 = vsel %vm1112, %v8726, 0
        %v8729 = vadd.s32 %v8727, %v8728
        %v8730 = vrot.slane %v8729, 4
        %v8731 = vadd.s32 %v8729, %v8730
        %v8732 = vrot.slane %v8731, 2
        %v8733 = vadd.s32 %v8731, %v8732
        %v8734 = vrot.slane %v8733, 1
        %v8735 = vadd.s32 %v8733, %v8734
        %vm8736 = vcmask 31744
        %v8737 = vsel %vm8736, %v8716, -inf
        %8738 = vmax.xlane.f32.xlu0 %v8737
        %v8739 = vpop.xlane.xlu0 %8738
        %v8740 = vsub.f32 %v8716, %v8739
        %v8741 = vmul.f32 %v8740, 1.442695
        %v8742 = vpow.pop %v8741
        %v8743 = vsel %vm8736, %v8742, 0.0
        %8744 = vadd.xlane.f32.xlu0 %v8743
        %v8745 = vpop.xlane.xlu0 %8744
        %v8746 = vrcp.pop %v8745
        %v8747 = vmul.f32 %v8745, %v8746
        %v8748 = vsub.f32 1.0, %v8747
        %v8749 = vmul.f32 %v8746, %v8748
        %v8750 = vadd.f32 %v8746, %v8749
        %vm8751 = vweird.f32 %v8745
        %vm8752 = vweird.f32 %v8746
        %vm8753 = vmor %vm8751, %vm8752
        %v8754 = vsel %vm8753, %v8746, %v8750
        %v8755 = vand.u32 2147483647, %v8745
        %vm8756 = vcmp.eq.f32.partialorder %v8755, 8.507059e+37
        %v8757 = vand.u32 %v8745, 2147483648
        %v8758 = vor.u32 1.1754944e-38, %v8757
        %v8759 = vsel %vm8756, %v8758, %v8754
        %v8760 = vmul.f32 %v8742, %v8759
        %vm8761 = vcmask 24576
        %8762 = vst.msk [vmem:[%s465] sm:$0x1] %vm8761, %v8760
        %8763 = vst.msk [vmem:[%s471] sm:$0x1] %vm8761, %v8735
        %s8764 = sand.u32 %s301, 1
        %s8765 = scalar_lea.sflag [#allocation5], %s8764
        %s8766 = sand.u32 %s301, 1
        %s8767 = scalar_lea.vmem [#allocation6], %s8766
        %s8768 = sand.u32 %s327, 1
        %s8769 = scalar_lea.sflag [#allocation8], %s8768
        %s8770 = sand.u32 %s327, 1
        %s8771 = scalar_lea.vmem [#allocation7], %s8770
        // Predicated region
        $region73: #{caan_forward.1} parent=67 // pred_check
          %p8772 = pneg %p311
        $region74: #{caan_forward.1} parent=67 // pred_check_branch
          %8774 = sbr.rel (%p8772) target = $region76
        $region75: #{caan_forward.1} parent=67 // pred_region
          %8776 = vsyncadd %s8765, 0
          %s8777 = scalar_lea.hbm %s12, %s36
          %s8779 = sshll.u32 %s8767, 4
          %s8780 = int_to_ptr.vmem [resolvable:$true] %s8779
          %s8781 = sshll.u32 %s8777, 4
          %s8782 = int_to_ptr.hbm [resolvable:$true] %s8781
          %8784 = dma.vmem_to_hbm [thread:$0]  %s8780, 16, %s8782, %s8765
        $region76: #{caan_forward.1} parent=67 // pred_fallthru
          _
        // Predicated region
        $region77: #{caan_forward.1} parent=67 // pred_check
          %p8785 = pneg %p337
        $region78: #{caan_forward.1} parent=67 // pred_check_branch
          %8787 = sbr.rel (%p8785) target = $region80
        $region79: #{caan_forward.1} parent=67 // pred_region
          %8789 = vsyncadd %s8769, 0
          %s8790 = scalar_lea.hbm %s13, %s36
          %s8792 = sshll.u32 %s8771, 4
          %s8793 = int_to_ptr.vmem [resolvable:$true] %s8792
          %s8794 = sshll.u32 %s8790, 4
          %s8795 = int_to_ptr.hbm [resolvable:$true] %s8794
          %8797 = dma.vmem_to_hbm [thread:$0]  %s8793, 16, %s8795, %s8769
        $region80: #{caan_forward.1} parent=67 // pred_fallthru
          _
      $region68: #{caan_forward.1} parent=5 // pred_fallthru
        _
      %p8798 = scmp.le.s32.totalorder 2, %s31
      // Predicated region
      $region81: #{caan_forward.1} parent=5 // pred_check
        %p8799 = pneg %p8798
      $region82: #{caan_forward.1} parent=5 // pred_check_branch
        %8801 = sbr.rel (%p8799) target = $region84
      $region83: #{caan_forward.1} parent=5 // pred_region
        %s8802 = ssub.s32 %s31, 2
        // Predicated region
        $region85: #{caan_forward.1} parent=83 // pred_check
          %p8803 = pneg %p317
        $region86: #{caan_forward.1} parent=83 // pred_check_branch
          %8805 = sbr.rel (%p8803) target = $region88
        $region87: #{caan_forward.1} parent=83 // pred_region
          %s8806 = sand.u32 %s302, 1
          %s8807 = scalar_lea.sflag [#allocation5], %s8806
          %s8808 = sand.u32 %s302, 1
          %s8809 = scalar_lea.vmem [#allocation6], %s8808
          %8811 = dma.done %s8807, 16
        $region88: #{caan_forward.1} parent=83 // pred_fallthru
          _
        // Predicated region
        $region89: #{caan_forward.1} parent=83 // pred_check
          %p8812 = pneg %p343
        $region90: #{caan_forward.1} parent=83 // pred_check_branch
          %8814 = sbr.rel (%p8812) target = $region92
        $region91: #{caan_forward.1} parent=83 // pred_region
          %s8815 = sand.u32 %s328, 1
          %s8816 = scalar_lea.sflag [#allocation8], %s8815
          %s8817 = sand.u32 %s328, 1
          %s8818 = scalar_lea.vmem [#allocation7], %s8817
          %8820 = dma.done %s8816, 16
        $region92: #{caan_forward.1} parent=83 // pred_fallthru
          _
      $region84: #{caan_forward.1} parent=5 // pred_fallthru
        _
    $region6: #{caan_forward.1} parent=1 // loop_footer
      %s35 = sadd.s32 1, %s31
    $region7: #{caan_forward.1} parent=1 // loop_footer_branch
      %30 = sbr.rel target = $region3
    $region8: #{caan_forward.1} parent=1 // loop_exit
      _
    %8821 = vsyncpa [#allocation4], 1
    %s8822 = scalar_lea.sflag [#allocation4], 1
    %8823 = vsyncpa %s8822, 1
    %8824 = vsyncpa [#allocation5], 1
    %s8825 = scalar_lea.sflag [#allocation5], 1
    %8826 = vsyncpa %s8825, 1
    %8827 = vsyncpa [#allocation8], 1
    %s8828 = scalar_lea.sflag [#allocation8], 1
    %8829 = vsyncpa %s8828, 1

</llo_original>
